<compile_context>
chip_gen: v5e
topology: v5e:2x2
jax: 0.10.0
libtpu: 0.0.40
codegen_flags: <defaults>
</compile_context>

<pallas_src>
import functools
import math

import jax
import jax.numpy as jnp
from jax.experimental import pallas as pl
from jax.experimental.pallas import tpu as pltpu


def _round_up(v, m):
    return ((v + m - 1) // m) * m


def _triple(v):
    return tuple(v) if isinstance(v, (tuple, list)) else (v, v, v)


# ----------------------------------------------------------------------------
# Pallas kernels: grouped tiled GEMM + bias (+ optional per-N scale, ReLU)
# ----------------------------------------------------------------------------
def _gemm_epilogue(acc, bias_ref, scale_ref, relu, dtype):
    out = acc
    if scale_ref is not None:
        out = out * scale_ref[0]
    out = out + bias_ref[0]
    if relu:
        out = jnp.maximum(out, 0.0)
    return out.astype(dtype)


def _gemm_single_k_kernel(*refs, relu, has_scale):
    """Single K block: no accumulator scratch, direct epilogue + store."""
    if has_scale:
        a_ref, b_ref, bias_ref, scale_ref, o_ref = refs
    else:
        a_ref, b_ref, bias_ref, o_ref = refs
        scale_ref = None
    acc = jnp.dot(a_ref[0], b_ref[0], preferred_element_type=jnp.float32)
    o_ref[0] = _gemm_epilogue(acc, bias_ref, scale_ref, relu, o_ref.dtype)


def _gemm_multi_k_kernel(*refs, n_k, relu, has_scale):
    """K-tiled reduction with f32 VMEM accumulator (K is the innermost axis)."""
    if has_scale:
        a_ref, b_ref, bias_ref, scale_ref, o_ref, acc_ref = refs
    else:
        a_ref, b_ref, bias_ref, o_ref, acc_ref = refs
        scale_ref = None
    k = pl.program_id(3)

    @pl.when(k == 0)
    def _init():
        acc_ref[...] = jnp.zeros_like(acc_ref)

    acc_ref[...] += jnp.dot(a_ref[0], b_ref[0], preferred_element_type=jnp.float32)

    @pl.when(k == n_k - 1)
    def _finish():
        o_ref[0] = _gemm_epilogue(acc_ref[...], bias_ref, scale_ref, relu,
                                  o_ref.dtype)


@functools.lru_cache(maxsize=1)
def _tile_targets():
    """Per-generation (tm, tn, tk, vmem_limit_bytes) targets.

    Budget is derived from the actual VMEM capacity (v7x has only 64 MiB/TC);
    the conservative fallback fits v7x: (1024,512,2048) tiles ~= 18 MiB
    double-buffered under a 40 MiB cap.
    """
    kind = ""
    vmem = None
    try:
        kind = jax.devices()[0].device_kind.lower()
    except Exception:
        pass
    try:
        vmem = int(pltpu.get_tpu_info().vmem_capacity_bytes)
    except Exception:
        vmem = None
    big_vmem = vmem is not None and vmem >= 100 * 1024 * 1024
    old_gen = any(s in kind for s in ("v2", "v3", "v4", "v5"))
    if big_vmem and not old_gen:
        # v6e-class: 128 MiB VMEM, 256-wide MXU.
        return 1024, 1024, 2048, 96 * 1024 * 1024
    if big_vmem:
        # v5e / v5p-class: 128 MiB VMEM, smaller MXU.
        return 512, 512, 2048, 64 * 1024 * 1024
    # v7x (64 MiB VMEM) or unknown: conservative.
    return 1024, 512, 2048, 40 * 1024 * 1024


def pallas_grouped_matmul_bias(a, b, bias, *, scale=None, relu=False,
                               out_dtype=jnp.float32):
    """out[g] = (relu?)((a[g] @ b[g]) * scale[g] + bias[g]).

    a:(G,M,K)  b:(G,K,N)  bias:(G,N)  scale:(G,N) or None  ->  (G,M,N).
    bf16 MXU matmul with f32 accumulation; A/B are zero-padded to the K block
    grid in HBM (no in-kernel ragged-K masking, no OOB reads); outputs are
    written un-padded (full-dim lane block when N % 128 != 0).
    """
    G, M, K = a.shape
    G2, K2, N = b.shape
    assert G == G2 and K == K2 and bias.shape == (G, N)

    tm_t, tn_t, tk_t, vmem_limit = _tile_targets()

    # --- K blocking: lane-dense (128-multiple) tiles, padded in HBM ----------
    if K <= tk_t:
        n_k = 1
        tk = _round_up(K, 128)
    else:
        n_k = (K + tk_t - 1) // tk_t
        tk = _round_up((K + n_k - 1) // n_k, 256)
    Kb = n_k * tk

    # --- N blocking: avoid padded writeback + post-slice whenever possible ---
    if N % 128 == 0:
        Nb, tn, pad_n = N, min(N, tn_t), False
    elif N <= 1024:
        Nb, tn, pad_n = N, N, False          # full-dim lane block (masked stores)
    else:
        Nb = _round_up(N, 128)
        tn, pad_n = min(Nb, tn_t), True

    tm = M if M <= tm_t else tm_t

    a_p = a.astype(jnp.bfloat16)
    if Kb != K:
        a_p = jnp.pad(a_p, ((0, 0), (0, 0), (0, Kb - K)))   # fuses with the cast
    b_p = jnp.zeros((G, Kb, Nb), jnp.bfloat16).at[:, :K, :N].set(
        b.astype(jnp.bfloat16))
    bias_p = jnp.zeros((G, 1, Nb), jnp.float32).at[:, 0, :N].set(
        bias.astype(jnp.float32))

    inputs = [a_p, b_p, bias_p]
    has_scale = scale is not None
    if has_scale:
        scale_p = jnp.zeros((G, 1, Nb), jnp.float32).at[:, 0, :N].set(
            scale.astype(jnp.float32))
        inputs.append(scale_p)

    if n_k == 1:
        grid = (G, pl.cdiv(M, tm), pl.cdiv(Nb, tn))
        in_specs = [
            pl.BlockSpec((1, tm, tk), lambda g, i, j: (g, i, 0)),
            pl.BlockSpec((1, tk, tn), lambda g, i, j: (g, 0, j)),
            pl.BlockSpec((1, 1, tn), lambda g, i, j: (g, 0, j)),
        ]
        if has_scale:
            in_specs.append(pl.BlockSpec((1, 1, tn), lambda g, i, j: (g, 0, j)))
        out_spec = pl.BlockSpec((1, tm, tn), lambda g, i, j: (g, i, j))
        kernel = functools.partial(_gemm_single_k_kernel, relu=relu,
                                   has_scale=has_scale)
        scratch = []
        semantics = ("parallel", "parallel", "parallel")
    else:
        grid = (G, pl.cdiv(M, tm), pl.cdiv(Nb, tn), n_k)
        in_specs = [
            pl.BlockSpec((1, tm, tk), lambda g, i, j, k: (g, i, k)),
            pl.BlockSpec((1, tk, tn), lambda g, i, j, k: (g, k, j)),
            pl.BlockSpec((1, 1, tn), lambda g, i, j, k: (g, 0, j)),
        ]
        if has_scale:
            in_specs.append(
                pl.BlockSpec((1, 1, tn), lambda g, i, j, k: (g, 0, j)))
        out_spec = pl.BlockSpec((1, tm, tn), lambda g, i, j, k: (g, i, j))
        kernel = functools.partial(_gemm_multi_k_kernel, n_k=n_k, relu=relu,
                                   has_scale=has_scale)
        scratch = [pltpu.VMEM((tm, tn), jnp.float32)]
        semantics = ("parallel", "parallel", "parallel", "arbitrary")

    out = pl.pallas_call(
        kernel,
        out_shape=jax.ShapeDtypeStruct((G, M, Nb), out_dtype),
        grid=grid,
        in_specs=in_specs,
        out_specs=out_spec,
        scratch_shapes=scratch,
        compiler_params=pltpu.CompilerParams(
            dimension_semantics=semantics,
            vmem_limit_bytes=vmem_limit,
        ),
    )(*inputs)
    if pad_n:
        out = out[:, :, :N]
    return out


# ----------------------------------------------------------------------------
# im2col helpers (channel-last; rectangular slicing / stacking only)
# ----------------------------------------------------------------------------
def _im2col_t_cl(x_cl, kT, sT, pT):
    """x_cl:(N,T,H,W,C) -> cols:(N,OT,H,W,kT,C)"""
    N, T, H, W, C = x_cl.shape
    OT = (T + 2 * pT - kT) // sT + 1
    xp = jnp.pad(x_cl, ((0, 0), (pT, pT), (0, 0), (0, 0), (0, 0)))
    slices = [xp[:, kt:kt + sT * OT:sT] for kt in range(kT)]
    return jnp.stack(slices, axis=4), OT


def _im2col_hw_cl(x_cl, kH, kW, sH, sW, pH, pW):
    """x_cl:(N,T,H,W,C) -> cols:(N,T,OH,OW,kH*kW,C)"""
    N, T, H, W, C = x_cl.shape
    OH = (H + 2 * pH - kH) // sH + 1
    OW = (W + 2 * pW - kW) // sW + 1
    xp = jnp.pad(x_cl, ((0, 0), (0, 0), (pH, pH), (pW, pW), (0, 0)))
    slices = [xp[:, :, kh:kh + sH * OH:sH, kw:kw + sW * OW:sW]
              for kh in range(kH) for kw in range(kW)]
    return jnp.stack(slices, axis=4), OH, OW


def _trilinear_sample(x_cl, t, h, w, dg):
    """x_cl:(N,T,H,W,C); t/h/w:(N,OT,OH,OW,DG,P) -> samp:(N,OT,OH,OW,DG,P,Cg) bf16.

    Corner-by-corner gather with an f32 running weighted sum (no materialised
    (..., 8, Cg) intermediate); zero padding outside the volume.  The
    data-dependent gather has no clean Pallas/TPU equivalent, so it stays in
    JAX glue feeding the Pallas GEMM.
    """
    N, T, H, W, C = x_cl.shape
    Cg = C // dg
    OT, OH, OW = t.shape[1], t.shape[2], t.shape[3]
    P = t.shape[5]
    L = OT * OH * OW * P

    x_g = x_cl.reshape(N, T * H * W, dg, Cg)
    x_g = jnp.transpose(x_g, (0, 2, 1, 3)).reshape(N * dg, T * H * W, Cg)

    t0, h0, w0 = jnp.floor(t), jnp.floor(h), jnp.floor(w)
    acc = jnp.zeros((N * dg, L, Cg), jnp.float32)
    for ct in (0.0, 1.0):
        for ch in (0.0, 1.0):
            for cw in (0.0, 1.0):
                ti, hi, wi = t0 + ct, h0 + ch, w0 + cw
                wgt = ((1.0 - jnp.abs(t - ti))
                       * (1.0 - jnp.abs(h - hi))
                       * (1.0 - jnp.abs(w - wi)))
                valid = ((ti >= 0) & (ti <= T - 1) & (hi >= 0) & (hi <= H - 1)
                         & (wi >= 0) & (wi <= W - 1))
                wgt = jnp.where(valid, wgt, 0.0)
                tic = jnp.clip(ti, 0, T - 1).astype(jnp.int32)
                hic = jnp.clip(hi, 0, H - 1).astype(jnp.int32)
                wic = jnp.clip(wi, 0, W - 1).astype(jnp.int32)
                idx = (tic * H + hic) * W + wic            # (N,OT,OH,OW,DG,P)
                idx_g = jnp.transpose(idx, (0, 4, 1, 2, 3, 5)).reshape(N * dg, L)
                wgt_g = jnp.transpose(wgt, (0, 4, 1, 2, 3, 5)).reshape(N * dg, L)
                gath = jax.vmap(lambda vol, iv: jnp.take(vol, iv, axis=0))(
                    x_g, idx_g)                            # (N*dg, L, Cg)
                acc = acc + gath.astype(jnp.float32) * wgt_g[..., None]

    samp = acc.reshape(N, dg, OT, OH, OW, P, Cg)
    # -> (N,OT,OH,OW,DG,P,Cg); bf16 only at the GEMM boundary (accum was f32).
    return jnp.transpose(samp, (0, 2, 3, 4, 1, 5, 6)).astype(jnp.bfloat16)


# ----------------------------------------------------------------------------
# SparseConv3dPackMore (JAX / Pallas)
# ----------------------------------------------------------------------------
class SparseConv3dPackMore:
    def __init__(self, key, in_channels, out_channels, kernel_size, stride,
                 padding, dilation=1, groups=1, deformable_groups=1,
                 dim_mask=(1, 1, 1)):
        assert in_channels % groups == 0 and out_channels % groups == 0
        assert in_channels % 4 == 0 and in_channels % deformable_groups == 0
        self.in_channels = in_channels
        self.out_channels = out_channels
        self.kernel_size = _triple(kernel_size)
        self.stride = _triple(stride)
        self.padding = _triple(padding)
        self.dilation = _triple(dilation)
        self.groups = groups
        self.deformable_groups = deformable_groups
        kT, kH, kW = self.kernel_size
        self.num_pts = kT * kH * kW
        P = self.num_pts
        off_out = deformable_groups * 3 * P

        k0, k1, k2, k3 = jax.random.split(key, 4)

        # main deformable-conv weight/bias (kaiming_uniform a=sqrt(5))
        fan_in = (in_channels // groups) * P
        bnd = 1.0 / math.sqrt(fan_in)
        self.weight = jax.random.uniform(
            k0, (out_channels, in_channels // groups, P),
            minval=-bnd, maxval=bnd, dtype=jnp.float32)
        self.bias = jax.random.uniform(
            k1, (out_channels,), minval=-bnd, maxval=bnd, dtype=jnp.float32)

        # conv_offset[0]: Conv3d(C, C//4, (kT,1,1), stride (sT,1,1), pad (pT,0,0), no bias)
        c4 = in_channels // 4
        bnd1 = 1.0 / math.sqrt(in_channels * kT)
        self.off_w1 = jax.random.uniform(
            k2, (c4, in_channels, kT, 1, 1), minval=-bnd1, maxval=bnd1,
            dtype=jnp.float32)
        self._bn_scale = 1.0 / math.sqrt(1.0 + 1e-5)   # eval-mode BN folded into w1

        # conv_offset[-1]: Conv3d(C//4, off_out, (1,kH,kW), stride (1,sH,sW), pad (0,pH,pW))
        # init_offset(): weight zeroed, bias ~ U(-bound, bound) with integer-floor bound
        self.off_w2 = jnp.zeros((off_out, c4, 1, kH, kW), jnp.float32)
        b_bound = (kT + kH + kW) // 6
        self.off_b2 = jax.random.uniform(
            k3, (off_out,), minval=-float(b_bound), maxval=float(b_bound),
            dtype=jnp.float32)

        # dim_mask: tile(repeat(dim_mask, P), DG)  (flat; applied per offset channel)
        dm = jnp.asarray(dim_mask, jnp.float32)
        self.dim_mask = jnp.tile(jnp.repeat(dm, P), deformable_groups)   # (off_out,)

    # ------------------------------------------------------------------
    def __call__(self, x):
        N, C, T, H, W = x.shape
        assert C == self.in_channels
        kT, kH, kW = self.kernel_size
        sT, sH, sW = self.stride
        pT, pH, pW = self.padding
        dT, dH, dW = self.dilation
        P = self.num_pts
        DG = self.deformable_groups
        c4 = C // 4
        off_out = DG * 3 * P
        OC = self.out_channels

        # channel-last once; bf16 activations feed both the offset branch and
        # the trilinear gather (accumulation stays f32).
        x_cl = jnp.transpose(x, (0, 2, 3, 4, 1)).astype(jnp.bfloat16)   # (N,T,H,W,C)

        # ---------------- conv_offset branch (channel-last throughout) -------
        # Note: PyTorch's conv_offset uses dilation=1 (nn.Conv3d default).
        cols1, OT1 = _im2col_t_cl(x_cl, kT, sT, pT)                 # (N,OT1,H,W,kT,C)
        a1 = cols1.reshape(N * OT1 * H * W, kT * C)
        w1 = jnp.transpose(self.off_w1.reshape(c4, C, kT), (0, 2, 1)).reshape(c4, kT * C)
        w1 = w1 * self._bn_scale            # fold BN(eval) scale into the weight
        y1 = pallas_grouped_matmul_bias(
            a1[None], jnp.transpose(w1)[None], jnp.zeros((1, c4), jnp.float32),
            relu=True)[0]                                           # fused ReLU epilogue
        y1 = y1.astype(jnp.bfloat16).reshape(N, OT1, H, W, c4)

        cols2, OH, OW = _im2col_hw_cl(y1, kH, kW, sH, sW, pH, pW)   # (N,OT1,OH,OW,kHkW,c4)
        a2 = cols2.reshape(N * OT1 * OH * OW, kH * kW * c4)
        w2 = jnp.transpose(self.off_w2.reshape(off_out, c4, kH * kW), (0, 2, 1))
        w2 = w2.reshape(off_out, kH * kW * c4)
        # dim_mask folded into the GEMM epilogue: (a@w + b) * m == a@w*m + b*m
        off = pallas_grouped_matmul_bias(
            a2[None], jnp.transpose(w2)[None],
            (self.off_b2 * self.dim_mask)[None],
            scale=self.dim_mask[None])[0]
        off = off.reshape(N, OT1, OH, OW, off_out)

        # ---------------- deformable sparse conv -----------------------------
        OT = (T + 2 * pT - dT * (kT - 1) - 1) // sT + 1
        # offset convs run with dilation 1 (as in the reference nn.Sequential);
        # the CUDA op requires the offset spatial extent to match the output.
        assert OT == OT1, "offset / main conv temporal extents must match"
        assert OH == (H + 2 * pH - dH * (kH - 1) - 1) // sH + 1
        assert OW == (W + 2 * pW - dW * (kW - 1) - 1) // sW + 1

        off_r = off.reshape(N, OT, OH, OW, DG, 3, P)
        off_t, off_h, off_w = off_r[..., 0, :], off_r[..., 1, :], off_r[..., 2, :]

        p_idx = jnp.arange(P)
        kt_off = (p_idx // (kH * kW)).astype(jnp.float32) * dT
        kh_off = ((p_idx // kW) % kH).astype(jnp.float32) * dH
        kw_off = (p_idx % kW).astype(jnp.float32) * dW
        ot = jnp.arange(OT, dtype=jnp.float32) * sT - pT
        oh = jnp.arange(OH, dtype=jnp.float32) * sH - pH
        ow = jnp.arange(OW, dtype=jnp.float32) * sW - pW

        t = off_t + ot[None, :, None, None, None, None] + kt_off[None, None, None, None, None, :]
        h = off_h + oh[None, None, :, None, None, None] + kh_off[None, None, None, None, None, :]
        w = off_w + ow[None, None, None, :, None, None] + kw_off[None, None, None, None, None, :]

        samp = _trilinear_sample(x_cl, t, h, w, DG)     # (N,OT,OH,OW,DG,P,Cg) bf16
        M = N * OT * OH * OW

        if self.groups == 1:
            # cols is a pure reshape; re-order the (small) weight to match the
            # (DG, P, Cg) column layout instead of transposing the big cols.
            cols = samp.reshape(M, C * P)
            wmat = jnp.transpose(self.weight.reshape(OC, DG, C // DG, P), (0, 1, 3, 2))
            wmat = wmat.reshape(OC, C * P)
            out = pallas_grouped_matmul_bias(
                cols[None], jnp.transpose(wmat)[None], self.bias[None])[0]
        else:
            # TODO(synk): replace with an (M, G, K)-layout grouped GEMM to avoid
            #             the two HBM transposes around a memory-bound matmul.
            Gc = self.groups
            cin_g, oc_g = C // Gc, OC // Gc
            samp_cm = jnp.transpose(samp, (0, 1, 2, 3, 4, 6, 5))   # channel-major
            a_g = jnp.transpose(samp_cm.reshape(M, Gc, cin_g * P), (1, 0, 2))
            w_g = jnp.transpose(self.weight.reshape(Gc, oc_g, cin_g * P), (0, 2, 1))
            out = pallas_grouped_matmul_bias(a_g, w_g, self.bias.reshape(Gc, oc_g))
            out = jnp.transpose(out, (1, 0, 2)).reshape(M, OC)

        out = out.reshape(N, OT, OH, OW, OC)
        return jnp.transpose(out, (0, 4, 1, 2, 3))      # (N, OC, OT, OH, OW)


# ----------------------------------------------------------------------------
if __name__ == "__main__":
    key = jax.random.PRNGKey(0)
    k_param, k_x = jax.random.split(key)

    # small shapes: batch=2, channels=8, T=4, H=W=8, kernel=3, stride=1, pad=1
    N, Cin, Cout, T, H, W = 2, 8, 8, 4, 8, 8
    module = SparseConv3dPackMore(
        k_param, in_channels=Cin, out_channels=Cout,
        kernel_size=3, stride=1, padding=1,
        dilation=1, groups=1, deformable_groups=1, dim_mask=(1, 1, 1))

    x = jax.random.normal(k_x, (N, Cin, T, H, W), dtype=jnp.float32)

    fwd = jax.jit(module.__call__)
    out = jax.block_until_ready(fwd(x))

    assert out.shape == (N, Cout, T, H, W), out.shape
    assert bool(jnp.all(jnp.isfinite(out)))
    print("KERNEL_OK")
</pallas_src>

<mosaic_0001>
module attributes {stable_mosaic.version = 11 : i64} {
  func.func @_gemm_single_k_kernel(%arg0: i32, %arg1: i32, %arg2: i32, %arg3: memref<1x512x128xbf16, #tpu.memory_space<vmem>>, %arg4: memref<1x128x2xbf16, #tpu.memory_space<vmem>>, %arg5: memref<1x1x2xf32, #tpu.memory_space<vmem>>, %arg6: memref<1x512x2xf32, #tpu.memory_space<vmem>>) attributes {dimension_semantics = [#tpu.dimension_semantics<parallel>, #tpu.dimension_semantics<parallel>, #tpu.dimension_semantics<parallel>], iteration_bounds = array<i64: 1, 1, 1>, scalar_prefetch = 0 : i64, scratch_operands = 0 : i64, tpu.core_type = #tpu.core_type<tc>, window_params = [{transform_indices = @transform_0, window_bounds = array<i64: 1, 512, 128>}, {transform_indices = @transform_1, window_bounds = array<i64: 1, 128, 2>}, {transform_indices = @transform_2, window_bounds = array<i64: 1, 1, 2>}, {transform_indices = @transform_3, window_bounds = array<i64: 1, 512, 2>}]} {
    %c0 = arith.constant 0 : index
    %c0_0 = arith.constant 0 : index
    %c0_1 = arith.constant 0 : index
    %0 = vector.load %arg3[%c0, %c0_0, %c0_1] : memref<1x512x128xbf16, #tpu.memory_space<vmem>>, vector<1x512x128xbf16>
    %1 = vector.shape_cast %0 : vector<1x512x128xbf16> to vector<512x128xbf16>
    %c0_2 = arith.constant 0 : index
    %c0_3 = arith.constant 0 : index
    %c0_4 = arith.constant 0 : index
    %2 = vector.load %arg4[%c0_2, %c0_3, %c0_4] : memref<1x128x2xbf16, #tpu.memory_space<vmem>>, vector<1x128x2xbf16>
    %3 = vector.shape_cast %2 : vector<1x128x2xbf16> to vector<128x2xbf16>
    %cst = arith.constant dense<0.000000e+00> : vector<512x2xf32>
    %4 = tpu.matmul %1, %3, %cst {dimension_numbers = #tpu.dot_dimension_numbers<[1], [0], [0], [1], [0, 0, 1, 1], [], []>} : vector<512x128xbf16>, vector<128x2xbf16>, vector<512x2xf32> -> vector<512x2xf32>
    %c0_5 = arith.constant 0 : index
    %c0_6 = arith.constant 0 : index
    %c0_7 = arith.constant 0 : index
    %5 = vector.load %arg5[%c0_5, %c0_6, %c0_7] : memref<1x1x2xf32, #tpu.memory_space<vmem>>, vector<1x1x2xf32>
    %6 = vector.shape_cast %5 : vector<1x1x2xf32> to vector<1x2xf32>
    %7 = vector.broadcast %6 : vector<1x2xf32> to vector<512x2xf32>
    %8 = arith.addf %4, %7 : vector<512x2xf32>
    %cst_8 = arith.constant 0.000000e+00 : f32
    %9 = vector.broadcast %cst_8 : f32 to vector<512x2xf32>
    %10 = arith.maximumf %8, %9 : vector<512x2xf32>
    %c0_9 = arith.constant 0 : index
    %c0_10 = arith.constant 0 : index
    %c0_11 = arith.constant 0 : index
    %11 = vector.load %arg6[%c0_9, %c0_10, %c0_11] : memref<1x512x2xf32, #tpu.memory_space<vmem>>, vector<1x512x2xf32>
    %12 = vector.shape_cast %11 : vector<1x512x2xf32> to vector<512x2xf32>
    %13 = vector.shape_cast %10 : vector<512x2xf32> to vector<1x512x2xf32>
    tpu.vector_store %arg6[%c0_9, %c0_10, %c0_11], %13 {strides = array<i32>} : memref<1x512x2xf32, #tpu.memory_space<vmem>>, vector<1x512x2xf32>,
    return
  }
  func.func @transform_0(%arg0: i32, %arg1: i32, %arg2: i32) -> (i32, i32, i32) {
    %c0_i32 = arith.constant 0 : i32
    %c0_i32_0 = arith.constant 0 : i32
    return %arg0, %arg1, %c0_i32 : i32, i32, i32
  }
  func.func @transform_1(%arg0: i32, %arg1: i32, %arg2: i32) -> (i32, i32, i32) {
    %c0_i32 = arith.constant 0 : i32
    %c0_i32_0 = arith.constant 0 : i32
    return %arg0, %c0_i32, %arg2 : i32, i32, i32
  }
  func.func @transform_2(%arg0: i32, %arg1: i32, %arg2: i32) -> (i32, i32, i32) {
    %c0_i32 = arith.constant 0 : i32
    %c0_i32_0 = arith.constant 0 : i32
    return %arg0, %c0_i32, %arg2 : i32, i32, i32
  }
  func.func @transform_3(%arg0: i32, %arg1: i32, %arg2: i32) -> (i32, i32, i32) {
    %c0_i32 = arith.constant 0 : i32
    return %arg0, %arg1, %arg2 : i32, i32, i32
  }
}

module attributes {stable_mosaic.version = 11 : i64} {
  func.func @_gemm_single_k_kernel(%arg0: i32, %arg1: i32, %arg2: i32, %arg3: memref<1x512x128xbf16, #tpu.memory_space<vmem>>, %arg4: memref<1x128x81xbf16, #tpu.memory_space<vmem>>, %arg5: memref<1x1x81xf32, #tpu.memory_space<vmem>>, %arg6: memref<1x1x81xf32, #tpu.memory_space<vmem>>, %arg7: memref<1x512x81xf32, #tpu.memory_space<vmem>>) attributes {dimension_semantics = [#tpu.dimension_semantics<parallel>, #tpu.dimension_semantics<parallel>, #tpu.dimension_semantics<parallel>], iteration_bounds = array<i64: 1, 1, 1>, scalar_prefetch = 0 : i64, scratch_operands = 0 : i64, tpu.core_type = #tpu.core_type<tc>, window_params = [{transform_indices = @transform_0, window_bounds = array<i64: 1, 512, 128>}, {transform_indices = @transform_1, window_bounds = array<i64: 1, 128, 81>}, {transform_indices = @transform_2, window_bounds = array<i64: 1, 1, 81>}, {transform_indices = @transform_3, window_bounds = array<i64: 1, 1, 81>}, {transform_indices = @transform_4, window_bounds = array<i64: 1, 512, 81>}]} {
    %c0 = arith.constant 0 : index
    %c0_0 = arith.constant 0 : index
    %c0_1 = arith.constant 0 : index
    %0 = vector.load %arg3[%c0, %c0_0, %c0_1] : memref<1x512x128xbf16, #tpu.memory_space<vmem>>, vector<1x512x128xbf16>
    %1 = vector.shape_cast %0 : vector<1x512x128xbf16> to vector<512x128xbf16>
    %c0_2 = arith.constant 0 : index
    %c0_3 = arith.constant 0 : index
    %c0_4 = arith.constant 0 : index
    %2 = vector.load %arg4[%c0_2, %c0_3, %c0_4] : memref<1x128x81xbf16, #tpu.memory_space<vmem>>, vector<1x128x81xbf16>
    %3 = vector.shape_cast %2 : vector<1x128x81xbf16> to vector<128x81xbf16>
    %cst = arith.constant dense<0.000000e+00> : vector<512x81xf32>
    %4 = tpu.matmul %1, %3, %cst {dimension_numbers = #tpu.dot_dimension_numbers<[1], [0], [0], [1], [0, 0, 1, 1], [], []>} : vector<512x128xbf16>, vector<128x81xbf16>, vector<512x81xf32> -> vector<512x81xf32>
    %c0_5 = arith.constant 0 : index
    %c0_6 = arith.constant 0 : index
    %c0_7 = arith.constant 0 : index
    %5 = vector.load %arg6[%c0_5, %c0_6, %c0_7] : memref<1x1x81xf32, #tpu.memory_space<vmem>>, vector<1x1x81xf32>
    %6 = vector.shape_cast %5 : vector<1x1x81xf32> to vector<1x81xf32>
    %7 = vector.broadcast %6 : vector<1x81xf32> to vector<512x81xf32>
    %8 = arith.mulf %4, %7 : vector<512x81xf32>
    %c0_8 = arith.constant 0 : index
    %c0_9 = arith.constant 0 : index
    %c0_10 = arith.constant 0 : index
    %9 = vector.load %arg5[%c0_8, %c0_9, %c0_10] : memref<1x1x81xf32, #tpu.memory_space<vmem>>, vector<1x1x81xf32>
    %10 = vector.shape_cast %9 : vector<1x1x81xf32> to vector<1x81xf32>
    %11 = vector.broadcast %10 : vector<1x81xf32> to vector<512x81xf32>
    %12 = arith.addf %8, %11 : vector<512x81xf32>
    %c0_11 = arith.constant 0 : index
    %c0_12 = arith.constant 0 : index
    %c0_13 = arith.constant 0 : index
    %13 = vector.load %arg7[%c0_11, %c0_12, %c0_13] : memref<1x512x81xf32, #tpu.memory_space<vmem>>, vector<1x512x81xf32>
    %14 = vector.shape_cast %13 : vector<1x512x81xf32> to vector<512x81xf32>
    %15 = vector.shape_cast %12 : vector<512x81xf32> to vector<1x512x81xf32>
    tpu.vector_store %arg7[%c0_11, %c0_12, %c0_13], %15 {strides = array<i32>} : memref<1x512x81xf32, #tpu.memory_space<vmem>>, vector<1x512x81xf32>,
    return
  }
  func.func @transform_0(%arg0: i32, %arg1: i32, %arg2: i32) -> (i32, i32, i32) {
    %c0_i32 = arith.constant 0 : i32
    %c0_i32_0 = arith.constant 0 : i32
    return %arg0, %arg1, %c0_i32 : i32, i32, i32
  }
  func.func @transform_1(%arg0: i32, %arg1: i32, %arg2: i32) -> (i32, i32, i32) {
    %c0_i32 = arith.constant 0 : i32
    %c0_i32_0 = arith.constant 0 : i32
    return %arg0, %c0_i32, %arg2 : i32, i32, i32
  }
  func.func @transform_2(%arg0: i32, %arg1: i32, %arg2: i32) -> (i32, i32, i32) {
    %c0_i32 = arith.constant 0 : i32
    %c0_i32_0 = arith.constant 0 : i32
    return %arg0, %c0_i32, %arg2 : i32, i32, i32
  }
  func.func @transform_3(%arg0: i32, %arg1: i32, %arg2: i32) -> (i32, i32, i32) {
    %c0_i32 = arith.constant 0 : i32
    %c0_i32_0 = arith.constant 0 : i32
    return %arg0, %c0_i32, %arg2 : i32, i32, i32
  }
  func.func @transform_4(%arg0: i32, %arg1: i32, %arg2: i32) -> (i32, i32, i32) {
    %c0_i32 = arith.constant 0 : i32
    return %arg0, %arg1, %arg2 : i32, i32, i32
  }
}

module attributes {stable_mosaic.version = 11 : i64} {
  func.func @_gemm_single_k_kernel(%arg0: i32, %arg1: i32, %arg2: i32, %arg3: memref<1x512x256xbf16, #tpu.memory_space<vmem>>, %arg4: memref<1x256x8xbf16, #tpu.memory_space<vmem>>, %arg5: memref<1x1x8xf32, #tpu.memory_space<vmem>>, %arg6: memref<1x512x8xf32, #tpu.memory_space<vmem>>) attributes {dimension_semantics = [#tpu.dimension_semantics<parallel>, #tpu.dimension_semantics<parallel>, #tpu.dimension_semantics<parallel>], iteration_bounds = array<i64: 1, 1, 1>, scalar_prefetch = 0 : i64, scratch_operands = 0 : i64, tpu.core_type = #tpu.core_type<tc>, window_params = [{transform_indices = @transform_0, window_bounds = array<i64: 1, 512, 256>}, {transform_indices = @transform_1, window_bounds = array<i64: 1, 256, 8>}, {transform_indices = @transform_2, window_bounds = array<i64: 1, 1, 8>}, {transform_indices = @transform_3, window_bounds = array<i64: 1, 512, 8>}]} {
    %c0 = arith.constant 0 : index
    %c0_0 = arith.constant 0 : index
    %c0_1 = arith.constant 0 : index
    %0 = vector.load %arg3[%c0, %c0_0, %c0_1] : memref<1x512x256xbf16, #tpu.memory_space<vmem>>, vector<1x512x256xbf16>
    %1 = vector.shape_cast %0 : vector<1x512x256xbf16> to vector<512x256xbf16>
    %c0_2 = arith.constant 0 : index
    %c0_3 = arith.constant 0 : index
    %c0_4 = arith.constant 0 : index
    %2 = vector.load %arg4[%c0_2, %c0_3, %c0_4] : memref<1x256x8xbf16, #tpu.memory_space<vmem>>, vector<1x256x8xbf16>
    %3 = vector.shape_cast %2 : vector<1x256x8xbf16> to vector<256x8xbf16>
    %cst = arith.constant dense<0.000000e+00> : vector<512x8xf32>
    %4 = tpu.matmul %1, %3, %cst {dimension_numbers = #tpu.dot_dimension_numbers<[1], [0], [0], [1], [0, 0, 1, 1], [], []>} : vector<512x256xbf16>, vector<256x8xbf16>, vector<512x8xf32> -> vector<512x8xf32>
    %c0_5 = arith.constant 0 : index
    %c0_6 = arith.constant 0 : index
    %c0_7 = arith.constant 0 : index
    %5 = vector.load %arg5[%c0_5, %c0_6, %c0_7] : memref<1x1x8xf32, #tpu.memory_space<vmem>>, vector<1x1x8xf32>
    %6 = vector.shape_cast %5 : vector<1x1x8xf32> to vector<1x8xf32>
    %7 = vector.broadcast %6 : vector<1x8xf32> to vector<512x8xf32>
    %8 = arith.addf %4, %7 : vector<512x8xf32>
    %c0_8 = arith.constant 0 : index
    %c0_9 = arith.constant 0 : index
    %c0_10 = arith.constant 0 : index
    %9 = vector.load %arg6[%c0_8, %c0_9, %c0_10] : memref<1x512x8xf32, #tpu.memory_space<vmem>>, vector<1x512x8xf32>
    %10 = vector.shape_cast %9 : vector<1x512x8xf32> to vector<512x8xf32>
    %11 = vector.shape_cast %8 : vector<512x8xf32> to vector<1x512x8xf32>
    tpu.vector_store %arg6[%c0_8, %c0_9, %c0_10], %11 {strides = array<i32>} : memref<1x512x8xf32, #tpu.memory_space<vmem>>, vector<1x512x8xf32>,
    return
  }
  func.func @transform_0(%arg0: i32, %arg1: i32, %arg2: i32) -> (i32, i32, i32) {
    %c0_i32 = arith.constant 0 : i32
    %c0_i32_0 = arith.constant 0 : i32
    return %arg0, %arg1, %c0_i32 : i32, i32, i32
  }
  func.func @transform_1(%arg0: i32, %arg1: i32, %arg2: i32) -> (i32, i32, i32) {
    %c0_i32 = arith.constant 0 : i32
    %c0_i32_0 = arith.constant 0 : i32
    return %arg0, %c0_i32, %arg2 : i32, i32, i32
  }
  func.func @transform_2(%arg0: i32, %arg1: i32, %arg2: i32) -> (i32, i32, i32) {
    %c0_i32 = arith.constant 0 : i32
    %c0_i32_0 = arith.constant 0 : i32
    return %arg0, %c0_i32, %arg2 : i32, i32, i32
  }
  func.func @transform_3(%arg0: i32, %arg1: i32, %arg2: i32) -> (i32, i32, i32) {
    %c0_i32 = arith.constant 0 : i32
    return %arg0, %arg1, %arg2 : i32, i32, i32
  }
}

</mosaic_0001>

<llo_original>
// kernel: a_call__.3
$region0: #{a_call__.3}
  #allocation0 [shape = 'u32[]', space=smem, size = 0x4, offset = 0x4, fixed_abs, tag = 'smem constant byte address 0x4 - core index']
  #allocation1 [shape = 'u32[72,128]{1,0:T(1,128)}', space=vmem, size = 0x9000, scoped, tag = 'internal scratch']
  %s0 = inlined_call_operand.vmem [shape: bf16[1,512,128], index: 0, kind: input, shape index: {}]
  %s1 = inlined_call_operand.vmem [shape: bf16[1,128,2], index: 1, kind: input, shape index: {}]
  %s2 = inlined_call_operand.vmem [shape: f32[1,1,2], index: 2, kind: input, shape index: {}]
  %s3 = inlined_call_operand.vmem [shape: f32[1,512,2], index: 3, kind: output, shape index: {}]
  %s4 = sld [smem:[#allocation0]]
  $region22: #{a_call__.3} parent=0
    _
  %s6 = ssub.s32 1, %s4
  %s7 = scalar_select 0, %s6, %s4
  // Predicated region
  $region2: #{a_call__.3} parent=0 // pred_check
    _
  $region3: #{a_call__.3} parent=0 // pred_check_branch
    %9 = sbr.rel (0) target = $region5
  $region4: #{a_call__.3} parent=0 // pred_region
    _
  $region5: #{a_call__.3} parent=0 // pred_fallthru
    _
  // Predicated region
  $region6: #{a_call__.3} parent=0 // pred_check
    _
  $region7: #{a_call__.3} parent=0 // pred_check_branch
    %11 = sbr.rel (0) target = $region9
  $region8: #{a_call__.3} parent=0 // pred_region
    _
  $region9: #{a_call__.3} parent=0 // pred_fallthru
    _
  // Predicated region
  $region10: #{a_call__.3} parent=0 // pred_check
    _
  $region11: #{a_call__.3} parent=0 // pred_check_branch
    %13 = sbr.rel (0) target = $region13
  $region12: #{a_call__.3} parent=0 // pred_region
    _
  $region13: #{a_call__.3} parent=0 // pred_fallthru
    _
  %v14 = vld [vmem:[%s0] sm:$0xf]
  %v15 = vld [vmem:[%s0 + $0x4] sm:$0xf]
  %v16 = vld [vmem:[%s0 + $0x8] sm:$0xf]
  %v17 = vld [vmem:[%s0 + $0xc] sm:$0xf]
  %v18 = vld [vmem:[%s0 + $0x10] sm:$0xf]
  %v19 = vld [vmem:[%s0 + $0x14] sm:$0xf]
  %v20 = vld [vmem:[%s0 + $0x18] sm:$0xf]
  %v21 = vld [vmem:[%s0 + $0x1c] sm:$0xf]
  %v22 = vld [vmem:[%s0 + $0x20] sm:$0xf]
  %v23 = vld [vmem:[%s0 + $0x24] sm:$0xf]
  %v24 = vld [vmem:[%s0 + $0x28] sm:$0xf]
  %v25 = vld [vmem:[%s0 + $0x2c] sm:$0xf]
  %v26 = vld [vmem:[%s0 + $0x30] sm:$0xf]
  %v27 = vld [vmem:[%s0 + $0x34] sm:$0xf]
  %v28 = vld [vmem:[%s0 + $0x38] sm:$0xf]
  %v29 = vld [vmem:[%s0 + $0x3c] sm:$0xf]
  %v30 = vld [vmem:[%s0 + $0x40] sm:$0xf]
  %v31 = vld [vmem:[%s0 + $0x44] sm:$0xf]
  %v32 = vld [vmem:[%s0 + $0x48] sm:$0xf]
  %v33 = vld [vmem:[%s0 + $0x4c] sm:$0xf]
  %v34 = vld [vmem:[%s0 + $0x50] sm:$0xf]
  %v35 = vld [vmem:[%s0 + $0x54] sm:$0xf]
  %v36 = vld [vmem:[%s0 + $0x58] sm:$0xf]
  %v37 = vld [vmem:[%s0 + $0x5c] sm:$0xf]
  %v38 = vld [vmem:[%s0 + $0x60] sm:$0xf]
  %v39 = vld [vmem:[%s0 + $0x64] sm:$0xf]
  %v40 = vld [vmem:[%s0 + $0x68] sm:$0xf]
  %v41 = vld [vmem:[%s0 + $0x6c] sm:$0xf]
  %v42 = vld [vmem:[%s0 + $0x70] sm:$0xf]
  %v43 = vld [vmem:[%s0 + $0x74] sm:$0xf]
  %v44 = vld [vmem:[%s0 + $0x78] sm:$0xf]
  %v45 = vld [vmem:[%s0 + $0x7c] sm:$0xf]
  %v46 = vld [vmem:[%s0 + $0x80] sm:$0xf]
  %v47 = vld [vmem:[%s0 + $0x84] sm:$0xf]
  %v48 = vld [vmem:[%s0 + $0x88] sm:$0xf]
  %v49 = vld [vmem:[%s0 + $0x8c] sm:$0xf]
  %v50 = vld [vmem:[%s0 + $0x90] sm:$0xf]
  %v51 = vld [vmem:[%s0 + $0x94] sm:$0xf]
  %v52 = vld [vmem:[%s0 + $0x98] sm:$0xf]
  %v53 = vld [vmem:[%s0 + $0x9c] sm:$0xf]
  %v54 = vld [vmem:[%s0 + $0xa0] sm:$0xf]
  %v55 = vld [vmem:[%s0 + $0xa4] sm:$0xf]
  %v56 = vld [vmem:[%s0 + $0xa8] sm:$0xf]
  %v57 = vld [vmem:[%s0 + $0xac] sm:$0xf]
  %v58 = vld [vmem:[%s0 + $0xb0] sm:$0xf]
  %v59 = vld [vmem:[%s0 + $0xb4] sm:$0xf]
  %v60 = vld [vmem:[%s0 + $0xb8] sm:$0xf]
  %v61 = vld [vmem:[%s0 + $0xbc] sm:$0xf]
  %v62 = vld [vmem:[%s0 + $0xc0] sm:$0xf]
  %v63 = vld [vmem:[%s0 + $0xc4] sm:$0xf]
  %v64 = vld [vmem:[%s0 + $0xc8] sm:$0xf]
  %v65 = vld [vmem:[%s0 + $0xcc] sm:$0xf]
  %v66 = vld [vmem:[%s0 + $0xd0] sm:$0xf]
  %v67 = vld [vmem:[%s0 + $0xd4] sm:$0xf]
  %v68 = vld [vmem:[%s0 + $0xd8] sm:$0xf]
  %v69 = vld [vmem:[%s0 + $0xdc] sm:$0xf]
  %v70 = vld [vmem:[%s0 + $0xe0] sm:$0xf]
  %v71 = vld [vmem:[%s0 + $0xe4] sm:$0xf]
  %v72 = vld [vmem:[%s0 + $0xe8] sm:$0xf]
  %v73 = vld [vmem:[%s0 + $0xec] sm:$0xf]
  %v74 = vld [vmem:[%s0 + $0xf0] sm:$0xf]
  %v75 = vld [vmem:[%s0 + $0xf4] sm:$0xf]
  %v76 = vld [vmem:[%s0 + $0xf8] sm:$0xf]
  %v77 = vld [vmem:[%s0 + $0xfc] sm:$0xf]
  %v78 = vld [vmem:[%s1] sm:$0xf]
  %v79 = vld [vmem:[%s1 + $0x4] sm:$0xf]
  %v80 = vld [vmem:[%s1 + $0x8] sm:$0xf]
  %v81 = vld [vmem:[%s1 + $0xc] sm:$0xf]
  %v82 = vld [vmem:[%s1 + $0x10] sm:$0xf]
  %v83 = vld [vmem:[%s1 + $0x14] sm:$0xf]
  %v84 = vld [vmem:[%s1 + $0x18] sm:$0xf]
  %v85 = vld [vmem:[%s1 + $0x1c] sm:$0xf]
  %v86 = vld [vmem:[%s1 + $0x20] sm:$0xf]
  %v87 = vld [vmem:[%s1 + $0x24] sm:$0xf]
  %v88 = vld [vmem:[%s1 + $0x28] sm:$0xf]
  %v89 = vld [vmem:[%s1 + $0x2c] sm:$0xf]
  %v90 = vld [vmem:[%s1 + $0x30] sm:$0xf]
  %v91 = vld [vmem:[%s1 + $0x34] sm:$0xf]
  %v92 = vld [vmem:[%s1 + $0x38] sm:$0xf]
  %v93 = vld [vmem:[%s1 + $0x3c] sm:$0xf]
  %v94 = vld [vmem:[%s2] sm:$0x1]
  %v96 = vperm.slane %v94, 0
  %v162 = vunpack.c.l.b16 %v14
  %v163 = vunpack.c.l.b16 %v15
  %v164 = vunpack.c.l.b16 %v16
  %v165 = vunpack.c.l.b16 %v17
  %v166 = vunpack.c.l.b16 %v18
  %v167 = vunpack.c.l.b16 %v19
  %v168 = vunpack.c.l.b16 %v20
  %v169 = vunpack.c.l.b16 %v21
  %v170 = vunpack.c.l.b16 %v22
  %v171 = vunpack.c.l.b16 %v23
  %v172 = vunpack.c.l.b16 %v24
  %v173 = vunpack.c.l.b16 %v25
  %v174 = vunpack.c.l.b16 %v26
  %v175 = vunpack.c.l.b16 %v27
  %v176 = vunpack.c.l.b16 %v28
  %v177 = vunpack.c.l.b16 %v29
  %v178 = vunpack.c.l.b16 %v30
  %v179 = vunpack.c.l.b16 %v31
  %v180 = vunpack.c.l.b16 %v32
  %v181 = vunpack.c.l.b16 %v33
  %v182 = vunpack.c.l.b16 %v34
  %v183 = vunpack.c.l.b16 %v35
  %v184 = vunpack.c.l.b16 %v36
  %v185 = vunpack.c.l.b16 %v37
  %v186 = vunpack.c.l.b16 %v38
  %v187 = vunpack.c.l.b16 %v39
  %v188 = vunpack.c.l.b16 %v40
  %v189 = vunpack.c.l.b16 %v41
  %v190 = vunpack.c.l.b16 %v42
  %v191 = vunpack.c.l.b16 %v43
  %v192 = vunpack.c.l.b16 %v44
  %v193 = vunpack.c.l.b16 %v45
  %v194 = vunpack.c.l.b16 %v46
  %v195 = vunpack.c.l.b16 %v47
  %v196 = vunpack.c.l.b16 %v48
  %v197 = vunpack.c.l.b16 %v49
  %v198 = vunpack.c.l.b16 %v50
  %v199 = vunpack.c.l.b16 %v51
  %v200 = vunpack.c.l.b16 %v52
  %v201 = vunpack.c.l.b16 %v53
  %v202 = vunpack.c.l.b16 %v54
  %v203 = vunpack.c.l.b16 %v55
  %v204 = vunpack.c.l.b16 %v56
  %v205 = vunpack.c.l.b16 %v57
  %v206 = vunpack.c.l.b16 %v58
  %v207 = vunpack.c.l.b16 %v59
  %v208 = vunpack.c.l.b16 %v60
  %v209 = vunpack.c.l.b16 %v61
  %v210 = vunpack.c.l.b16 %v62
  %v211 = vunpack.c.l.b16 %v63
  %v212 = vunpack.c.l.b16 %v64
  %v213 = vunpack.c.l.b16 %v65
  %v214 = vunpack.c.l.b16 %v66
  %v215 = vunpack.c.l.b16 %v67
  %v216 = vunpack.c.l.b16 %v68
  %v217 = vunpack.c.l.b16 %v69
  %v218 = vunpack.c.l.b16 %v70
  %v219 = vunpack.c.l.b16 %v71
  %v220 = vunpack.c.l.b16 %v72
  %v221 = vunpack.c.l.b16 %v73
  %v222 = vunpack.c.l.b16 %v74
  %v223 = vunpack.c.l.b16 %v75
  %v224 = vunpack.c.l.b16 %v76
  %v225 = vunpack.c.l.b16 %v77
  %v226 = vpack.c.b16 %v163, %v162
  %v227 = vpack.c.b16 %v165, %v164
  %v228 = vpack.c.b16 %v167, %v166
  %v229 = vpack.c.b16 %v169, %v168
  %v230 = vpack.c.b16 %v171, %v170
  %v231 = vpack.c.b16 %v173, %v172
  %v232 = vpack.c.b16 %v175, %v174
  %v233 = vpack.c.b16 %v177, %v176
  %v234 = vpack.c.b16 %v179, %v178
  %v235 = vpack.c.b16 %v181, %v180
  %v236 = vpack.c.b16 %v183, %v182
  %v237 = vpack.c.b16 %v185, %v184
  %v238 = vpack.c.b16 %v187, %v186
  %v239 = vpack.c.b16 %v189, %v188
  %v240 = vpack.c.b16 %v191, %v190
  %v241 = vpack.c.b16 %v193, %v192
  %v242 = vpack.c.b16 %v195, %v194
  %v243 = vpack.c.b16 %v197, %v196
  %v244 = vpack.c.b16 %v199, %v198
  %v245 = vpack.c.b16 %v201, %v200
  %v246 = vpack.c.b16 %v203, %v202
  %v247 = vpack.c.b16 %v205, %v204
  %v248 = vpack.c.b16 %v207, %v206
  %v249 = vpack.c.b16 %v209, %v208
  %v250 = vpack.c.b16 %v211, %v210
  %v251 = vpack.c.b16 %v213, %v212
  %v252 = vpack.c.b16 %v215, %v214
  %v253 = vpack.c.b16 %v217, %v216
  %v254 = vpack.c.b16 %v219, %v218
  %v255 = vpack.c.b16 %v221, %v220
  %v256 = vpack.c.b16 %v223, %v222
  %v257 = vpack.c.b16 %v225, %v224
  %v306 = vunpack.c.l.b16 %v78
  %v307 = vunpack.c.l.b16 %v79
  %v308 = vunpack.c.l.b16 %v80
  %v309 = vunpack.c.l.b16 %v81
  %v310 = vunpack.c.l.b16 %v82
  %v311 = vunpack.c.l.b16 %v83
  %v312 = vunpack.c.l.b16 %v84
  %v313 = vunpack.c.l.b16 %v85
  %v314 = vunpack.c.l.b16 %v86
  %v315 = vunpack.c.l.b16 %v87
  %v316 = vunpack.c.l.b16 %v88
  %v317 = vunpack.c.l.b16 %v89
  %v318 = vunpack.c.l.b16 %v90
  %v319 = vunpack.c.l.b16 %v91
  %v320 = vunpack.c.l.b16 %v92
  %v321 = vunpack.c.l.b16 %v93
  %v322 = vpack.c.b16 %v307, %v306
  %v323 = vpack.c.b16 %v309, %v308
  %v324 = vpack.c.b16 %v311, %v310
  %v325 = vpack.c.b16 %v313, %v312
  %v326 = vpack.c.b16 %v315, %v314
  %v327 = vpack.c.b16 %v317, %v316
  %v328 = vpack.c.b16 %v319, %v318
  %v329 = vpack.c.b16 %v321, %v320
  %338 = vmatpush.bf16.msra.mxu0 %v329
  %339 = vmatpush.bf16.msra.mxu0 %v328
  %340 = vmatpush.bf16.msra.mxu0 %v327
  %341 = vmatpush.bf16.msra.mxu0 %v326
  %342 = vmatpush.bf16.msra.mxu0 %v325
  %343 = vmatpush.bf16.msra.mxu0 %v324
  %344 = vmatpush.bf16.msra.mxu0 %v323
  %345 = vmatpush.bf16.msra.mxu0 %v322
  %346 = vmatmul.bf16.gmra.mxu0 %v226
  %v347 = vpop.f32.mrf.mxu0
  %v348 = vadd.f32 %v96, %v347
  %v349 = vpop.f32.mrf.mxu0
  %v350 = vadd.f32 %v96, %v349
  %351 = vmatmul.bf16.gmra.mxu0 %v227
  %v352 = vpop.f32.mrf.mxu0
  %v353 = vadd.f32 %v96, %v352
  %v354 = vpop.f32.mrf.mxu0
  %v355 = vadd.f32 %v96, %v354
  %356 = vmatmul.bf16.gmra.mxu0 %v228
  %v357 = vpop.f32.mrf.mxu0
  %v358 = vadd.f32 %v96, %v357
  %v359 = vpop.f32.mrf.mxu0
  %v360 = vadd.f32 %v96, %v359
  %361 = vmatmul.bf16.gmra.mxu0 %v229
  %v362 = vpop.f32.mrf.mxu0
  %v363 = vadd.f32 %v96, %v362
  %v364 = vpop.f32.mrf.mxu0
  %v365 = vadd.f32 %v96, %v364
  %366 = vmatmul.bf16.gmra.mxu0 %v230
  %v367 = vpop.f32.mrf.mxu0
  %v368 = vadd.f32 %v96, %v367
  %v369 = vpop.f32.mrf.mxu0
  %v370 = vadd.f32 %v96, %v369
  %371 = vmatmul.bf16.gmra.mxu0 %v231
  %v372 = vpop.f32.mrf.mxu0
  %v373 = vadd.f32 %v96, %v372
  %v374 = vpop.f32.mrf.mxu0
  %v375 = vadd.f32 %v96, %v374
  %376 = vmatmul.bf16.gmra.mxu0 %v232
  %v377 = vpop.f32.mrf.mxu0
  %v378 = vadd.f32 %v96, %v377
  %v379 = vpop.f32.mrf.mxu0
  %v380 = vadd.f32 %v96, %v379
  %381 = vmatmul.bf16.gmra.mxu0 %v233
  %v382 = vpop.f32.mrf.mxu0
  %v383 = vadd.f32 %v96, %v382
  %v384 = vpop.f32.mrf.mxu0
  %v385 = vadd.f32 %v96, %v384
  %386 = vmatmul.bf16.gmra.mxu0 %v234
  %v387 = vpop.f32.mrf.mxu0
  %v388 = vadd.f32 %v96, %v387
  %v389 = vpop.f32.mrf.mxu0
  %v390 = vadd.f32 %v96, %v389
  %391 = vmatmul.bf16.gmra.mxu0 %v235
  %v392 = vpop.f32.mrf.mxu0
  %v393 = vadd.f32 %v96, %v392
  %v394 = vpop.f32.mrf.mxu0
  %v395 = vadd.f32 %v96, %v394
  %396 = vmatmul.bf16.gmra.mxu0 %v236
  %v397 = vpop.f32.mrf.mxu0
  %v398 = vadd.f32 %v96, %v397
  %v399 = vpop.f32.mrf.mxu0
  %v400 = vadd.f32 %v96, %v399
  %401 = vmatmul.bf16.gmra.mxu0 %v237
  %v402 = vpop.f32.mrf.mxu0
  %v403 = vadd.f32 %v96, %v402
  %v404 = vpop.f32.mrf.mxu0
  %v405 = vadd.f32 %v96, %v404
  %406 = vmatmul.bf16.gmra.mxu0 %v238
  %v407 = vpop.f32.mrf.mxu0
  %v408 = vadd.f32 %v96, %v407
  %v409 = vpop.f32.mrf.mxu0
  %v410 = vadd.f32 %v96, %v409
  %411 = vmatmul.bf16.gmra.mxu0 %v239
  %v412 = vpop.f32.mrf.mxu0
  %v413 = vadd.f32 %v96, %v412
  %v414 = vpop.f32.mrf.mxu0
  %v415 = vadd.f32 %v96, %v414
  %416 = vmatmul.bf16.gmra.mxu0 %v240
  %v417 = vpop.f32.mrf.mxu0
  %v418 = vadd.f32 %v96, %v417
  %v419 = vpop.f32.mrf.mxu0
  %v420 = vadd.f32 %v96, %v419
  %421 = vmatmul.bf16.gmra.mxu0 %v241
  %v422 = vpop.f32.mrf.mxu0
  %v423 = vadd.f32 %v96, %v422
  %v424 = vpop.f32.mrf.mxu0
  %v425 = vadd.f32 %v96, %v424
  %426 = vmatmul.bf16.gmra.mxu0 %v242
  %v427 = vpop.f32.mrf.mxu0
  %v428 = vadd.f32 %v96, %v427
  %v429 = vpop.f32.mrf.mxu0
  %v430 = vadd.f32 %v96, %v429
  %431 = vmatmul.bf16.gmra.mxu0 %v243
  %v432 = vpop.f32.mrf.mxu0
  %v433 = vadd.f32 %v96, %v432
  %v434 = vpop.f32.mrf.mxu0
  %v435 = vadd.f32 %v96, %v434
  %436 = vmatmul.bf16.gmra.mxu0 %v244
  %v437 = vpop.f32.mrf.mxu0
  %v438 = vadd.f32 %v96, %v437
  %v439 = vpop.f32.mrf.mxu0
  %v440 = vadd.f32 %v96, %v439
  %441 = vmatmul.bf16.gmra.mxu0 %v245
  %v442 = vpop.f32.mrf.mxu0
  %v443 = vadd.f32 %v96, %v442
  %v444 = vpop.f32.mrf.mxu0
  %v445 = vadd.f32 %v96, %v444
  %446 = vmatmul.bf16.gmra.mxu0 %v246
  %v447 = vpop.f32.mrf.mxu0
  %v448 = vadd.f32 %v96, %v447
  %v449 = vpop.f32.mrf.mxu0
  %v450 = vadd.f32 %v96, %v449
  %451 = vmatmul.bf16.gmra.mxu0 %v247
  %v452 = vpop.f32.mrf.mxu0
  %v453 = vadd.f32 %v96, %v452
  %v454 = vpop.f32.mrf.mxu0
  %v455 = vadd.f32 %v96, %v454
  %456 = vmatmul.bf16.gmra.mxu0 %v248
  %v457 = vpop.f32.mrf.mxu0
  %v458 = vadd.f32 %v96, %v457
  %v459 = vpop.f32.mrf.mxu0
  %v460 = vadd.f32 %v96, %v459
  %461 = vmatmul.bf16.gmra.mxu0 %v249
  %v462 = vpop.f32.mrf.mxu0
  %v463 = vadd.f32 %v96, %v462
  %v464 = vpop.f32.mrf.mxu0
  %v465 = vadd.f32 %v96, %v464
  %466 = vmatmul.bf16.gmra.mxu0 %v250
  %v467 = vpop.f32.mrf.mxu0
  %v468 = vadd.f32 %v96, %v467
  %v469 = vpop.f32.mrf.mxu0
  %v470 = vadd.f32 %v96, %v469
  %471 = vmatmul.bf16.gmra.mxu0 %v251
  %v472 = vpop.f32.mrf.mxu0
  %v473 = vadd.f32 %v96, %v472
  %v474 = vpop.f32.mrf.mxu0
  %v475 = vadd.f32 %v96, %v474
  %476 = vmatmul.bf16.gmra.mxu0 %v252
  %v477 = vpop.f32.mrf.mxu0
  %v478 = vadd.f32 %v96, %v477
  %v479 = vpop.f32.mrf.mxu0
  %v480 = vadd.f32 %v96, %v479
  %481 = vmatmul.bf16.gmra.mxu0 %v253
  %v482 = vpop.f32.mrf.mxu0
  %v483 = vadd.f32 %v96, %v482
  %v484 = vpop.f32.mrf.mxu0
  %v485 = vadd.f32 %v96, %v484
  %486 = vmatmul.bf16.gmra.mxu0 %v254
  %v487 = vpop.f32.mrf.mxu0
  %v488 = vadd.f32 %v96, %v487
  %v489 = vpop.f32.mrf.mxu0
  %v490 = vadd.f32 %v96, %v489
  %491 = vmatmul.bf16.gmra.mxu0 %v255
  %v492 = vpop.f32.mrf.mxu0
  %v493 = vadd.f32 %v96, %v492
  %v494 = vpop.f32.mrf.mxu0
  %v495 = vadd.f32 %v96, %v494
  %496 = vmatmul.bf16.gmra.mxu0 %v256
  %v497 = vpop.f32.mrf.mxu0
  %v498 = vadd.f32 %v96, %v497
  %v499 = vpop.f32.mrf.mxu0
  %v500 = vadd.f32 %v96, %v499
  %501 = vmatmul.bf16.gmra.mxu0 %v257
  %v502 = vpop.f32.mrf.mxu0
  %v503 = vadd.f32 %v96, %v502
  %v504 = vpop.f32.mrf.mxu0
  %v505 = vadd.f32 %v96, %v504
  %506 = vdwg.mxu0
  %v507 = vmax.f32 %v348, 0.0
  %v508 = vmax.f32 %v350, 0.0
  %v509 = vmax.f32 %v353, 0.0
  %v510 = vmax.f32 %v355, 0.0
  %v511 = vmax.f32 %v358, 0.0
  %v512 = vmax.f32 %v360, 0.0
  %v513 = vmax.f32 %v363, 0.0
  %v514 = vmax.f32 %v365, 0.0
  %v515 = vmax.f32 %v368, 0.0
  %v516 = vmax.f32 %v370, 0.0
  %v517 = vmax.f32 %v373, 0.0
  %v518 = vmax.f32 %v375, 0.0
  %v519 = vmax.f32 %v378, 0.0
  %v520 = vmax.f32 %v380, 0.0
  %v521 = vmax.f32 %v383, 0.0
  %v522 = vmax.f32 %v385, 0.0
  %v523 = vmax.f32 %v388, 0.0
  %v524 = vmax.f32 %v390, 0.0
  %v525 = vmax.f32 %v393, 0.0
  %v526 = vmax.f32 %v395, 0.0
  %v527 = vmax.f32 %v398, 0.0
  %v528 = vmax.f32 %v400, 0.0
  %v529 = vmax.f32 %v403, 0.0
  %v530 = vmax.f32 %v405, 0.0
  %v531 = vmax.f32 %v408, 0.0
  %v532 = vmax.f32 %v410, 0.0
  %v533 = vmax.f32 %v413, 0.0
  %v534 = vmax.f32 %v415, 0.0
  %v535 = vmax.f32 %v418, 0.0
  %v536 = vmax.f32 %v420, 0.0
  %v537 = vmax.f32 %v423, 0.0
  %v538 = vmax.f32 %v425, 0.0
  %v539 = vmax.f32 %v428, 0.0
  %v540 = vmax.f32 %v430, 0.0
  %v541 = vmax.f32 %v433, 0.0
  %v542 = vmax.f32 %v435, 0.0
  %v543 = vmax.f32 %v438, 0.0
  %v544 = vmax.f32 %v440, 0.0
  %v545 = vmax.f32 %v443, 0.0
  %v546 = vmax.f32 %v445, 0.0
  %v547 = vmax.f32 %v448, 0.0
  %v548 = vmax.f32 %v450, 0.0
  %v549 = vmax.f32 %v453, 0.0
  %v550 = vmax.f32 %v455, 0.0
  %v551 = vmax.f32 %v458, 0.0
  %v552 = vmax.f32 %v460, 0.0
  %v553 = vmax.f32 %v463, 0.0
  %v554 = vmax.f32 %v465, 0.0
  %v555 = vmax.f32 %v468, 0.0
  %v556 = vmax.f32 %v470, 0.0
  %v557 = vmax.f32 %v473, 0.0
  %v558 = vmax.f32 %v475, 0.0
  %v559 = vmax.f32 %v478, 0.0
  %v560 = vmax.f32 %v480, 0.0
  %v561 = vmax.f32 %v483, 0.0
  %v562 = vmax.f32 %v485, 0.0
  %v563 = vmax.f32 %v488, 0.0
  %v564 = vmax.f32 %v490, 0.0
  %v565 = vmax.f32 %v493, 0.0
  %v566 = vmax.f32 %v495, 0.0
  %v567 = vmax.f32 %v498, 0.0
  %v568 = vmax.f32 %v500, 0.0
  %v569 = vmax.f32 %v503, 0.0
  %v570 = vmax.f32 %v505, 0.0
  %vm571 = vcmask 15360
  %572 = vst.msk [vmem:[%s3] sm:$0xff] %vm571, %v507
  %573 = vst.msk [vmem:[%s3 + $0x8] sm:$0xff] %vm571, %v508
  %574 = vst.msk [vmem:[%s3 + $0x10] sm:$0xff] %vm571, %v509
  %575 = vst.msk [vmem:[%s3 + $0x18] sm:$0xff] %vm571, %v510
  %576 = vst.msk [vmem:[%s3 + $0x20] sm:$0xff] %vm571, %v511
  %577 = vst.msk [vmem:[%s3 + $0x28] sm:$0xff] %vm571, %v512
  %578 = vst.msk [vmem:[%s3 + $0x30] sm:$0xff] %vm571, %v513
  %579 = vst.msk [vmem:[%s3 + $0x38] sm:$0xff] %vm571, %v514
  %580 = vst.msk [vmem:[%s3 + $0x40] sm:$0xff] %vm571, %v515
  %581 = vst.msk [vmem:[%s3 + $0x48] sm:$0xff] %vm571, %v516
  %582 = vst.msk [vmem:[%s3 + $0x50] sm:$0xff] %vm571, %v517
  %583 = vst.msk [vmem:[%s3 + $0x58] sm:$0xff] %vm571, %v518
  %584 = vst.msk [vmem:[%s3 + $0x60] sm:$0xff] %vm571, %v519
  %585 = vst.msk [vmem:[%s3 + $0x68] sm:$0xff] %vm571, %v520
  %586 = vst.msk [vmem:[%s3 + $0x70] sm:$0xff] %vm571, %v521
  %587 = vst.msk [vmem:[%s3 + $0x78] sm:$0xff] %vm571, %v522
  %588 = vst.msk [vmem:[%s3 + $0x80] sm:$0xff] %vm571, %v523
  %589 = vst.msk [vmem:[%s3 + $0x88] sm:$0xff] %vm571, %v524
  %590 = vst.msk [vmem:[%s3 + $0x90] sm:$0xff] %vm571, %v525
  %591 = vst.msk [vmem:[%s3 + $0x98] sm:$0xff] %vm571, %v526
  %592 = vst.msk [vmem:[%s3 + $0xa0] sm:$0xff] %vm571, %v527
  %593 = vst.msk [vmem:[%s3 + $0xa8] sm:$0xff] %vm571, %v528
  %594 = vst.msk [vmem:[%s3 + $0xb0] sm:$0xff] %vm571, %v529
  %595 = vst.msk [vmem:[%s3 + $0xb8] sm:$0xff] %vm571, %v530
  %596 = vst.msk [vmem:[%s3 + $0xc0] sm:$0xff] %vm571, %v531
  %597 = vst.msk [vmem:[%s3 + $0xc8] sm:$0xff] %vm571, %v532
  %598 = vst.msk [vmem:[%s3 + $0xd0] sm:$0xff] %vm571, %v533
  %599 = vst.msk [vmem:[%s3 + $0xd8] sm:$0xff] %vm571, %v534
  %600 = vst.msk [vmem:[%s3 + $0xe0] sm:$0xff] %vm571, %v535
  %601 = vst.msk [vmem:[%s3 + $0xe8] sm:$0xff] %vm571, %v536
  %602 = vst.msk [vmem:[%s3 + $0xf0] sm:$0xff] %vm571, %v537
  %603 = vst.msk [vmem:[%s3 + $0xf8] sm:$0xff] %vm571, %v538
  %604 = vst.msk [vmem:[%s3 + $0x100] sm:$0xff] %vm571, %v539
  %605 = vst.msk [vmem:[%s3 + $0x108] sm:$0xff] %vm571, %v540
  %606 = vst.msk [vmem:[%s3 + $0x110] sm:$0xff] %vm571, %v541
  %607 = vst.msk [vmem:[%s3 + $0x118] sm:$0xff] %vm571, %v542
  %608 = vst.msk [vmem:[%s3 + $0x120] sm:$0xff] %vm571, %v543
  %609 = vst.msk [vmem:[%s3 + $0x128] sm:$0xff] %vm571, %v544
  %610 = vst.msk [vmem:[%s3 + $0x130] sm:$0xff] %vm571, %v545
  %611 = vst.msk [vmem:[%s3 + $0x138] sm:$0xff] %vm571, %v546
  %612 = vst.msk [vmem:[%s3 + $0x140] sm:$0xff] %vm571, %v547
  %613 = vst.msk [vmem:[%s3 + $0x148] sm:$0xff] %vm571, %v548
  %614 = vst.msk [vmem:[%s3 + $0x150] sm:$0xff] %vm571, %v549
  %615 = vst.msk [vmem:[%s3 + $0x158] sm:$0xff] %vm571, %v550
  %616 = vst.msk [vmem:[%s3 + $0x160] sm:$0xff] %vm571, %v551
  %617 = vst.msk [vmem:[%s3 + $0x168] sm:$0xff] %vm571, %v552
  %618 = vst.msk [vmem:[%s3 + $0x170] sm:$0xff] %vm571, %v553
  %619 = vst.msk [vmem:[%s3 + $0x178] sm:$0xff] %vm571, %v554
  %620 = vst.msk [vmem:[%s3 + $0x180] sm:$0xff] %vm571, %v555
  %621 = vst.msk [vmem:[%s3 + $0x188] sm:$0xff] %vm571, %v556
  %622 = vst.msk [vmem:[%s3 + $0x190] sm:$0xff] %vm571, %v557
  %623 = vst.msk [vmem:[%s3 + $0x198] sm:$0xff] %vm571, %v558
  %624 = vst.msk [vmem:[%s3 + $0x1a0] sm:$0xff] %vm571, %v559
  %625 = vst.msk [vmem:[%s3 + $0x1a8] sm:$0xff] %vm571, %v560
  %626 = vst.msk [vmem:[%s3 + $0x1b0] sm:$0xff] %vm571, %v561
  %627 = vst.msk [vmem:[%s3 + $0x1b8] sm:$0xff] %vm571, %v562
  %628 = vst.msk [vmem:[%s3 + $0x1c0] sm:$0xff] %vm571, %v563
  %629 = vst.msk [vmem:[%s3 + $0x1c8] sm:$0xff] %vm571, %v564
  %630 = vst.msk [vmem:[%s3 + $0x1d0] sm:$0xff] %vm571, %v565
  %631 = vst.msk [vmem:[%s3 + $0x1d8] sm:$0xff] %vm571, %v566
  %632 = vst.msk [vmem:[%s3 + $0x1e0] sm:$0xff] %vm571, %v567
  %633 = vst.msk [vmem:[%s3 + $0x1e8] sm:$0xff] %vm571, %v568
  %634 = vst.msk [vmem:[%s3 + $0x1f0] sm:$0xff] %vm571, %v569
  %635 = vst.msk [vmem:[%s3 + $0x1f8] sm:$0xff] %vm571, %v570
  // Predicated region
  $region14: #{a_call__.3} parent=0 // pred_check
    _
  $region15: #{a_call__.3} parent=0 // pred_check_branch
    %637 = sbr.rel (0) target = $region17
  $region16: #{a_call__.3} parent=0 // pred_region
    _
  $region17: #{a_call__.3} parent=0 // pred_fallthru
    _
  // Predicated region
  $region18: #{a_call__.3} parent=0 // pred_check
    _
  $region19: #{a_call__.3} parent=0 // pred_check_branch
    %639 = sbr.rel (0) target = $region21
  $region20: #{a_call__.3} parent=0 // pred_region
    _
  $region21: #{a_call__.3} parent=0 // pred_fallthru
    _

// kernel: squeeze.7
$region0: #{squeeze.7}
  %s0 = inlined_call_operand.vmem [shape: f32[1,512,81], index: 0, kind: input, shape index: {}]
  %s1 = inlined_call_operand.vmem [shape: f32[2,4,8,8,1,3,27], index: 1, kind: output, shape index: {}]
  $region1: #{squeeze.7} parent=0
    #allocation0 [shape = 'u8[2097152]{0}', space=vmem, size = 0x200000, scoped, tag = 'scoped mem for output reshape']
    %v2 = vld [vmem:[%s0] sm:$0xff]
    %vm3 = vcmask 220160
    %4 = vst.msk [vmem:[#allocation0] ss:$8 sm:$0xf] %vm3, %v2
    %5 = vst.msk [vmem:[#allocation0] ss:$8 sm:$0xf0] %vm3, %v2
    %s6 = scalar_lea.vmem %s0, 8
    %v7 = vld [vmem:[%s6] sm:$0xff]
    %vm8 = vcmask 220160
    %s9 = scalar_lea.vmem [#allocation0], 64
    %10 = vst.msk [vmem:[%s9] ss:$8 sm:$0xf] %vm8, %v7
    %s11 = scalar_lea.vmem [#allocation0], 64
    %12 = vst.msk [vmem:[%s11] ss:$8 sm:$0xf0] %vm8, %v7
    %s13 = scalar_lea.vmem %s0, 16
    %v14 = vld [vmem:[%s13] sm:$0xff]
    %vm15 = vcmask 220160
    %s16 = scalar_lea.vmem [#allocation0], 128
    %17 = vst.msk [vmem:[%s16] ss:$8 sm:$0xf] %vm15, %v14
    %s18 = scalar_lea.vmem [#allocation0], 128
    %19 = vst.msk [vmem:[%s18] ss:$8 sm:$0xf0] %vm15, %v14
    %s20 = scalar_lea.vmem %s0, 24
    %v21 = vld [vmem:[%s20] sm:$0xff]
    %vm22 = vcmask 220160
    %s23 = scalar_lea.vmem [#allocation0], 192
    %24 = vst.msk [vmem:[%s23] ss:$8 sm:$0xf] %vm22, %v21
    %s25 = scalar_lea.vmem [#allocation0], 192
    %26 = vst.msk [vmem:[%s25] ss:$8 sm:$0xf0] %vm22, %v21
    %s27 = scalar_lea.vmem %s0, 32
    %v28 = vld [vmem:[%s27] sm:$0xff]
    %vm29 = vcmask 220160
    %s30 = scalar_lea.vmem [#allocation0], 256
    %31 = vst.msk [vmem:[%s30] ss:$8 sm:$0xf] %vm29, %v28
    %s32 = scalar_lea.vmem [#allocation0], 256
    %33 = vst.msk [vmem:[%s32] ss:$8 sm:$0xf0] %vm29, %v28
    %s34 = scalar_lea.vmem %s0, 40
    %v35 = vld [vmem:[%s34] sm:$0xff]
    %vm36 = vcmask 220160
    %s37 = scalar_lea.vmem [#allocation0], 320
    %38 = vst.msk [vmem:[%s37] ss:$8 sm:$0xf] %vm36, %v35
    %s39 = scalar_lea.vmem [#allocation0], 320
    %40 = vst.msk [vmem:[%s39] ss:$8 sm:$0xf0] %vm36, %v35
    %s41 = scalar_lea.vmem %s0, 48
    %v42 = vld [vmem:[%s41] sm:$0xff]
    %vm43 = vcmask 220160
    %s44 = scalar_lea.vmem [#allocation0], 384
    %45 = vst.msk [vmem:[%s44] ss:$8 sm:$0xf] %vm43, %v42
    %s46 = scalar_lea.vmem [#allocation0], 384
    %47 = vst.msk [vmem:[%s46] ss:$8 sm:$0xf0] %vm43, %v42
    %s48 = scalar_lea.vmem %s0, 56
    %v49 = vld [vmem:[%s48] sm:$0xff]
    %vm50 = vcmask 220160
    %s51 = scalar_lea.vmem [#allocation0], 448
    %52 = vst.msk [vmem:[%s51] ss:$8 sm:$0xf] %vm50, %v49
    %s53 = scalar_lea.vmem [#allocation0], 448
    %54 = vst.msk [vmem:[%s53] ss:$8 sm:$0xf0] %vm50, %v49
    %s55 = scalar_lea.vmem %s0, 64
    %v56 = vld [vmem:[%s55] sm:$0xff]
    %vm57 = vcmask 220160
    %s58 = scalar_lea.vmem [#allocation0], 512
    %59 = vst.msk [vmem:[%s58] ss:$8 sm:$0xf] %vm57, %v56
    %s60 = scalar_lea.vmem [#allocation0], 512
    %61 = vst.msk [vmem:[%s60] ss:$8 sm:$0xf0] %vm57, %v56
    %s62 = scalar_lea.vmem %s0, 72
    %v63 = vld [vmem:[%s62] sm:$0xff]
    %vm64 = vcmask 220160
    %s65 = scalar_lea.vmem [#allocation0], 576
    %66 = vst.msk [vmem:[%s65] ss:$8 sm:$0xf] %vm64, %v63
    %s67 = scalar_lea.vmem [#allocation0], 576
    %68 = vst.msk [vmem:[%s67] ss:$8 sm:$0xf0] %vm64, %v63
    %s69 = scalar_lea.vmem %s0, 80
    %v70 = vld [vmem:[%s69] sm:$0xff]
    %vm71 = vcmask 220160
    %s72 = scalar_lea.vmem [#allocation0], 640
    %73 = vst.msk [vmem:[%s72] ss:$8 sm:$0xf] %vm71, %v70
    %s74 = scalar_lea.vmem [#allocation0], 640
    %75 = vst.msk [vmem:[%s74] ss:$8 sm:$0xf0] %vm71, %v70
    %s76 = scalar_lea.vmem %s0, 88
    %v77 = vld [vmem:[%s76] sm:$0xff]
    %vm78 = vcmask 220160
    %s79 = scalar_lea.vmem [#allocation0], 704
    %80 = vst.msk [vmem:[%s79] ss:$8 sm:$0xf] %vm78, %v77
    %s81 = scalar_lea.vmem [#allocation0], 704
    %82 = vst.msk [vmem:[%s81] ss:$8 sm:$0xf0] %vm78, %v77
    %s83 = scalar_lea.vmem %s0, 96
    %v84 = vld [vmem:[%s83] sm:$0xff]
    %vm85 = vcmask 220160
    %s86 = scalar_lea.vmem [#allocation0], 768
    %87 = vst.msk [vmem:[%s86] ss:$8 sm:$0xf] %vm85, %v84
    %s88 = scalar_lea.vmem [#allocation0], 768
    %89 = vst.msk [vmem:[%s88] ss:$8 sm:$0xf0] %vm85, %v84
    %s90 = scalar_lea.vmem %s0, 104
    %v91 = vld [vmem:[%s90] sm:$0xff]
    %vm92 = vcmask 220160
    %s93 = scalar_lea.vmem [#allocation0], 832
    %94 = vst.msk [vmem:[%s93] ss:$8 sm:$0xf] %vm92, %v91
    %s95 = scalar_lea.vmem [#allocation0], 832
    %96 = vst.msk [vmem:[%s95] ss:$8 sm:$0xf0] %vm92, %v91
    %s97 = scalar_lea.vmem %s0, 112
    %v98 = vld [vmem:[%s97] sm:$0xff]
    %vm99 = vcmask 220160
    %s100 = scalar_lea.vmem [#allocation0], 896
    %101 = vst.msk [vmem:[%s100] ss:$8 sm:$0xf] %vm99, %v98
    %s102 = scalar_lea.vmem [#allocation0], 896
    %103 = vst.msk [vmem:[%s102] ss:$8 sm:$0xf0] %vm99, %v98
    %s104 = scalar_lea.vmem %s0, 120
    %v105 = vld [vmem:[%s104] sm:$0xff]
    %vm106 = vcmask 220160
    %s107 = scalar_lea.vmem [#allocation0], 960
    %108 = vst.msk [vmem:[%s107] ss:$8 sm:$0xf] %vm106, %v105
    %s109 = scalar_lea.vmem [#allocation0], 960
    %110 = vst.msk [vmem:[%s109] ss:$8 sm:$0xf0] %vm106, %v105
    %s111 = scalar_lea.vmem %s0, 128
    %v112 = vld [vmem:[%s111] sm:$0xff]
    %vm113 = vcmask 220160
    %s114 = scalar_lea.vmem [#allocation0], 1024
    %115 = vst.msk [vmem:[%s114] ss:$8 sm:$0xf] %vm113, %v112
    %s116 = scalar_lea.vmem [#allocation0], 1024
    %117 = vst.msk [vmem:[%s116] ss:$8 sm:$0xf0] %vm113, %v112
    %s118 = scalar_lea.vmem %s0, 136
    %v119 = vld [vmem:[%s118] sm:$0xff]
    %vm120 = vcmask 220160
    %s121 = scalar_lea.vmem [#allocation0], 1088
    %122 = vst.msk [vmem:[%s121] ss:$8 sm:$0xf] %vm120, %v119
    %s123 = scalar_lea.vmem [#allocation0], 1088
    %124 = vst.msk [vmem:[%s123] ss:$8 sm:$0xf0] %vm120, %v119
    %s125 = scalar_lea.vmem %s0, 144
    %v126 = vld [vmem:[%s125] sm:$0xff]
    %vm127 = vcmask 220160
    %s128 = scalar_lea.vmem [#allocation0], 1152
    %129 = vst.msk [vmem:[%s128] ss:$8 sm:$0xf] %vm127, %v126
    %s130 = scalar_lea.vmem [#allocation0], 1152
    %131 = vst.msk [vmem:[%s130] ss:$8 sm:$0xf0] %vm127, %v126
    %s132 = scalar_lea.vmem %s0, 152
    %v133 = vld [vmem:[%s132] sm:$0xff]
    %vm134 = vcmask 220160
    %s135 = scalar_lea.vmem [#allocation0], 1216
    %136 = vst.msk [vmem:[%s135] ss:$8 sm:$0xf] %vm134, %v133
    %s137 = scalar_lea.vmem [#allocation0], 1216
    %138 = vst.msk [vmem:[%s137] ss:$8 sm:$0xf0] %vm134, %v133
    %s139 = scalar_lea.vmem %s0, 160
    %v140 = vld [vmem:[%s139] sm:$0xff]
    %vm141 = vcmask 220160
    %s142 = scalar_lea.vmem [#allocation0], 1280
    %143 = vst.msk [vmem:[%s142] ss:$8 sm:$0xf] %vm141, %v140
    %s144 = scalar_lea.vmem [#allocation0], 1280
    %145 = vst.msk [vmem:[%s144] ss:$8 sm:$0xf0] %vm141, %v140
    %s146 = scalar_lea.vmem %s0, 168
    %v147 = vld [vmem:[%s146] sm:$0xff]
    %vm148 = vcmask 220160
    %s149 = scalar_lea.vmem [#allocation0], 1344
    %150 = vst.msk [vmem:[%s149] ss:$8 sm:$0xf] %vm148, %v147
    %s151 = scalar_lea.vmem [#allocation0], 1344
    %152 = vst.msk [vmem:[%s151] ss:$8 sm:$0xf0] %vm148, %v147
    %s153 = scalar_lea.vmem %s0, 176
    %v154 = vld [vmem:[%s153] sm:$0xff]
    %vm155 = vcmask 220160
    %s156 = scalar_lea.vmem [#allocation0], 1408
    %157 = vst.msk [vmem:[%s156] ss:$8 sm:$0xf] %vm155, %v154
    %s158 = scalar_lea.vmem [#allocation0], 1408
    %159 = vst.msk [vmem:[%s158] ss:$8 sm:$0xf0] %vm155, %v154
    %s160 = scalar_lea.vmem %s0, 184
    %v161 = vld [vmem:[%s160] sm:$0xff]
    %vm162 = vcmask 220160
    %s163 = scalar_lea.vmem [#allocation0], 1472
    %164 = vst.msk [vmem:[%s163] ss:$8 sm:$0xf] %vm162, %v161
    %s165 = scalar_lea.vmem [#allocation0], 1472
    %166 = vst.msk [vmem:[%s165] ss:$8 sm:$0xf0] %vm162, %v161
    %s167 = scalar_lea.vmem %s0, 192
    %v168 = vld [vmem:[%s167] sm:$0xff]
    %vm169 = vcmask 220160
    %s170 = scalar_lea.vmem [#allocation0], 1536
    %171 = vst.msk [vmem:[%s170] ss:$8 sm:$0xf] %vm169, %v168
    %s172 = scalar_lea.vmem [#allocation0], 1536
    %173 = vst.msk [vmem:[%s172] ss:$8 sm:$0xf0] %vm169, %v168
    %s174 = scalar_lea.vmem %s0, 200
    %v175 = vld [vmem:[%s174] sm:$0xff]
    %vm176 = vcmask 220160
    %s177 = scalar_lea.vmem [#allocation0], 1600
    %178 = vst.msk [vmem:[%s177] ss:$8 sm:$0xf] %vm176, %v175
    %s179 = scalar_lea.vmem [#allocation0], 1600
    %180 = vst.msk [vmem:[%s179] ss:$8 sm:$0xf0] %vm176, %v175
    %s181 = scalar_lea.vmem %s0, 208
    %v182 = vld [vmem:[%s181] sm:$0xff]
    %vm183 = vcmask 220160
    %s184 = scalar_lea.vmem [#allocation0], 1664
    %185 = vst.msk [vmem:[%s184] ss:$8 sm:$0xf] %vm183, %v182
    %s186 = scalar_lea.vmem [#allocation0], 1664
    %187 = vst.msk [vmem:[%s186] ss:$8 sm:$0xf0] %vm183, %v182
    %s188 = scalar_lea.vmem %s0, 216
    %v189 = vld [vmem:[%s188] sm:$0xff]
    %vm190 = vcmask 220160
    %s191 = scalar_lea.vmem [#allocation0], 1728
    %192 = vst.msk [vmem:[%s191] ss:$8 sm:$0xf] %vm190, %v189
    %s193 = scalar_lea.vmem [#allocation0], 1728
    %194 = vst.msk [vmem:[%s193] ss:$8 sm:$0xf0] %vm190, %v189
    %s195 = scalar_lea.vmem %s0, 224
    %v196 = vld [vmem:[%s195] sm:$0xff]
    %vm197 = vcmask 220160
    %s198 = scalar_lea.vmem [#allocation0], 1792
    %199 = vst.msk [vmem:[%s198] ss:$8 sm:$0xf] %vm197, %v196
    %s200 = scalar_lea.vmem [#allocation0], 1792
    %201 = vst.msk [vmem:[%s200] ss:$8 sm:$0xf0] %vm197, %v196
    %s202 = scalar_lea.vmem %s0, 232
    %v203 = vld [vmem:[%s202] sm:$0xff]
    %vm204 = vcmask 220160
    %s205 = scalar_lea.vmem [#allocation0], 1856
    %206 = vst.msk [vmem:[%s205] ss:$8 sm:$0xf] %vm204, %v203
    %s207 = scalar_lea.vmem [#allocation0], 1856
    %208 = vst.msk [vmem:[%s207] ss:$8 sm:$0xf0] %vm204, %v203
    %s209 = scalar_lea.vmem %s0, 240
    %v210 = vld [vmem:[%s209] sm:$0xff]
    %vm211 = vcmask 220160
    %s212 = scalar_lea.vmem [#allocation0], 1920
    %213 = vst.msk [vmem:[%s212] ss:$8 sm:$0xf] %vm211, %v210
    %s214 = scalar_lea.vmem [#allocation0], 1920
    %215 = vst.msk [vmem:[%s214] ss:$8 sm:$0xf0] %vm211, %v210
    %s216 = scalar_lea.vmem %s0, 248
    %v217 = vld [vmem:[%s216] sm:$0xff]
    %vm218 = vcmask 220160
    %s219 = scalar_lea.vmem [#allocation0], 1984
    %220 = vst.msk [vmem:[%s219] ss:$8 sm:$0xf] %vm218, %v217
    %s221 = scalar_lea.vmem [#allocation0], 1984
    %222 = vst.msk [vmem:[%s221] ss:$8 sm:$0xf0] %vm218, %v217
    %s223 = scalar_lea.vmem %s0, 256
    %v224 = vld [vmem:[%s223] sm:$0xff]
    %vm225 = vcmask 220160
    %s226 = scalar_lea.vmem [#allocation0], 2048
    %227 = vst.msk [vmem:[%s226] ss:$8 sm:$0xf] %vm225, %v224
    %s228 = scalar_lea.vmem [#allocation0], 2048
    %229 = vst.msk [vmem:[%s228] ss:$8 sm:$0xf0] %vm225, %v224
    %s230 = scalar_lea.vmem %s0, 264
    %v231 = vld [vmem:[%s230] sm:$0xff]
    %vm232 = vcmask 220160
    %s233 = scalar_lea.vmem [#allocation0], 2112
    %234 = vst.msk [vmem:[%s233] ss:$8 sm:$0xf] %vm232, %v231
    %s235 = scalar_lea.vmem [#allocation0], 2112
    %236 = vst.msk [vmem:[%s235] ss:$8 sm:$0xf0] %vm232, %v231
    %s237 = scalar_lea.vmem %s0, 272
    %v238 = vld [vmem:[%s237] sm:$0xff]
    %vm239 = vcmask 220160
    %s240 = scalar_lea.vmem [#allocation0], 2176
    %241 = vst.msk [vmem:[%s240] ss:$8 sm:$0xf] %vm239, %v238
    %s242 = scalar_lea.vmem [#allocation0], 2176
    %243 = vst.msk [vmem:[%s242] ss:$8 sm:$0xf0] %vm239, %v238
    %s244 = scalar_lea.vmem %s0, 280
    %v245 = vld [vmem:[%s244] sm:$0xff]
    %vm246 = vcmask 220160
    %s247 = scalar_lea.vmem [#allocation0], 2240
    %248 = vst.msk [vmem:[%s247] ss:$8 sm:$0xf] %vm246, %v245
    %s249 = scalar_lea.vmem [#allocation0], 2240
    %250 = vst.msk [vmem:[%s249] ss:$8 sm:$0xf0] %vm246, %v245
    %s251 = scalar_lea.vmem %s0, 288
    %v252 = vld [vmem:[%s251] sm:$0xff]
    %vm253 = vcmask 220160
    %s254 = scalar_lea.vmem [#allocation0], 2304
    %255 = vst.msk [vmem:[%s254] ss:$8 sm:$0xf] %vm253, %v252
    %s256 = scalar_lea.vmem [#allocation0], 2304
    %257 = vst.msk [vmem:[%s256] ss:$8 sm:$0xf0] %vm253, %v252
    %s258 = scalar_lea.vmem %s0, 296
    %v259 = vld [vmem:[%s258] sm:$0xff]
    %vm260 = vcmask 220160
    %s261 = scalar_lea.vmem [#allocation0], 2368
    %262 = vst.msk [vmem:[%s261] ss:$8 sm:$0xf] %vm260, %v259
    %s263 = scalar_lea.vmem [#allocation0], 2368
    %264 = vst.msk [vmem:[%s263] ss:$8 sm:$0xf0] %vm260, %v259
    %s265 = scalar_lea.vmem %s0, 304
    %v266 = vld [vmem:[%s265] sm:$0xff]
    %vm267 = vcmask 220160
    %s268 = scalar_lea.vmem [#allocation0], 2432
    %269 = vst.msk [vmem:[%s268] ss:$8 sm:$0xf] %vm267, %v266
    %s270 = scalar_lea.vmem [#allocation0], 2432
    %271 = vst.msk [vmem:[%s270] ss:$8 sm:$0xf0] %vm267, %v266
    %s272 = scalar_lea.vmem %s0, 312
    %v273 = vld [vmem:[%s272] sm:$0xff]
    %vm274 = vcmask 220160
    %s275 = scalar_lea.vmem [#allocation0], 2496
    %276 = vst.msk [vmem:[%s275] ss:$8 sm:$0xf] %vm274, %v273
    %s277 = scalar_lea.vmem [#allocation0], 2496
    %278 = vst.msk [vmem:[%s277] ss:$8 sm:$0xf0] %vm274, %v273
    %s279 = scalar_lea.vmem %s0, 320
    %v280 = vld [vmem:[%s279] sm:$0xff]
    %vm281 = vcmask 220160
    %s282 = scalar_lea.vmem [#allocation0], 2560
    %283 = vst.msk [vmem:[%s282] ss:$8 sm:$0xf] %vm281, %v280
    %s284 = scalar_lea.vmem [#allocation0], 2560
    %285 = vst.msk [vmem:[%s284] ss:$8 sm:$0xf0] %vm281, %v280
    %s286 = scalar_lea.vmem %s0, 328
    %v287 = vld [vmem:[%s286] sm:$0xff]
    %vm288 = vcmask 220160
    %s289 = scalar_lea.vmem [#allocation0], 2624
    %290 = vst.msk [vmem:[%s289] ss:$8 sm:$0xf] %vm288, %v287
    %s291 = scalar_lea.vmem [#allocation0], 2624
    %292 = vst.msk [vmem:[%s291] ss:$8 sm:$0xf0] %vm288, %v287
    %s293 = scalar_lea.vmem %s0, 336
    %v294 = vld [vmem:[%s293] sm:$0xff]
    %vm295 = vcmask 220160
    %s296 = scalar_lea.vmem [#allocation0], 2688
    %297 = vst.msk [vmem:[%s296] ss:$8 sm:$0xf] %vm295, %v294
    %s298 = scalar_lea.vmem [#allocation0], 2688
    %299 = vst.msk [vmem:[%s298] ss:$8 sm:$0xf0] %vm295, %v294
    %s300 = scalar_lea.vmem %s0, 344
    %v301 = vld [vmem:[%s300] sm:$0xff]
    %vm302 = vcmask 220160
    %s303 = scalar_lea.vmem [#allocation0], 2752
    %304 = vst.msk [vmem:[%s303] ss:$8 sm:$0xf] %vm302, %v301
    %s305 = scalar_lea.vmem [#allocation0], 2752
    %306 = vst.msk [vmem:[%s305] ss:$8 sm:$0xf0] %vm302, %v301
    %s307 = scalar_lea.vmem %s0, 352
    %v308 = vld [vmem:[%s307] sm:$0xff]
    %vm309 = vcmask 220160
    %s310 = scalar_lea.vmem [#allocation0], 2816
    %311 = vst.msk [vmem:[%s310] ss:$8 sm:$0xf] %vm309, %v308
    %s312 = scalar_lea.vmem [#allocation0], 2816
    %313 = vst.msk [vmem:[%s312] ss:$8 sm:$0xf0] %vm309, %v308
    %s314 = scalar_lea.vmem %s0, 360
    %v315 = vld [vmem:[%s314] sm:$0xff]
    %vm316 = vcmask 220160
    %s317 = scalar_lea.vmem [#allocation0], 2880
    %318 = vst.msk [vmem:[%s317] ss:$8 sm:$0xf] %vm316, %v315
    %s319 = scalar_lea.vmem [#allocation0], 2880
    %320 = vst.msk [vmem:[%s319] ss:$8 sm:$0xf0] %vm316, %v315
    %s321 = scalar_lea.vmem %s0, 368
    %v322 = vld [vmem:[%s321] sm:$0xff]
    %vm323 = vcmask 220160
    %s324 = scalar_lea.vmem [#allocation0], 2944
    %325 = vst.msk [vmem:[%s324] ss:$8 sm:$0xf] %vm323, %v322
    %s326 = scalar_lea.vmem [#allocation0], 2944
    %327 = vst.msk [vmem:[%s326] ss:$8 sm:$0xf0] %vm323, %v322
    %s328 = scalar_lea.vmem %s0, 376
    %v329 = vld [vmem:[%s328] sm:$0xff]
    %vm330 = vcmask 220160
    %s331 = scalar_lea.vmem [#allocation0], 3008
    %332 = vst.msk [vmem:[%s331] ss:$8 sm:$0xf] %vm330, %v329
    %s333 = scalar_lea.vmem [#allocation0], 3008
    %334 = vst.msk [vmem:[%s333] ss:$8 sm:$0xf0] %vm330, %v329
    %s335 = scalar_lea.vmem %s0, 384
    %v336 = vld [vmem:[%s335] sm:$0xff]
    %vm337 = vcmask 220160
    %s338 = scalar_lea.vmem [#allocation0], 3072
    %339 = vst.msk [vmem:[%s338] ss:$8 sm:$0xf] %vm337, %v336
    %s340 = scalar_lea.vmem [#allocation0], 3072
    %341 = vst.msk [vmem:[%s340] ss:$8 sm:$0xf0] %vm337, %v336
    %s342 = scalar_lea.vmem %s0, 392
    %v343 = vld [vmem:[%s342] sm:$0xff]
    %vm344 = vcmask 220160
    %s345 = scalar_lea.vmem [#allocation0], 3136
    %346 = vst.msk [vmem:[%s345] ss:$8 sm:$0xf] %vm344, %v343
    %s347 = scalar_lea.vmem [#allocation0], 3136
    %348 = vst.msk [vmem:[%s347] ss:$8 sm:$0xf0] %vm344, %v343
    %s349 = scalar_lea.vmem %s0, 400
    %v350 = vld [vmem:[%s349] sm:$0xff]
    %vm351 = vcmask 220160
    %s352 = scalar_lea.vmem [#allocation0], 3200
    %353 = vst.msk [vmem:[%s352] ss:$8 sm:$0xf] %vm351, %v350
    %s354 = scalar_lea.vmem [#allocation0], 3200
    %355 = vst.msk [vmem:[%s354] ss:$8 sm:$0xf0] %vm351, %v350
    %s356 = scalar_lea.vmem %s0, 408
    %v357 = vld [vmem:[%s356] sm:$0xff]
    %vm358 = vcmask 220160
    %s359 = scalar_lea.vmem [#allocation0], 3264
    %360 = vst.msk [vmem:[%s359] ss:$8 sm:$0xf] %vm358, %v357
    %s361 = scalar_lea.vmem [#allocation0], 3264
    %362 = vst.msk [vmem:[%s361] ss:$8 sm:$0xf0] %vm358, %v357
    %s363 = scalar_lea.vmem %s0, 416
    %v364 = vld [vmem:[%s363] sm:$0xff]
    %vm365 = vcmask 220160
    %s366 = scalar_lea.vmem [#allocation0], 3328
    %367 = vst.msk [vmem:[%s366] ss:$8 sm:$0xf] %vm365, %v364
    %s368 = scalar_lea.vmem [#allocation0], 3328
    %369 = vst.msk [vmem:[%s368] ss:$8 sm:$0xf0] %vm365, %v364
    %s370 = scalar_lea.vmem %s0, 424
    %v371 = vld [vmem:[%s370] sm:$0xff]
    %vm372 = vcmask 220160
    %s373 = scalar_lea.vmem [#allocation0], 3392
    %374 = vst.msk [vmem:[%s373] ss:$8 sm:$0xf] %vm372, %v371
    %s375 = scalar_lea.vmem [#allocation0], 3392
    %376 = vst.msk [vmem:[%s375] ss:$8 sm:$0xf0] %vm372, %v371
    %s377 = scalar_lea.vmem %s0, 432
    %v378 = vld [vmem:[%s377] sm:$0xff]
    %vm379 = vcmask 220160
    %s380 = scalar_lea.vmem [#allocation0], 3456
    %381 = vst.msk [vmem:[%s380] ss:$8 sm:$0xf] %vm379, %v378
    %s382 = scalar_lea.vmem [#allocation0], 3456
    %383 = vst.msk [vmem:[%s382] ss:$8 sm:$0xf0] %vm379, %v378
    %s384 = scalar_lea.vmem %s0, 440
    %v385 = vld [vmem:[%s384] sm:$0xff]
    %vm386 = vcmask 220160
    %s387 = scalar_lea.vmem [#allocation0], 3520
    %388 = vst.msk [vmem:[%s387] ss:$8 sm:$0xf] %vm386, %v385
    %s389 = scalar_lea.vmem [#allocation0], 3520
    %390 = vst.msk [vmem:[%s389] ss:$8 sm:$0xf0] %vm386, %v385
    %s391 = scalar_lea.vmem %s0, 448
    %v392 = vld [vmem:[%s391] sm:$0xff]
    %vm393 = vcmask 220160
    %s394 = scalar_lea.vmem [#allocation0], 3584
    %395 = vst.msk [vmem:[%s394] ss:$8 sm:$0xf] %vm393, %v392
    %s396 = scalar_lea.vmem [#allocation0], 3584
    %397 = vst.msk [vmem:[%s396] ss:$8 sm:$0xf0] %vm393, %v392
    %s398 = scalar_lea.vmem %s0, 456
    %v399 = vld [vmem:[%s398] sm:$0xff]
    %vm400 = vcmask 220160
    %s401 = scalar_lea.vmem [#allocation0], 3648
    %402 = vst.msk [vmem:[%s401] ss:$8 sm:$0xf] %vm400, %v399
    %s403 = scalar_lea.vmem [#allocation0], 3648
    %404 = vst.msk [vmem:[%s403] ss:$8 sm:$0xf0] %vm400, %v399
    %s405 = scalar_lea.vmem %s0, 464
    %v406 = vld [vmem:[%s405] sm:$0xff]
    %vm407 = vcmask 220160
    %s408 = scalar_lea.vmem [#allocation0], 3712
    %409 = vst.msk [vmem:[%s408] ss:$8 sm:$0xf] %vm407, %v406
    %s410 = scalar_lea.vmem [#allocation0], 3712
    %411 = vst.msk [vmem:[%s410] ss:$8 sm:$0xf0] %vm407, %v406
    %s412 = scalar_lea.vmem %s0, 472
    %v413 = vld [vmem:[%s412] sm:$0xff]
    %vm414 = vcmask 220160
    %s415 = scalar_lea.vmem [#allocation0], 3776
    %416 = vst.msk [vmem:[%s415] ss:$8 sm:$0xf] %vm414, %v413
    %s417 = scalar_lea.vmem [#allocation0], 3776
    %418 = vst.msk [vmem:[%s417] ss:$8 sm:$0xf0] %vm414, %v413
    %s419 = scalar_lea.vmem %s0, 480
    %v420 = vld [vmem:[%s419] sm:$0xff]
    %vm421 = vcmask 220160
    %s422 = scalar_lea.vmem [#allocation0], 3840
    %423 = vst.msk [vmem:[%s422] ss:$8 sm:$0xf] %vm421, %v420
    %s424 = scalar_lea.vmem [#allocation0], 3840
    %425 = vst.msk [vmem:[%s424] ss:$8 sm:$0xf0] %vm421, %v420
    %s426 = scalar_lea.vmem %s0, 488
    %v427 = vld [vmem:[%s426] sm:$0xff]
    %vm428 = vcmask 220160
    %s429 = scalar_lea.vmem [#allocation0], 3904
    %430 = vst.msk [vmem:[%s429] ss:$8 sm:$0xf] %vm428, %v427
    %s431 = scalar_lea.vmem [#allocation0], 3904
    %432 = vst.msk [vmem:[%s431] ss:$8 sm:$0xf0] %vm428, %v427
    %s433 = scalar_lea.vmem %s0, 496
    %v434 = vld [vmem:[%s433] sm:$0xff]
    %vm435 = vcmask 220160
    %s436 = scalar_lea.vmem [#allocation0], 3968
    %437 = vst.msk [vmem:[%s436] ss:$8 sm:$0xf] %vm435, %v434
    %s438 = scalar_lea.vmem [#allocation0], 3968
    %439 = vst.msk [vmem:[%s438] ss:$8 sm:$0xf0] %vm435, %v434
    %s440 = scalar_lea.vmem %s0, 504
    %v441 = vld [vmem:[%s440] sm:$0xff]
    %vm442 = vcmask 220160
    %s443 = scalar_lea.vmem [#allocation0], 4032
    %444 = vst.msk [vmem:[%s443] ss:$8 sm:$0xf] %vm442, %v441
    %s445 = scalar_lea.vmem [#allocation0], 4032
    %446 = vst.msk [vmem:[%s445] ss:$8 sm:$0xf0] %vm442, %v441
    %v447 = vld [vmem:[%s0] sm:$0xff]
    %448 = vrot.lane.b32.xlu0 %v447, 101
    %v449 = vpop.permute.xlu0 %448
    %vm450 = vcmask 220160
    %s451 = scalar_lea.vmem [#allocation0], 1
    %452 = vst.msk [vmem:[%s451] ss:$8 sm:$0xf] %vm450, %v449
    %s453 = scalar_lea.vmem [#allocation0], 1
    %454 = vst.msk [vmem:[%s453] ss:$8 sm:$0xf0] %vm450, %v449
    %s455 = scalar_lea.vmem %s0, 8
    %v456 = vld [vmem:[%s455] sm:$0xff]
    %457 = vrot.lane.b32.xlu0 %v456, 101
    %v458 = vpop.permute.xlu0 %457
    %vm459 = vcmask 220160
    %s460 = scalar_lea.vmem [#allocation0], 65
    %461 = vst.msk [vmem:[%s460] ss:$8 sm:$0xf] %vm459, %v458
    %s462 = scalar_lea.vmem [#allocation0], 65
    %463 = vst.msk [vmem:[%s462] ss:$8 sm:$0xf0] %vm459, %v458
    %s464 = scalar_lea.vmem %s0, 16
    %v465 = vld [vmem:[%s464] sm:$0xff]
    %466 = vrot.lane.b32.xlu0 %v465, 101
    %v467 = vpop.permute.xlu0 %466
    %vm468 = vcmask 220160
    %s469 = scalar_lea.vmem [#allocation0], 129
    %470 = vst.msk [vmem:[%s469] ss:$8 sm:$0xf] %vm468, %v467
    %s471 = scalar_lea.vmem [#allocation0], 129
    %472 = vst.msk [vmem:[%s471] ss:$8 sm:$0xf0] %vm468, %v467
    %s473 = scalar_lea.vmem %s0, 24
    %v474 = vld [vmem:[%s473] sm:$0xff]
    %475 = vrot.lane.b32.xlu0 %v474, 101
    %v476 = vpop.permute.xlu0 %475
    %vm477 = vcmask 220160
    %s478 = scalar_lea.vmem [#allocation0], 193
    %479 = vst.msk [vmem:[%s478] ss:$8 sm:$0xf] %vm477, %v476
    %s480 = scalar_lea.vmem [#allocation0], 193
    %481 = vst.msk [vmem:[%s480] ss:$8 sm:$0xf0] %vm477, %v476
    %s482 = scalar_lea.vmem %s0, 32
    %v483 = vld [vmem:[%s482] sm:$0xff]
    %484 = vrot.lane.b32.xlu0 %v483, 101
    %v485 = vpop.permute.xlu0 %484
    %vm486 = vcmask 220160
    %s487 = scalar_lea.vmem [#allocation0], 257
    %488 = vst.msk [vmem:[%s487] ss:$8 sm:$0xf] %vm486, %v485
    %s489 = scalar_lea.vmem [#allocation0], 257
    %490 = vst.msk [vmem:[%s489] ss:$8 sm:$0xf0] %vm486, %v485
    %s491 = scalar_lea.vmem %s0, 40
    %v492 = vld [vmem:[%s491] sm:$0xff]
    %493 = vrot.lane.b32.xlu0 %v492, 101
    %v494 = vpop.permute.xlu0 %493
    %vm495 = vcmask 220160
    %s496 = scalar_lea.vmem [#allocation0], 321
    %497 = vst.msk [vmem:[%s496] ss:$8 sm:$0xf] %vm495, %v494
    %s498 = scalar_lea.vmem [#allocation0], 321
    %499 = vst.msk [vmem:[%s498] ss:$8 sm:$0xf0] %vm495, %v494
    %s500 = scalar_lea.vmem %s0, 48
    %v501 = vld [vmem:[%s500] sm:$0xff]
    %502 = vrot.lane.b32.xlu0 %v501, 101
    %v503 = vpop.permute.xlu0 %502
    %vm504 = vcmask 220160
    %s505 = scalar_lea.vmem [#allocation0], 385
    %506 = vst.msk [vmem:[%s505] ss:$8 sm:$0xf] %vm504, %v503
    %s507 = scalar_lea.vmem [#allocation0], 385
    %508 = vst.msk [vmem:[%s507] ss:$8 sm:$0xf0] %vm504, %v503
    %s509 = scalar_lea.vmem %s0, 56
    %v510 = vld [vmem:[%s509] sm:$0xff]
    %511 = vrot.lane.b32.xlu0 %v510, 101
    %v512 = vpop.permute.xlu0 %511
    %vm513 = vcmask 220160
    %s514 = scalar_lea.vmem [#allocation0], 449
    %515 = vst.msk [vmem:[%s514] ss:$8 sm:$0xf] %vm513, %v512
    %s516 = scalar_lea.vmem [#allocation0], 449
    %517 = vst.msk [vmem:[%s516] ss:$8 sm:$0xf0] %vm513, %v512
    %s518 = scalar_lea.vmem %s0, 64
    %v519 = vld [vmem:[%s518] sm:$0xff]
    %520 = vrot.lane.b32.xlu0 %v519, 101
    %v521 = vpop.permute.xlu0 %520
    %vm522 = vcmask 220160
    %s523 = scalar_lea.vmem [#allocation0], 513
    %524 = vst.msk [vmem:[%s523] ss:$8 sm:$0xf] %vm522, %v521
    %s525 = scalar_lea.vmem [#allocation0], 513
    %526 = vst.msk [vmem:[%s525] ss:$8 sm:$0xf0] %vm522, %v521
    %s527 = scalar_lea.vmem %s0, 72
    %v528 = vld [vmem:[%s527] sm:$0xff]
    %529 = vrot.lane.b32.xlu0 %v528, 101
    %v530 = vpop.permute.xlu0 %529
    %vm531 = vcmask 220160
    %s532 = scalar_lea.vmem [#allocation0], 577
    %533 = vst.msk [vmem:[%s532] ss:$8 sm:$0xf] %vm531, %v530
    %s534 = scalar_lea.vmem [#allocation0], 577
    %535 = vst.msk [vmem:[%s534] ss:$8 sm:$0xf0] %vm531, %v530
    %s536 = scalar_lea.vmem %s0, 80
    %v537 = vld [vmem:[%s536] sm:$0xff]
    %538 = vrot.lane.b32.xlu0 %v537, 101
    %v539 = vpop.permute.xlu0 %538
    %vm540 = vcmask 220160
    %s541 = scalar_lea.vmem [#allocation0], 641
    %542 = vst.msk [vmem:[%s541] ss:$8 sm:$0xf] %vm540, %v539
    %s543 = scalar_lea.vmem [#allocation0], 641
    %544 = vst.msk [vmem:[%s543] ss:$8 sm:$0xf0] %vm540, %v539
    %s545 = scalar_lea.vmem %s0, 88
    %v546 = vld [vmem:[%s545] sm:$0xff]
    %547 = vrot.lane.b32.xlu0 %v546, 101
    %v548 = vpop.permute.xlu0 %547
    %vm549 = vcmask 220160
    %s550 = scalar_lea.vmem [#allocation0], 705
    %551 = vst.msk [vmem:[%s550] ss:$8 sm:$0xf] %vm549, %v548
    %s552 = scalar_lea.vmem [#allocation0], 705
    %553 = vst.msk [vmem:[%s552] ss:$8 sm:$0xf0] %vm549, %v548
    %s554 = scalar_lea.vmem %s0, 96
    %v555 = vld [vmem:[%s554] sm:$0xff]
    %556 = vrot.lane.b32.xlu0 %v555, 101
    %v557 = vpop.permute.xlu0 %556
    %vm558 = vcmask 220160
    %s559 = scalar_lea.vmem [#allocation0], 769
    %560 = vst.msk [vmem:[%s559] ss:$8 sm:$0xf] %vm558, %v557
    %s561 = scalar_lea.vmem [#allocation0], 769
    %562 = vst.msk [vmem:[%s561] ss:$8 sm:$0xf0] %vm558, %v557
    %s563 = scalar_lea.vmem %s0, 104
    %v564 = vld [vmem:[%s563] sm:$0xff]
    %565 = vrot.lane.b32.xlu0 %v564, 101
    %v566 = vpop.permute.xlu0 %565
    %vm567 = vcmask 220160
    %s568 = scalar_lea.vmem [#allocation0], 833
    %569 = vst.msk [vmem:[%s568] ss:$8 sm:$0xf] %vm567, %v566
    %s570 = scalar_lea.vmem [#allocation0], 833
    %571 = vst.msk [vmem:[%s570] ss:$8 sm:$0xf0] %vm567, %v566
    %s572 = scalar_lea.vmem %s0, 112
    %v573 = vld [vmem:[%s572] sm:$0xff]
    %574 = vrot.lane.b32.xlu0 %v573, 101
    %v575 = vpop.permute.xlu0 %574
    %vm576 = vcmask 220160
    %s577 = scalar_lea.vmem [#allocation0], 897
    %578 = vst.msk [vmem:[%s577] ss:$8 sm:$0xf] %vm576, %v575
    %s579 = scalar_lea.vmem [#allocation0], 897
    %580 = vst.msk [vmem:[%s579] ss:$8 sm:$0xf0] %vm576, %v575
    %s581 = scalar_lea.vmem %s0, 120
    %v582 = vld [vmem:[%s581] sm:$0xff]
    %583 = vrot.lane.b32.xlu0 %v582, 101
    %v584 = vpop.permute.xlu0 %583
    %vm585 = vcmask 220160
    %s586 = scalar_lea.vmem [#allocation0], 961
    %587 = vst.msk [vmem:[%s586] ss:$8 sm:$0xf] %vm585, %v584
    %s588 = scalar_lea.vmem [#allocation0], 961
    %589 = vst.msk [vmem:[%s588] ss:$8 sm:$0xf0] %vm585, %v584
    %s590 = scalar_lea.vmem %s0, 128
    %v591 = vld [vmem:[%s590] sm:$0xff]
    %592 = vrot.lane.b32.xlu0 %v591, 101
    %v593 = vpop.permute.xlu0 %592
    %vm594 = vcmask 220160
    %s595 = scalar_lea.vmem [#allocation0], 1025
    %596 = vst.msk [vmem:[%s595] ss:$8 sm:$0xf] %vm594, %v593
    %s597 = scalar_lea.vmem [#allocation0], 1025
    %598 = vst.msk [vmem:[%s597] ss:$8 sm:$0xf0] %vm594, %v593
    %s599 = scalar_lea.vmem %s0, 136
    %v600 = vld [vmem:[%s599] sm:$0xff]
    %601 = vrot.lane.b32.xlu0 %v600, 101
    %v602 = vpop.permute.xlu0 %601
    %vm603 = vcmask 220160
    %s604 = scalar_lea.vmem [#allocation0], 1089
    %605 = vst.msk [vmem:[%s604] ss:$8 sm:$0xf] %vm603, %v602
    %s606 = scalar_lea.vmem [#allocation0], 1089
    %607 = vst.msk [vmem:[%s606] ss:$8 sm:$0xf0] %vm603, %v602
    %s608 = scalar_lea.vmem %s0, 144
    %v609 = vld [vmem:[%s608] sm:$0xff]
    %610 = vrot.lane.b32.xlu0 %v609, 101
    %v611 = vpop.permute.xlu0 %610
    %vm612 = vcmask 220160
    %s613 = scalar_lea.vmem [#allocation0], 1153
    %614 = vst.msk [vmem:[%s613] ss:$8 sm:$0xf] %vm612, %v611
    %s615 = scalar_lea.vmem [#allocation0], 1153
    %616 = vst.msk [vmem:[%s615] ss:$8 sm:$0xf0] %vm612, %v611
    %s617 = scalar_lea.vmem %s0, 152
    %v618 = vld [vmem:[%s617] sm:$0xff]
    %619 = vrot.lane.b32.xlu0 %v618, 101
    %v620 = vpop.permute.xlu0 %619
    %vm621 = vcmask 220160
    %s622 = scalar_lea.vmem [#allocation0], 1217
    %623 = vst.msk [vmem:[%s622] ss:$8 sm:$0xf] %vm621, %v620
    %s624 = scalar_lea.vmem [#allocation0], 1217
    %625 = vst.msk [vmem:[%s624] ss:$8 sm:$0xf0] %vm621, %v620
    %s626 = scalar_lea.vmem %s0, 160
    %v627 = vld [vmem:[%s626] sm:$0xff]
    %628 = vrot.lane.b32.xlu0 %v627, 101
    %v629 = vpop.permute.xlu0 %628
    %vm630 = vcmask 220160
    %s631 = scalar_lea.vmem [#allocation0], 1281
    %632 = vst.msk [vmem:[%s631] ss:$8 sm:$0xf] %vm630, %v629
    %s633 = scalar_lea.vmem [#allocation0], 1281
    %634 = vst.msk [vmem:[%s633] ss:$8 sm:$0xf0] %vm630, %v629
    %s635 = scalar_lea.vmem %s0, 168
    %v636 = vld [vmem:[%s635] sm:$0xff]
    %637 = vrot.lane.b32.xlu0 %v636, 101
    %v638 = vpop.permute.xlu0 %637
    %vm639 = vcmask 220160
    %s640 = scalar_lea.vmem [#allocation0], 1345
    %641 = vst.msk [vmem:[%s640] ss:$8 sm:$0xf] %vm639, %v638
    %s642 = scalar_lea.vmem [#allocation0], 1345
    %643 = vst.msk [vmem:[%s642] ss:$8 sm:$0xf0] %vm639, %v638
    %s644 = scalar_lea.vmem %s0, 176
    %v645 = vld [vmem:[%s644] sm:$0xff]
    %646 = vrot.lane.b32.xlu0 %v645, 101
    %v647 = vpop.permute.xlu0 %646
    %vm648 = vcmask 220160
    %s649 = scalar_lea.vmem [#allocation0], 1409
    %650 = vst.msk [vmem:[%s649] ss:$8 sm:$0xf] %vm648, %v647
    %s651 = scalar_lea.vmem [#allocation0], 1409
    %652 = vst.msk [vmem:[%s651] ss:$8 sm:$0xf0] %vm648, %v647
    %s653 = scalar_lea.vmem %s0, 184
    %v654 = vld [vmem:[%s653] sm:$0xff]
    %655 = vrot.lane.b32.xlu0 %v654, 101
    %v656 = vpop.permute.xlu0 %655
    %vm657 = vcmask 220160
    %s658 = scalar_lea.vmem [#allocation0], 1473
    %659 = vst.msk [vmem:[%s658] ss:$8 sm:$0xf] %vm657, %v656
    %s660 = scalar_lea.vmem [#allocation0], 1473
    %661 = vst.msk [vmem:[%s660] ss:$8 sm:$0xf0] %vm657, %v656
    %s662 = scalar_lea.vmem %s0, 192
    %v663 = vld [vmem:[%s662] sm:$0xff]
    %664 = vrot.lane.b32.xlu0 %v663, 101
    %v665 = vpop.permute.xlu0 %664
    %vm666 = vcmask 220160
    %s667 = scalar_lea.vmem [#allocation0], 1537
    %668 = vst.msk [vmem:[%s667] ss:$8 sm:$0xf] %vm666, %v665
    %s669 = scalar_lea.vmem [#allocation0], 1537
    %670 = vst.msk [vmem:[%s669] ss:$8 sm:$0xf0] %vm666, %v665
    %s671 = scalar_lea.vmem %s0, 200
    %v672 = vld [vmem:[%s671] sm:$0xff]
    %673 = vrot.lane.b32.xlu0 %v672, 101
    %v674 = vpop.permute.xlu0 %673
    %vm675 = vcmask 220160
    %s676 = scalar_lea.vmem [#allocation0], 1601
    %677 = vst.msk [vmem:[%s676] ss:$8 sm:$0xf] %vm675, %v674
    %s678 = scalar_lea.vmem [#allocation0], 1601
    %679 = vst.msk [vmem:[%s678] ss:$8 sm:$0xf0] %vm675, %v674
    %s680 = scalar_lea.vmem %s0, 208
    %v681 = vld [vmem:[%s680] sm:$0xff]
    %682 = vrot.lane.b32.xlu0 %v681, 101
    %v683 = vpop.permute.xlu0 %682
    %vm684 = vcmask 220160
    %s685 = scalar_lea.vmem [#allocation0], 1665
    %686 = vst.msk [vmem:[%s685] ss:$8 sm:$0xf] %vm684, %v683
    %s687 = scalar_lea.vmem [#allocation0], 1665
    %688 = vst.msk [vmem:[%s687] ss:$8 sm:$0xf0] %vm684, %v683
    %s689 = scalar_lea.vmem %s0, 216
    %v690 = vld [vmem:[%s689] sm:$0xff]
    %691 = vrot.lane.b32.xlu0 %v690, 101
    %v692 = vpop.permute.xlu0 %691
    %vm693 = vcmask 220160
    %s694 = scalar_lea.vmem [#allocation0], 1729
    %695 = vst.msk [vmem:[%s694] ss:$8 sm:$0xf] %vm693, %v692
    %s696 = scalar_lea.vmem [#allocation0], 1729
    %697 = vst.msk [vmem:[%s696] ss:$8 sm:$0xf0] %vm693, %v692
    %s698 = scalar_lea.vmem %s0, 224
    %v699 = vld [vmem:[%s698] sm:$0xff]
    %700 = vrot.lane.b32.xlu0 %v699, 101
    %v701 = vpop.permute.xlu0 %700
    %vm702 = vcmask 220160
    %s703 = scalar_lea.vmem [#allocation0], 1793
    %704 = vst.msk [vmem:[%s703] ss:$8 sm:$0xf] %vm702, %v701
    %s705 = scalar_lea.vmem [#allocation0], 1793
    %706 = vst.msk [vmem:[%s705] ss:$8 sm:$0xf0] %vm702, %v701
    %s707 = scalar_lea.vmem %s0, 232
    %v708 = vld [vmem:[%s707] sm:$0xff]
    %709 = vrot.lane.b32.xlu0 %v708, 101
    %v710 = vpop.permute.xlu0 %709
    %vm711 = vcmask 220160
    %s712 = scalar_lea.vmem [#allocation0], 1857
    %713 = vst.msk [vmem:[%s712] ss:$8 sm:$0xf] %vm711, %v710
    %s714 = scalar_lea.vmem [#allocation0], 1857
    %715 = vst.msk [vmem:[%s714] ss:$8 sm:$0xf0] %vm711, %v710
    %s716 = scalar_lea.vmem %s0, 240
    %v717 = vld [vmem:[%s716] sm:$0xff]
    %718 = vrot.lane.b32.xlu0 %v717, 101
    %v719 = vpop.permute.xlu0 %718
    %vm720 = vcmask 220160
    %s721 = scalar_lea.vmem [#allocation0], 1921
    %722 = vst.msk [vmem:[%s721] ss:$8 sm:$0xf] %vm720, %v719
    %s723 = scalar_lea.vmem [#allocation0], 1921
    %724 = vst.msk [vmem:[%s723] ss:$8 sm:$0xf0] %vm720, %v719
    %s725 = scalar_lea.vmem %s0, 248
    %v726 = vld [vmem:[%s725] sm:$0xff]
    %727 = vrot.lane.b32.xlu0 %v726, 101
    %v728 = vpop.permute.xlu0 %727
    %vm729 = vcmask 220160
    %s730 = scalar_lea.vmem [#allocation0], 1985
    %731 = vst.msk [vmem:[%s730] ss:$8 sm:$0xf] %vm729, %v728
    %s732 = scalar_lea.vmem [#allocation0], 1985
    %733 = vst.msk [vmem:[%s732] ss:$8 sm:$0xf0] %vm729, %v728
    %s734 = scalar_lea.vmem %s0, 256
    %v735 = vld [vmem:[%s734] sm:$0xff]
    %736 = vrot.lane.b32.xlu0 %v735, 101
    %v737 = vpop.permute.xlu0 %736
    %vm738 = vcmask 220160
    %s739 = scalar_lea.vmem [#allocation0], 2049
    %740 = vst.msk [vmem:[%s739] ss:$8 sm:$0xf] %vm738, %v737
    %s741 = scalar_lea.vmem [#allocation0], 2049
    %742 = vst.msk [vmem:[%s741] ss:$8 sm:$0xf0] %vm738, %v737
    %s743 = scalar_lea.vmem %s0, 264
    %v744 = vld [vmem:[%s743] sm:$0xff]
    %745 = vrot.lane.b32.xlu0 %v744, 101
    %v746 = vpop.permute.xlu0 %745
    %vm747 = vcmask 220160
    %s748 = scalar_lea.vmem [#allocation0], 2113
    %749 = vst.msk [vmem:[%s748] ss:$8 sm:$0xf] %vm747, %v746
    %s750 = scalar_lea.vmem [#allocation0], 2113
    %751 = vst.msk [vmem:[%s750] ss:$8 sm:$0xf0] %vm747, %v746
    %s752 = scalar_lea.vmem %s0, 272
    %v753 = vld [vmem:[%s752] sm:$0xff]
    %754 = vrot.lane.b32.xlu0 %v753, 101
    %v755 = vpop.permute.xlu0 %754
    %vm756 = vcmask 220160
    %s757 = scalar_lea.vmem [#allocation0], 2177
    %758 = vst.msk [vmem:[%s757] ss:$8 sm:$0xf] %vm756, %v755
    %s759 = scalar_lea.vmem [#allocation0], 2177
    %760 = vst.msk [vmem:[%s759] ss:$8 sm:$0xf0] %vm756, %v755
    %s761 = scalar_lea.vmem %s0, 280
    %v762 = vld [vmem:[%s761] sm:$0xff]
    %763 = vrot.lane.b32.xlu0 %v762, 101
    %v764 = vpop.permute.xlu0 %763
    %vm765 = vcmask 220160
    %s766 = scalar_lea.vmem [#allocation0], 2241
    %767 = vst.msk [vmem:[%s766] ss:$8 sm:$0xf] %vm765, %v764
    %s768 = scalar_lea.vmem [#allocation0], 2241
    %769 = vst.msk [vmem:[%s768] ss:$8 sm:$0xf0] %vm765, %v764
    %s770 = scalar_lea.vmem %s0, 288
    %v771 = vld [vmem:[%s770] sm:$0xff]
    %772 = vrot.lane.b32.xlu0 %v771, 101
    %v773 = vpop.permute.xlu0 %772
    %vm774 = vcmask 220160
    %s775 = scalar_lea.vmem [#allocation0], 2305
    %776 = vst.msk [vmem:[%s775] ss:$8 sm:$0xf] %vm774, %v773
    %s777 = scalar_lea.vmem [#allocation0], 2305
    %778 = vst.msk [vmem:[%s777] ss:$8 sm:$0xf0] %vm774, %v773
    %s779 = scalar_lea.vmem %s0, 296
    %v780 = vld [vmem:[%s779] sm:$0xff]
    %781 = vrot.lane.b32.xlu0 %v780, 101
    %v782 = vpop.permute.xlu0 %781
    %vm783 = vcmask 220160
    %s784 = scalar_lea.vmem [#allocation0], 2369
    %785 = vst.msk [vmem:[%s784] ss:$8 sm:$0xf] %vm783, %v782
    %s786 = scalar_lea.vmem [#allocation0], 2369
    %787 = vst.msk [vmem:[%s786] ss:$8 sm:$0xf0] %vm783, %v782
    %s788 = scalar_lea.vmem %s0, 304
    %v789 = vld [vmem:[%s788] sm:$0xff]
    %790 = vrot.lane.b32.xlu0 %v789, 101
    %v791 = vpop.permute.xlu0 %790
    %vm792 = vcmask 220160
    %s793 = scalar_lea.vmem [#allocation0], 2433
    %794 = vst.msk [vmem:[%s793] ss:$8 sm:$0xf] %vm792, %v791
    %s795 = scalar_lea.vmem [#allocation0], 2433
    %796 = vst.msk [vmem:[%s795] ss:$8 sm:$0xf0] %vm792, %v791
    %s797 = scalar_lea.vmem %s0, 312
    %v798 = vld [vmem:[%s797] sm:$0xff]
    %799 = vrot.lane.b32.xlu0 %v798, 101
    %v800 = vpop.permute.xlu0 %799
    %vm801 = vcmask 220160
    %s802 = scalar_lea.vmem [#allocation0], 2497
    %803 = vst.msk [vmem:[%s802] ss:$8 sm:$0xf] %vm801, %v800
    %s804 = scalar_lea.vmem [#allocation0], 2497
    %805 = vst.msk [vmem:[%s804] ss:$8 sm:$0xf0] %vm801, %v800
    %s806 = scalar_lea.vmem %s0, 320
    %v807 = vld [vmem:[%s806] sm:$0xff]
    %808 = vrot.lane.b32.xlu0 %v807, 101
    %v809 = vpop.permute.xlu0 %808
    %vm810 = vcmask 220160
    %s811 = scalar_lea.vmem [#allocation0], 2561
    %812 = vst.msk [vmem:[%s811] ss:$8 sm:$0xf] %vm810, %v809
    %s813 = scalar_lea.vmem [#allocation0], 2561
    %814 = vst.msk [vmem:[%s813] ss:$8 sm:$0xf0] %vm810, %v809
    %s815 = scalar_lea.vmem %s0, 328
    %v816 = vld [vmem:[%s815] sm:$0xff]
    %817 = vrot.lane.b32.xlu0 %v816, 101
    %v818 = vpop.permute.xlu0 %817
    %vm819 = vcmask 220160
    %s820 = scalar_lea.vmem [#allocation0], 2625
    %821 = vst.msk [vmem:[%s820] ss:$8 sm:$0xf] %vm819, %v818
    %s822 = scalar_lea.vmem [#allocation0], 2625
    %823 = vst.msk [vmem:[%s822] ss:$8 sm:$0xf0] %vm819, %v818
    %s824 = scalar_lea.vmem %s0, 336
    %v825 = vld [vmem:[%s824] sm:$0xff]
    %826 = vrot.lane.b32.xlu0 %v825, 101
    %v827 = vpop.permute.xlu0 %826
    %vm828 = vcmask 220160
    %s829 = scalar_lea.vmem [#allocation0], 2689
    %830 = vst.msk [vmem:[%s829] ss:$8 sm:$0xf] %vm828, %v827
    %s831 = scalar_lea.vmem [#allocation0], 2689
    %832 = vst.msk [vmem:[%s831] ss:$8 sm:$0xf0] %vm828, %v827
    %s833 = scalar_lea.vmem %s0, 344
    %v834 = vld [vmem:[%s833] sm:$0xff]
    %835 = vrot.lane.b32.xlu0 %v834, 101
    %v836 = vpop.permute.xlu0 %835
    %vm837 = vcmask 220160
    %s838 = scalar_lea.vmem [#allocation0], 2753
    %839 = vst.msk [vmem:[%s838] ss:$8 sm:$0xf] %vm837, %v836
    %s840 = scalar_lea.vmem [#allocation0], 2753
    %841 = vst.msk [vmem:[%s840] ss:$8 sm:$0xf0] %vm837, %v836
    %s842 = scalar_lea.vmem %s0, 352
    %v843 = vld [vmem:[%s842] sm:$0xff]
    %844 = vrot.lane.b32.xlu0 %v843, 101
    %v845 = vpop.permute.xlu0 %844
    %vm846 = vcmask 220160
    %s847 = scalar_lea.vmem [#allocation0], 2817
    %848 = vst.msk [vmem:[%s847] ss:$8 sm:$0xf] %vm846, %v845
    %s849 = scalar_lea.vmem [#allocation0], 2817
    %850 = vst.msk [vmem:[%s849] ss:$8 sm:$0xf0] %vm846, %v845
    %s851 = scalar_lea.vmem %s0, 360
    %v852 = vld [vmem:[%s851] sm:$0xff]
    %853 = vrot.lane.b32.xlu0 %v852, 101
    %v854 = vpop.permute.xlu0 %853
    %vm855 = vcmask 220160
    %s856 = scalar_lea.vmem [#allocation0], 2881
    %857 = vst.msk [vmem:[%s856] ss:$8 sm:$0xf] %vm855, %v854
    %s858 = scalar_lea.vmem [#allocation0], 2881
    %859 = vst.msk [vmem:[%s858] ss:$8 sm:$0xf0] %vm855, %v854
    %s860 = scalar_lea.vmem %s0, 368
    %v861 = vld [vmem:[%s860] sm:$0xff]
    %862 = vrot.lane.b32.xlu0 %v861, 101
    %v863 = vpop.permute.xlu0 %862
    %vm864 = vcmask 220160
    %s865 = scalar_lea.vmem [#allocation0], 2945
    %866 = vst.msk [vmem:[%s865] ss:$8 sm:$0xf] %vm864, %v863
    %s867 = scalar_lea.vmem [#allocation0], 2945
    %868 = vst.msk [vmem:[%s867] ss:$8 sm:$0xf0] %vm864, %v863
    %s869 = scalar_lea.vmem %s0, 376
    %v870 = vld [vmem:[%s869] sm:$0xff]
    %871 = vrot.lane.b32.xlu0 %v870, 101
    %v872 = vpop.permute.xlu0 %871
    %vm873 = vcmask 220160
    %s874 = scalar_lea.vmem [#allocation0], 3009
    %875 = vst.msk [vmem:[%s874] ss:$8 sm:$0xf] %vm873, %v872
    %s876 = scalar_lea.vmem [#allocation0], 3009
    %877 = vst.msk [vmem:[%s876] ss:$8 sm:$0xf0] %vm873, %v872
    %s878 = scalar_lea.vmem %s0, 384
    %v879 = vld [vmem:[%s878] sm:$0xff]
    %880 = vrot.lane.b32.xlu0 %v879, 101
    %v881 = vpop.permute.xlu0 %880
    %vm882 = vcmask 220160
    %s883 = scalar_lea.vmem [#allocation0], 3073
    %884 = vst.msk [vmem:[%s883] ss:$8 sm:$0xf] %vm882, %v881
    %s885 = scalar_lea.vmem [#allocation0], 3073
    %886 = vst.msk [vmem:[%s885] ss:$8 sm:$0xf0] %vm882, %v881
    %s887 = scalar_lea.vmem %s0, 392
    %v888 = vld [vmem:[%s887] sm:$0xff]
    %889 = vrot.lane.b32.xlu0 %v888, 101
    %v890 = vpop.permute.xlu0 %889
    %vm891 = vcmask 220160
    %s892 = scalar_lea.vmem [#allocation0], 3137
    %893 = vst.msk [vmem:[%s892] ss:$8 sm:$0xf] %vm891, %v890
    %s894 = scalar_lea.vmem [#allocation0], 3137
    %895 = vst.msk [vmem:[%s894] ss:$8 sm:$0xf0] %vm891, %v890
    %s896 = scalar_lea.vmem %s0, 400
    %v897 = vld [vmem:[%s896] sm:$0xff]
    %898 = vrot.lane.b32.xlu0 %v897, 101
    %v899 = vpop.permute.xlu0 %898
    %vm900 = vcmask 220160
    %s901 = scalar_lea.vmem [#allocation0], 3201
    %902 = vst.msk [vmem:[%s901] ss:$8 sm:$0xf] %vm900, %v899
    %s903 = scalar_lea.vmem [#allocation0], 3201
    %904 = vst.msk [vmem:[%s903] ss:$8 sm:$0xf0] %vm900, %v899
    %s905 = scalar_lea.vmem %s0, 408
    %v906 = vld [vmem:[%s905] sm:$0xff]
    %907 = vrot.lane.b32.xlu0 %v906, 101
    %v908 = vpop.permute.xlu0 %907
    %vm909 = vcmask 220160
    %s910 = scalar_lea.vmem [#allocation0], 3265
    %911 = vst.msk [vmem:[%s910] ss:$8 sm:$0xf] %vm909, %v908
    %s912 = scalar_lea.vmem [#allocation0], 3265
    %913 = vst.msk [vmem:[%s912] ss:$8 sm:$0xf0] %vm909, %v908
    %s914 = scalar_lea.vmem %s0, 416
    %v915 = vld [vmem:[%s914] sm:$0xff]
    %916 = vrot.lane.b32.xlu0 %v915, 101
    %v917 = vpop.permute.xlu0 %916
    %vm918 = vcmask 220160
    %s919 = scalar_lea.vmem [#allocation0], 3329
    %920 = vst.msk [vmem:[%s919] ss:$8 sm:$0xf] %vm918, %v917
    %s921 = scalar_lea.vmem [#allocation0], 3329
    %922 = vst.msk [vmem:[%s921] ss:$8 sm:$0xf0] %vm918, %v917
    %s923 = scalar_lea.vmem %s0, 424
    %v924 = vld [vmem:[%s923] sm:$0xff]
    %925 = vrot.lane.b32.xlu0 %v924, 101
    %v926 = vpop.permute.xlu0 %925
    %vm927 = vcmask 220160
    %s928 = scalar_lea.vmem [#allocation0], 3393
    %929 = vst.msk [vmem:[%s928] ss:$8 sm:$0xf] %vm927, %v926
    %s930 = scalar_lea.vmem [#allocation0], 3393
    %931 = vst.msk [vmem:[%s930] ss:$8 sm:$0xf0] %vm927, %v926
    %s932 = scalar_lea.vmem %s0, 432
    %v933 = vld [vmem:[%s932] sm:$0xff]
    %934 = vrot.lane.b32.xlu0 %v933, 101
    %v935 = vpop.permute.xlu0 %934
    %vm936 = vcmask 220160
    %s937 = scalar_lea.vmem [#allocation0], 3457
    %938 = vst.msk [vmem:[%s937] ss:$8 sm:$0xf] %vm936, %v935
    %s939 = scalar_lea.vmem [#allocation0], 3457
    %940 = vst.msk [vmem:[%s939] ss:$8 sm:$0xf0] %vm936, %v935
    %s941 = scalar_lea.vmem %s0, 440
    %v942 = vld [vmem:[%s941] sm:$0xff]
    %943 = vrot.lane.b32.xlu0 %v942, 101
    %v944 = vpop.permute.xlu0 %943
    %vm945 = vcmask 220160
    %s946 = scalar_lea.vmem [#allocation0], 3521
    %947 = vst.msk [vmem:[%s946] ss:$8 sm:$0xf] %vm945, %v944
    %s948 = scalar_lea.vmem [#allocation0], 3521
    %949 = vst.msk [vmem:[%s948] ss:$8 sm:$0xf0] %vm945, %v944
    %s950 = scalar_lea.vmem %s0, 448
    %v951 = vld [vmem:[%s950] sm:$0xff]
    %952 = vrot.lane.b32.xlu0 %v951, 101
    %v953 = vpop.permute.xlu0 %952
    %vm954 = vcmask 220160
    %s955 = scalar_lea.vmem [#allocation0], 3585
    %956 = vst.msk [vmem:[%s955] ss:$8 sm:$0xf] %vm954, %v953
    %s957 = scalar_lea.vmem [#allocation0], 3585
    %958 = vst.msk [vmem:[%s957] ss:$8 sm:$0xf0] %vm954, %v953
    %s959 = scalar_lea.vmem %s0, 456
    %v960 = vld [vmem:[%s959] sm:$0xff]
    %961 = vrot.lane.b32.xlu0 %v960, 101
    %v962 = vpop.permute.xlu0 %961
    %vm963 = vcmask 220160
    %s964 = scalar_lea.vmem [#allocation0], 3649
    %965 = vst.msk [vmem:[%s964] ss:$8 sm:$0xf] %vm963, %v962
    %s966 = scalar_lea.vmem [#allocation0], 3649
    %967 = vst.msk [vmem:[%s966] ss:$8 sm:$0xf0] %vm963, %v962
    %s968 = scalar_lea.vmem %s0, 464
    %v969 = vld [vmem:[%s968] sm:$0xff]
    %970 = vrot.lane.b32.xlu0 %v969, 101
    %v971 = vpop.permute.xlu0 %970
    %vm972 = vcmask 220160
    %s973 = scalar_lea.vmem [#allocation0], 3713
    %974 = vst.msk [vmem:[%s973] ss:$8 sm:$0xf] %vm972, %v971
    %s975 = scalar_lea.vmem [#allocation0], 3713
    %976 = vst.msk [vmem:[%s975] ss:$8 sm:$0xf0] %vm972, %v971
    %s977 = scalar_lea.vmem %s0, 472
    %v978 = vld [vmem:[%s977] sm:$0xff]
    %979 = vrot.lane.b32.xlu0 %v978, 101
    %v980 = vpop.permute.xlu0 %979
    %vm981 = vcmask 220160
    %s982 = scalar_lea.vmem [#allocation0], 3777
    %983 = vst.msk [vmem:[%s982] ss:$8 sm:$0xf] %vm981, %v980
    %s984 = scalar_lea.vmem [#allocation0], 3777
    %985 = vst.msk [vmem:[%s984] ss:$8 sm:$0xf0] %vm981, %v980
    %s986 = scalar_lea.vmem %s0, 480
    %v987 = vld [vmem:[%s986] sm:$0xff]
    %988 = vrot.lane.b32.xlu0 %v987, 101
    %v989 = vpop.permute.xlu0 %988
    %vm990 = vcmask 220160
    %s991 = scalar_lea.vmem [#allocation0], 3841
    %992 = vst.msk [vmem:[%s991] ss:$8 sm:$0xf] %vm990, %v989
    %s993 = scalar_lea.vmem [#allocation0], 3841
    %994 = vst.msk [vmem:[%s993] ss:$8 sm:$0xf0] %vm990, %v989
    %s995 = scalar_lea.vmem %s0, 488
    %v996 = vld [vmem:[%s995] sm:$0xff]
    %997 = vrot.lane.b32.xlu0 %v996, 101
    %v998 = vpop.permute.xlu0 %997
    %vm999 = vcmask 220160
    %s1000 = scalar_lea.vmem [#allocation0], 3905
    %1001 = vst.msk [vmem:[%s1000] ss:$8 sm:$0xf] %vm999, %v998
    %s1002 = scalar_lea.vmem [#allocation0], 3905
    %1003 = vst.msk [vmem:[%s1002] ss:$8 sm:$0xf0] %vm999, %v998
    %s1004 = scalar_lea.vmem %s0, 496
    %v1005 = vld [vmem:[%s1004] sm:$0xff]
    %1006 = vrot.lane.b32.xlu0 %v1005, 101
    %v1007 = vpop.permute.xlu0 %1006
    %vm1008 = vcmask 220160
    %s1009 = scalar_lea.vmem [#allocation0], 3969
    %1010 = vst.msk [vmem:[%s1009] ss:$8 sm:$0xf] %vm1008, %v1007
    %s1011 = scalar_lea.vmem [#allocation0], 3969
    %1012 = vst.msk [vmem:[%s1011] ss:$8 sm:$0xf0] %vm1008, %v1007
    %s1013 = scalar_lea.vmem %s0, 504
    %v1014 = vld [vmem:[%s1013] sm:$0xff]
    %1015 = vrot.lane.b32.xlu0 %v1014, 101
    %v1016 = vpop.permute.xlu0 %1015
    %vm1017 = vcmask 220160
    %s1018 = scalar_lea.vmem [#allocation0], 4033
    %1019 = vst.msk [vmem:[%s1018] ss:$8 sm:$0xf] %vm1017, %v1016
    %s1020 = scalar_lea.vmem [#allocation0], 4033
    %1021 = vst.msk [vmem:[%s1020] ss:$8 sm:$0xf0] %vm1017, %v1016
    %v1022 = vld [vmem:[%s0] sm:$0xff]
    %1023 = vrot.lane.b32.xlu0 %v1022, 74
    %v1024 = vpop.permute.xlu0 %1023
    %vm1025 = vcmask 220160
    %s1026 = scalar_lea.vmem [#allocation0], 2
    %1027 = vst.msk [vmem:[%s1026] ss:$8 sm:$0xf] %vm1025, %v1024
    %s1028 = scalar_lea.vmem [#allocation0], 2
    %1029 = vst.msk [vmem:[%s1028] ss:$8 sm:$0xf0] %vm1025, %v1024
    %s1030 = scalar_lea.vmem %s0, 8
    %v1031 = vld [vmem:[%s1030] sm:$0xff]
    %1032 = vrot.lane.b32.xlu0 %v1031, 74
    %v1033 = vpop.permute.xlu0 %1032
    %vm1034 = vcmask 220160
    %s1035 = scalar_lea.vmem [#allocation0], 66
    %1036 = vst.msk [vmem:[%s1035] ss:$8 sm:$0xf] %vm1034, %v1033
    %s1037 = scalar_lea.vmem [#allocation0], 66
    %1038 = vst.msk [vmem:[%s1037] ss:$8 sm:$0xf0] %vm1034, %v1033
    %s1039 = scalar_lea.vmem %s0, 16
    %v1040 = vld [vmem:[%s1039] sm:$0xff]
    %1041 = vrot.lane.b32.xlu0 %v1040, 74
    %v1042 = vpop.permute.xlu0 %1041
    %vm1043 = vcmask 220160
    %s1044 = scalar_lea.vmem [#allocation0], 130
    %1045 = vst.msk [vmem:[%s1044] ss:$8 sm:$0xf] %vm1043, %v1042
    %s1046 = scalar_lea.vmem [#allocation0], 130
    %1047 = vst.msk [vmem:[%s1046] ss:$8 sm:$0xf0] %vm1043, %v1042
    %s1048 = scalar_lea.vmem %s0, 24
    %v1049 = vld [vmem:[%s1048] sm:$0xff]
    %1050 = vrot.lane.b32.xlu0 %v1049, 74
    %v1051 = vpop.permute.xlu0 %1050
    %vm1052 = vcmask 220160
    %s1053 = scalar_lea.vmem [#allocation0], 194
    %1054 = vst.msk [vmem:[%s1053] ss:$8 sm:$0xf] %vm1052, %v1051
    %s1055 = scalar_lea.vmem [#allocation0], 194
    %1056 = vst.msk [vmem:[%s1055] ss:$8 sm:$0xf0] %vm1052, %v1051
    %s1057 = scalar_lea.vmem %s0, 32
    %v1058 = vld [vmem:[%s1057] sm:$0xff]
    %1059 = vrot.lane.b32.xlu0 %v1058, 74
    %v1060 = vpop.permute.xlu0 %1059
    %vm1061 = vcmask 220160
    %s1062 = scalar_lea.vmem [#allocation0], 258
    %1063 = vst.msk [vmem:[%s1062] ss:$8 sm:$0xf] %vm1061, %v1060
    %s1064 = scalar_lea.vmem [#allocation0], 258
    %1065 = vst.msk [vmem:[%s1064] ss:$8 sm:$0xf0] %vm1061, %v1060
    %s1066 = scalar_lea.vmem %s0, 40
    %v1067 = vld [vmem:[%s1066] sm:$0xff]
    %1068 = vrot.lane.b32.xlu0 %v1067, 74
    %v1069 = vpop.permute.xlu0 %1068
    %vm1070 = vcmask 220160
    %s1071 = scalar_lea.vmem [#allocation0], 322
    %1072 = vst.msk [vmem:[%s1071] ss:$8 sm:$0xf] %vm1070, %v1069
    %s1073 = scalar_lea.vmem [#allocation0], 322
    %1074 = vst.msk [vmem:[%s1073] ss:$8 sm:$0xf0] %vm1070, %v1069
    %s1075 = scalar_lea.vmem %s0, 48
    %v1076 = vld [vmem:[%s1075] sm:$0xff]
    %1077 = vrot.lane.b32.xlu0 %v1076, 74
    %v1078 = vpop.permute.xlu0 %1077
    %vm1079 = vcmask 220160
    %s1080 = scalar_lea.vmem [#allocation0], 386
    %1081 = vst.msk [vmem:[%s1080] ss:$8 sm:$0xf] %vm1079, %v1078
    %s1082 = scalar_lea.vmem [#allocation0], 386
    %1083 = vst.msk [vmem:[%s1082] ss:$8 sm:$0xf0] %vm1079, %v1078
    %s1084 = scalar_lea.vmem %s0, 56
    %v1085 = vld [vmem:[%s1084] sm:$0xff]
    %1086 = vrot.lane.b32.xlu0 %v1085, 74
    %v1087 = vpop.permute.xlu0 %1086
    %vm1088 = vcmask 220160
    %s1089 = scalar_lea.vmem [#allocation0], 450
    %1090 = vst.msk [vmem:[%s1089] ss:$8 sm:$0xf] %vm1088, %v1087
    %s1091 = scalar_lea.vmem [#allocation0], 450
    %1092 = vst.msk [vmem:[%s1091] ss:$8 sm:$0xf0] %vm1088, %v1087
    %s1093 = scalar_lea.vmem %s0, 64
    %v1094 = vld [vmem:[%s1093] sm:$0xff]
    %1095 = vrot.lane.b32.xlu0 %v1094, 74
    %v1096 = vpop.permute.xlu0 %1095
    %vm1097 = vcmask 220160
    %s1098 = scalar_lea.vmem [#allocation0], 514
    %1099 = vst.msk [vmem:[%s1098] ss:$8 sm:$0xf] %vm1097, %v1096
    %s1100 = scalar_lea.vmem [#allocation0], 514
    %1101 = vst.msk [vmem:[%s1100] ss:$8 sm:$0xf0] %vm1097, %v1096
    %s1102 = scalar_lea.vmem %s0, 72
    %v1103 = vld [vmem:[%s1102] sm:$0xff]
    %1104 = vrot.lane.b32.xlu0 %v1103, 74
    %v1105 = vpop.permute.xlu0 %1104
    %vm1106 = vcmask 220160
    %s1107 = scalar_lea.vmem [#allocation0], 578
    %1108 = vst.msk [vmem:[%s1107] ss:$8 sm:$0xf] %vm1106, %v1105
    %s1109 = scalar_lea.vmem [#allocation0], 578
    %1110 = vst.msk [vmem:[%s1109] ss:$8 sm:$0xf0] %vm1106, %v1105
    %s1111 = scalar_lea.vmem %s0, 80
    %v1112 = vld [vmem:[%s1111] sm:$0xff]
    %1113 = vrot.lane.b32.xlu0 %v1112, 74
    %v1114 = vpop.permute.xlu0 %1113
    %vm1115 = vcmask 220160
    %s1116 = scalar_lea.vmem [#allocation0], 642
    %1117 = vst.msk [vmem:[%s1116] ss:$8 sm:$0xf] %vm1115, %v1114
    %s1118 = scalar_lea.vmem [#allocation0], 642
    %1119 = vst.msk [vmem:[%s1118] ss:$8 sm:$0xf0] %vm1115, %v1114
    %s1120 = scalar_lea.vmem %s0, 88
    %v1121 = vld [vmem:[%s1120] sm:$0xff]
    %1122 = vrot.lane.b32.xlu0 %v1121, 74
    %v1123 = vpop.permute.xlu0 %1122
    %vm1124 = vcmask 220160
    %s1125 = scalar_lea.vmem [#allocation0], 706
    %1126 = vst.msk [vmem:[%s1125] ss:$8 sm:$0xf] %vm1124, %v1123
    %s1127 = scalar_lea.vmem [#allocation0], 706
    %1128 = vst.msk [vmem:[%s1127] ss:$8 sm:$0xf0] %vm1124, %v1123
    %s1129 = scalar_lea.vmem %s0, 96
    %v1130 = vld [vmem:[%s1129] sm:$0xff]
    %1131 = vrot.lane.b32.xlu0 %v1130, 74
    %v1132 = vpop.permute.xlu0 %1131
    %vm1133 = vcmask 220160
    %s1134 = scalar_lea.vmem [#allocation0], 770
    %1135 = vst.msk [vmem:[%s1134] ss:$8 sm:$0xf] %vm1133, %v1132
    %s1136 = scalar_lea.vmem [#allocation0], 770
    %1137 = vst.msk [vmem:[%s1136] ss:$8 sm:$0xf0] %vm1133, %v1132
    %s1138 = scalar_lea.vmem %s0, 104
    %v1139 = vld [vmem:[%s1138] sm:$0xff]
    %1140 = vrot.lane.b32.xlu0 %v1139, 74
    %v1141 = vpop.permute.xlu0 %1140
    %vm1142 = vcmask 220160
    %s1143 = scalar_lea.vmem [#allocation0], 834
    %1144 = vst.msk [vmem:[%s1143] ss:$8 sm:$0xf] %vm1142, %v1141
    %s1145 = scalar_lea.vmem [#allocation0], 834
    %1146 = vst.msk [vmem:[%s1145] ss:$8 sm:$0xf0] %vm1142, %v1141
    %s1147 = scalar_lea.vmem %s0, 112
    %v1148 = vld [vmem:[%s1147] sm:$0xff]
    %1149 = vrot.lane.b32.xlu0 %v1148, 74
    %v1150 = vpop.permute.xlu0 %1149
    %vm1151 = vcmask 220160
    %s1152 = scalar_lea.vmem [#allocation0], 898
    %1153 = vst.msk [vmem:[%s1152] ss:$8 sm:$0xf] %vm1151, %v1150
    %s1154 = scalar_lea.vmem [#allocation0], 898
    %1155 = vst.msk [vmem:[%s1154] ss:$8 sm:$0xf0] %vm1151, %v1150
    %s1156 = scalar_lea.vmem %s0, 120
    %v1157 = vld [vmem:[%s1156] sm:$0xff]
    %1158 = vrot.lane.b32.xlu0 %v1157, 74
    %v1159 = vpop.permute.xlu0 %1158
    %vm1160 = vcmask 220160
    %s1161 = scalar_lea.vmem [#allocation0], 962
    %1162 = vst.msk [vmem:[%s1161] ss:$8 sm:$0xf] %vm1160, %v1159
    %s1163 = scalar_lea.vmem [#allocation0], 962
    %1164 = vst.msk [vmem:[%s1163] ss:$8 sm:$0xf0] %vm1160, %v1159
    %s1165 = scalar_lea.vmem %s0, 128
    %v1166 = vld [vmem:[%s1165] sm:$0xff]
    %1167 = vrot.lane.b32.xlu0 %v1166, 74
    %v1168 = vpop.permute.xlu0 %1167
    %vm1169 = vcmask 220160
    %s1170 = scalar_lea.vmem [#allocation0], 1026
    %1171 = vst.msk [vmem:[%s1170] ss:$8 sm:$0xf] %vm1169, %v1168
    %s1172 = scalar_lea.vmem [#allocation0], 1026
    %1173 = vst.msk [vmem:[%s1172] ss:$8 sm:$0xf0] %vm1169, %v1168
    %s1174 = scalar_lea.vmem %s0, 136
    %v1175 = vld [vmem:[%s1174] sm:$0xff]
    %1176 = vrot.lane.b32.xlu0 %v1175, 74
    %v1177 = vpop.permute.xlu0 %1176
    %vm1178 = vcmask 220160
    %s1179 = scalar_lea.vmem [#allocation0], 1090
    %1180 = vst.msk [vmem:[%s1179] ss:$8 sm:$0xf] %vm1178, %v1177
    %s1181 = scalar_lea.vmem [#allocation0], 1090
    %1182 = vst.msk [vmem:[%s1181] ss:$8 sm:$0xf0] %vm1178, %v1177
    %s1183 = scalar_lea.vmem %s0, 144
    %v1184 = vld [vmem:[%s1183] sm:$0xff]
    %1185 = vrot.lane.b32.xlu0 %v1184, 74
    %v1186 = vpop.permute.xlu0 %1185
    %vm1187 = vcmask 220160
    %s1188 = scalar_lea.vmem [#allocation0], 1154
    %1189 = vst.msk [vmem:[%s1188] ss:$8 sm:$0xf] %vm1187, %v1186
    %s1190 = scalar_lea.vmem [#allocation0], 1154
    %1191 = vst.msk [vmem:[%s1190] ss:$8 sm:$0xf0] %vm1187, %v1186
    %s1192 = scalar_lea.vmem %s0, 152
    %v1193 = vld [vmem:[%s1192] sm:$0xff]
    %1194 = vrot.lane.b32.xlu0 %v1193, 74
    %v1195 = vpop.permute.xlu0 %1194
    %vm1196 = vcmask 220160
    %s1197 = scalar_lea.vmem [#allocation0], 1218
    %1198 = vst.msk [vmem:[%s1197] ss:$8 sm:$0xf] %vm1196, %v1195
    %s1199 = scalar_lea.vmem [#allocation0], 1218
    %1200 = vst.msk [vmem:[%s1199] ss:$8 sm:$0xf0] %vm1196, %v1195
    %s1201 = scalar_lea.vmem %s0, 160
    %v1202 = vld [vmem:[%s1201] sm:$0xff]
    %1203 = vrot.lane.b32.xlu0 %v1202, 74
    %v1204 = vpop.permute.xlu0 %1203
    %vm1205 = vcmask 220160
    %s1206 = scalar_lea.vmem [#allocation0], 1282
    %1207 = vst.msk [vmem:[%s1206] ss:$8 sm:$0xf] %vm1205, %v1204
    %s1208 = scalar_lea.vmem [#allocation0], 1282
    %1209 = vst.msk [vmem:[%s1208] ss:$8 sm:$0xf0] %vm1205, %v1204
    %s1210 = scalar_lea.vmem %s0, 168
    %v1211 = vld [vmem:[%s1210] sm:$0xff]
    %1212 = vrot.lane.b32.xlu0 %v1211, 74
    %v1213 = vpop.permute.xlu0 %1212
    %vm1214 = vcmask 220160
    %s1215 = scalar_lea.vmem [#allocation0], 1346
    %1216 = vst.msk [vmem:[%s1215] ss:$8 sm:$0xf] %vm1214, %v1213
    %s1217 = scalar_lea.vmem [#allocation0], 1346
    %1218 = vst.msk [vmem:[%s1217] ss:$8 sm:$0xf0] %vm1214, %v1213
    %s1219 = scalar_lea.vmem %s0, 176
    %v1220 = vld [vmem:[%s1219] sm:$0xff]
    %1221 = vrot.lane.b32.xlu0 %v1220, 74
    %v1222 = vpop.permute.xlu0 %1221
    %vm1223 = vcmask 220160
    %s1224 = scalar_lea.vmem [#allocation0], 1410
    %1225 = vst.msk [vmem:[%s1224] ss:$8 sm:$0xf] %vm1223, %v1222
    %s1226 = scalar_lea.vmem [#allocation0], 1410
    %1227 = vst.msk [vmem:[%s1226] ss:$8 sm:$0xf0] %vm1223, %v1222
    %s1228 = scalar_lea.vmem %s0, 184
    %v1229 = vld [vmem:[%s1228] sm:$0xff]
    %1230 = vrot.lane.b32.xlu0 %v1229, 74
    %v1231 = vpop.permute.xlu0 %1230
    %vm1232 = vcmask 220160
    %s1233 = scalar_lea.vmem [#allocation0], 1474
    %1234 = vst.msk [vmem:[%s1233] ss:$8 sm:$0xf] %vm1232, %v1231
    %s1235 = scalar_lea.vmem [#allocation0], 1474
    %1236 = vst.msk [vmem:[%s1235] ss:$8 sm:$0xf0] %vm1232, %v1231
    %s1237 = scalar_lea.vmem %s0, 192
    %v1238 = vld [vmem:[%s1237] sm:$0xff]
    %1239 = vrot.lane.b32.xlu0 %v1238, 74
    %v1240 = vpop.permute.xlu0 %1239
    %vm1241 = vcmask 220160
    %s1242 = scalar_lea.vmem [#allocation0], 1538
    %1243 = vst.msk [vmem:[%s1242] ss:$8 sm:$0xf] %vm1241, %v1240
    %s1244 = scalar_lea.vmem [#allocation0], 1538
    %1245 = vst.msk [vmem:[%s1244] ss:$8 sm:$0xf0] %vm1241, %v1240
    %s1246 = scalar_lea.vmem %s0, 200
    %v1247 = vld [vmem:[%s1246] sm:$0xff]
    %1248 = vrot.lane.b32.xlu0 %v1247, 74
    %v1249 = vpop.permute.xlu0 %1248
    %vm1250 = vcmask 220160
    %s1251 = scalar_lea.vmem [#allocation0], 1602
    %1252 = vst.msk [vmem:[%s1251] ss:$8 sm:$0xf] %vm1250, %v1249
    %s1253 = scalar_lea.vmem [#allocation0], 1602
    %1254 = vst.msk [vmem:[%s1253] ss:$8 sm:$0xf0] %vm1250, %v1249
    %s1255 = scalar_lea.vmem %s0, 208
    %v1256 = vld [vmem:[%s1255] sm:$0xff]
    %1257 = vrot.lane.b32.xlu0 %v1256, 74
    %v1258 = vpop.permute.xlu0 %1257
    %vm1259 = vcmask 220160
    %s1260 = scalar_lea.vmem [#allocation0], 1666
    %1261 = vst.msk [vmem:[%s1260] ss:$8 sm:$0xf] %vm1259, %v1258
    %s1262 = scalar_lea.vmem [#allocation0], 1666
    %1263 = vst.msk [vmem:[%s1262] ss:$8 sm:$0xf0] %vm1259, %v1258
    %s1264 = scalar_lea.vmem %s0, 216
    %v1265 = vld [vmem:[%s1264] sm:$0xff]
    %1266 = vrot.lane.b32.xlu0 %v1265, 74
    %v1267 = vpop.permute.xlu0 %1266
    %vm1268 = vcmask 220160
    %s1269 = scalar_lea.vmem [#allocation0], 1730
    %1270 = vst.msk [vmem:[%s1269] ss:$8 sm:$0xf] %vm1268, %v1267
    %s1271 = scalar_lea.vmem [#allocation0], 1730
    %1272 = vst.msk [vmem:[%s1271] ss:$8 sm:$0xf0] %vm1268, %v1267
    %s1273 = scalar_lea.vmem %s0, 224
    %v1274 = vld [vmem:[%s1273] sm:$0xff]
    %1275 = vrot.lane.b32.xlu0 %v1274, 74
    %v1276 = vpop.permute.xlu0 %1275
    %vm1277 = vcmask 220160
    %s1278 = scalar_lea.vmem [#allocation0], 1794
    %1279 = vst.msk [vmem:[%s1278] ss:$8 sm:$0xf] %vm1277, %v1276
    %s1280 = scalar_lea.vmem [#allocation0], 1794
    %1281 = vst.msk [vmem:[%s1280] ss:$8 sm:$0xf0] %vm1277, %v1276
    %s1282 = scalar_lea.vmem %s0, 232
    %v1283 = vld [vmem:[%s1282] sm:$0xff]
    %1284 = vrot.lane.b32.xlu0 %v1283, 74
    %v1285 = vpop.permute.xlu0 %1284
    %vm1286 = vcmask 220160
    %s1287 = scalar_lea.vmem [#allocation0], 1858
    %1288 = vst.msk [vmem:[%s1287] ss:$8 sm:$0xf] %vm1286, %v1285
    %s1289 = scalar_lea.vmem [#allocation0], 1858
    %1290 = vst.msk [vmem:[%s1289] ss:$8 sm:$0xf0] %vm1286, %v1285
    %s1291 = scalar_lea.vmem %s0, 240
    %v1292 = vld [vmem:[%s1291] sm:$0xff]
    %1293 = vrot.lane.b32.xlu0 %v1292, 74
    %v1294 = vpop.permute.xlu0 %1293
    %vm1295 = vcmask 220160
    %s1296 = scalar_lea.vmem [#allocation0], 1922
    %1297 = vst.msk [vmem:[%s1296] ss:$8 sm:$0xf] %vm1295, %v1294
    %s1298 = scalar_lea.vmem [#allocation0], 1922
    %1299 = vst.msk [vmem:[%s1298] ss:$8 sm:$0xf0] %vm1295, %v1294
    %s1300 = scalar_lea.vmem %s0, 248
    %v1301 = vld [vmem:[%s1300] sm:$0xff]
    %1302 = vrot.lane.b32.xlu0 %v1301, 74
    %v1303 = vpop.permute.xlu0 %1302
    %vm1304 = vcmask 220160
    %s1305 = scalar_lea.vmem [#allocation0], 1986
    %1306 = vst.msk [vmem:[%s1305] ss:$8 sm:$0xf] %vm1304, %v1303
    %s1307 = scalar_lea.vmem [#allocation0], 1986
    %1308 = vst.msk [vmem:[%s1307] ss:$8 sm:$0xf0] %vm1304, %v1303
    %s1309 = scalar_lea.vmem %s0, 256
    %v1310 = vld [vmem:[%s1309] sm:$0xff]
    %1311 = vrot.lane.b32.xlu0 %v1310, 74
    %v1312 = vpop.permute.xlu0 %1311
    %vm1313 = vcmask 220160
    %s1314 = scalar_lea.vmem [#allocation0], 2050
    %1315 = vst.msk [vmem:[%s1314] ss:$8 sm:$0xf] %vm1313, %v1312
    %s1316 = scalar_lea.vmem [#allocation0], 2050
    %1317 = vst.msk [vmem:[%s1316] ss:$8 sm:$0xf0] %vm1313, %v1312
    %s1318 = scalar_lea.vmem %s0, 264
    %v1319 = vld [vmem:[%s1318] sm:$0xff]
    %1320 = vrot.lane.b32.xlu0 %v1319, 74
    %v1321 = vpop.permute.xlu0 %1320
    %vm1322 = vcmask 220160
    %s1323 = scalar_lea.vmem [#allocation0], 2114
    %1324 = vst.msk [vmem:[%s1323] ss:$8 sm:$0xf] %vm1322, %v1321
    %s1325 = scalar_lea.vmem [#allocation0], 2114
    %1326 = vst.msk [vmem:[%s1325] ss:$8 sm:$0xf0] %vm1322, %v1321
    %s1327 = scalar_lea.vmem %s0, 272
    %v1328 = vld [vmem:[%s1327] sm:$0xff]
    %1329 = vrot.lane.b32.xlu0 %v1328, 74
    %v1330 = vpop.permute.xlu0 %1329
    %vm1331 = vcmask 220160
    %s1332 = scalar_lea.vmem [#allocation0], 2178
    %1333 = vst.msk [vmem:[%s1332] ss:$8 sm:$0xf] %vm1331, %v1330
    %s1334 = scalar_lea.vmem [#allocation0], 2178
    %1335 = vst.msk [vmem:[%s1334] ss:$8 sm:$0xf0] %vm1331, %v1330
    %s1336 = scalar_lea.vmem %s0, 280
    %v1337 = vld [vmem:[%s1336] sm:$0xff]
    %1338 = vrot.lane.b32.xlu0 %v1337, 74
    %v1339 = vpop.permute.xlu0 %1338
    %vm1340 = vcmask 220160
    %s1341 = scalar_lea.vmem [#allocation0], 2242
    %1342 = vst.msk [vmem:[%s1341] ss:$8 sm:$0xf] %vm1340, %v1339
    %s1343 = scalar_lea.vmem [#allocation0], 2242
    %1344 = vst.msk [vmem:[%s1343] ss:$8 sm:$0xf0] %vm1340, %v1339
    %s1345 = scalar_lea.vmem %s0, 288
    %v1346 = vld [vmem:[%s1345] sm:$0xff]
    %1347 = vrot.lane.b32.xlu0 %v1346, 74
    %v1348 = vpop.permute.xlu0 %1347
    %vm1349 = vcmask 220160
    %s1350 = scalar_lea.vmem [#allocation0], 2306
    %1351 = vst.msk [vmem:[%s1350] ss:$8 sm:$0xf] %vm1349, %v1348
    %s1352 = scalar_lea.vmem [#allocation0], 2306
    %1353 = vst.msk [vmem:[%s1352] ss:$8 sm:$0xf0] %vm1349, %v1348
    %s1354 = scalar_lea.vmem %s0, 296
    %v1355 = vld [vmem:[%s1354] sm:$0xff]
    %1356 = vrot.lane.b32.xlu0 %v1355, 74
    %v1357 = vpop.permute.xlu0 %1356
    %vm1358 = vcmask 220160
    %s1359 = scalar_lea.vmem [#allocation0], 2370
    %1360 = vst.msk [vmem:[%s1359] ss:$8 sm:$0xf] %vm1358, %v1357
    %s1361 = scalar_lea.vmem [#allocation0], 2370
    %1362 = vst.msk [vmem:[%s1361] ss:$8 sm:$0xf0] %vm1358, %v1357
    %s1363 = scalar_lea.vmem %s0, 304
    %v1364 = vld [vmem:[%s1363] sm:$0xff]
    %1365 = vrot.lane.b32.xlu0 %v1364, 74
    %v1366 = vpop.permute.xlu0 %1365
    %vm1367 = vcmask 220160
    %s1368 = scalar_lea.vmem [#allocation0], 2434
    %1369 = vst.msk [vmem:[%s1368] ss:$8 sm:$0xf] %vm1367, %v1366
    %s1370 = scalar_lea.vmem [#allocation0], 2434
    %1371 = vst.msk [vmem:[%s1370] ss:$8 sm:$0xf0] %vm1367, %v1366
    %s1372 = scalar_lea.vmem %s0, 312
    %v1373 = vld [vmem:[%s1372] sm:$0xff]
    %1374 = vrot.lane.b32.xlu0 %v1373, 74
    %v1375 = vpop.permute.xlu0 %1374
    %vm1376 = vcmask 220160
    %s1377 = scalar_lea.vmem [#allocation0], 2498
    %1378 = vst.msk [vmem:[%s1377] ss:$8 sm:$0xf] %vm1376, %v1375
    %s1379 = scalar_lea.vmem [#allocation0], 2498
    %1380 = vst.msk [vmem:[%s1379] ss:$8 sm:$0xf0] %vm1376, %v1375
    %s1381 = scalar_lea.vmem %s0, 320
    %v1382 = vld [vmem:[%s1381] sm:$0xff]
    %1383 = vrot.lane.b32.xlu0 %v1382, 74
    %v1384 = vpop.permute.xlu0 %1383
    %vm1385 = vcmask 220160
    %s1386 = scalar_lea.vmem [#allocation0], 2562
    %1387 = vst.msk [vmem:[%s1386] ss:$8 sm:$0xf] %vm1385, %v1384
    %s1388 = scalar_lea.vmem [#allocation0], 2562
    %1389 = vst.msk [vmem:[%s1388] ss:$8 sm:$0xf0] %vm1385, %v1384
    %s1390 = scalar_lea.vmem %s0, 328
    %v1391 = vld [vmem:[%s1390] sm:$0xff]
    %1392 = vrot.lane.b32.xlu0 %v1391, 74
    %v1393 = vpop.permute.xlu0 %1392
    %vm1394 = vcmask 220160
    %s1395 = scalar_lea.vmem [#allocation0], 2626
    %1396 = vst.msk [vmem:[%s1395] ss:$8 sm:$0xf] %vm1394, %v1393
    %s1397 = scalar_lea.vmem [#allocation0], 2626
    %1398 = vst.msk [vmem:[%s1397] ss:$8 sm:$0xf0] %vm1394, %v1393
    %s1399 = scalar_lea.vmem %s0, 336
    %v1400 = vld [vmem:[%s1399] sm:$0xff]
    %1401 = vrot.lane.b32.xlu0 %v1400, 74
    %v1402 = vpop.permute.xlu0 %1401
    %vm1403 = vcmask 220160
    %s1404 = scalar_lea.vmem [#allocation0], 2690
    %1405 = vst.msk [vmem:[%s1404] ss:$8 sm:$0xf] %vm1403, %v1402
    %s1406 = scalar_lea.vmem [#allocation0], 2690
    %1407 = vst.msk [vmem:[%s1406] ss:$8 sm:$0xf0] %vm1403, %v1402
    %s1408 = scalar_lea.vmem %s0, 344
    %v1409 = vld [vmem:[%s1408] sm:$0xff]
    %1410 = vrot.lane.b32.xlu0 %v1409, 74
    %v1411 = vpop.permute.xlu0 %1410
    %vm1412 = vcmask 220160
    %s1413 = scalar_lea.vmem [#allocation0], 2754
    %1414 = vst.msk [vmem:[%s1413] ss:$8 sm:$0xf] %vm1412, %v1411
    %s1415 = scalar_lea.vmem [#allocation0], 2754
    %1416 = vst.msk [vmem:[%s1415] ss:$8 sm:$0xf0] %vm1412, %v1411
    %s1417 = scalar_lea.vmem %s0, 352
    %v1418 = vld [vmem:[%s1417] sm:$0xff]
    %1419 = vrot.lane.b32.xlu0 %v1418, 74
    %v1420 = vpop.permute.xlu0 %1419
    %vm1421 = vcmask 220160
    %s1422 = scalar_lea.vmem [#allocation0], 2818
    %1423 = vst.msk [vmem:[%s1422] ss:$8 sm:$0xf] %vm1421, %v1420
    %s1424 = scalar_lea.vmem [#allocation0], 2818
    %1425 = vst.msk [vmem:[%s1424] ss:$8 sm:$0xf0] %vm1421, %v1420
    %s1426 = scalar_lea.vmem %s0, 360
    %v1427 = vld [vmem:[%s1426] sm:$0xff]
    %1428 = vrot.lane.b32.xlu0 %v1427, 74
    %v1429 = vpop.permute.xlu0 %1428
    %vm1430 = vcmask 220160
    %s1431 = scalar_lea.vmem [#allocation0], 2882
    %1432 = vst.msk [vmem:[%s1431] ss:$8 sm:$0xf] %vm1430, %v1429
    %s1433 = scalar_lea.vmem [#allocation0], 2882
    %1434 = vst.msk [vmem:[%s1433] ss:$8 sm:$0xf0] %vm1430, %v1429
    %s1435 = scalar_lea.vmem %s0, 368
    %v1436 = vld [vmem:[%s1435] sm:$0xff]
    %1437 = vrot.lane.b32.xlu0 %v1436, 74
    %v1438 = vpop.permute.xlu0 %1437
    %vm1439 = vcmask 220160
    %s1440 = scalar_lea.vmem [#allocation0], 2946
    %1441 = vst.msk [vmem:[%s1440] ss:$8 sm:$0xf] %vm1439, %v1438
    %s1442 = scalar_lea.vmem [#allocation0], 2946
    %1443 = vst.msk [vmem:[%s1442] ss:$8 sm:$0xf0] %vm1439, %v1438
    %s1444 = scalar_lea.vmem %s0, 376
    %v1445 = vld [vmem:[%s1444] sm:$0xff]
    %1446 = vrot.lane.b32.xlu0 %v1445, 74
    %v1447 = vpop.permute.xlu0 %1446
    %vm1448 = vcmask 220160
    %s1449 = scalar_lea.vmem [#allocation0], 3010
    %1450 = vst.msk [vmem:[%s1449] ss:$8 sm:$0xf] %vm1448, %v1447
    %s1451 = scalar_lea.vmem [#allocation0], 3010
    %1452 = vst.msk [vmem:[%s1451] ss:$8 sm:$0xf0] %vm1448, %v1447
    %s1453 = scalar_lea.vmem %s0, 384
    %v1454 = vld [vmem:[%s1453] sm:$0xff]
    %1455 = vrot.lane.b32.xlu0 %v1454, 74
    %v1456 = vpop.permute.xlu0 %1455
    %vm1457 = vcmask 220160
    %s1458 = scalar_lea.vmem [#allocation0], 3074
    %1459 = vst.msk [vmem:[%s1458] ss:$8 sm:$0xf] %vm1457, %v1456
    %s1460 = scalar_lea.vmem [#allocation0], 3074
    %1461 = vst.msk [vmem:[%s1460] ss:$8 sm:$0xf0] %vm1457, %v1456
    %s1462 = scalar_lea.vmem %s0, 392
    %v1463 = vld [vmem:[%s1462] sm:$0xff]
    %1464 = vrot.lane.b32.xlu0 %v1463, 74
    %v1465 = vpop.permute.xlu0 %1464
    %vm1466 = vcmask 220160
    %s1467 = scalar_lea.vmem [#allocation0], 3138
    %1468 = vst.msk [vmem:[%s1467] ss:$8 sm:$0xf] %vm1466, %v1465
    %s1469 = scalar_lea.vmem [#allocation0], 3138
    %1470 = vst.msk [vmem:[%s1469] ss:$8 sm:$0xf0] %vm1466, %v1465
    %s1471 = scalar_lea.vmem %s0, 400
    %v1472 = vld [vmem:[%s1471] sm:$0xff]
    %1473 = vrot.lane.b32.xlu0 %v1472, 74
    %v1474 = vpop.permute.xlu0 %1473
    %vm1475 = vcmask 220160
    %s1476 = scalar_lea.vmem [#allocation0], 3202
    %1477 = vst.msk [vmem:[%s1476] ss:$8 sm:$0xf] %vm1475, %v1474
    %s1478 = scalar_lea.vmem [#allocation0], 3202
    %1479 = vst.msk [vmem:[%s1478] ss:$8 sm:$0xf0] %vm1475, %v1474
    %s1480 = scalar_lea.vmem %s0, 408
    %v1481 = vld [vmem:[%s1480] sm:$0xff]
    %1482 = vrot.lane.b32.xlu0 %v1481, 74
    %v1483 = vpop.permute.xlu0 %1482
    %vm1484 = vcmask 220160
    %s1485 = scalar_lea.vmem [#allocation0], 3266
    %1486 = vst.msk [vmem:[%s1485] ss:$8 sm:$0xf] %vm1484, %v1483
    %s1487 = scalar_lea.vmem [#allocation0], 3266
    %1488 = vst.msk [vmem:[%s1487] ss:$8 sm:$0xf0] %vm1484, %v1483
    %s1489 = scalar_lea.vmem %s0, 416
    %v1490 = vld [vmem:[%s1489] sm:$0xff]
    %1491 = vrot.lane.b32.xlu0 %v1490, 74
    %v1492 = vpop.permute.xlu0 %1491
    %vm1493 = vcmask 220160
    %s1494 = scalar_lea.vmem [#allocation0], 3330
    %1495 = vst.msk [vmem:[%s1494] ss:$8 sm:$0xf] %vm1493, %v1492
    %s1496 = scalar_lea.vmem [#allocation0], 3330
    %1497 = vst.msk [vmem:[%s1496] ss:$8 sm:$0xf0] %vm1493, %v1492
    %s1498 = scalar_lea.vmem %s0, 424
    %v1499 = vld [vmem:[%s1498] sm:$0xff]
    %1500 = vrot.lane.b32.xlu0 %v1499, 74
    %v1501 = vpop.permute.xlu0 %1500
    %vm1502 = vcmask 220160
    %s1503 = scalar_lea.vmem [#allocation0], 3394
    %1504 = vst.msk [vmem:[%s1503] ss:$8 sm:$0xf] %vm1502, %v1501
    %s1505 = scalar_lea.vmem [#allocation0], 3394
    %1506 = vst.msk [vmem:[%s1505] ss:$8 sm:$0xf0] %vm1502, %v1501
    %s1507 = scalar_lea.vmem %s0, 432
    %v1508 = vld [vmem:[%s1507] sm:$0xff]
    %1509 = vrot.lane.b32.xlu0 %v1508, 74
    %v1510 = vpop.permute.xlu0 %1509
    %vm1511 = vcmask 220160
    %s1512 = scalar_lea.vmem [#allocation0], 3458
    %1513 = vst.msk [vmem:[%s1512] ss:$8 sm:$0xf] %vm1511, %v1510
    %s1514 = scalar_lea.vmem [#allocation0], 3458
    %1515 = vst.msk [vmem:[%s1514] ss:$8 sm:$0xf0] %vm1511, %v1510
    %s1516 = scalar_lea.vmem %s0, 440
    %v1517 = vld [vmem:[%s1516] sm:$0xff]
    %1518 = vrot.lane.b32.xlu0 %v1517, 74
    %v1519 = vpop.permute.xlu0 %1518
    %vm1520 = vcmask 220160
    %s1521 = scalar_lea.vmem [#allocation0], 3522
    %1522 = vst.msk [vmem:[%s1521] ss:$8 sm:$0xf] %vm1520, %v1519
    %s1523 = scalar_lea.vmem [#allocation0], 3522
    %1524 = vst.msk [vmem:[%s1523] ss:$8 sm:$0xf0] %vm1520, %v1519
    %s1525 = scalar_lea.vmem %s0, 448
    %v1526 = vld [vmem:[%s1525] sm:$0xff]
    %1527 = vrot.lane.b32.xlu0 %v1526, 74
    %v1528 = vpop.permute.xlu0 %1527
    %vm1529 = vcmask 220160
    %s1530 = scalar_lea.vmem [#allocation0], 3586
    %1531 = vst.msk [vmem:[%s1530] ss:$8 sm:$0xf] %vm1529, %v1528
    %s1532 = scalar_lea.vmem [#allocation0], 3586
    %1533 = vst.msk [vmem:[%s1532] ss:$8 sm:$0xf0] %vm1529, %v1528
    %s1534 = scalar_lea.vmem %s0, 456
    %v1535 = vld [vmem:[%s1534] sm:$0xff]
    %1536 = vrot.lane.b32.xlu0 %v1535, 74
    %v1537 = vpop.permute.xlu0 %1536
    %vm1538 = vcmask 220160
    %s1539 = scalar_lea.vmem [#allocation0], 3650
    %1540 = vst.msk [vmem:[%s1539] ss:$8 sm:$0xf] %vm1538, %v1537
    %s1541 = scalar_lea.vmem [#allocation0], 3650
    %1542 = vst.msk [vmem:[%s1541] ss:$8 sm:$0xf0] %vm1538, %v1537
    %s1543 = scalar_lea.vmem %s0, 464
    %v1544 = vld [vmem:[%s1543] sm:$0xff]
    %1545 = vrot.lane.b32.xlu0 %v1544, 74
    %v1546 = vpop.permute.xlu0 %1545
    %vm1547 = vcmask 220160
    %s1548 = scalar_lea.vmem [#allocation0], 3714
    %1549 = vst.msk [vmem:[%s1548] ss:$8 sm:$0xf] %vm1547, %v1546
    %s1550 = scalar_lea.vmem [#allocation0], 3714
    %1551 = vst.msk [vmem:[%s1550] ss:$8 sm:$0xf0] %vm1547, %v1546
    %s1552 = scalar_lea.vmem %s0, 472
    %v1553 = vld [vmem:[%s1552] sm:$0xff]
    %1554 = vrot.lane.b32.xlu0 %v1553, 74
    %v1555 = vpop.permute.xlu0 %1554
    %vm1556 = vcmask 220160
    %s1557 = scalar_lea.vmem [#allocation0], 3778
    %1558 = vst.msk [vmem:[%s1557] ss:$8 sm:$0xf] %vm1556, %v1555
    %s1559 = scalar_lea.vmem [#allocation0], 3778
    %1560 = vst.msk [vmem:[%s1559] ss:$8 sm:$0xf0] %vm1556, %v1555
    %s1561 = scalar_lea.vmem %s0, 480
    %v1562 = vld [vmem:[%s1561] sm:$0xff]
    %1563 = vrot.lane.b32.xlu0 %v1562, 74
    %v1564 = vpop.permute.xlu0 %1563
    %vm1565 = vcmask 220160
    %s1566 = scalar_lea.vmem [#allocation0], 3842
    %1567 = vst.msk [vmem:[%s1566] ss:$8 sm:$0xf] %vm1565, %v1564
    %s1568 = scalar_lea.vmem [#allocation0], 3842
    %1569 = vst.msk [vmem:[%s1568] ss:$8 sm:$0xf0] %vm1565, %v1564
    %s1570 = scalar_lea.vmem %s0, 488
    %v1571 = vld [vmem:[%s1570] sm:$0xff]
    %1572 = vrot.lane.b32.xlu0 %v1571, 74
    %v1573 = vpop.permute.xlu0 %1572
    %vm1574 = vcmask 220160
    %s1575 = scalar_lea.vmem [#allocation0], 3906
    %1576 = vst.msk [vmem:[%s1575] ss:$8 sm:$0xf] %vm1574, %v1573
    %s1577 = scalar_lea.vmem [#allocation0], 3906
    %1578 = vst.msk [vmem:[%s1577] ss:$8 sm:$0xf0] %vm1574, %v1573
    %s1579 = scalar_lea.vmem %s0, 496
    %v1580 = vld [vmem:[%s1579] sm:$0xff]
    %1581 = vrot.lane.b32.xlu0 %v1580, 74
    %v1582 = vpop.permute.xlu0 %1581
    %vm1583 = vcmask 220160
    %s1584 = scalar_lea.vmem [#allocation0], 3970
    %1585 = vst.msk [vmem:[%s1584] ss:$8 sm:$0xf] %vm1583, %v1582
    %s1586 = scalar_lea.vmem [#allocation0], 3970
    %1587 = vst.msk [vmem:[%s1586] ss:$8 sm:$0xf0] %vm1583, %v1582
    %s1588 = scalar_lea.vmem %s0, 504
    %v1589 = vld [vmem:[%s1588] sm:$0xff]
    %1590 = vrot.lane.b32.xlu0 %v1589, 74
    %v1591 = vpop.permute.xlu0 %1590
    %vm1592 = vcmask 220160
    %s1593 = scalar_lea.vmem [#allocation0], 4034
    %1594 = vst.msk [vmem:[%s1593] ss:$8 sm:$0xf] %vm1592, %v1591
    %s1595 = scalar_lea.vmem [#allocation0], 4034
    %1596 = vst.msk [vmem:[%s1595] ss:$8 sm:$0xf0] %vm1592, %v1591
    %s1598 = ssub.s32 16, 1
    %v1599 = vld [vmem:[#allocation0] sm:%s1598]
    %s1601 = ssub.s32 16, 1
    %1602 = vst [vmem:[%s1] sm:%s1601] %v1599
    %s1603 = scalar_lea.vmem [#allocation0], 8
    %v1604 = vld [vmem:[%s1603] sm:%s1598]
    %s1606 = ssub.s32 16, 1
    %s1607 = scalar_lea.vmem %s1, 4
    %1608 = vst [vmem:[%s1607] sm:%s1606] %v1604
    %s1609 = scalar_lea.vmem [#allocation0], 16
    %v1610 = vld [vmem:[%s1609] sm:%s1598]
    %s1612 = ssub.s32 16, 1
    %s1613 = scalar_lea.vmem %s1, 8
    %1614 = vst [vmem:[%s1613] sm:%s1612] %v1610
    %s1615 = scalar_lea.vmem [#allocation0], 24
    %v1616 = vld [vmem:[%s1615] sm:%s1598]
    %s1618 = ssub.s32 16, 1
    %s1619 = scalar_lea.vmem %s1, 12
    %1620 = vst [vmem:[%s1619] sm:%s1618] %v1616
    %s1621 = scalar_lea.vmem [#allocation0], 32
    %v1622 = vld [vmem:[%s1621] sm:%s1598]
    %s1624 = ssub.s32 16, 1
    %s1625 = scalar_lea.vmem %s1, 16
    %1626 = vst [vmem:[%s1625] sm:%s1624] %v1622
    %s1627 = scalar_lea.vmem [#allocation0], 40
    %v1628 = vld [vmem:[%s1627] sm:%s1598]
    %s1630 = ssub.s32 16, 1
    %s1631 = scalar_lea.vmem %s1, 20
    %1632 = vst [vmem:[%s1631] sm:%s1630] %v1628
    %s1633 = scalar_lea.vmem [#allocation0], 48
    %v1634 = vld [vmem:[%s1633] sm:%s1598]
    %s1636 = ssub.s32 16, 1
    %s1637 = scalar_lea.vmem %s1, 24
    %1638 = vst [vmem:[%s1637] sm:%s1636] %v1634
    %s1639 = scalar_lea.vmem [#allocation0], 56
    %v1640 = vld [vmem:[%s1639] sm:%s1598]
    %s1642 = ssub.s32 16, 1
    %s1643 = scalar_lea.vmem %s1, 28
    %1644 = vst [vmem:[%s1643] sm:%s1642] %v1640
    %s1645 = scalar_lea.vmem [#allocation0], 64
    %v1646 = vld [vmem:[%s1645] sm:%s1598]
    %s1648 = ssub.s32 16, 1
    %s1649 = scalar_lea.vmem %s1, 32
    %1650 = vst [vmem:[%s1649] sm:%s1648] %v1646
    %s1651 = scalar_lea.vmem [#allocation0], 72
    %v1652 = vld [vmem:[%s1651] sm:%s1598]
    %s1654 = ssub.s32 16, 1
    %s1655 = scalar_lea.vmem %s1, 36
    %1656 = vst [vmem:[%s1655] sm:%s1654] %v1652
    %s1657 = scalar_lea.vmem [#allocation0], 80
    %v1658 = vld [vmem:[%s1657] sm:%s1598]
    %s1660 = ssub.s32 16, 1
    %s1661 = scalar_lea.vmem %s1, 40
    %1662 = vst [vmem:[%s1661] sm:%s1660] %v1658
    %s1663 = scalar_lea.vmem [#allocation0], 88
    %v1664 = vld [vmem:[%s1663] sm:%s1598]
    %s1666 = ssub.s32 16, 1
    %s1667 = scalar_lea.vmem %s1, 44
    %1668 = vst [vmem:[%s1667] sm:%s1666] %v1664
    %s1669 = scalar_lea.vmem [#allocation0], 96
    %v1670 = vld [vmem:[%s1669] sm:%s1598]
    %s1672 = ssub.s32 16, 1
    %s1673 = scalar_lea.vmem %s1, 48
    %1674 = vst [vmem:[%s1673] sm:%s1672] %v1670
    %s1675 = scalar_lea.vmem [#allocation0], 104
    %v1676 = vld [vmem:[%s1675] sm:%s1598]
    %s1678 = ssub.s32 16, 1
    %s1679 = scalar_lea.vmem %s1, 52
    %1680 = vst [vmem:[%s1679] sm:%s1678] %v1676
    %s1681 = scalar_lea.vmem [#allocation0], 112
    %v1682 = vld [vmem:[%s1681] sm:%s1598]
    %s1684 = ssub.s32 16, 1
    %s1685 = scalar_lea.vmem %s1, 56
    %1686 = vst [vmem:[%s1685] sm:%s1684] %v1682
    %s1687 = scalar_lea.vmem [#allocation0], 120
    %v1688 = vld [vmem:[%s1687] sm:%s1598]
    %s1690 = ssub.s32 16, 1
    %s1691 = scalar_lea.vmem %s1, 60
    %1692 = vst [vmem:[%s1691] sm:%s1690] %v1688
    %s1693 = scalar_lea.vmem [#allocation0], 128
    %v1694 = vld [vmem:[%s1693] sm:%s1598]
    %s1696 = ssub.s32 16, 1
    %s1697 = scalar_lea.vmem %s1, 64
    %1698 = vst [vmem:[%s1697] sm:%s1696] %v1694
    %s1699 = scalar_lea.vmem [#allocation0], 136
    %v1700 = vld [vmem:[%s1699] sm:%s1598]
    %s1702 = ssub.s32 16, 1
    %s1703 = scalar_lea.vmem %s1, 68
    %1704 = vst [vmem:[%s1703] sm:%s1702] %v1700
    %s1705 = scalar_lea.vmem [#allocation0], 144
    %v1706 = vld [vmem:[%s1705] sm:%s1598]
    %s1708 = ssub.s32 16, 1
    %s1709 = scalar_lea.vmem %s1, 72
    %1710 = vst [vmem:[%s1709] sm:%s1708] %v1706
    %s1711 = scalar_lea.vmem [#allocation0], 152
    %v1712 = vld [vmem:[%s1711] sm:%s1598]
    %s1714 = ssub.s32 16, 1
    %s1715 = scalar_lea.vmem %s1, 76
    %1716 = vst [vmem:[%s1715] sm:%s1714] %v1712
    %s1717 = scalar_lea.vmem [#allocation0], 160
    %v1718 = vld [vmem:[%s1717] sm:%s1598]
    %s1720 = ssub.s32 16, 1
    %s1721 = scalar_lea.vmem %s1, 80
    %1722 = vst [vmem:[%s1721] sm:%s1720] %v1718
    %s1723 = scalar_lea.vmem [#allocation0], 168
    %v1724 = vld [vmem:[%s1723] sm:%s1598]
    %s1726 = ssub.s32 16, 1
    %s1727 = scalar_lea.vmem %s1, 84
    %1728 = vst [vmem:[%s1727] sm:%s1726] %v1724
    %s1729 = scalar_lea.vmem [#allocation0], 176
    %v1730 = vld [vmem:[%s1729] sm:%s1598]
    %s1732 = ssub.s32 16, 1
    %s1733 = scalar_lea.vmem %s1, 88
    %1734 = vst [vmem:[%s1733] sm:%s1732] %v1730
    %s1735 = scalar_lea.vmem [#allocation0], 184
    %v1736 = vld [vmem:[%s1735] sm:%s1598]
    %s1738 = ssub.s32 16, 1
    %s1739 = scalar_lea.vmem %s1, 92
    %1740 = vst [vmem:[%s1739] sm:%s1738] %v1736
    %s1741 = scalar_lea.vmem [#allocation0], 192
    %v1742 = vld [vmem:[%s1741] sm:%s1598]
    %s1744 = ssub.s32 16, 1
    %s1745 = scalar_lea.vmem %s1, 96
    %1746 = vst [vmem:[%s1745] sm:%s1744] %v1742
    %s1747 = scalar_lea.vmem [#allocation0], 200
    %v1748 = vld [vmem:[%s1747] sm:%s1598]
    %s1750 = ssub.s32 16, 1
    %s1751 = scalar_lea.vmem %s1, 100
    %1752 = vst [vmem:[%s1751] sm:%s1750] %v1748
    %s1753 = scalar_lea.vmem [#allocation0], 208
    %v1754 = vld [vmem:[%s1753] sm:%s1598]
    %s1756 = ssub.s32 16, 1
    %s1757 = scalar_lea.vmem %s1, 104
    %1758 = vst [vmem:[%s1757] sm:%s1756] %v1754
    %s1759 = scalar_lea.vmem [#allocation0], 216
    %v1760 = vld [vmem:[%s1759] sm:%s1598]
    %s1762 = ssub.s32 16, 1
    %s1763 = scalar_lea.vmem %s1, 108
    %1764 = vst [vmem:[%s1763] sm:%s1762] %v1760
    %s1765 = scalar_lea.vmem [#allocation0], 224
    %v1766 = vld [vmem:[%s1765] sm:%s1598]
    %s1768 = ssub.s32 16, 1
    %s1769 = scalar_lea.vmem %s1, 112
    %1770 = vst [vmem:[%s1769] sm:%s1768] %v1766
    %s1771 = scalar_lea.vmem [#allocation0], 232
    %v1772 = vld [vmem:[%s1771] sm:%s1598]
    %s1774 = ssub.s32 16, 1
    %s1775 = scalar_lea.vmem %s1, 116
    %1776 = vst [vmem:[%s1775] sm:%s1774] %v1772
    %s1777 = scalar_lea.vmem [#allocation0], 240
    %v1778 = vld [vmem:[%s1777] sm:%s1598]
    %s1780 = ssub.s32 16, 1
    %s1781 = scalar_lea.vmem %s1, 120
    %1782 = vst [vmem:[%s1781] sm:%s1780] %v1778
    %s1783 = scalar_lea.vmem [#allocation0], 248
    %v1784 = vld [vmem:[%s1783] sm:%s1598]
    %s1786 = ssub.s32 16, 1
    %s1787 = scalar_lea.vmem %s1, 124
    %1788 = vst [vmem:[%s1787] sm:%s1786] %v1784
    %s1789 = scalar_lea.vmem [#allocation0], 256
    %v1790 = vld [vmem:[%s1789] sm:%s1598]
    %s1792 = ssub.s32 16, 1
    %s1793 = scalar_lea.vmem %s1, 128
    %1794 = vst [vmem:[%s1793] sm:%s1792] %v1790
    %s1795 = scalar_lea.vmem [#allocation0], 264
    %v1796 = vld [vmem:[%s1795] sm:%s1598]
    %s1798 = ssub.s32 16, 1
    %s1799 = scalar_lea.vmem %s1, 132
    %1800 = vst [vmem:[%s1799] sm:%s1798] %v1796
    %s1801 = scalar_lea.vmem [#allocation0], 272
    %v1802 = vld [vmem:[%s1801] sm:%s1598]
    %s1804 = ssub.s32 16, 1
    %s1805 = scalar_lea.vmem %s1, 136
    %1806 = vst [vmem:[%s1805] sm:%s1804] %v1802
    %s1807 = scalar_lea.vmem [#allocation0], 280
    %v1808 = vld [vmem:[%s1807] sm:%s1598]
    %s1810 = ssub.s32 16, 1
    %s1811 = scalar_lea.vmem %s1, 140
    %1812 = vst [vmem:[%s1811] sm:%s1810] %v1808
    %s1813 = scalar_lea.vmem [#allocation0], 288
    %v1814 = vld [vmem:[%s1813] sm:%s1598]
    %s1816 = ssub.s32 16, 1
    %s1817 = scalar_lea.vmem %s1, 144
    %1818 = vst [vmem:[%s1817] sm:%s1816] %v1814
    %s1819 = scalar_lea.vmem [#allocation0], 296
    %v1820 = vld [vmem:[%s1819] sm:%s1598]
    %s1822 = ssub.s32 16, 1
    %s1823 = scalar_lea.vmem %s1, 148
    %1824 = vst [vmem:[%s1823] sm:%s1822] %v1820
    %s1825 = scalar_lea.vmem [#allocation0], 304
    %v1826 = vld [vmem:[%s1825] sm:%s1598]
    %s1828 = ssub.s32 16, 1
    %s1829 = scalar_lea.vmem %s1, 152
    %1830 = vst [vmem:[%s1829] sm:%s1828] %v1826
    %s1831 = scalar_lea.vmem [#allocation0], 312
    %v1832 = vld [vmem:[%s1831] sm:%s1598]
    %s1834 = ssub.s32 16, 1
    %s1835 = scalar_lea.vmem %s1, 156
    %1836 = vst [vmem:[%s1835] sm:%s1834] %v1832
    %s1837 = scalar_lea.vmem [#allocation0], 320
    %v1838 = vld [vmem:[%s1837] sm:%s1598]
    %s1840 = ssub.s32 16, 1
    %s1841 = scalar_lea.vmem %s1, 160
    %1842 = vst [vmem:[%s1841] sm:%s1840] %v1838
    %s1843 = scalar_lea.vmem [#allocation0], 328
    %v1844 = vld [vmem:[%s1843] sm:%s1598]
    %s1846 = ssub.s32 16, 1
    %s1847 = scalar_lea.vmem %s1, 164
    %1848 = vst [vmem:[%s1847] sm:%s1846] %v1844
    %s1849 = scalar_lea.vmem [#allocation0], 336
    %v1850 = vld [vmem:[%s1849] sm:%s1598]
    %s1852 = ssub.s32 16, 1
    %s1853 = scalar_lea.vmem %s1, 168
    %1854 = vst [vmem:[%s1853] sm:%s1852] %v1850
    %s1855 = scalar_lea.vmem [#allocation0], 344
    %v1856 = vld [vmem:[%s1855] sm:%s1598]
    %s1858 = ssub.s32 16, 1
    %s1859 = scalar_lea.vmem %s1, 172
    %1860 = vst [vmem:[%s1859] sm:%s1858] %v1856
    %s1861 = scalar_lea.vmem [#allocation0], 352
    %v1862 = vld [vmem:[%s1861] sm:%s1598]
    %s1864 = ssub.s32 16, 1
    %s1865 = scalar_lea.vmem %s1, 176
    %1866 = vst [vmem:[%s1865] sm:%s1864] %v1862
    %s1867 = scalar_lea.vmem [#allocation0], 360
    %v1868 = vld [vmem:[%s1867] sm:%s1598]
    %s1870 = ssub.s32 16, 1
    %s1871 = scalar_lea.vmem %s1, 180
    %1872 = vst [vmem:[%s1871] sm:%s1870] %v1868
    %s1873 = scalar_lea.vmem [#allocation0], 368
    %v1874 = vld [vmem:[%s1873] sm:%s1598]
    %s1876 = ssub.s32 16, 1
    %s1877 = scalar_lea.vmem %s1, 184
    %1878 = vst [vmem:[%s1877] sm:%s1876] %v1874
    %s1879 = scalar_lea.vmem [#allocation0], 376
    %v1880 = vld [vmem:[%s1879] sm:%s1598]
    %s1882 = ssub.s32 16, 1
    %s1883 = scalar_lea.vmem %s1, 188
    %1884 = vst [vmem:[%s1883] sm:%s1882] %v1880
    %s1885 = scalar_lea.vmem [#allocation0], 384
    %v1886 = vld [vmem:[%s1885] sm:%s1598]
    %s1888 = ssub.s32 16, 1
    %s1889 = scalar_lea.vmem %s1, 192
    %1890 = vst [vmem:[%s1889] sm:%s1888] %v1886
    %s1891 = scalar_lea.vmem [#allocation0], 392
    %v1892 = vld [vmem:[%s1891] sm:%s1598]
    %s1894 = ssub.s32 16, 1
    %s1895 = scalar_lea.vmem %s1, 196
    %1896 = vst [vmem:[%s1895] sm:%s1894] %v1892
    %s1897 = scalar_lea.vmem [#allocation0], 400
    %v1898 = vld [vmem:[%s1897] sm:%s1598]
    %s1900 = ssub.s32 16, 1
    %s1901 = scalar_lea.vmem %s1, 200
    %1902 = vst [vmem:[%s1901] sm:%s1900] %v1898
    %s1903 = scalar_lea.vmem [#allocation0], 408
    %v1904 = vld [vmem:[%s1903] sm:%s1598]
    %s1906 = ssub.s32 16, 1
    %s1907 = scalar_lea.vmem %s1, 204
    %1908 = vst [vmem:[%s1907] sm:%s1906] %v1904
    %s1909 = scalar_lea.vmem [#allocation0], 416
    %v1910 = vld [vmem:[%s1909] sm:%s1598]
    %s1912 = ssub.s32 16, 1
    %s1913 = scalar_lea.vmem %s1, 208
    %1914 = vst [vmem:[%s1913] sm:%s1912] %v1910
    %s1915 = scalar_lea.vmem [#allocation0], 424
    %v1916 = vld [vmem:[%s1915] sm:%s1598]
    %s1918 = ssub.s32 16, 1
    %s1919 = scalar_lea.vmem %s1, 212
    %1920 = vst [vmem:[%s1919] sm:%s1918] %v1916
    %s1921 = scalar_lea.vmem [#allocation0], 432
    %v1922 = vld [vmem:[%s1921] sm:%s1598]
    %s1924 = ssub.s32 16, 1
    %s1925 = scalar_lea.vmem %s1, 216
    %1926 = vst [vmem:[%s1925] sm:%s1924] %v1922
    %s1927 = scalar_lea.vmem [#allocation0], 440
    %v1928 = vld [vmem:[%s1927] sm:%s1598]
    %s1930 = ssub.s32 16, 1
    %s1931 = scalar_lea.vmem %s1, 220
    %1932 = vst [vmem:[%s1931] sm:%s1930] %v1928
    %s1933 = scalar_lea.vmem [#allocation0], 448
    %v1934 = vld [vmem:[%s1933] sm:%s1598]
    %s1936 = ssub.s32 16, 1
    %s1937 = scalar_lea.vmem %s1, 224
    %1938 = vst [vmem:[%s1937] sm:%s1936] %v1934
    %s1939 = scalar_lea.vmem [#allocation0], 456
    %v1940 = vld [vmem:[%s1939] sm:%s1598]
    %s1942 = ssub.s32 16, 1
    %s1943 = scalar_lea.vmem %s1, 228
    %1944 = vst [vmem:[%s1943] sm:%s1942] %v1940
    %s1945 = scalar_lea.vmem [#allocation0], 464
    %v1946 = vld [vmem:[%s1945] sm:%s1598]
    %s1948 = ssub.s32 16, 1
    %s1949 = scalar_lea.vmem %s1, 232
    %1950 = vst [vmem:[%s1949] sm:%s1948] %v1946
    %s1951 = scalar_lea.vmem [#allocation0], 472
    %v1952 = vld [vmem:[%s1951] sm:%s1598]
    %s1954 = ssub.s32 16, 1
    %s1955 = scalar_lea.vmem %s1, 236
    %1956 = vst [vmem:[%s1955] sm:%s1954] %v1952
    %s1957 = scalar_lea.vmem [#allocation0], 480
    %v1958 = vld [vmem:[%s1957] sm:%s1598]
    %s1960 = ssub.s32 16, 1
    %s1961 = scalar_lea.vmem %s1, 240
    %1962 = vst [vmem:[%s1961] sm:%s1960] %v1958
    %s1963 = scalar_lea.vmem [#allocation0], 488
    %v1964 = vld [vmem:[%s1963] sm:%s1598]
    %s1966 = ssub.s32 16, 1
    %s1967 = scalar_lea.vmem %s1, 244
    %1968 = vst [vmem:[%s1967] sm:%s1966] %v1964
    %s1969 = scalar_lea.vmem [#allocation0], 496
    %v1970 = vld [vmem:[%s1969] sm:%s1598]
    %s1972 = ssub.s32 16, 1
    %s1973 = scalar_lea.vmem %s1, 248
    %1974 = vst [vmem:[%s1973] sm:%s1972] %v1970
    %s1975 = scalar_lea.vmem [#allocation0], 504
    %v1976 = vld [vmem:[%s1975] sm:%s1598]
    %s1978 = ssub.s32 16, 1
    %s1979 = scalar_lea.vmem %s1, 252
    %1980 = vst [vmem:[%s1979] sm:%s1978] %v1976
    %s1981 = scalar_lea.vmem [#allocation0], 512
    %v1982 = vld [vmem:[%s1981] sm:%s1598]
    %s1984 = ssub.s32 16, 1
    %s1985 = scalar_lea.vmem %s1, 256
    %1986 = vst [vmem:[%s1985] sm:%s1984] %v1982
    %s1987 = scalar_lea.vmem [#allocation0], 520
    %v1988 = vld [vmem:[%s1987] sm:%s1598]
    %s1990 = ssub.s32 16, 1
    %s1991 = scalar_lea.vmem %s1, 260
    %1992 = vst [vmem:[%s1991] sm:%s1990] %v1988
    %s1993 = scalar_lea.vmem [#allocation0], 528
    %v1994 = vld [vmem:[%s1993] sm:%s1598]
    %s1996 = ssub.s32 16, 1
    %s1997 = scalar_lea.vmem %s1, 264
    %1998 = vst [vmem:[%s1997] sm:%s1996] %v1994
    %s1999 = scalar_lea.vmem [#allocation0], 536
    %v2000 = vld [vmem:[%s1999] sm:%s1598]
    %s2002 = ssub.s32 16, 1
    %s2003 = scalar_lea.vmem %s1, 268
    %2004 = vst [vmem:[%s2003] sm:%s2002] %v2000
    %s2005 = scalar_lea.vmem [#allocation0], 544
    %v2006 = vld [vmem:[%s2005] sm:%s1598]
    %s2008 = ssub.s32 16, 1
    %s2009 = scalar_lea.vmem %s1, 272
    %2010 = vst [vmem:[%s2009] sm:%s2008] %v2006
    %s2011 = scalar_lea.vmem [#allocation0], 552
    %v2012 = vld [vmem:[%s2011] sm:%s1598]
    %s2014 = ssub.s32 16, 1
    %s2015 = scalar_lea.vmem %s1, 276
    %2016 = vst [vmem:[%s2015] sm:%s2014] %v2012
    %s2017 = scalar_lea.vmem [#allocation0], 560
    %v2018 = vld [vmem:[%s2017] sm:%s1598]
    %s2020 = ssub.s32 16, 1
    %s2021 = scalar_lea.vmem %s1, 280
    %2022 = vst [vmem:[%s2021] sm:%s2020] %v2018
    %s2023 = scalar_lea.vmem [#allocation0], 568
    %v2024 = vld [vmem:[%s2023] sm:%s1598]
    %s2026 = ssub.s32 16, 1
    %s2027 = scalar_lea.vmem %s1, 284
    %2028 = vst [vmem:[%s2027] sm:%s2026] %v2024
    %s2029 = scalar_lea.vmem [#allocation0], 576
    %v2030 = vld [vmem:[%s2029] sm:%s1598]
    %s2032 = ssub.s32 16, 1
    %s2033 = scalar_lea.vmem %s1, 288
    %2034 = vst [vmem:[%s2033] sm:%s2032] %v2030
    %s2035 = scalar_lea.vmem [#allocation0], 584
    %v2036 = vld [vmem:[%s2035] sm:%s1598]
    %s2038 = ssub.s32 16, 1
    %s2039 = scalar_lea.vmem %s1, 292
    %2040 = vst [vmem:[%s2039] sm:%s2038] %v2036
    %s2041 = scalar_lea.vmem [#allocation0], 592
    %v2042 = vld [vmem:[%s2041] sm:%s1598]
    %s2044 = ssub.s32 16, 1
    %s2045 = scalar_lea.vmem %s1, 296
    %2046 = vst [vmem:[%s2045] sm:%s2044] %v2042
    %s2047 = scalar_lea.vmem [#allocation0], 600
    %v2048 = vld [vmem:[%s2047] sm:%s1598]
    %s2050 = ssub.s32 16, 1
    %s2051 = scalar_lea.vmem %s1, 300
    %2052 = vst [vmem:[%s2051] sm:%s2050] %v2048
    %s2053 = scalar_lea.vmem [#allocation0], 608
    %v2054 = vld [vmem:[%s2053] sm:%s1598]
    %s2056 = ssub.s32 16, 1
    %s2057 = scalar_lea.vmem %s1, 304
    %2058 = vst [vmem:[%s2057] sm:%s2056] %v2054
    %s2059 = scalar_lea.vmem [#allocation0], 616
    %v2060 = vld [vmem:[%s2059] sm:%s1598]
    %s2062 = ssub.s32 16, 1
    %s2063 = scalar_lea.vmem %s1, 308
    %2064 = vst [vmem:[%s2063] sm:%s2062] %v2060
    %s2065 = scalar_lea.vmem [#allocation0], 624
    %v2066 = vld [vmem:[%s2065] sm:%s1598]
    %s2068 = ssub.s32 16, 1
    %s2069 = scalar_lea.vmem %s1, 312
    %2070 = vst [vmem:[%s2069] sm:%s2068] %v2066
    %s2071 = scalar_lea.vmem [#allocation0], 632
    %v2072 = vld [vmem:[%s2071] sm:%s1598]
    %s2074 = ssub.s32 16, 1
    %s2075 = scalar_lea.vmem %s1, 316
    %2076 = vst [vmem:[%s2075] sm:%s2074] %v2072
    %s2077 = scalar_lea.vmem [#allocation0], 640
    %v2078 = vld [vmem:[%s2077] sm:%s1598]
    %s2080 = ssub.s32 16, 1
    %s2081 = scalar_lea.vmem %s1, 320
    %2082 = vst [vmem:[%s2081] sm:%s2080] %v2078
    %s2083 = scalar_lea.vmem [#allocation0], 648
    %v2084 = vld [vmem:[%s2083] sm:%s1598]
    %s2086 = ssub.s32 16, 1
    %s2087 = scalar_lea.vmem %s1, 324
    %2088 = vst [vmem:[%s2087] sm:%s2086] %v2084
    %s2089 = scalar_lea.vmem [#allocation0], 656
    %v2090 = vld [vmem:[%s2089] sm:%s1598]
    %s2092 = ssub.s32 16, 1
    %s2093 = scalar_lea.vmem %s1, 328
    %2094 = vst [vmem:[%s2093] sm:%s2092] %v2090
    %s2095 = scalar_lea.vmem [#allocation0], 664
    %v2096 = vld [vmem:[%s2095] sm:%s1598]
    %s2098 = ssub.s32 16, 1
    %s2099 = scalar_lea.vmem %s1, 332
    %2100 = vst [vmem:[%s2099] sm:%s2098] %v2096
    %s2101 = scalar_lea.vmem [#allocation0], 672
    %v2102 = vld [vmem:[%s2101] sm:%s1598]
    %s2104 = ssub.s32 16, 1
    %s2105 = scalar_lea.vmem %s1, 336
    %2106 = vst [vmem:[%s2105] sm:%s2104] %v2102
    %s2107 = scalar_lea.vmem [#allocation0], 680
    %v2108 = vld [vmem:[%s2107] sm:%s1598]
    %s2110 = ssub.s32 16, 1
    %s2111 = scalar_lea.vmem %s1, 340
    %2112 = vst [vmem:[%s2111] sm:%s2110] %v2108
    %s2113 = scalar_lea.vmem [#allocation0], 688
    %v2114 = vld [vmem:[%s2113] sm:%s1598]
    %s2116 = ssub.s32 16, 1
    %s2117 = scalar_lea.vmem %s1, 344
    %2118 = vst [vmem:[%s2117] sm:%s2116] %v2114
    %s2119 = scalar_lea.vmem [#allocation0], 696
    %v2120 = vld [vmem:[%s2119] sm:%s1598]
    %s2122 = ssub.s32 16, 1
    %s2123 = scalar_lea.vmem %s1, 348
    %2124 = vst [vmem:[%s2123] sm:%s2122] %v2120
    %s2125 = scalar_lea.vmem [#allocation0], 704
    %v2126 = vld [vmem:[%s2125] sm:%s1598]
    %s2128 = ssub.s32 16, 1
    %s2129 = scalar_lea.vmem %s1, 352
    %2130 = vst [vmem:[%s2129] sm:%s2128] %v2126
    %s2131 = scalar_lea.vmem [#allocation0], 712
    %v2132 = vld [vmem:[%s2131] sm:%s1598]
    %s2134 = ssub.s32 16, 1
    %s2135 = scalar_lea.vmem %s1, 356
    %2136 = vst [vmem:[%s2135] sm:%s2134] %v2132
    %s2137 = scalar_lea.vmem [#allocation0], 720
    %v2138 = vld [vmem:[%s2137] sm:%s1598]
    %s2140 = ssub.s32 16, 1
    %s2141 = scalar_lea.vmem %s1, 360
    %2142 = vst [vmem:[%s2141] sm:%s2140] %v2138
    %s2143 = scalar_lea.vmem [#allocation0], 728
    %v2144 = vld [vmem:[%s2143] sm:%s1598]
    %s2146 = ssub.s32 16, 1
    %s2147 = scalar_lea.vmem %s1, 364
    %2148 = vst [vmem:[%s2147] sm:%s2146] %v2144
    %s2149 = scalar_lea.vmem [#allocation0], 736
    %v2150 = vld [vmem:[%s2149] sm:%s1598]
    %s2152 = ssub.s32 16, 1
    %s2153 = scalar_lea.vmem %s1, 368
    %2154 = vst [vmem:[%s2153] sm:%s2152] %v2150
    %s2155 = scalar_lea.vmem [#allocation0], 744
    %v2156 = vld [vmem:[%s2155] sm:%s1598]
    %s2158 = ssub.s32 16, 1
    %s2159 = scalar_lea.vmem %s1, 372
    %2160 = vst [vmem:[%s2159] sm:%s2158] %v2156
    %s2161 = scalar_lea.vmem [#allocation0], 752
    %v2162 = vld [vmem:[%s2161] sm:%s1598]
    %s2164 = ssub.s32 16, 1
    %s2165 = scalar_lea.vmem %s1, 376
    %2166 = vst [vmem:[%s2165] sm:%s2164] %v2162
    %s2167 = scalar_lea.vmem [#allocation0], 760
    %v2168 = vld [vmem:[%s2167] sm:%s1598]
    %s2170 = ssub.s32 16, 1
    %s2171 = scalar_lea.vmem %s1, 380
    %2172 = vst [vmem:[%s2171] sm:%s2170] %v2168
    %s2173 = scalar_lea.vmem [#allocation0], 768
    %v2174 = vld [vmem:[%s2173] sm:%s1598]
    %s2176 = ssub.s32 16, 1
    %s2177 = scalar_lea.vmem %s1, 384
    %2178 = vst [vmem:[%s2177] sm:%s2176] %v2174
    %s2179 = scalar_lea.vmem [#allocation0], 776
    %v2180 = vld [vmem:[%s2179] sm:%s1598]
    %s2182 = ssub.s32 16, 1
    %s2183 = scalar_lea.vmem %s1, 388
    %2184 = vst [vmem:[%s2183] sm:%s2182] %v2180
    %s2185 = scalar_lea.vmem [#allocation0], 784
    %v2186 = vld [vmem:[%s2185] sm:%s1598]
    %s2188 = ssub.s32 16, 1
    %s2189 = scalar_lea.vmem %s1, 392
    %2190 = vst [vmem:[%s2189] sm:%s2188] %v2186
    %s2191 = scalar_lea.vmem [#allocation0], 792
    %v2192 = vld [vmem:[%s2191] sm:%s1598]
    %s2194 = ssub.s32 16, 1
    %s2195 = scalar_lea.vmem %s1, 396
    %2196 = vst [vmem:[%s2195] sm:%s2194] %v2192
    %s2197 = scalar_lea.vmem [#allocation0], 800
    %v2198 = vld [vmem:[%s2197] sm:%s1598]
    %s2200 = ssub.s32 16, 1
    %s2201 = scalar_lea.vmem %s1, 400
    %2202 = vst [vmem:[%s2201] sm:%s2200] %v2198
    %s2203 = scalar_lea.vmem [#allocation0], 808
    %v2204 = vld [vmem:[%s2203] sm:%s1598]
    %s2206 = ssub.s32 16, 1
    %s2207 = scalar_lea.vmem %s1, 404
    %2208 = vst [vmem:[%s2207] sm:%s2206] %v2204
    %s2209 = scalar_lea.vmem [#allocation0], 816
    %v2210 = vld [vmem:[%s2209] sm:%s1598]
    %s2212 = ssub.s32 16, 1
    %s2213 = scalar_lea.vmem %s1, 408
    %2214 = vst [vmem:[%s2213] sm:%s2212] %v2210
    %s2215 = scalar_lea.vmem [#allocation0], 824
    %v2216 = vld [vmem:[%s2215] sm:%s1598]
    %s2218 = ssub.s32 16, 1
    %s2219 = scalar_lea.vmem %s1, 412
    %2220 = vst [vmem:[%s2219] sm:%s2218] %v2216
    %s2221 = scalar_lea.vmem [#allocation0], 832
    %v2222 = vld [vmem:[%s2221] sm:%s1598]
    %s2224 = ssub.s32 16, 1
    %s2225 = scalar_lea.vmem %s1, 416
    %2226 = vst [vmem:[%s2225] sm:%s2224] %v2222
    %s2227 = scalar_lea.vmem [#allocation0], 840
    %v2228 = vld [vmem:[%s2227] sm:%s1598]
    %s2230 = ssub.s32 16, 1
    %s2231 = scalar_lea.vmem %s1, 420
    %2232 = vst [vmem:[%s2231] sm:%s2230] %v2228
    %s2233 = scalar_lea.vmem [#allocation0], 848
    %v2234 = vld [vmem:[%s2233] sm:%s1598]
    %s2236 = ssub.s32 16, 1
    %s2237 = scalar_lea.vmem %s1, 424
    %2238 = vst [vmem:[%s2237] sm:%s2236] %v2234
    %s2239 = scalar_lea.vmem [#allocation0], 856
    %v2240 = vld [vmem:[%s2239] sm:%s1598]
    %s2242 = ssub.s32 16, 1
    %s2243 = scalar_lea.vmem %s1, 428
    %2244 = vst [vmem:[%s2243] sm:%s2242] %v2240
    %s2245 = scalar_lea.vmem [#allocation0], 864
    %v2246 = vld [vmem:[%s2245] sm:%s1598]
    %s2248 = ssub.s32 16, 1
    %s2249 = scalar_lea.vmem %s1, 432
    %2250 = vst [vmem:[%s2249] sm:%s2248] %v2246
    %s2251 = scalar_lea.vmem [#allocation0], 872
    %v2252 = vld [vmem:[%s2251] sm:%s1598]
    %s2254 = ssub.s32 16, 1
    %s2255 = scalar_lea.vmem %s1, 436
    %2256 = vst [vmem:[%s2255] sm:%s2254] %v2252
    %s2257 = scalar_lea.vmem [#allocation0], 880
    %v2258 = vld [vmem:[%s2257] sm:%s1598]
    %s2260 = ssub.s32 16, 1
    %s2261 = scalar_lea.vmem %s1, 440
    %2262 = vst [vmem:[%s2261] sm:%s2260] %v2258
    %s2263 = scalar_lea.vmem [#allocation0], 888
    %v2264 = vld [vmem:[%s2263] sm:%s1598]
    %s2266 = ssub.s32 16, 1
    %s2267 = scalar_lea.vmem %s1, 444
    %2268 = vst [vmem:[%s2267] sm:%s2266] %v2264
    %s2269 = scalar_lea.vmem [#allocation0], 896
    %v2270 = vld [vmem:[%s2269] sm:%s1598]
    %s2272 = ssub.s32 16, 1
    %s2273 = scalar_lea.vmem %s1, 448
    %2274 = vst [vmem:[%s2273] sm:%s2272] %v2270
    %s2275 = scalar_lea.vmem [#allocation0], 904
    %v2276 = vld [vmem:[%s2275] sm:%s1598]
    %s2278 = ssub.s32 16, 1
    %s2279 = scalar_lea.vmem %s1, 452
    %2280 = vst [vmem:[%s2279] sm:%s2278] %v2276
    %s2281 = scalar_lea.vmem [#allocation0], 912
    %v2282 = vld [vmem:[%s2281] sm:%s1598]
    %s2284 = ssub.s32 16, 1
    %s2285 = scalar_lea.vmem %s1, 456
    %2286 = vst [vmem:[%s2285] sm:%s2284] %v2282
    %s2287 = scalar_lea.vmem [#allocation0], 920
    %v2288 = vld [vmem:[%s2287] sm:%s1598]
    %s2290 = ssub.s32 16, 1
    %s2291 = scalar_lea.vmem %s1, 460
    %2292 = vst [vmem:[%s2291] sm:%s2290] %v2288
    %s2293 = scalar_lea.vmem [#allocation0], 928
    %v2294 = vld [vmem:[%s2293] sm:%s1598]
    %s2296 = ssub.s32 16, 1
    %s2297 = scalar_lea.vmem %s1, 464
    %2298 = vst [vmem:[%s2297] sm:%s2296] %v2294
    %s2299 = scalar_lea.vmem [#allocation0], 936
    %v2300 = vld [vmem:[%s2299] sm:%s1598]
    %s2302 = ssub.s32 16, 1
    %s2303 = scalar_lea.vmem %s1, 468
    %2304 = vst [vmem:[%s2303] sm:%s2302] %v2300
    %s2305 = scalar_lea.vmem [#allocation0], 944
    %v2306 = vld [vmem:[%s2305] sm:%s1598]
    %s2308 = ssub.s32 16, 1
    %s2309 = scalar_lea.vmem %s1, 472
    %2310 = vst [vmem:[%s2309] sm:%s2308] %v2306
    %s2311 = scalar_lea.vmem [#allocation0], 952
    %v2312 = vld [vmem:[%s2311] sm:%s1598]
    %s2314 = ssub.s32 16, 1
    %s2315 = scalar_lea.vmem %s1, 476
    %2316 = vst [vmem:[%s2315] sm:%s2314] %v2312
    %s2317 = scalar_lea.vmem [#allocation0], 960
    %v2318 = vld [vmem:[%s2317] sm:%s1598]
    %s2320 = ssub.s32 16, 1
    %s2321 = scalar_lea.vmem %s1, 480
    %2322 = vst [vmem:[%s2321] sm:%s2320] %v2318
    %s2323 = scalar_lea.vmem [#allocation0], 968
    %v2324 = vld [vmem:[%s2323] sm:%s1598]
    %s2326 = ssub.s32 16, 1
    %s2327 = scalar_lea.vmem %s1, 484
    %2328 = vst [vmem:[%s2327] sm:%s2326] %v2324
    %s2329 = scalar_lea.vmem [#allocation0], 976
    %v2330 = vld [vmem:[%s2329] sm:%s1598]
    %s2332 = ssub.s32 16, 1
    %s2333 = scalar_lea.vmem %s1, 488
    %2334 = vst [vmem:[%s2333] sm:%s2332] %v2330
    %s2335 = scalar_lea.vmem [#allocation0], 984
    %v2336 = vld [vmem:[%s2335] sm:%s1598]
    %s2338 = ssub.s32 16, 1
    %s2339 = scalar_lea.vmem %s1, 492
    %2340 = vst [vmem:[%s2339] sm:%s2338] %v2336
    %s2341 = scalar_lea.vmem [#allocation0], 992
    %v2342 = vld [vmem:[%s2341] sm:%s1598]
    %s2344 = ssub.s32 16, 1
    %s2345 = scalar_lea.vmem %s1, 496
    %2346 = vst [vmem:[%s2345] sm:%s2344] %v2342
    %s2347 = scalar_lea.vmem [#allocation0], 1000
    %v2348 = vld [vmem:[%s2347] sm:%s1598]
    %s2350 = ssub.s32 16, 1
    %s2351 = scalar_lea.vmem %s1, 500
    %2352 = vst [vmem:[%s2351] sm:%s2350] %v2348
    %s2353 = scalar_lea.vmem [#allocation0], 1008
    %v2354 = vld [vmem:[%s2353] sm:%s1598]
    %s2356 = ssub.s32 16, 1
    %s2357 = scalar_lea.vmem %s1, 504
    %2358 = vst [vmem:[%s2357] sm:%s2356] %v2354
    %s2359 = scalar_lea.vmem [#allocation0], 1016
    %v2360 = vld [vmem:[%s2359] sm:%s1598]
    %s2362 = ssub.s32 16, 1
    %s2363 = scalar_lea.vmem %s1, 508
    %2364 = vst [vmem:[%s2363] sm:%s2362] %v2360
    %s2365 = scalar_lea.vmem [#allocation0], 1024
    %v2366 = vld [vmem:[%s2365] sm:%s1598]
    %s2368 = ssub.s32 16, 1
    %s2369 = scalar_lea.vmem %s1, 512
    %2370 = vst [vmem:[%s2369] sm:%s2368] %v2366
    %s2371 = scalar_lea.vmem [#allocation0], 1032
    %v2372 = vld [vmem:[%s2371] sm:%s1598]
    %s2374 = ssub.s32 16, 1
    %s2375 = scalar_lea.vmem %s1, 516
    %2376 = vst [vmem:[%s2375] sm:%s2374] %v2372
    %s2377 = scalar_lea.vmem [#allocation0], 1040
    %v2378 = vld [vmem:[%s2377] sm:%s1598]
    %s2380 = ssub.s32 16, 1
    %s2381 = scalar_lea.vmem %s1, 520
    %2382 = vst [vmem:[%s2381] sm:%s2380] %v2378
    %s2383 = scalar_lea.vmem [#allocation0], 1048
    %v2384 = vld [vmem:[%s2383] sm:%s1598]
    %s2386 = ssub.s32 16, 1
    %s2387 = scalar_lea.vmem %s1, 524
    %2388 = vst [vmem:[%s2387] sm:%s2386] %v2384
    %s2389 = scalar_lea.vmem [#allocation0], 1056
    %v2390 = vld [vmem:[%s2389] sm:%s1598]
    %s2392 = ssub.s32 16, 1
    %s2393 = scalar_lea.vmem %s1, 528
    %2394 = vst [vmem:[%s2393] sm:%s2392] %v2390
    %s2395 = scalar_lea.vmem [#allocation0], 1064
    %v2396 = vld [vmem:[%s2395] sm:%s1598]
    %s2398 = ssub.s32 16, 1
    %s2399 = scalar_lea.vmem %s1, 532
    %2400 = vst [vmem:[%s2399] sm:%s2398] %v2396
    %s2401 = scalar_lea.vmem [#allocation0], 1072
    %v2402 = vld [vmem:[%s2401] sm:%s1598]
    %s2404 = ssub.s32 16, 1
    %s2405 = scalar_lea.vmem %s1, 536
    %2406 = vst [vmem:[%s2405] sm:%s2404] %v2402
    %s2407 = scalar_lea.vmem [#allocation0], 1080
    %v2408 = vld [vmem:[%s2407] sm:%s1598]
    %s2410 = ssub.s32 16, 1
    %s2411 = scalar_lea.vmem %s1, 540
    %2412 = vst [vmem:[%s2411] sm:%s2410] %v2408
    %s2413 = scalar_lea.vmem [#allocation0], 1088
    %v2414 = vld [vmem:[%s2413] sm:%s1598]
    %s2416 = ssub.s32 16, 1
    %s2417 = scalar_lea.vmem %s1, 544
    %2418 = vst [vmem:[%s2417] sm:%s2416] %v2414
    %s2419 = scalar_lea.vmem [#allocation0], 1096
    %v2420 = vld [vmem:[%s2419] sm:%s1598]
    %s2422 = ssub.s32 16, 1
    %s2423 = scalar_lea.vmem %s1, 548
    %2424 = vst [vmem:[%s2423] sm:%s2422] %v2420
    %s2425 = scalar_lea.vmem [#allocation0], 1104
    %v2426 = vld [vmem:[%s2425] sm:%s1598]
    %s2428 = ssub.s32 16, 1
    %s2429 = scalar_lea.vmem %s1, 552
    %2430 = vst [vmem:[%s2429] sm:%s2428] %v2426
    %s2431 = scalar_lea.vmem [#allocation0], 1112
    %v2432 = vld [vmem:[%s2431] sm:%s1598]
    %s2434 = ssub.s32 16, 1
    %s2435 = scalar_lea.vmem %s1, 556
    %2436 = vst [vmem:[%s2435] sm:%s2434] %v2432
    %s2437 = scalar_lea.vmem [#allocation0], 1120
    %v2438 = vld [vmem:[%s2437] sm:%s1598]
    %s2440 = ssub.s32 16, 1
    %s2441 = scalar_lea.vmem %s1, 560
    %2442 = vst [vmem:[%s2441] sm:%s2440] %v2438
    %s2443 = scalar_lea.vmem [#allocation0], 1128
    %v2444 = vld [vmem:[%s2443] sm:%s1598]
    %s2446 = ssub.s32 16, 1
    %s2447 = scalar_lea.vmem %s1, 564
    %2448 = vst [vmem:[%s2447] sm:%s2446] %v2444
    %s2449 = scalar_lea.vmem [#allocation0], 1136
    %v2450 = vld [vmem:[%s2449] sm:%s1598]
    %s2452 = ssub.s32 16, 1
    %s2453 = scalar_lea.vmem %s1, 568
    %2454 = vst [vmem:[%s2453] sm:%s2452] %v2450
    %s2455 = scalar_lea.vmem [#allocation0], 1144
    %v2456 = vld [vmem:[%s2455] sm:%s1598]
    %s2458 = ssub.s32 16, 1
    %s2459 = scalar_lea.vmem %s1, 572
    %2460 = vst [vmem:[%s2459] sm:%s2458] %v2456
    %s2461 = scalar_lea.vmem [#allocation0], 1152
    %v2462 = vld [vmem:[%s2461] sm:%s1598]
    %s2464 = ssub.s32 16, 1
    %s2465 = scalar_lea.vmem %s1, 576
    %2466 = vst [vmem:[%s2465] sm:%s2464] %v2462
    %s2467 = scalar_lea.vmem [#allocation0], 1160
    %v2468 = vld [vmem:[%s2467] sm:%s1598]
    %s2470 = ssub.s32 16, 1
    %s2471 = scalar_lea.vmem %s1, 580
    %2472 = vst [vmem:[%s2471] sm:%s2470] %v2468
    %s2473 = scalar_lea.vmem [#allocation0], 1168
    %v2474 = vld [vmem:[%s2473] sm:%s1598]
    %s2476 = ssub.s32 16, 1
    %s2477 = scalar_lea.vmem %s1, 584
    %2478 = vst [vmem:[%s2477] sm:%s2476] %v2474
    %s2479 = scalar_lea.vmem [#allocation0], 1176
    %v2480 = vld [vmem:[%s2479] sm:%s1598]
    %s2482 = ssub.s32 16, 1
    %s2483 = scalar_lea.vmem %s1, 588
    %2484 = vst [vmem:[%s2483] sm:%s2482] %v2480
    %s2485 = scalar_lea.vmem [#allocation0], 1184
    %v2486 = vld [vmem:[%s2485] sm:%s1598]
    %s2488 = ssub.s32 16, 1
    %s2489 = scalar_lea.vmem %s1, 592
    %2490 = vst [vmem:[%s2489] sm:%s2488] %v2486
    %s2491 = scalar_lea.vmem [#allocation0], 1192
    %v2492 = vld [vmem:[%s2491] sm:%s1598]
    %s2494 = ssub.s32 16, 1
    %s2495 = scalar_lea.vmem %s1, 596
    %2496 = vst [vmem:[%s2495] sm:%s2494] %v2492
    %s2497 = scalar_lea.vmem [#allocation0], 1200
    %v2498 = vld [vmem:[%s2497] sm:%s1598]
    %s2500 = ssub.s32 16, 1
    %s2501 = scalar_lea.vmem %s1, 600
    %2502 = vst [vmem:[%s2501] sm:%s2500] %v2498
    %s2503 = scalar_lea.vmem [#allocation0], 1208
    %v2504 = vld [vmem:[%s2503] sm:%s1598]
    %s2506 = ssub.s32 16, 1
    %s2507 = scalar_lea.vmem %s1, 604
    %2508 = vst [vmem:[%s2507] sm:%s2506] %v2504
    %s2509 = scalar_lea.vmem [#allocation0], 1216
    %v2510 = vld [vmem:[%s2509] sm:%s1598]
    %s2512 = ssub.s32 16, 1
    %s2513 = scalar_lea.vmem %s1, 608
    %2514 = vst [vmem:[%s2513] sm:%s2512] %v2510
    %s2515 = scalar_lea.vmem [#allocation0], 1224
    %v2516 = vld [vmem:[%s2515] sm:%s1598]
    %s2518 = ssub.s32 16, 1
    %s2519 = scalar_lea.vmem %s1, 612
    %2520 = vst [vmem:[%s2519] sm:%s2518] %v2516
    %s2521 = scalar_lea.vmem [#allocation0], 1232
    %v2522 = vld [vmem:[%s2521] sm:%s1598]
    %s2524 = ssub.s32 16, 1
    %s2525 = scalar_lea.vmem %s1, 616
    %2526 = vst [vmem:[%s2525] sm:%s2524] %v2522
    %s2527 = scalar_lea.vmem [#allocation0], 1240
    %v2528 = vld [vmem:[%s2527] sm:%s1598]
    %s2530 = ssub.s32 16, 1
    %s2531 = scalar_lea.vmem %s1, 620
    %2532 = vst [vmem:[%s2531] sm:%s2530] %v2528
    %s2533 = scalar_lea.vmem [#allocation0], 1248
    %v2534 = vld [vmem:[%s2533] sm:%s1598]
    %s2536 = ssub.s32 16, 1
    %s2537 = scalar_lea.vmem %s1, 624
    %2538 = vst [vmem:[%s2537] sm:%s2536] %v2534
    %s2539 = scalar_lea.vmem [#allocation0], 1256
    %v2540 = vld [vmem:[%s2539] sm:%s1598]
    %s2542 = ssub.s32 16, 1
    %s2543 = scalar_lea.vmem %s1, 628
    %2544 = vst [vmem:[%s2543] sm:%s2542] %v2540
    %s2545 = scalar_lea.vmem [#allocation0], 1264
    %v2546 = vld [vmem:[%s2545] sm:%s1598]
    %s2548 = ssub.s32 16, 1
    %s2549 = scalar_lea.vmem %s1, 632
    %2550 = vst [vmem:[%s2549] sm:%s2548] %v2546
    %s2551 = scalar_lea.vmem [#allocation0], 1272
    %v2552 = vld [vmem:[%s2551] sm:%s1598]
    %s2554 = ssub.s32 16, 1
    %s2555 = scalar_lea.vmem %s1, 636
    %2556 = vst [vmem:[%s2555] sm:%s2554] %v2552
    %s2557 = scalar_lea.vmem [#allocation0], 1280
    %v2558 = vld [vmem:[%s2557] sm:%s1598]
    %s2560 = ssub.s32 16, 1
    %s2561 = scalar_lea.vmem %s1, 640
    %2562 = vst [vmem:[%s2561] sm:%s2560] %v2558
    %s2563 = scalar_lea.vmem [#allocation0], 1288
    %v2564 = vld [vmem:[%s2563] sm:%s1598]
    %s2566 = ssub.s32 16, 1
    %s2567 = scalar_lea.vmem %s1, 644
    %2568 = vst [vmem:[%s2567] sm:%s2566] %v2564
    %s2569 = scalar_lea.vmem [#allocation0], 1296
    %v2570 = vld [vmem:[%s2569] sm:%s1598]
    %s2572 = ssub.s32 16, 1
    %s2573 = scalar_lea.vmem %s1, 648
    %2574 = vst [vmem:[%s2573] sm:%s2572] %v2570
    %s2575 = scalar_lea.vmem [#allocation0], 1304
    %v2576 = vld [vmem:[%s2575] sm:%s1598]
    %s2578 = ssub.s32 16, 1
    %s2579 = scalar_lea.vmem %s1, 652
    %2580 = vst [vmem:[%s2579] sm:%s2578] %v2576
    %s2581 = scalar_lea.vmem [#allocation0], 1312
    %v2582 = vld [vmem:[%s2581] sm:%s1598]
    %s2584 = ssub.s32 16, 1
    %s2585 = scalar_lea.vmem %s1, 656
    %2586 = vst [vmem:[%s2585] sm:%s2584] %v2582
    %s2587 = scalar_lea.vmem [#allocation0], 1320
    %v2588 = vld [vmem:[%s2587] sm:%s1598]
    %s2590 = ssub.s32 16, 1
    %s2591 = scalar_lea.vmem %s1, 660
    %2592 = vst [vmem:[%s2591] sm:%s2590] %v2588
    %s2593 = scalar_lea.vmem [#allocation0], 1328
    %v2594 = vld [vmem:[%s2593] sm:%s1598]
    %s2596 = ssub.s32 16, 1
    %s2597 = scalar_lea.vmem %s1, 664
    %2598 = vst [vmem:[%s2597] sm:%s2596] %v2594
    %s2599 = scalar_lea.vmem [#allocation0], 1336
    %v2600 = vld [vmem:[%s2599] sm:%s1598]
    %s2602 = ssub.s32 16, 1
    %s2603 = scalar_lea.vmem %s1, 668
    %2604 = vst [vmem:[%s2603] sm:%s2602] %v2600
    %s2605 = scalar_lea.vmem [#allocation0], 1344
    %v2606 = vld [vmem:[%s2605] sm:%s1598]
    %s2608 = ssub.s32 16, 1
    %s2609 = scalar_lea.vmem %s1, 672
    %2610 = vst [vmem:[%s2609] sm:%s2608] %v2606
    %s2611 = scalar_lea.vmem [#allocation0], 1352
    %v2612 = vld [vmem:[%s2611] sm:%s1598]
    %s2614 = ssub.s32 16, 1
    %s2615 = scalar_lea.vmem %s1, 676
    %2616 = vst [vmem:[%s2615] sm:%s2614] %v2612
    %s2617 = scalar_lea.vmem [#allocation0], 1360
    %v2618 = vld [vmem:[%s2617] sm:%s1598]
    %s2620 = ssub.s32 16, 1
    %s2621 = scalar_lea.vmem %s1, 680
    %2622 = vst [vmem:[%s2621] sm:%s2620] %v2618
    %s2623 = scalar_lea.vmem [#allocation0], 1368
    %v2624 = vld [vmem:[%s2623] sm:%s1598]
    %s2626 = ssub.s32 16, 1
    %s2627 = scalar_lea.vmem %s1, 684
    %2628 = vst [vmem:[%s2627] sm:%s2626] %v2624
    %s2629 = scalar_lea.vmem [#allocation0], 1376
    %v2630 = vld [vmem:[%s2629] sm:%s1598]
    %s2632 = ssub.s32 16, 1
    %s2633 = scalar_lea.vmem %s1, 688
    %2634 = vst [vmem:[%s2633] sm:%s2632] %v2630
    %s2635 = scalar_lea.vmem [#allocation0], 1384
    %v2636 = vld [vmem:[%s2635] sm:%s1598]
    %s2638 = ssub.s32 16, 1
    %s2639 = scalar_lea.vmem %s1, 692
    %2640 = vst [vmem:[%s2639] sm:%s2638] %v2636
    %s2641 = scalar_lea.vmem [#allocation0], 1392
    %v2642 = vld [vmem:[%s2641] sm:%s1598]
    %s2644 = ssub.s32 16, 1
    %s2645 = scalar_lea.vmem %s1, 696
    %2646 = vst [vmem:[%s2645] sm:%s2644] %v2642
    %s2647 = scalar_lea.vmem [#allocation0], 1400
    %v2648 = vld [vmem:[%s2647] sm:%s1598]
    %s2650 = ssub.s32 16, 1
    %s2651 = scalar_lea.vmem %s1, 700
    %2652 = vst [vmem:[%s2651] sm:%s2650] %v2648
    %s2653 = scalar_lea.vmem [#allocation0], 1408
    %v2654 = vld [vmem:[%s2653] sm:%s1598]
    %s2656 = ssub.s32 16, 1
    %s2657 = scalar_lea.vmem %s1, 704
    %2658 = vst [vmem:[%s2657] sm:%s2656] %v2654
    %s2659 = scalar_lea.vmem [#allocation0], 1416
    %v2660 = vld [vmem:[%s2659] sm:%s1598]
    %s2662 = ssub.s32 16, 1
    %s2663 = scalar_lea.vmem %s1, 708
    %2664 = vst [vmem:[%s2663] sm:%s2662] %v2660
    %s2665 = scalar_lea.vmem [#allocation0], 1424
    %v2666 = vld [vmem:[%s2665] sm:%s1598]
    %s2668 = ssub.s32 16, 1
    %s2669 = scalar_lea.vmem %s1, 712
    %2670 = vst [vmem:[%s2669] sm:%s2668] %v2666
    %s2671 = scalar_lea.vmem [#allocation0], 1432
    %v2672 = vld [vmem:[%s2671] sm:%s1598]
    %s2674 = ssub.s32 16, 1
    %s2675 = scalar_lea.vmem %s1, 716
    %2676 = vst [vmem:[%s2675] sm:%s2674] %v2672
    %s2677 = scalar_lea.vmem [#allocation0], 1440
    %v2678 = vld [vmem:[%s2677] sm:%s1598]
    %s2680 = ssub.s32 16, 1
    %s2681 = scalar_lea.vmem %s1, 720
    %2682 = vst [vmem:[%s2681] sm:%s2680] %v2678
    %s2683 = scalar_lea.vmem [#allocation0], 1448
    %v2684 = vld [vmem:[%s2683] sm:%s1598]
    %s2686 = ssub.s32 16, 1
    %s2687 = scalar_lea.vmem %s1, 724
    %2688 = vst [vmem:[%s2687] sm:%s2686] %v2684
    %s2689 = scalar_lea.vmem [#allocation0], 1456
    %v2690 = vld [vmem:[%s2689] sm:%s1598]
    %s2692 = ssub.s32 16, 1
    %s2693 = scalar_lea.vmem %s1, 728
    %2694 = vst [vmem:[%s2693] sm:%s2692] %v2690
    %s2695 = scalar_lea.vmem [#allocation0], 1464
    %v2696 = vld [vmem:[%s2695] sm:%s1598]
    %s2698 = ssub.s32 16, 1
    %s2699 = scalar_lea.vmem %s1, 732
    %2700 = vst [vmem:[%s2699] sm:%s2698] %v2696
    %s2701 = scalar_lea.vmem [#allocation0], 1472
    %v2702 = vld [vmem:[%s2701] sm:%s1598]
    %s2704 = ssub.s32 16, 1
    %s2705 = scalar_lea.vmem %s1, 736
    %2706 = vst [vmem:[%s2705] sm:%s2704] %v2702
    %s2707 = scalar_lea.vmem [#allocation0], 1480
    %v2708 = vld [vmem:[%s2707] sm:%s1598]
    %s2710 = ssub.s32 16, 1
    %s2711 = scalar_lea.vmem %s1, 740
    %2712 = vst [vmem:[%s2711] sm:%s2710] %v2708
    %s2713 = scalar_lea.vmem [#allocation0], 1488
    %v2714 = vld [vmem:[%s2713] sm:%s1598]
    %s2716 = ssub.s32 16, 1
    %s2717 = scalar_lea.vmem %s1, 744
    %2718 = vst [vmem:[%s2717] sm:%s2716] %v2714
    %s2719 = scalar_lea.vmem [#allocation0], 1496
    %v2720 = vld [vmem:[%s2719] sm:%s1598]
    %s2722 = ssub.s32 16, 1
    %s2723 = scalar_lea.vmem %s1, 748
    %2724 = vst [vmem:[%s2723] sm:%s2722] %v2720
    %s2725 = scalar_lea.vmem [#allocation0], 1504
    %v2726 = vld [vmem:[%s2725] sm:%s1598]
    %s2728 = ssub.s32 16, 1
    %s2729 = scalar_lea.vmem %s1, 752
    %2730 = vst [vmem:[%s2729] sm:%s2728] %v2726
    %s2731 = scalar_lea.vmem [#allocation0], 1512
    %v2732 = vld [vmem:[%s2731] sm:%s1598]
    %s2734 = ssub.s32 16, 1
    %s2735 = scalar_lea.vmem %s1, 756
    %2736 = vst [vmem:[%s2735] sm:%s2734] %v2732
    %s2737 = scalar_lea.vmem [#allocation0], 1520
    %v2738 = vld [vmem:[%s2737] sm:%s1598]
    %s2740 = ssub.s32 16, 1
    %s2741 = scalar_lea.vmem %s1, 760
    %2742 = vst [vmem:[%s2741] sm:%s2740] %v2738
    %s2743 = scalar_lea.vmem [#allocation0], 1528
    %v2744 = vld [vmem:[%s2743] sm:%s1598]
    %s2746 = ssub.s32 16, 1
    %s2747 = scalar_lea.vmem %s1, 764
    %2748 = vst [vmem:[%s2747] sm:%s2746] %v2744
    %s2749 = scalar_lea.vmem [#allocation0], 1536
    %v2750 = vld [vmem:[%s2749] sm:%s1598]
    %s2752 = ssub.s32 16, 1
    %s2753 = scalar_lea.vmem %s1, 768
    %2754 = vst [vmem:[%s2753] sm:%s2752] %v2750
    %s2755 = scalar_lea.vmem [#allocation0], 1544
    %v2756 = vld [vmem:[%s2755] sm:%s1598]
    %s2758 = ssub.s32 16, 1
    %s2759 = scalar_lea.vmem %s1, 772
    %2760 = vst [vmem:[%s2759] sm:%s2758] %v2756
    %s2761 = scalar_lea.vmem [#allocation0], 1552
    %v2762 = vld [vmem:[%s2761] sm:%s1598]
    %s2764 = ssub.s32 16, 1
    %s2765 = scalar_lea.vmem %s1, 776
    %2766 = vst [vmem:[%s2765] sm:%s2764] %v2762
    %s2767 = scalar_lea.vmem [#allocation0], 1560
    %v2768 = vld [vmem:[%s2767] sm:%s1598]
    %s2770 = ssub.s32 16, 1
    %s2771 = scalar_lea.vmem %s1, 780
    %2772 = vst [vmem:[%s2771] sm:%s2770] %v2768
    %s2773 = scalar_lea.vmem [#allocation0], 1568
    %v2774 = vld [vmem:[%s2773] sm:%s1598]
    %s2776 = ssub.s32 16, 1
    %s2777 = scalar_lea.vmem %s1, 784
    %2778 = vst [vmem:[%s2777] sm:%s2776] %v2774
    %s2779 = scalar_lea.vmem [#allocation0], 1576
    %v2780 = vld [vmem:[%s2779] sm:%s1598]
    %s2782 = ssub.s32 16, 1
    %s2783 = scalar_lea.vmem %s1, 788
    %2784 = vst [vmem:[%s2783] sm:%s2782] %v2780
    %s2785 = scalar_lea.vmem [#allocation0], 1584
    %v2786 = vld [vmem:[%s2785] sm:%s1598]
    %s2788 = ssub.s32 16, 1
    %s2789 = scalar_lea.vmem %s1, 792
    %2790 = vst [vmem:[%s2789] sm:%s2788] %v2786
    %s2791 = scalar_lea.vmem [#allocation0], 1592
    %v2792 = vld [vmem:[%s2791] sm:%s1598]
    %s2794 = ssub.s32 16, 1
    %s2795 = scalar_lea.vmem %s1, 796
    %2796 = vst [vmem:[%s2795] sm:%s2794] %v2792
    %s2797 = scalar_lea.vmem [#allocation0], 1600
    %v2798 = vld [vmem:[%s2797] sm:%s1598]
    %s2800 = ssub.s32 16, 1
    %s2801 = scalar_lea.vmem %s1, 800
    %2802 = vst [vmem:[%s2801] sm:%s2800] %v2798
    %s2803 = scalar_lea.vmem [#allocation0], 1608
    %v2804 = vld [vmem:[%s2803] sm:%s1598]
    %s2806 = ssub.s32 16, 1
    %s2807 = scalar_lea.vmem %s1, 804
    %2808 = vst [vmem:[%s2807] sm:%s2806] %v2804
    %s2809 = scalar_lea.vmem [#allocation0], 1616
    %v2810 = vld [vmem:[%s2809] sm:%s1598]
    %s2812 = ssub.s32 16, 1
    %s2813 = scalar_lea.vmem %s1, 808
    %2814 = vst [vmem:[%s2813] sm:%s2812] %v2810
    %s2815 = scalar_lea.vmem [#allocation0], 1624
    %v2816 = vld [vmem:[%s2815] sm:%s1598]
    %s2818 = ssub.s32 16, 1
    %s2819 = scalar_lea.vmem %s1, 812
    %2820 = vst [vmem:[%s2819] sm:%s2818] %v2816
    %s2821 = scalar_lea.vmem [#allocation0], 1632
    %v2822 = vld [vmem:[%s2821] sm:%s1598]
    %s2824 = ssub.s32 16, 1
    %s2825 = scalar_lea.vmem %s1, 816
    %2826 = vst [vmem:[%s2825] sm:%s2824] %v2822
    %s2827 = scalar_lea.vmem [#allocation0], 1640
    %v2828 = vld [vmem:[%s2827] sm:%s1598]
    %s2830 = ssub.s32 16, 1
    %s2831 = scalar_lea.vmem %s1, 820
    %2832 = vst [vmem:[%s2831] sm:%s2830] %v2828
    %s2833 = scalar_lea.vmem [#allocation0], 1648
    %v2834 = vld [vmem:[%s2833] sm:%s1598]
    %s2836 = ssub.s32 16, 1
    %s2837 = scalar_lea.vmem %s1, 824
    %2838 = vst [vmem:[%s2837] sm:%s2836] %v2834
    %s2839 = scalar_lea.vmem [#allocation0], 1656
    %v2840 = vld [vmem:[%s2839] sm:%s1598]
    %s2842 = ssub.s32 16, 1
    %s2843 = scalar_lea.vmem %s1, 828
    %2844 = vst [vmem:[%s2843] sm:%s2842] %v2840
    %s2845 = scalar_lea.vmem [#allocation0], 1664
    %v2846 = vld [vmem:[%s2845] sm:%s1598]
    %s2848 = ssub.s32 16, 1
    %s2849 = scalar_lea.vmem %s1, 832
    %2850 = vst [vmem:[%s2849] sm:%s2848] %v2846
    %s2851 = scalar_lea.vmem [#allocation0], 1672
    %v2852 = vld [vmem:[%s2851] sm:%s1598]
    %s2854 = ssub.s32 16, 1
    %s2855 = scalar_lea.vmem %s1, 836
    %2856 = vst [vmem:[%s2855] sm:%s2854] %v2852
    %s2857 = scalar_lea.vmem [#allocation0], 1680
    %v2858 = vld [vmem:[%s2857] sm:%s1598]
    %s2860 = ssub.s32 16, 1
    %s2861 = scalar_lea.vmem %s1, 840
    %2862 = vst [vmem:[%s2861] sm:%s2860] %v2858
    %s2863 = scalar_lea.vmem [#allocation0], 1688
    %v2864 = vld [vmem:[%s2863] sm:%s1598]
    %s2866 = ssub.s32 16, 1
    %s2867 = scalar_lea.vmem %s1, 844
    %2868 = vst [vmem:[%s2867] sm:%s2866] %v2864
    %s2869 = scalar_lea.vmem [#allocation0], 1696
    %v2870 = vld [vmem:[%s2869] sm:%s1598]
    %s2872 = ssub.s32 16, 1
    %s2873 = scalar_lea.vmem %s1, 848
    %2874 = vst [vmem:[%s2873] sm:%s2872] %v2870
    %s2875 = scalar_lea.vmem [#allocation0], 1704
    %v2876 = vld [vmem:[%s2875] sm:%s1598]
    %s2878 = ssub.s32 16, 1
    %s2879 = scalar_lea.vmem %s1, 852
    %2880 = vst [vmem:[%s2879] sm:%s2878] %v2876
    %s2881 = scalar_lea.vmem [#allocation0], 1712
    %v2882 = vld [vmem:[%s2881] sm:%s1598]
    %s2884 = ssub.s32 16, 1
    %s2885 = scalar_lea.vmem %s1, 856
    %2886 = vst [vmem:[%s2885] sm:%s2884] %v2882
    %s2887 = scalar_lea.vmem [#allocation0], 1720
    %v2888 = vld [vmem:[%s2887] sm:%s1598]
    %s2890 = ssub.s32 16, 1
    %s2891 = scalar_lea.vmem %s1, 860
    %2892 = vst [vmem:[%s2891] sm:%s2890] %v2888
    %s2893 = scalar_lea.vmem [#allocation0], 1728
    %v2894 = vld [vmem:[%s2893] sm:%s1598]
    %s2896 = ssub.s32 16, 1
    %s2897 = scalar_lea.vmem %s1, 864
    %2898 = vst [vmem:[%s2897] sm:%s2896] %v2894
    %s2899 = scalar_lea.vmem [#allocation0], 1736
    %v2900 = vld [vmem:[%s2899] sm:%s1598]
    %s2902 = ssub.s32 16, 1
    %s2903 = scalar_lea.vmem %s1, 868
    %2904 = vst [vmem:[%s2903] sm:%s2902] %v2900
    %s2905 = scalar_lea.vmem [#allocation0], 1744
    %v2906 = vld [vmem:[%s2905] sm:%s1598]
    %s2908 = ssub.s32 16, 1
    %s2909 = scalar_lea.vmem %s1, 872
    %2910 = vst [vmem:[%s2909] sm:%s2908] %v2906
    %s2911 = scalar_lea.vmem [#allocation0], 1752
    %v2912 = vld [vmem:[%s2911] sm:%s1598]
    %s2914 = ssub.s32 16, 1
    %s2915 = scalar_lea.vmem %s1, 876
    %2916 = vst [vmem:[%s2915] sm:%s2914] %v2912
    %s2917 = scalar_lea.vmem [#allocation0], 1760
    %v2918 = vld [vmem:[%s2917] sm:%s1598]
    %s2920 = ssub.s32 16, 1
    %s2921 = scalar_lea.vmem %s1, 880
    %2922 = vst [vmem:[%s2921] sm:%s2920] %v2918
    %s2923 = scalar_lea.vmem [#allocation0], 1768
    %v2924 = vld [vmem:[%s2923] sm:%s1598]
    %s2926 = ssub.s32 16, 1
    %s2927 = scalar_lea.vmem %s1, 884
    %2928 = vst [vmem:[%s2927] sm:%s2926] %v2924
    %s2929 = scalar_lea.vmem [#allocation0], 1776
    %v2930 = vld [vmem:[%s2929] sm:%s1598]
    %s2932 = ssub.s32 16, 1
    %s2933 = scalar_lea.vmem %s1, 888
    %2934 = vst [vmem:[%s2933] sm:%s2932] %v2930
    %s2935 = scalar_lea.vmem [#allocation0], 1784
    %v2936 = vld [vmem:[%s2935] sm:%s1598]
    %s2938 = ssub.s32 16, 1
    %s2939 = scalar_lea.vmem %s1, 892
    %2940 = vst [vmem:[%s2939] sm:%s2938] %v2936
    %s2941 = scalar_lea.vmem [#allocation0], 1792
    %v2942 = vld [vmem:[%s2941] sm:%s1598]
    %s2944 = ssub.s32 16, 1
    %s2945 = scalar_lea.vmem %s1, 896
    %2946 = vst [vmem:[%s2945] sm:%s2944] %v2942
    %s2947 = scalar_lea.vmem [#allocation0], 1800
    %v2948 = vld [vmem:[%s2947] sm:%s1598]
    %s2950 = ssub.s32 16, 1
    %s2951 = scalar_lea.vmem %s1, 900
    %2952 = vst [vmem:[%s2951] sm:%s2950] %v2948
    %s2953 = scalar_lea.vmem [#allocation0], 1808
    %v2954 = vld [vmem:[%s2953] sm:%s1598]
    %s2956 = ssub.s32 16, 1
    %s2957 = scalar_lea.vmem %s1, 904
    %2958 = vst [vmem:[%s2957] sm:%s2956] %v2954
    %s2959 = scalar_lea.vmem [#allocation0], 1816
    %v2960 = vld [vmem:[%s2959] sm:%s1598]
    %s2962 = ssub.s32 16, 1
    %s2963 = scalar_lea.vmem %s1, 908
    %2964 = vst [vmem:[%s2963] sm:%s2962] %v2960
    %s2965 = scalar_lea.vmem [#allocation0], 1824
    %v2966 = vld [vmem:[%s2965] sm:%s1598]
    %s2968 = ssub.s32 16, 1
    %s2969 = scalar_lea.vmem %s1, 912
    %2970 = vst [vmem:[%s2969] sm:%s2968] %v2966
    %s2971 = scalar_lea.vmem [#allocation0], 1832
    %v2972 = vld [vmem:[%s2971] sm:%s1598]
    %s2974 = ssub.s32 16, 1
    %s2975 = scalar_lea.vmem %s1, 916
    %2976 = vst [vmem:[%s2975] sm:%s2974] %v2972
    %s2977 = scalar_lea.vmem [#allocation0], 1840
    %v2978 = vld [vmem:[%s2977] sm:%s1598]
    %s2980 = ssub.s32 16, 1
    %s2981 = scalar_lea.vmem %s1, 920
    %2982 = vst [vmem:[%s2981] sm:%s2980] %v2978
    %s2983 = scalar_lea.vmem [#allocation0], 1848
    %v2984 = vld [vmem:[%s2983] sm:%s1598]
    %s2986 = ssub.s32 16, 1
    %s2987 = scalar_lea.vmem %s1, 924
    %2988 = vst [vmem:[%s2987] sm:%s2986] %v2984
    %s2989 = scalar_lea.vmem [#allocation0], 1856
    %v2990 = vld [vmem:[%s2989] sm:%s1598]
    %s2992 = ssub.s32 16, 1
    %s2993 = scalar_lea.vmem %s1, 928
    %2994 = vst [vmem:[%s2993] sm:%s2992] %v2990
    %s2995 = scalar_lea.vmem [#allocation0], 1864
    %v2996 = vld [vmem:[%s2995] sm:%s1598]
    %s2998 = ssub.s32 16, 1
    %s2999 = scalar_lea.vmem %s1, 932
    %3000 = vst [vmem:[%s2999] sm:%s2998] %v2996
    %s3001 = scalar_lea.vmem [#allocation0], 1872
    %v3002 = vld [vmem:[%s3001] sm:%s1598]
    %s3004 = ssub.s32 16, 1
    %s3005 = scalar_lea.vmem %s1, 936
    %3006 = vst [vmem:[%s3005] sm:%s3004] %v3002
    %s3007 = scalar_lea.vmem [#allocation0], 1880
    %v3008 = vld [vmem:[%s3007] sm:%s1598]
    %s3010 = ssub.s32 16, 1
    %s3011 = scalar_lea.vmem %s1, 940
    %3012 = vst [vmem:[%s3011] sm:%s3010] %v3008
    %s3013 = scalar_lea.vmem [#allocation0], 1888
    %v3014 = vld [vmem:[%s3013] sm:%s1598]
    %s3016 = ssub.s32 16, 1
    %s3017 = scalar_lea.vmem %s1, 944
    %3018 = vst [vmem:[%s3017] sm:%s3016] %v3014
    %s3019 = scalar_lea.vmem [#allocation0], 1896
    %v3020 = vld [vmem:[%s3019] sm:%s1598]
    %s3022 = ssub.s32 16, 1
    %s3023 = scalar_lea.vmem %s1, 948
    %3024 = vst [vmem:[%s3023] sm:%s3022] %v3020
    %s3025 = scalar_lea.vmem [#allocation0], 1904
    %v3026 = vld [vmem:[%s3025] sm:%s1598]
    %s3028 = ssub.s32 16, 1
    %s3029 = scalar_lea.vmem %s1, 952
    %3030 = vst [vmem:[%s3029] sm:%s3028] %v3026
    %s3031 = scalar_lea.vmem [#allocation0], 1912
    %v3032 = vld [vmem:[%s3031] sm:%s1598]
    %s3034 = ssub.s32 16, 1
    %s3035 = scalar_lea.vmem %s1, 956
    %3036 = vst [vmem:[%s3035] sm:%s3034] %v3032
    %s3037 = scalar_lea.vmem [#allocation0], 1920
    %v3038 = vld [vmem:[%s3037] sm:%s1598]
    %s3040 = ssub.s32 16, 1
    %s3041 = scalar_lea.vmem %s1, 960
    %3042 = vst [vmem:[%s3041] sm:%s3040] %v3038
    %s3043 = scalar_lea.vmem [#allocation0], 1928
    %v3044 = vld [vmem:[%s3043] sm:%s1598]
    %s3046 = ssub.s32 16, 1
    %s3047 = scalar_lea.vmem %s1, 964
    %3048 = vst [vmem:[%s3047] sm:%s3046] %v3044
    %s3049 = scalar_lea.vmem [#allocation0], 1936
    %v3050 = vld [vmem:[%s3049] sm:%s1598]
    %s3052 = ssub.s32 16, 1
    %s3053 = scalar_lea.vmem %s1, 968
    %3054 = vst [vmem:[%s3053] sm:%s3052] %v3050
    %s3055 = scalar_lea.vmem [#allocation0], 1944
    %v3056 = vld [vmem:[%s3055] sm:%s1598]
    %s3058 = ssub.s32 16, 1
    %s3059 = scalar_lea.vmem %s1, 972
    %3060 = vst [vmem:[%s3059] sm:%s3058] %v3056
    %s3061 = scalar_lea.vmem [#allocation0], 1952
    %v3062 = vld [vmem:[%s3061] sm:%s1598]
    %s3064 = ssub.s32 16, 1
    %s3065 = scalar_lea.vmem %s1, 976
    %3066 = vst [vmem:[%s3065] sm:%s3064] %v3062
    %s3067 = scalar_lea.vmem [#allocation0], 1960
    %v3068 = vld [vmem:[%s3067] sm:%s1598]
    %s3070 = ssub.s32 16, 1
    %s3071 = scalar_lea.vmem %s1, 980
    %3072 = vst [vmem:[%s3071] sm:%s3070] %v3068
    %s3073 = scalar_lea.vmem [#allocation0], 1968
    %v3074 = vld [vmem:[%s3073] sm:%s1598]
    %s3076 = ssub.s32 16, 1
    %s3077 = scalar_lea.vmem %s1, 984
    %3078 = vst [vmem:[%s3077] sm:%s3076] %v3074
    %s3079 = scalar_lea.vmem [#allocation0], 1976
    %v3080 = vld [vmem:[%s3079] sm:%s1598]
    %s3082 = ssub.s32 16, 1
    %s3083 = scalar_lea.vmem %s1, 988
    %3084 = vst [vmem:[%s3083] sm:%s3082] %v3080
    %s3085 = scalar_lea.vmem [#allocation0], 1984
    %v3086 = vld [vmem:[%s3085] sm:%s1598]
    %s3088 = ssub.s32 16, 1
    %s3089 = scalar_lea.vmem %s1, 992
    %3090 = vst [vmem:[%s3089] sm:%s3088] %v3086
    %s3091 = scalar_lea.vmem [#allocation0], 1992
    %v3092 = vld [vmem:[%s3091] sm:%s1598]
    %s3094 = ssub.s32 16, 1
    %s3095 = scalar_lea.vmem %s1, 996
    %3096 = vst [vmem:[%s3095] sm:%s3094] %v3092
    %s3097 = scalar_lea.vmem [#allocation0], 2000
    %v3098 = vld [vmem:[%s3097] sm:%s1598]
    %s3100 = ssub.s32 16, 1
    %s3101 = scalar_lea.vmem %s1, 1000
    %3102 = vst [vmem:[%s3101] sm:%s3100] %v3098
    %s3103 = scalar_lea.vmem [#allocation0], 2008
    %v3104 = vld [vmem:[%s3103] sm:%s1598]
    %s3106 = ssub.s32 16, 1
    %s3107 = scalar_lea.vmem %s1, 1004
    %3108 = vst [vmem:[%s3107] sm:%s3106] %v3104
    %s3109 = scalar_lea.vmem [#allocation0], 2016
    %v3110 = vld [vmem:[%s3109] sm:%s1598]
    %s3112 = ssub.s32 16, 1
    %s3113 = scalar_lea.vmem %s1, 1008
    %3114 = vst [vmem:[%s3113] sm:%s3112] %v3110
    %s3115 = scalar_lea.vmem [#allocation0], 2024
    %v3116 = vld [vmem:[%s3115] sm:%s1598]
    %s3118 = ssub.s32 16, 1
    %s3119 = scalar_lea.vmem %s1, 1012
    %3120 = vst [vmem:[%s3119] sm:%s3118] %v3116
    %s3121 = scalar_lea.vmem [#allocation0], 2032
    %v3122 = vld [vmem:[%s3121] sm:%s1598]
    %s3124 = ssub.s32 16, 1
    %s3125 = scalar_lea.vmem %s1, 1016
    %3126 = vst [vmem:[%s3125] sm:%s3124] %v3122
    %s3127 = scalar_lea.vmem [#allocation0], 2040
    %v3128 = vld [vmem:[%s3127] sm:%s1598]
    %s3130 = ssub.s32 16, 1
    %s3131 = scalar_lea.vmem %s1, 1020
    %3132 = vst [vmem:[%s3131] sm:%s3130] %v3128
    %s3133 = scalar_lea.vmem [#allocation0], 2048
    %v3134 = vld [vmem:[%s3133] sm:%s1598]
    %s3136 = ssub.s32 16, 1
    %s3137 = scalar_lea.vmem %s1, 1024
    %3138 = vst [vmem:[%s3137] sm:%s3136] %v3134
    %s3139 = scalar_lea.vmem [#allocation0], 2056
    %v3140 = vld [vmem:[%s3139] sm:%s1598]
    %s3142 = ssub.s32 16, 1
    %s3143 = scalar_lea.vmem %s1, 1028
    %3144 = vst [vmem:[%s3143] sm:%s3142] %v3140
    %s3145 = scalar_lea.vmem [#allocation0], 2064
    %v3146 = vld [vmem:[%s3145] sm:%s1598]
    %s3148 = ssub.s32 16, 1
    %s3149 = scalar_lea.vmem %s1, 1032
    %3150 = vst [vmem:[%s3149] sm:%s3148] %v3146
    %s3151 = scalar_lea.vmem [#allocation0], 2072
    %v3152 = vld [vmem:[%s3151] sm:%s1598]
    %s3154 = ssub.s32 16, 1
    %s3155 = scalar_lea.vmem %s1, 1036
    %3156 = vst [vmem:[%s3155] sm:%s3154] %v3152
    %s3157 = scalar_lea.vmem [#allocation0], 2080
    %v3158 = vld [vmem:[%s3157] sm:%s1598]
    %s3160 = ssub.s32 16, 1
    %s3161 = scalar_lea.vmem %s1, 1040
    %3162 = vst [vmem:[%s3161] sm:%s3160] %v3158
    %s3163 = scalar_lea.vmem [#allocation0], 2088
    %v3164 = vld [vmem:[%s3163] sm:%s1598]
    %s3166 = ssub.s32 16, 1
    %s3167 = scalar_lea.vmem %s1, 1044
    %3168 = vst [vmem:[%s3167] sm:%s3166] %v3164
    %s3169 = scalar_lea.vmem [#allocation0], 2096
    %v3170 = vld [vmem:[%s3169] sm:%s1598]
    %s3172 = ssub.s32 16, 1
    %s3173 = scalar_lea.vmem %s1, 1048
    %3174 = vst [vmem:[%s3173] sm:%s3172] %v3170
    %s3175 = scalar_lea.vmem [#allocation0], 2104
    %v3176 = vld [vmem:[%s3175] sm:%s1598]
    %s3178 = ssub.s32 16, 1
    %s3179 = scalar_lea.vmem %s1, 1052
    %3180 = vst [vmem:[%s3179] sm:%s3178] %v3176
    %s3181 = scalar_lea.vmem [#allocation0], 2112
    %v3182 = vld [vmem:[%s3181] sm:%s1598]
    %s3184 = ssub.s32 16, 1
    %s3185 = scalar_lea.vmem %s1, 1056
    %3186 = vst [vmem:[%s3185] sm:%s3184] %v3182
    %s3187 = scalar_lea.vmem [#allocation0], 2120
    %v3188 = vld [vmem:[%s3187] sm:%s1598]
    %s3190 = ssub.s32 16, 1
    %s3191 = scalar_lea.vmem %s1, 1060
    %3192 = vst [vmem:[%s3191] sm:%s3190] %v3188
    %s3193 = scalar_lea.vmem [#allocation0], 2128
    %v3194 = vld [vmem:[%s3193] sm:%s1598]
    %s3196 = ssub.s32 16, 1
    %s3197 = scalar_lea.vmem %s1, 1064
    %3198 = vst [vmem:[%s3197] sm:%s3196] %v3194
    %s3199 = scalar_lea.vmem [#allocation0], 2136
    %v3200 = vld [vmem:[%s3199] sm:%s1598]
    %s3202 = ssub.s32 16, 1
    %s3203 = scalar_lea.vmem %s1, 1068
    %3204 = vst [vmem:[%s3203] sm:%s3202] %v3200
    %s3205 = scalar_lea.vmem [#allocation0], 2144
    %v3206 = vld [vmem:[%s3205] sm:%s1598]
    %s3208 = ssub.s32 16, 1
    %s3209 = scalar_lea.vmem %s1, 1072
    %3210 = vst [vmem:[%s3209] sm:%s3208] %v3206
    %s3211 = scalar_lea.vmem [#allocation0], 2152
    %v3212 = vld [vmem:[%s3211] sm:%s1598]
    %s3214 = ssub.s32 16, 1
    %s3215 = scalar_lea.vmem %s1, 1076
    %3216 = vst [vmem:[%s3215] sm:%s3214] %v3212
    %s3217 = scalar_lea.vmem [#allocation0], 2160
    %v3218 = vld [vmem:[%s3217] sm:%s1598]
    %s3220 = ssub.s32 16, 1
    %s3221 = scalar_lea.vmem %s1, 1080
    %3222 = vst [vmem:[%s3221] sm:%s3220] %v3218
    %s3223 = scalar_lea.vmem [#allocation0], 2168
    %v3224 = vld [vmem:[%s3223] sm:%s1598]
    %s3226 = ssub.s32 16, 1
    %s3227 = scalar_lea.vmem %s1, 1084
    %3228 = vst [vmem:[%s3227] sm:%s3226] %v3224
    %s3229 = scalar_lea.vmem [#allocation0], 2176
    %v3230 = vld [vmem:[%s3229] sm:%s1598]
    %s3232 = ssub.s32 16, 1
    %s3233 = scalar_lea.vmem %s1, 1088
    %3234 = vst [vmem:[%s3233] sm:%s3232] %v3230
    %s3235 = scalar_lea.vmem [#allocation0], 2184
    %v3236 = vld [vmem:[%s3235] sm:%s1598]
    %s3238 = ssub.s32 16, 1
    %s3239 = scalar_lea.vmem %s1, 1092
    %3240 = vst [vmem:[%s3239] sm:%s3238] %v3236
    %s3241 = scalar_lea.vmem [#allocation0], 2192
    %v3242 = vld [vmem:[%s3241] sm:%s1598]
    %s3244 = ssub.s32 16, 1
    %s3245 = scalar_lea.vmem %s1, 1096
    %3246 = vst [vmem:[%s3245] sm:%s3244] %v3242
    %s3247 = scalar_lea.vmem [#allocation0], 2200
    %v3248 = vld [vmem:[%s3247] sm:%s1598]
    %s3250 = ssub.s32 16, 1
    %s3251 = scalar_lea.vmem %s1, 1100
    %3252 = vst [vmem:[%s3251] sm:%s3250] %v3248
    %s3253 = scalar_lea.vmem [#allocation0], 2208
    %v3254 = vld [vmem:[%s3253] sm:%s1598]
    %s3256 = ssub.s32 16, 1
    %s3257 = scalar_lea.vmem %s1, 1104
    %3258 = vst [vmem:[%s3257] sm:%s3256] %v3254
    %s3259 = scalar_lea.vmem [#allocation0], 2216
    %v3260 = vld [vmem:[%s3259] sm:%s1598]
    %s3262 = ssub.s32 16, 1
    %s3263 = scalar_lea.vmem %s1, 1108
    %3264 = vst [vmem:[%s3263] sm:%s3262] %v3260
    %s3265 = scalar_lea.vmem [#allocation0], 2224
    %v3266 = vld [vmem:[%s3265] sm:%s1598]
    %s3268 = ssub.s32 16, 1
    %s3269 = scalar_lea.vmem %s1, 1112
    %3270 = vst [vmem:[%s3269] sm:%s3268] %v3266
    %s3271 = scalar_lea.vmem [#allocation0], 2232
    %v3272 = vld [vmem:[%s3271] sm:%s1598]
    %s3274 = ssub.s32 16, 1
    %s3275 = scalar_lea.vmem %s1, 1116
    %3276 = vst [vmem:[%s3275] sm:%s3274] %v3272
    %s3277 = scalar_lea.vmem [#allocation0], 2240
    %v3278 = vld [vmem:[%s3277] sm:%s1598]
    %s3280 = ssub.s32 16, 1
    %s3281 = scalar_lea.vmem %s1, 1120
    %3282 = vst [vmem:[%s3281] sm:%s3280] %v3278
    %s3283 = scalar_lea.vmem [#allocation0], 2248
    %v3284 = vld [vmem:[%s3283] sm:%s1598]
    %s3286 = ssub.s32 16, 1
    %s3287 = scalar_lea.vmem %s1, 1124
    %3288 = vst [vmem:[%s3287] sm:%s3286] %v3284
    %s3289 = scalar_lea.vmem [#allocation0], 2256
    %v3290 = vld [vmem:[%s3289] sm:%s1598]
    %s3292 = ssub.s32 16, 1
    %s3293 = scalar_lea.vmem %s1, 1128
    %3294 = vst [vmem:[%s3293] sm:%s3292] %v3290
    %s3295 = scalar_lea.vmem [#allocation0], 2264
    %v3296 = vld [vmem:[%s3295] sm:%s1598]
    %s3298 = ssub.s32 16, 1
    %s3299 = scalar_lea.vmem %s1, 1132
    %3300 = vst [vmem:[%s3299] sm:%s3298] %v3296
    %s3301 = scalar_lea.vmem [#allocation0], 2272
    %v3302 = vld [vmem:[%s3301] sm:%s1598]
    %s3304 = ssub.s32 16, 1
    %s3305 = scalar_lea.vmem %s1, 1136
    %3306 = vst [vmem:[%s3305] sm:%s3304] %v3302
    %s3307 = scalar_lea.vmem [#allocation0], 2280
    %v3308 = vld [vmem:[%s3307] sm:%s1598]
    %s3310 = ssub.s32 16, 1
    %s3311 = scalar_lea.vmem %s1, 1140
    %3312 = vst [vmem:[%s3311] sm:%s3310] %v3308
    %s3313 = scalar_lea.vmem [#allocation0], 2288
    %v3314 = vld [vmem:[%s3313] sm:%s1598]
    %s3316 = ssub.s32 16, 1
    %s3317 = scalar_lea.vmem %s1, 1144
    %3318 = vst [vmem:[%s3317] sm:%s3316] %v3314
    %s3319 = scalar_lea.vmem [#allocation0], 2296
    %v3320 = vld [vmem:[%s3319] sm:%s1598]
    %s3322 = ssub.s32 16, 1
    %s3323 = scalar_lea.vmem %s1, 1148
    %3324 = vst [vmem:[%s3323] sm:%s3322] %v3320
    %s3325 = scalar_lea.vmem [#allocation0], 2304
    %v3326 = vld [vmem:[%s3325] sm:%s1598]
    %s3328 = ssub.s32 16, 1
    %s3329 = scalar_lea.vmem %s1, 1152
    %3330 = vst [vmem:[%s3329] sm:%s3328] %v3326
    %s3331 = scalar_lea.vmem [#allocation0], 2312
    %v3332 = vld [vmem:[%s3331] sm:%s1598]
    %s3334 = ssub.s32 16, 1
    %s3335 = scalar_lea.vmem %s1, 1156
    %3336 = vst [vmem:[%s3335] sm:%s3334] %v3332
    %s3337 = scalar_lea.vmem [#allocation0], 2320
    %v3338 = vld [vmem:[%s3337] sm:%s1598]
    %s3340 = ssub.s32 16, 1
    %s3341 = scalar_lea.vmem %s1, 1160
    %3342 = vst [vmem:[%s3341] sm:%s3340] %v3338
    %s3343 = scalar_lea.vmem [#allocation0], 2328
    %v3344 = vld [vmem:[%s3343] sm:%s1598]
    %s3346 = ssub.s32 16, 1
    %s3347 = scalar_lea.vmem %s1, 1164
    %3348 = vst [vmem:[%s3347] sm:%s3346] %v3344
    %s3349 = scalar_lea.vmem [#allocation0], 2336
    %v3350 = vld [vmem:[%s3349] sm:%s1598]
    %s3352 = ssub.s32 16, 1
    %s3353 = scalar_lea.vmem %s1, 1168
    %3354 = vst [vmem:[%s3353] sm:%s3352] %v3350
    %s3355 = scalar_lea.vmem [#allocation0], 2344
    %v3356 = vld [vmem:[%s3355] sm:%s1598]
    %s3358 = ssub.s32 16, 1
    %s3359 = scalar_lea.vmem %s1, 1172
    %3360 = vst [vmem:[%s3359] sm:%s3358] %v3356
    %s3361 = scalar_lea.vmem [#allocation0], 2352
    %v3362 = vld [vmem:[%s3361] sm:%s1598]
    %s3364 = ssub.s32 16, 1
    %s3365 = scalar_lea.vmem %s1, 1176
    %3366 = vst [vmem:[%s3365] sm:%s3364] %v3362
    %s3367 = scalar_lea.vmem [#allocation0], 2360
    %v3368 = vld [vmem:[%s3367] sm:%s1598]
    %s3370 = ssub.s32 16, 1
    %s3371 = scalar_lea.vmem %s1, 1180
    %3372 = vst [vmem:[%s3371] sm:%s3370] %v3368
    %s3373 = scalar_lea.vmem [#allocation0], 2368
    %v3374 = vld [vmem:[%s3373] sm:%s1598]
    %s3376 = ssub.s32 16, 1
    %s3377 = scalar_lea.vmem %s1, 1184
    %3378 = vst [vmem:[%s3377] sm:%s3376] %v3374
    %s3379 = scalar_lea.vmem [#allocation0], 2376
    %v3380 = vld [vmem:[%s3379] sm:%s1598]
    %s3382 = ssub.s32 16, 1
    %s3383 = scalar_lea.vmem %s1, 1188
    %3384 = vst [vmem:[%s3383] sm:%s3382] %v3380
    %s3385 = scalar_lea.vmem [#allocation0], 2384
    %v3386 = vld [vmem:[%s3385] sm:%s1598]
    %s3388 = ssub.s32 16, 1
    %s3389 = scalar_lea.vmem %s1, 1192
    %3390 = vst [vmem:[%s3389] sm:%s3388] %v3386
    %s3391 = scalar_lea.vmem [#allocation0], 2392
    %v3392 = vld [vmem:[%s3391] sm:%s1598]
    %s3394 = ssub.s32 16, 1
    %s3395 = scalar_lea.vmem %s1, 1196
    %3396 = vst [vmem:[%s3395] sm:%s3394] %v3392
    %s3397 = scalar_lea.vmem [#allocation0], 2400
    %v3398 = vld [vmem:[%s3397] sm:%s1598]
    %s3400 = ssub.s32 16, 1
    %s3401 = scalar_lea.vmem %s1, 1200
    %3402 = vst [vmem:[%s3401] sm:%s3400] %v3398
    %s3403 = scalar_lea.vmem [#allocation0], 2408
    %v3404 = vld [vmem:[%s3403] sm:%s1598]
    %s3406 = ssub.s32 16, 1
    %s3407 = scalar_lea.vmem %s1, 1204
    %3408 = vst [vmem:[%s3407] sm:%s3406] %v3404
    %s3409 = scalar_lea.vmem [#allocation0], 2416
    %v3410 = vld [vmem:[%s3409] sm:%s1598]
    %s3412 = ssub.s32 16, 1
    %s3413 = scalar_lea.vmem %s1, 1208
    %3414 = vst [vmem:[%s3413] sm:%s3412] %v3410
    %s3415 = scalar_lea.vmem [#allocation0], 2424
    %v3416 = vld [vmem:[%s3415] sm:%s1598]
    %s3418 = ssub.s32 16, 1
    %s3419 = scalar_lea.vmem %s1, 1212
    %3420 = vst [vmem:[%s3419] sm:%s3418] %v3416
    %s3421 = scalar_lea.vmem [#allocation0], 2432
    %v3422 = vld [vmem:[%s3421] sm:%s1598]
    %s3424 = ssub.s32 16, 1
    %s3425 = scalar_lea.vmem %s1, 1216
    %3426 = vst [vmem:[%s3425] sm:%s3424] %v3422
    %s3427 = scalar_lea.vmem [#allocation0], 2440
    %v3428 = vld [vmem:[%s3427] sm:%s1598]
    %s3430 = ssub.s32 16, 1
    %s3431 = scalar_lea.vmem %s1, 1220
    %3432 = vst [vmem:[%s3431] sm:%s3430] %v3428
    %s3433 = scalar_lea.vmem [#allocation0], 2448
    %v3434 = vld [vmem:[%s3433] sm:%s1598]
    %s3436 = ssub.s32 16, 1
    %s3437 = scalar_lea.vmem %s1, 1224
    %3438 = vst [vmem:[%s3437] sm:%s3436] %v3434
    %s3439 = scalar_lea.vmem [#allocation0], 2456
    %v3440 = vld [vmem:[%s3439] sm:%s1598]
    %s3442 = ssub.s32 16, 1
    %s3443 = scalar_lea.vmem %s1, 1228
    %3444 = vst [vmem:[%s3443] sm:%s3442] %v3440
    %s3445 = scalar_lea.vmem [#allocation0], 2464
    %v3446 = vld [vmem:[%s3445] sm:%s1598]
    %s3448 = ssub.s32 16, 1
    %s3449 = scalar_lea.vmem %s1, 1232
    %3450 = vst [vmem:[%s3449] sm:%s3448] %v3446
    %s3451 = scalar_lea.vmem [#allocation0], 2472
    %v3452 = vld [vmem:[%s3451] sm:%s1598]
    %s3454 = ssub.s32 16, 1
    %s3455 = scalar_lea.vmem %s1, 1236
    %3456 = vst [vmem:[%s3455] sm:%s3454] %v3452
    %s3457 = scalar_lea.vmem [#allocation0], 2480
    %v3458 = vld [vmem:[%s3457] sm:%s1598]
    %s3460 = ssub.s32 16, 1
    %s3461 = scalar_lea.vmem %s1, 1240
    %3462 = vst [vmem:[%s3461] sm:%s3460] %v3458
    %s3463 = scalar_lea.vmem [#allocation0], 2488
    %v3464 = vld [vmem:[%s3463] sm:%s1598]
    %s3466 = ssub.s32 16, 1
    %s3467 = scalar_lea.vmem %s1, 1244
    %3468 = vst [vmem:[%s3467] sm:%s3466] %v3464
    %s3469 = scalar_lea.vmem [#allocation0], 2496
    %v3470 = vld [vmem:[%s3469] sm:%s1598]
    %s3472 = ssub.s32 16, 1
    %s3473 = scalar_lea.vmem %s1, 1248
    %3474 = vst [vmem:[%s3473] sm:%s3472] %v3470
    %s3475 = scalar_lea.vmem [#allocation0], 2504
    %v3476 = vld [vmem:[%s3475] sm:%s1598]
    %s3478 = ssub.s32 16, 1
    %s3479 = scalar_lea.vmem %s1, 1252
    %3480 = vst [vmem:[%s3479] sm:%s3478] %v3476
    %s3481 = scalar_lea.vmem [#allocation0], 2512
    %v3482 = vld [vmem:[%s3481] sm:%s1598]
    %s3484 = ssub.s32 16, 1
    %s3485 = scalar_lea.vmem %s1, 1256
    %3486 = vst [vmem:[%s3485] sm:%s3484] %v3482
    %s3487 = scalar_lea.vmem [#allocation0], 2520
    %v3488 = vld [vmem:[%s3487] sm:%s1598]
    %s3490 = ssub.s32 16, 1
    %s3491 = scalar_lea.vmem %s1, 1260
    %3492 = vst [vmem:[%s3491] sm:%s3490] %v3488
    %s3493 = scalar_lea.vmem [#allocation0], 2528
    %v3494 = vld [vmem:[%s3493] sm:%s1598]
    %s3496 = ssub.s32 16, 1
    %s3497 = scalar_lea.vmem %s1, 1264
    %3498 = vst [vmem:[%s3497] sm:%s3496] %v3494
    %s3499 = scalar_lea.vmem [#allocation0], 2536
    %v3500 = vld [vmem:[%s3499] sm:%s1598]
    %s3502 = ssub.s32 16, 1
    %s3503 = scalar_lea.vmem %s1, 1268
    %3504 = vst [vmem:[%s3503] sm:%s3502] %v3500
    %s3505 = scalar_lea.vmem [#allocation0], 2544
    %v3506 = vld [vmem:[%s3505] sm:%s1598]
    %s3508 = ssub.s32 16, 1
    %s3509 = scalar_lea.vmem %s1, 1272
    %3510 = vst [vmem:[%s3509] sm:%s3508] %v3506
    %s3511 = scalar_lea.vmem [#allocation0], 2552
    %v3512 = vld [vmem:[%s3511] sm:%s1598]
    %s3514 = ssub.s32 16, 1
    %s3515 = scalar_lea.vmem %s1, 1276
    %3516 = vst [vmem:[%s3515] sm:%s3514] %v3512
    %s3517 = scalar_lea.vmem [#allocation0], 2560
    %v3518 = vld [vmem:[%s3517] sm:%s1598]
    %s3520 = ssub.s32 16, 1
    %s3521 = scalar_lea.vmem %s1, 1280
    %3522 = vst [vmem:[%s3521] sm:%s3520] %v3518
    %s3523 = scalar_lea.vmem [#allocation0], 2568
    %v3524 = vld [vmem:[%s3523] sm:%s1598]
    %s3526 = ssub.s32 16, 1
    %s3527 = scalar_lea.vmem %s1, 1284
    %3528 = vst [vmem:[%s3527] sm:%s3526] %v3524
    %s3529 = scalar_lea.vmem [#allocation0], 2576
    %v3530 = vld [vmem:[%s3529] sm:%s1598]
    %s3532 = ssub.s32 16, 1
    %s3533 = scalar_lea.vmem %s1, 1288
    %3534 = vst [vmem:[%s3533] sm:%s3532] %v3530
    %s3535 = scalar_lea.vmem [#allocation0], 2584
    %v3536 = vld [vmem:[%s3535] sm:%s1598]
    %s3538 = ssub.s32 16, 1
    %s3539 = scalar_lea.vmem %s1, 1292
    %3540 = vst [vmem:[%s3539] sm:%s3538] %v3536
    %s3541 = scalar_lea.vmem [#allocation0], 2592
    %v3542 = vld [vmem:[%s3541] sm:%s1598]
    %s3544 = ssub.s32 16, 1
    %s3545 = scalar_lea.vmem %s1, 1296
    %3546 = vst [vmem:[%s3545] sm:%s3544] %v3542
    %s3547 = scalar_lea.vmem [#allocation0], 2600
    %v3548 = vld [vmem:[%s3547] sm:%s1598]
    %s3550 = ssub.s32 16, 1
    %s3551 = scalar_lea.vmem %s1, 1300
    %3552 = vst [vmem:[%s3551] sm:%s3550] %v3548
    %s3553 = scalar_lea.vmem [#allocation0], 2608
    %v3554 = vld [vmem:[%s3553] sm:%s1598]
    %s3556 = ssub.s32 16, 1
    %s3557 = scalar_lea.vmem %s1, 1304
    %3558 = vst [vmem:[%s3557] sm:%s3556] %v3554
    %s3559 = scalar_lea.vmem [#allocation0], 2616
    %v3560 = vld [vmem:[%s3559] sm:%s1598]
    %s3562 = ssub.s32 16, 1
    %s3563 = scalar_lea.vmem %s1, 1308
    %3564 = vst [vmem:[%s3563] sm:%s3562] %v3560
    %s3565 = scalar_lea.vmem [#allocation0], 2624
    %v3566 = vld [vmem:[%s3565] sm:%s1598]
    %s3568 = ssub.s32 16, 1
    %s3569 = scalar_lea.vmem %s1, 1312
    %3570 = vst [vmem:[%s3569] sm:%s3568] %v3566
    %s3571 = scalar_lea.vmem [#allocation0], 2632
    %v3572 = vld [vmem:[%s3571] sm:%s1598]
    %s3574 = ssub.s32 16, 1
    %s3575 = scalar_lea.vmem %s1, 1316
    %3576 = vst [vmem:[%s3575] sm:%s3574] %v3572
    %s3577 = scalar_lea.vmem [#allocation0], 2640
    %v3578 = vld [vmem:[%s3577] sm:%s1598]
    %s3580 = ssub.s32 16, 1
    %s3581 = scalar_lea.vmem %s1, 1320
    %3582 = vst [vmem:[%s3581] sm:%s3580] %v3578
    %s3583 = scalar_lea.vmem [#allocation0], 2648
    %v3584 = vld [vmem:[%s3583] sm:%s1598]
    %s3586 = ssub.s32 16, 1
    %s3587 = scalar_lea.vmem %s1, 1324
    %3588 = vst [vmem:[%s3587] sm:%s3586] %v3584
    %s3589 = scalar_lea.vmem [#allocation0], 2656
    %v3590 = vld [vmem:[%s3589] sm:%s1598]
    %s3592 = ssub.s32 16, 1
    %s3593 = scalar_lea.vmem %s1, 1328
    %3594 = vst [vmem:[%s3593] sm:%s3592] %v3590
    %s3595 = scalar_lea.vmem [#allocation0], 2664
    %v3596 = vld [vmem:[%s3595] sm:%s1598]
    %s3598 = ssub.s32 16, 1
    %s3599 = scalar_lea.vmem %s1, 1332
    %3600 = vst [vmem:[%s3599] sm:%s3598] %v3596
    %s3601 = scalar_lea.vmem [#allocation0], 2672
    %v3602 = vld [vmem:[%s3601] sm:%s1598]
    %s3604 = ssub.s32 16, 1
    %s3605 = scalar_lea.vmem %s1, 1336
    %3606 = vst [vmem:[%s3605] sm:%s3604] %v3602
    %s3607 = scalar_lea.vmem [#allocation0], 2680
    %v3608 = vld [vmem:[%s3607] sm:%s1598]
    %s3610 = ssub.s32 16, 1
    %s3611 = scalar_lea.vmem %s1, 1340
    %3612 = vst [vmem:[%s3611] sm:%s3610] %v3608
    %s3613 = scalar_lea.vmem [#allocation0], 2688
    %v3614 = vld [vmem:[%s3613] sm:%s1598]
    %s3616 = ssub.s32 16, 1
    %s3617 = scalar_lea.vmem %s1, 1344
    %3618 = vst [vmem:[%s3617] sm:%s3616] %v3614
    %s3619 = scalar_lea.vmem [#allocation0], 2696
    %v3620 = vld [vmem:[%s3619] sm:%s1598]
    %s3622 = ssub.s32 16, 1
    %s3623 = scalar_lea.vmem %s1, 1348
    %3624 = vst [vmem:[%s3623] sm:%s3622] %v3620
    %s3625 = scalar_lea.vmem [#allocation0], 2704
    %v3626 = vld [vmem:[%s3625] sm:%s1598]
    %s3628 = ssub.s32 16, 1
    %s3629 = scalar_lea.vmem %s1, 1352
    %3630 = vst [vmem:[%s3629] sm:%s3628] %v3626
    %s3631 = scalar_lea.vmem [#allocation0], 2712
    %v3632 = vld [vmem:[%s3631] sm:%s1598]
    %s3634 = ssub.s32 16, 1
    %s3635 = scalar_lea.vmem %s1, 1356
    %3636 = vst [vmem:[%s3635] sm:%s3634] %v3632
    %s3637 = scalar_lea.vmem [#allocation0], 2720
    %v3638 = vld [vmem:[%s3637] sm:%s1598]
    %s3640 = ssub.s32 16, 1
    %s3641 = scalar_lea.vmem %s1, 1360
    %3642 = vst [vmem:[%s3641] sm:%s3640] %v3638
    %s3643 = scalar_lea.vmem [#allocation0], 2728
    %v3644 = vld [vmem:[%s3643] sm:%s1598]
    %s3646 = ssub.s32 16, 1
    %s3647 = scalar_lea.vmem %s1, 1364
    %3648 = vst [vmem:[%s3647] sm:%s3646] %v3644
    %s3649 = scalar_lea.vmem [#allocation0], 2736
    %v3650 = vld [vmem:[%s3649] sm:%s1598]
    %s3652 = ssub.s32 16, 1
    %s3653 = scalar_lea.vmem %s1, 1368
    %3654 = vst [vmem:[%s3653] sm:%s3652] %v3650
    %s3655 = scalar_lea.vmem [#allocation0], 2744
    %v3656 = vld [vmem:[%s3655] sm:%s1598]
    %s3658 = ssub.s32 16, 1
    %s3659 = scalar_lea.vmem %s1, 1372
    %3660 = vst [vmem:[%s3659] sm:%s3658] %v3656
    %s3661 = scalar_lea.vmem [#allocation0], 2752
    %v3662 = vld [vmem:[%s3661] sm:%s1598]
    %s3664 = ssub.s32 16, 1
    %s3665 = scalar_lea.vmem %s1, 1376
    %3666 = vst [vmem:[%s3665] sm:%s3664] %v3662
    %s3667 = scalar_lea.vmem [#allocation0], 2760
    %v3668 = vld [vmem:[%s3667] sm:%s1598]
    %s3670 = ssub.s32 16, 1
    %s3671 = scalar_lea.vmem %s1, 1380
    %3672 = vst [vmem:[%s3671] sm:%s3670] %v3668
    %s3673 = scalar_lea.vmem [#allocation0], 2768
    %v3674 = vld [vmem:[%s3673] sm:%s1598]
    %s3676 = ssub.s32 16, 1
    %s3677 = scalar_lea.vmem %s1, 1384
    %3678 = vst [vmem:[%s3677] sm:%s3676] %v3674
    %s3679 = scalar_lea.vmem [#allocation0], 2776
    %v3680 = vld [vmem:[%s3679] sm:%s1598]
    %s3682 = ssub.s32 16, 1
    %s3683 = scalar_lea.vmem %s1, 1388
    %3684 = vst [vmem:[%s3683] sm:%s3682] %v3680
    %s3685 = scalar_lea.vmem [#allocation0], 2784
    %v3686 = vld [vmem:[%s3685] sm:%s1598]
    %s3688 = ssub.s32 16, 1
    %s3689 = scalar_lea.vmem %s1, 1392
    %3690 = vst [vmem:[%s3689] sm:%s3688] %v3686
    %s3691 = scalar_lea.vmem [#allocation0], 2792
    %v3692 = vld [vmem:[%s3691] sm:%s1598]
    %s3694 = ssub.s32 16, 1
    %s3695 = scalar_lea.vmem %s1, 1396
    %3696 = vst [vmem:[%s3695] sm:%s3694] %v3692
    %s3697 = scalar_lea.vmem [#allocation0], 2800
    %v3698 = vld [vmem:[%s3697] sm:%s1598]
    %s3700 = ssub.s32 16, 1
    %s3701 = scalar_lea.vmem %s1, 1400
    %3702 = vst [vmem:[%s3701] sm:%s3700] %v3698
    %s3703 = scalar_lea.vmem [#allocation0], 2808
    %v3704 = vld [vmem:[%s3703] sm:%s1598]
    %s3706 = ssub.s32 16, 1
    %s3707 = scalar_lea.vmem %s1, 1404
    %3708 = vst [vmem:[%s3707] sm:%s3706] %v3704
    %s3709 = scalar_lea.vmem [#allocation0], 2816
    %v3710 = vld [vmem:[%s3709] sm:%s1598]
    %s3712 = ssub.s32 16, 1
    %s3713 = scalar_lea.vmem %s1, 1408
    %3714 = vst [vmem:[%s3713] sm:%s3712] %v3710
    %s3715 = scalar_lea.vmem [#allocation0], 2824
    %v3716 = vld [vmem:[%s3715] sm:%s1598]
    %s3718 = ssub.s32 16, 1
    %s3719 = scalar_lea.vmem %s1, 1412
    %3720 = vst [vmem:[%s3719] sm:%s3718] %v3716
    %s3721 = scalar_lea.vmem [#allocation0], 2832
    %v3722 = vld [vmem:[%s3721] sm:%s1598]
    %s3724 = ssub.s32 16, 1
    %s3725 = scalar_lea.vmem %s1, 1416
    %3726 = vst [vmem:[%s3725] sm:%s3724] %v3722
    %s3727 = scalar_lea.vmem [#allocation0], 2840
    %v3728 = vld [vmem:[%s3727] sm:%s1598]
    %s3730 = ssub.s32 16, 1
    %s3731 = scalar_lea.vmem %s1, 1420
    %3732 = vst [vmem:[%s3731] sm:%s3730] %v3728
    %s3733 = scalar_lea.vmem [#allocation0], 2848
    %v3734 = vld [vmem:[%s3733] sm:%s1598]
    %s3736 = ssub.s32 16, 1
    %s3737 = scalar_lea.vmem %s1, 1424
    %3738 = vst [vmem:[%s3737] sm:%s3736] %v3734
    %s3739 = scalar_lea.vmem [#allocation0], 2856
    %v3740 = vld [vmem:[%s3739] sm:%s1598]
    %s3742 = ssub.s32 16, 1
    %s3743 = scalar_lea.vmem %s1, 1428
    %3744 = vst [vmem:[%s3743] sm:%s3742] %v3740
    %s3745 = scalar_lea.vmem [#allocation0], 2864
    %v3746 = vld [vmem:[%s3745] sm:%s1598]
    %s3748 = ssub.s32 16, 1
    %s3749 = scalar_lea.vmem %s1, 1432
    %3750 = vst [vmem:[%s3749] sm:%s3748] %v3746
    %s3751 = scalar_lea.vmem [#allocation0], 2872
    %v3752 = vld [vmem:[%s3751] sm:%s1598]
    %s3754 = ssub.s32 16, 1
    %s3755 = scalar_lea.vmem %s1, 1436
    %3756 = vst [vmem:[%s3755] sm:%s3754] %v3752
    %s3757 = scalar_lea.vmem [#allocation0], 2880
    %v3758 = vld [vmem:[%s3757] sm:%s1598]
    %s3760 = ssub.s32 16, 1
    %s3761 = scalar_lea.vmem %s1, 1440
    %3762 = vst [vmem:[%s3761] sm:%s3760] %v3758
    %s3763 = scalar_lea.vmem [#allocation0], 2888
    %v3764 = vld [vmem:[%s3763] sm:%s1598]
    %s3766 = ssub.s32 16, 1
    %s3767 = scalar_lea.vmem %s1, 1444
    %3768 = vst [vmem:[%s3767] sm:%s3766] %v3764
    %s3769 = scalar_lea.vmem [#allocation0], 2896
    %v3770 = vld [vmem:[%s3769] sm:%s1598]
    %s3772 = ssub.s32 16, 1
    %s3773 = scalar_lea.vmem %s1, 1448
    %3774 = vst [vmem:[%s3773] sm:%s3772] %v3770
    %s3775 = scalar_lea.vmem [#allocation0], 2904
    %v3776 = vld [vmem:[%s3775] sm:%s1598]
    %s3778 = ssub.s32 16, 1
    %s3779 = scalar_lea.vmem %s1, 1452
    %3780 = vst [vmem:[%s3779] sm:%s3778] %v3776
    %s3781 = scalar_lea.vmem [#allocation0], 2912
    %v3782 = vld [vmem:[%s3781] sm:%s1598]
    %s3784 = ssub.s32 16, 1
    %s3785 = scalar_lea.vmem %s1, 1456
    %3786 = vst [vmem:[%s3785] sm:%s3784] %v3782
    %s3787 = scalar_lea.vmem [#allocation0], 2920
    %v3788 = vld [vmem:[%s3787] sm:%s1598]
    %s3790 = ssub.s32 16, 1
    %s3791 = scalar_lea.vmem %s1, 1460
    %3792 = vst [vmem:[%s3791] sm:%s3790] %v3788
    %s3793 = scalar_lea.vmem [#allocation0], 2928
    %v3794 = vld [vmem:[%s3793] sm:%s1598]
    %s3796 = ssub.s32 16, 1
    %s3797 = scalar_lea.vmem %s1, 1464
    %3798 = vst [vmem:[%s3797] sm:%s3796] %v3794
    %s3799 = scalar_lea.vmem [#allocation0], 2936
    %v3800 = vld [vmem:[%s3799] sm:%s1598]
    %s3802 = ssub.s32 16, 1
    %s3803 = scalar_lea.vmem %s1, 1468
    %3804 = vst [vmem:[%s3803] sm:%s3802] %v3800
    %s3805 = scalar_lea.vmem [#allocation0], 2944
    %v3806 = vld [vmem:[%s3805] sm:%s1598]
    %s3808 = ssub.s32 16, 1
    %s3809 = scalar_lea.vmem %s1, 1472
    %3810 = vst [vmem:[%s3809] sm:%s3808] %v3806
    %s3811 = scalar_lea.vmem [#allocation0], 2952
    %v3812 = vld [vmem:[%s3811] sm:%s1598]
    %s3814 = ssub.s32 16, 1
    %s3815 = scalar_lea.vmem %s1, 1476
    %3816 = vst [vmem:[%s3815] sm:%s3814] %v3812
    %s3817 = scalar_lea.vmem [#allocation0], 2960
    %v3818 = vld [vmem:[%s3817] sm:%s1598]
    %s3820 = ssub.s32 16, 1
    %s3821 = scalar_lea.vmem %s1, 1480
    %3822 = vst [vmem:[%s3821] sm:%s3820] %v3818
    %s3823 = scalar_lea.vmem [#allocation0], 2968
    %v3824 = vld [vmem:[%s3823] sm:%s1598]
    %s3826 = ssub.s32 16, 1
    %s3827 = scalar_lea.vmem %s1, 1484
    %3828 = vst [vmem:[%s3827] sm:%s3826] %v3824
    %s3829 = scalar_lea.vmem [#allocation0], 2976
    %v3830 = vld [vmem:[%s3829] sm:%s1598]
    %s3832 = ssub.s32 16, 1
    %s3833 = scalar_lea.vmem %s1, 1488
    %3834 = vst [vmem:[%s3833] sm:%s3832] %v3830
    %s3835 = scalar_lea.vmem [#allocation0], 2984
    %v3836 = vld [vmem:[%s3835] sm:%s1598]
    %s3838 = ssub.s32 16, 1
    %s3839 = scalar_lea.vmem %s1, 1492
    %3840 = vst [vmem:[%s3839] sm:%s3838] %v3836
    %s3841 = scalar_lea.vmem [#allocation0], 2992
    %v3842 = vld [vmem:[%s3841] sm:%s1598]
    %s3844 = ssub.s32 16, 1
    %s3845 = scalar_lea.vmem %s1, 1496
    %3846 = vst [vmem:[%s3845] sm:%s3844] %v3842
    %s3847 = scalar_lea.vmem [#allocation0], 3000
    %v3848 = vld [vmem:[%s3847] sm:%s1598]
    %s3850 = ssub.s32 16, 1
    %s3851 = scalar_lea.vmem %s1, 1500
    %3852 = vst [vmem:[%s3851] sm:%s3850] %v3848
    %s3853 = scalar_lea.vmem [#allocation0], 3008
    %v3854 = vld [vmem:[%s3853] sm:%s1598]
    %s3856 = ssub.s32 16, 1
    %s3857 = scalar_lea.vmem %s1, 1504
    %3858 = vst [vmem:[%s3857] sm:%s3856] %v3854
    %s3859 = scalar_lea.vmem [#allocation0], 3016
    %v3860 = vld [vmem:[%s3859] sm:%s1598]
    %s3862 = ssub.s32 16, 1
    %s3863 = scalar_lea.vmem %s1, 1508
    %3864 = vst [vmem:[%s3863] sm:%s3862] %v3860
    %s3865 = scalar_lea.vmem [#allocation0], 3024
    %v3866 = vld [vmem:[%s3865] sm:%s1598]
    %s3868 = ssub.s32 16, 1
    %s3869 = scalar_lea.vmem %s1, 1512
    %3870 = vst [vmem:[%s3869] sm:%s3868] %v3866
    %s3871 = scalar_lea.vmem [#allocation0], 3032
    %v3872 = vld [vmem:[%s3871] sm:%s1598]
    %s3874 = ssub.s32 16, 1
    %s3875 = scalar_lea.vmem %s1, 1516
    %3876 = vst [vmem:[%s3875] sm:%s3874] %v3872
    %s3877 = scalar_lea.vmem [#allocation0], 3040
    %v3878 = vld [vmem:[%s3877] sm:%s1598]
    %s3880 = ssub.s32 16, 1
    %s3881 = scalar_lea.vmem %s1, 1520
    %3882 = vst [vmem:[%s3881] sm:%s3880] %v3878
    %s3883 = scalar_lea.vmem [#allocation0], 3048
    %v3884 = vld [vmem:[%s3883] sm:%s1598]
    %s3886 = ssub.s32 16, 1
    %s3887 = scalar_lea.vmem %s1, 1524
    %3888 = vst [vmem:[%s3887] sm:%s3886] %v3884
    %s3889 = scalar_lea.vmem [#allocation0], 3056
    %v3890 = vld [vmem:[%s3889] sm:%s1598]
    %s3892 = ssub.s32 16, 1
    %s3893 = scalar_lea.vmem %s1, 1528
    %3894 = vst [vmem:[%s3893] sm:%s3892] %v3890
    %s3895 = scalar_lea.vmem [#allocation0], 3064
    %v3896 = vld [vmem:[%s3895] sm:%s1598]
    %s3898 = ssub.s32 16, 1
    %s3899 = scalar_lea.vmem %s1, 1532
    %3900 = vst [vmem:[%s3899] sm:%s3898] %v3896
    %s3901 = scalar_lea.vmem [#allocation0], 3072
    %v3902 = vld [vmem:[%s3901] sm:%s1598]
    %s3904 = ssub.s32 16, 1
    %s3905 = scalar_lea.vmem %s1, 1536
    %3906 = vst [vmem:[%s3905] sm:%s3904] %v3902
    %s3907 = scalar_lea.vmem [#allocation0], 3080
    %v3908 = vld [vmem:[%s3907] sm:%s1598]
    %s3910 = ssub.s32 16, 1
    %s3911 = scalar_lea.vmem %s1, 1540
    %3912 = vst [vmem:[%s3911] sm:%s3910] %v3908
    %s3913 = scalar_lea.vmem [#allocation0], 3088
    %v3914 = vld [vmem:[%s3913] sm:%s1598]
    %s3916 = ssub.s32 16, 1
    %s3917 = scalar_lea.vmem %s1, 1544
    %3918 = vst [vmem:[%s3917] sm:%s3916] %v3914
    %s3919 = scalar_lea.vmem [#allocation0], 3096
    %v3920 = vld [vmem:[%s3919] sm:%s1598]
    %s3922 = ssub.s32 16, 1
    %s3923 = scalar_lea.vmem %s1, 1548
    %3924 = vst [vmem:[%s3923] sm:%s3922] %v3920
    %s3925 = scalar_lea.vmem [#allocation0], 3104
    %v3926 = vld [vmem:[%s3925] sm:%s1598]
    %s3928 = ssub.s32 16, 1
    %s3929 = scalar_lea.vmem %s1, 1552
    %3930 = vst [vmem:[%s3929] sm:%s3928] %v3926
    %s3931 = scalar_lea.vmem [#allocation0], 3112
    %v3932 = vld [vmem:[%s3931] sm:%s1598]
    %s3934 = ssub.s32 16, 1
    %s3935 = scalar_lea.vmem %s1, 1556
    %3936 = vst [vmem:[%s3935] sm:%s3934] %v3932
    %s3937 = scalar_lea.vmem [#allocation0], 3120
    %v3938 = vld [vmem:[%s3937] sm:%s1598]
    %s3940 = ssub.s32 16, 1
    %s3941 = scalar_lea.vmem %s1, 1560
    %3942 = vst [vmem:[%s3941] sm:%s3940] %v3938
    %s3943 = scalar_lea.vmem [#allocation0], 3128
    %v3944 = vld [vmem:[%s3943] sm:%s1598]
    %s3946 = ssub.s32 16, 1
    %s3947 = scalar_lea.vmem %s1, 1564
    %3948 = vst [vmem:[%s3947] sm:%s3946] %v3944
    %s3949 = scalar_lea.vmem [#allocation0], 3136
    %v3950 = vld [vmem:[%s3949] sm:%s1598]
    %s3952 = ssub.s32 16, 1
    %s3953 = scalar_lea.vmem %s1, 1568
    %3954 = vst [vmem:[%s3953] sm:%s3952] %v3950
    %s3955 = scalar_lea.vmem [#allocation0], 3144
    %v3956 = vld [vmem:[%s3955] sm:%s1598]
    %s3958 = ssub.s32 16, 1
    %s3959 = scalar_lea.vmem %s1, 1572
    %3960 = vst [vmem:[%s3959] sm:%s3958] %v3956
    %s3961 = scalar_lea.vmem [#allocation0], 3152
    %v3962 = vld [vmem:[%s3961] sm:%s1598]
    %s3964 = ssub.s32 16, 1
    %s3965 = scalar_lea.vmem %s1, 1576
    %3966 = vst [vmem:[%s3965] sm:%s3964] %v3962
    %s3967 = scalar_lea.vmem [#allocation0], 3160
    %v3968 = vld [vmem:[%s3967] sm:%s1598]
    %s3970 = ssub.s32 16, 1
    %s3971 = scalar_lea.vmem %s1, 1580
    %3972 = vst [vmem:[%s3971] sm:%s3970] %v3968
    %s3973 = scalar_lea.vmem [#allocation0], 3168
    %v3974 = vld [vmem:[%s3973] sm:%s1598]
    %s3976 = ssub.s32 16, 1
    %s3977 = scalar_lea.vmem %s1, 1584
    %3978 = vst [vmem:[%s3977] sm:%s3976] %v3974
    %s3979 = scalar_lea.vmem [#allocation0], 3176
    %v3980 = vld [vmem:[%s3979] sm:%s1598]
    %s3982 = ssub.s32 16, 1
    %s3983 = scalar_lea.vmem %s1, 1588
    %3984 = vst [vmem:[%s3983] sm:%s3982] %v3980
    %s3985 = scalar_lea.vmem [#allocation0], 3184
    %v3986 = vld [vmem:[%s3985] sm:%s1598]
    %s3988 = ssub.s32 16, 1
    %s3989 = scalar_lea.vmem %s1, 1592
    %3990 = vst [vmem:[%s3989] sm:%s3988] %v3986
    %s3991 = scalar_lea.vmem [#allocation0], 3192
    %v3992 = vld [vmem:[%s3991] sm:%s1598]
    %s3994 = ssub.s32 16, 1
    %s3995 = scalar_lea.vmem %s1, 1596
    %3996 = vst [vmem:[%s3995] sm:%s3994] %v3992
    %s3997 = scalar_lea.vmem [#allocation0], 3200
    %v3998 = vld [vmem:[%s3997] sm:%s1598]
    %s4000 = ssub.s32 16, 1
    %s4001 = scalar_lea.vmem %s1, 1600
    %4002 = vst [vmem:[%s4001] sm:%s4000] %v3998
    %s4003 = scalar_lea.vmem [#allocation0], 3208
    %v4004 = vld [vmem:[%s4003] sm:%s1598]
    %s4006 = ssub.s32 16, 1
    %s4007 = scalar_lea.vmem %s1, 1604
    %4008 = vst [vmem:[%s4007] sm:%s4006] %v4004
    %s4009 = scalar_lea.vmem [#allocation0], 3216
    %v4010 = vld [vmem:[%s4009] sm:%s1598]
    %s4012 = ssub.s32 16, 1
    %s4013 = scalar_lea.vmem %s1, 1608
    %4014 = vst [vmem:[%s4013] sm:%s4012] %v4010
    %s4015 = scalar_lea.vmem [#allocation0], 3224
    %v4016 = vld [vmem:[%s4015] sm:%s1598]
    %s4018 = ssub.s32 16, 1
    %s4019 = scalar_lea.vmem %s1, 1612
    %4020 = vst [vmem:[%s4019] sm:%s4018] %v4016
    %s4021 = scalar_lea.vmem [#allocation0], 3232
    %v4022 = vld [vmem:[%s4021] sm:%s1598]
    %s4024 = ssub.s32 16, 1
    %s4025 = scalar_lea.vmem %s1, 1616
    %4026 = vst [vmem:[%s4025] sm:%s4024] %v4022
    %s4027 = scalar_lea.vmem [#allocation0], 3240
    %v4028 = vld [vmem:[%s4027] sm:%s1598]
    %s4030 = ssub.s32 16, 1
    %s4031 = scalar_lea.vmem %s1, 1620
    %4032 = vst [vmem:[%s4031] sm:%s4030] %v4028
    %s4033 = scalar_lea.vmem [#allocation0], 3248
    %v4034 = vld [vmem:[%s4033] sm:%s1598]
    %s4036 = ssub.s32 16, 1
    %s4037 = scalar_lea.vmem %s1, 1624
    %4038 = vst [vmem:[%s4037] sm:%s4036] %v4034
    %s4039 = scalar_lea.vmem [#allocation0], 3256
    %v4040 = vld [vmem:[%s4039] sm:%s1598]
    %s4042 = ssub.s32 16, 1
    %s4043 = scalar_lea.vmem %s1, 1628
    %4044 = vst [vmem:[%s4043] sm:%s4042] %v4040
    %s4045 = scalar_lea.vmem [#allocation0], 3264
    %v4046 = vld [vmem:[%s4045] sm:%s1598]
    %s4048 = ssub.s32 16, 1
    %s4049 = scalar_lea.vmem %s1, 1632
    %4050 = vst [vmem:[%s4049] sm:%s4048] %v4046
    %s4051 = scalar_lea.vmem [#allocation0], 3272
    %v4052 = vld [vmem:[%s4051] sm:%s1598]
    %s4054 = ssub.s32 16, 1
    %s4055 = scalar_lea.vmem %s1, 1636
    %4056 = vst [vmem:[%s4055] sm:%s4054] %v4052
    %s4057 = scalar_lea.vmem [#allocation0], 3280
    %v4058 = vld [vmem:[%s4057] sm:%s1598]
    %s4060 = ssub.s32 16, 1
    %s4061 = scalar_lea.vmem %s1, 1640
    %4062 = vst [vmem:[%s4061] sm:%s4060] %v4058
    %s4063 = scalar_lea.vmem [#allocation0], 3288
    %v4064 = vld [vmem:[%s4063] sm:%s1598]
    %s4066 = ssub.s32 16, 1
    %s4067 = scalar_lea.vmem %s1, 1644
    %4068 = vst [vmem:[%s4067] sm:%s4066] %v4064
    %s4069 = scalar_lea.vmem [#allocation0], 3296
    %v4070 = vld [vmem:[%s4069] sm:%s1598]
    %s4072 = ssub.s32 16, 1
    %s4073 = scalar_lea.vmem %s1, 1648
    %4074 = vst [vmem:[%s4073] sm:%s4072] %v4070
    %s4075 = scalar_lea.vmem [#allocation0], 3304
    %v4076 = vld [vmem:[%s4075] sm:%s1598]
    %s4078 = ssub.s32 16, 1
    %s4079 = scalar_lea.vmem %s1, 1652
    %4080 = vst [vmem:[%s4079] sm:%s4078] %v4076
    %s4081 = scalar_lea.vmem [#allocation0], 3312
    %v4082 = vld [vmem:[%s4081] sm:%s1598]
    %s4084 = ssub.s32 16, 1
    %s4085 = scalar_lea.vmem %s1, 1656
    %4086 = vst [vmem:[%s4085] sm:%s4084] %v4082
    %s4087 = scalar_lea.vmem [#allocation0], 3320
    %v4088 = vld [vmem:[%s4087] sm:%s1598]
    %s4090 = ssub.s32 16, 1
    %s4091 = scalar_lea.vmem %s1, 1660
    %4092 = vst [vmem:[%s4091] sm:%s4090] %v4088
    %s4093 = scalar_lea.vmem [#allocation0], 3328
    %v4094 = vld [vmem:[%s4093] sm:%s1598]
    %s4096 = ssub.s32 16, 1
    %s4097 = scalar_lea.vmem %s1, 1664
    %4098 = vst [vmem:[%s4097] sm:%s4096] %v4094
    %s4099 = scalar_lea.vmem [#allocation0], 3336
    %v4100 = vld [vmem:[%s4099] sm:%s1598]
    %s4102 = ssub.s32 16, 1
    %s4103 = scalar_lea.vmem %s1, 1668
    %4104 = vst [vmem:[%s4103] sm:%s4102] %v4100
    %s4105 = scalar_lea.vmem [#allocation0], 3344
    %v4106 = vld [vmem:[%s4105] sm:%s1598]
    %s4108 = ssub.s32 16, 1
    %s4109 = scalar_lea.vmem %s1, 1672
    %4110 = vst [vmem:[%s4109] sm:%s4108] %v4106
    %s4111 = scalar_lea.vmem [#allocation0], 3352
    %v4112 = vld [vmem:[%s4111] sm:%s1598]
    %s4114 = ssub.s32 16, 1
    %s4115 = scalar_lea.vmem %s1, 1676
    %4116 = vst [vmem:[%s4115] sm:%s4114] %v4112
    %s4117 = scalar_lea.vmem [#allocation0], 3360
    %v4118 = vld [vmem:[%s4117] sm:%s1598]
    %s4120 = ssub.s32 16, 1
    %s4121 = scalar_lea.vmem %s1, 1680
    %4122 = vst [vmem:[%s4121] sm:%s4120] %v4118
    %s4123 = scalar_lea.vmem [#allocation0], 3368
    %v4124 = vld [vmem:[%s4123] sm:%s1598]
    %s4126 = ssub.s32 16, 1
    %s4127 = scalar_lea.vmem %s1, 1684
    %4128 = vst [vmem:[%s4127] sm:%s4126] %v4124
    %s4129 = scalar_lea.vmem [#allocation0], 3376
    %v4130 = vld [vmem:[%s4129] sm:%s1598]
    %s4132 = ssub.s32 16, 1
    %s4133 = scalar_lea.vmem %s1, 1688
    %4134 = vst [vmem:[%s4133] sm:%s4132] %v4130
    %s4135 = scalar_lea.vmem [#allocation0], 3384
    %v4136 = vld [vmem:[%s4135] sm:%s1598]
    %s4138 = ssub.s32 16, 1
    %s4139 = scalar_lea.vmem %s1, 1692
    %4140 = vst [vmem:[%s4139] sm:%s4138] %v4136
    %s4141 = scalar_lea.vmem [#allocation0], 3392
    %v4142 = vld [vmem:[%s4141] sm:%s1598]
    %s4144 = ssub.s32 16, 1
    %s4145 = scalar_lea.vmem %s1, 1696
    %4146 = vst [vmem:[%s4145] sm:%s4144] %v4142
    %s4147 = scalar_lea.vmem [#allocation0], 3400
    %v4148 = vld [vmem:[%s4147] sm:%s1598]
    %s4150 = ssub.s32 16, 1
    %s4151 = scalar_lea.vmem %s1, 1700
    %4152 = vst [vmem:[%s4151] sm:%s4150] %v4148
    %s4153 = scalar_lea.vmem [#allocation0], 3408
    %v4154 = vld [vmem:[%s4153] sm:%s1598]
    %s4156 = ssub.s32 16, 1
    %s4157 = scalar_lea.vmem %s1, 1704
    %4158 = vst [vmem:[%s4157] sm:%s4156] %v4154
    %s4159 = scalar_lea.vmem [#allocation0], 3416
    %v4160 = vld [vmem:[%s4159] sm:%s1598]
    %s4162 = ssub.s32 16, 1
    %s4163 = scalar_lea.vmem %s1, 1708
    %4164 = vst [vmem:[%s4163] sm:%s4162] %v4160
    %s4165 = scalar_lea.vmem [#allocation0], 3424
    %v4166 = vld [vmem:[%s4165] sm:%s1598]
    %s4168 = ssub.s32 16, 1
    %s4169 = scalar_lea.vmem %s1, 1712
    %4170 = vst [vmem:[%s4169] sm:%s4168] %v4166
    %s4171 = scalar_lea.vmem [#allocation0], 3432
    %v4172 = vld [vmem:[%s4171] sm:%s1598]
    %s4174 = ssub.s32 16, 1
    %s4175 = scalar_lea.vmem %s1, 1716
    %4176 = vst [vmem:[%s4175] sm:%s4174] %v4172
    %s4177 = scalar_lea.vmem [#allocation0], 3440
    %v4178 = vld [vmem:[%s4177] sm:%s1598]
    %s4180 = ssub.s32 16, 1
    %s4181 = scalar_lea.vmem %s1, 1720
    %4182 = vst [vmem:[%s4181] sm:%s4180] %v4178
    %s4183 = scalar_lea.vmem [#allocation0], 3448
    %v4184 = vld [vmem:[%s4183] sm:%s1598]
    %s4186 = ssub.s32 16, 1
    %s4187 = scalar_lea.vmem %s1, 1724
    %4188 = vst [vmem:[%s4187] sm:%s4186] %v4184
    %s4189 = scalar_lea.vmem [#allocation0], 3456
    %v4190 = vld [vmem:[%s4189] sm:%s1598]
    %s4192 = ssub.s32 16, 1
    %s4193 = scalar_lea.vmem %s1, 1728
    %4194 = vst [vmem:[%s4193] sm:%s4192] %v4190
    %s4195 = scalar_lea.vmem [#allocation0], 3464
    %v4196 = vld [vmem:[%s4195] sm:%s1598]
    %s4198 = ssub.s32 16, 1
    %s4199 = scalar_lea.vmem %s1, 1732
    %4200 = vst [vmem:[%s4199] sm:%s4198] %v4196
    %s4201 = scalar_lea.vmem [#allocation0], 3472
    %v4202 = vld [vmem:[%s4201] sm:%s1598]
    %s4204 = ssub.s32 16, 1
    %s4205 = scalar_lea.vmem %s1, 1736
    %4206 = vst [vmem:[%s4205] sm:%s4204] %v4202
    %s4207 = scalar_lea.vmem [#allocation0], 3480
    %v4208 = vld [vmem:[%s4207] sm:%s1598]
    %s4210 = ssub.s32 16, 1
    %s4211 = scalar_lea.vmem %s1, 1740
    %4212 = vst [vmem:[%s4211] sm:%s4210] %v4208
    %s4213 = scalar_lea.vmem [#allocation0], 3488
    %v4214 = vld [vmem:[%s4213] sm:%s1598]
    %s4216 = ssub.s32 16, 1
    %s4217 = scalar_lea.vmem %s1, 1744
    %4218 = vst [vmem:[%s4217] sm:%s4216] %v4214
    %s4219 = scalar_lea.vmem [#allocation0], 3496
    %v4220 = vld [vmem:[%s4219] sm:%s1598]
    %s4222 = ssub.s32 16, 1
    %s4223 = scalar_lea.vmem %s1, 1748
    %4224 = vst [vmem:[%s4223] sm:%s4222] %v4220
    %s4225 = scalar_lea.vmem [#allocation0], 3504
    %v4226 = vld [vmem:[%s4225] sm:%s1598]
    %s4228 = ssub.s32 16, 1
    %s4229 = scalar_lea.vmem %s1, 1752
    %4230 = vst [vmem:[%s4229] sm:%s4228] %v4226
    %s4231 = scalar_lea.vmem [#allocation0], 3512
    %v4232 = vld [vmem:[%s4231] sm:%s1598]
    %s4234 = ssub.s32 16, 1
    %s4235 = scalar_lea.vmem %s1, 1756
    %4236 = vst [vmem:[%s4235] sm:%s4234] %v4232
    %s4237 = scalar_lea.vmem [#allocation0], 3520
    %v4238 = vld [vmem:[%s4237] sm:%s1598]
    %s4240 = ssub.s32 16, 1
    %s4241 = scalar_lea.vmem %s1, 1760
    %4242 = vst [vmem:[%s4241] sm:%s4240] %v4238
    %s4243 = scalar_lea.vmem [#allocation0], 3528
    %v4244 = vld [vmem:[%s4243] sm:%s1598]
    %s4246 = ssub.s32 16, 1
    %s4247 = scalar_lea.vmem %s1, 1764
    %4248 = vst [vmem:[%s4247] sm:%s4246] %v4244
    %s4249 = scalar_lea.vmem [#allocation0], 3536
    %v4250 = vld [vmem:[%s4249] sm:%s1598]
    %s4252 = ssub.s32 16, 1
    %s4253 = scalar_lea.vmem %s1, 1768
    %4254 = vst [vmem:[%s4253] sm:%s4252] %v4250
    %s4255 = scalar_lea.vmem [#allocation0], 3544
    %v4256 = vld [vmem:[%s4255] sm:%s1598]
    %s4258 = ssub.s32 16, 1
    %s4259 = scalar_lea.vmem %s1, 1772
    %4260 = vst [vmem:[%s4259] sm:%s4258] %v4256
    %s4261 = scalar_lea.vmem [#allocation0], 3552
    %v4262 = vld [vmem:[%s4261] sm:%s1598]
    %s4264 = ssub.s32 16, 1
    %s4265 = scalar_lea.vmem %s1, 1776
    %4266 = vst [vmem:[%s4265] sm:%s4264] %v4262
    %s4267 = scalar_lea.vmem [#allocation0], 3560
    %v4268 = vld [vmem:[%s4267] sm:%s1598]
    %s4270 = ssub.s32 16, 1
    %s4271 = scalar_lea.vmem %s1, 1780
    %4272 = vst [vmem:[%s4271] sm:%s4270] %v4268
    %s4273 = scalar_lea.vmem [#allocation0], 3568
    %v4274 = vld [vmem:[%s4273] sm:%s1598]
    %s4276 = ssub.s32 16, 1
    %s4277 = scalar_lea.vmem %s1, 1784
    %4278 = vst [vmem:[%s4277] sm:%s4276] %v4274
    %s4279 = scalar_lea.vmem [#allocation0], 3576
    %v4280 = vld [vmem:[%s4279] sm:%s1598]
    %s4282 = ssub.s32 16, 1
    %s4283 = scalar_lea.vmem %s1, 1788
    %4284 = vst [vmem:[%s4283] sm:%s4282] %v4280
    %s4285 = scalar_lea.vmem [#allocation0], 3584
    %v4286 = vld [vmem:[%s4285] sm:%s1598]
    %s4288 = ssub.s32 16, 1
    %s4289 = scalar_lea.vmem %s1, 1792
    %4290 = vst [vmem:[%s4289] sm:%s4288] %v4286
    %s4291 = scalar_lea.vmem [#allocation0], 3592
    %v4292 = vld [vmem:[%s4291] sm:%s1598]
    %s4294 = ssub.s32 16, 1
    %s4295 = scalar_lea.vmem %s1, 1796
    %4296 = vst [vmem:[%s4295] sm:%s4294] %v4292
    %s4297 = scalar_lea.vmem [#allocation0], 3600
    %v4298 = vld [vmem:[%s4297] sm:%s1598]
    %s4300 = ssub.s32 16, 1
    %s4301 = scalar_lea.vmem %s1, 1800
    %4302 = vst [vmem:[%s4301] sm:%s4300] %v4298
    %s4303 = scalar_lea.vmem [#allocation0], 3608
    %v4304 = vld [vmem:[%s4303] sm:%s1598]
    %s4306 = ssub.s32 16, 1
    %s4307 = scalar_lea.vmem %s1, 1804
    %4308 = vst [vmem:[%s4307] sm:%s4306] %v4304
    %s4309 = scalar_lea.vmem [#allocation0], 3616
    %v4310 = vld [vmem:[%s4309] sm:%s1598]
    %s4312 = ssub.s32 16, 1
    %s4313 = scalar_lea.vmem %s1, 1808
    %4314 = vst [vmem:[%s4313] sm:%s4312] %v4310
    %s4315 = scalar_lea.vmem [#allocation0], 3624
    %v4316 = vld [vmem:[%s4315] sm:%s1598]
    %s4318 = ssub.s32 16, 1
    %s4319 = scalar_lea.vmem %s1, 1812
    %4320 = vst [vmem:[%s4319] sm:%s4318] %v4316
    %s4321 = scalar_lea.vmem [#allocation0], 3632
    %v4322 = vld [vmem:[%s4321] sm:%s1598]
    %s4324 = ssub.s32 16, 1
    %s4325 = scalar_lea.vmem %s1, 1816
    %4326 = vst [vmem:[%s4325] sm:%s4324] %v4322
    %s4327 = scalar_lea.vmem [#allocation0], 3640
    %v4328 = vld [vmem:[%s4327] sm:%s1598]
    %s4330 = ssub.s32 16, 1
    %s4331 = scalar_lea.vmem %s1, 1820
    %4332 = vst [vmem:[%s4331] sm:%s4330] %v4328
    %s4333 = scalar_lea.vmem [#allocation0], 3648
    %v4334 = vld [vmem:[%s4333] sm:%s1598]
    %s4336 = ssub.s32 16, 1
    %s4337 = scalar_lea.vmem %s1, 1824
    %4338 = vst [vmem:[%s4337] sm:%s4336] %v4334
    %s4339 = scalar_lea.vmem [#allocation0], 3656
    %v4340 = vld [vmem:[%s4339] sm:%s1598]
    %s4342 = ssub.s32 16, 1
    %s4343 = scalar_lea.vmem %s1, 1828
    %4344 = vst [vmem:[%s4343] sm:%s4342] %v4340
    %s4345 = scalar_lea.vmem [#allocation0], 3664
    %v4346 = vld [vmem:[%s4345] sm:%s1598]
    %s4348 = ssub.s32 16, 1
    %s4349 = scalar_lea.vmem %s1, 1832
    %4350 = vst [vmem:[%s4349] sm:%s4348] %v4346
    %s4351 = scalar_lea.vmem [#allocation0], 3672
    %v4352 = vld [vmem:[%s4351] sm:%s1598]
    %s4354 = ssub.s32 16, 1
    %s4355 = scalar_lea.vmem %s1, 1836
    %4356 = vst [vmem:[%s4355] sm:%s4354] %v4352
    %s4357 = scalar_lea.vmem [#allocation0], 3680
    %v4358 = vld [vmem:[%s4357] sm:%s1598]
    %s4360 = ssub.s32 16, 1
    %s4361 = scalar_lea.vmem %s1, 1840
    %4362 = vst [vmem:[%s4361] sm:%s4360] %v4358
    %s4363 = scalar_lea.vmem [#allocation0], 3688
    %v4364 = vld [vmem:[%s4363] sm:%s1598]
    %s4366 = ssub.s32 16, 1
    %s4367 = scalar_lea.vmem %s1, 1844
    %4368 = vst [vmem:[%s4367] sm:%s4366] %v4364
    %s4369 = scalar_lea.vmem [#allocation0], 3696
    %v4370 = vld [vmem:[%s4369] sm:%s1598]
    %s4372 = ssub.s32 16, 1
    %s4373 = scalar_lea.vmem %s1, 1848
    %4374 = vst [vmem:[%s4373] sm:%s4372] %v4370
    %s4375 = scalar_lea.vmem [#allocation0], 3704
    %v4376 = vld [vmem:[%s4375] sm:%s1598]
    %s4378 = ssub.s32 16, 1
    %s4379 = scalar_lea.vmem %s1, 1852
    %4380 = vst [vmem:[%s4379] sm:%s4378] %v4376
    %s4381 = scalar_lea.vmem [#allocation0], 3712
    %v4382 = vld [vmem:[%s4381] sm:%s1598]
    %s4384 = ssub.s32 16, 1
    %s4385 = scalar_lea.vmem %s1, 1856
    %4386 = vst [vmem:[%s4385] sm:%s4384] %v4382
    %s4387 = scalar_lea.vmem [#allocation0], 3720
    %v4388 = vld [vmem:[%s4387] sm:%s1598]
    %s4390 = ssub.s32 16, 1
    %s4391 = scalar_lea.vmem %s1, 1860
    %4392 = vst [vmem:[%s4391] sm:%s4390] %v4388
    %s4393 = scalar_lea.vmem [#allocation0], 3728
    %v4394 = vld [vmem:[%s4393] sm:%s1598]
    %s4396 = ssub.s32 16, 1
    %s4397 = scalar_lea.vmem %s1, 1864
    %4398 = vst [vmem:[%s4397] sm:%s4396] %v4394
    %s4399 = scalar_lea.vmem [#allocation0], 3736
    %v4400 = vld [vmem:[%s4399] sm:%s1598]
    %s4402 = ssub.s32 16, 1
    %s4403 = scalar_lea.vmem %s1, 1868
    %4404 = vst [vmem:[%s4403] sm:%s4402] %v4400
    %s4405 = scalar_lea.vmem [#allocation0], 3744
    %v4406 = vld [vmem:[%s4405] sm:%s1598]
    %s4408 = ssub.s32 16, 1
    %s4409 = scalar_lea.vmem %s1, 1872
    %4410 = vst [vmem:[%s4409] sm:%s4408] %v4406
    %s4411 = scalar_lea.vmem [#allocation0], 3752
    %v4412 = vld [vmem:[%s4411] sm:%s1598]
    %s4414 = ssub.s32 16, 1
    %s4415 = scalar_lea.vmem %s1, 1876
    %4416 = vst [vmem:[%s4415] sm:%s4414] %v4412
    %s4417 = scalar_lea.vmem [#allocation0], 3760
    %v4418 = vld [vmem:[%s4417] sm:%s1598]
    %s4420 = ssub.s32 16, 1
    %s4421 = scalar_lea.vmem %s1, 1880
    %4422 = vst [vmem:[%s4421] sm:%s4420] %v4418
    %s4423 = scalar_lea.vmem [#allocation0], 3768
    %v4424 = vld [vmem:[%s4423] sm:%s1598]
    %s4426 = ssub.s32 16, 1
    %s4427 = scalar_lea.vmem %s1, 1884
    %4428 = vst [vmem:[%s4427] sm:%s4426] %v4424
    %s4429 = scalar_lea.vmem [#allocation0], 3776
    %v4430 = vld [vmem:[%s4429] sm:%s1598]
    %s4432 = ssub.s32 16, 1
    %s4433 = scalar_lea.vmem %s1, 1888
    %4434 = vst [vmem:[%s4433] sm:%s4432] %v4430
    %s4435 = scalar_lea.vmem [#allocation0], 3784
    %v4436 = vld [vmem:[%s4435] sm:%s1598]
    %s4438 = ssub.s32 16, 1
    %s4439 = scalar_lea.vmem %s1, 1892
    %4440 = vst [vmem:[%s4439] sm:%s4438] %v4436
    %s4441 = scalar_lea.vmem [#allocation0], 3792
    %v4442 = vld [vmem:[%s4441] sm:%s1598]
    %s4444 = ssub.s32 16, 1
    %s4445 = scalar_lea.vmem %s1, 1896
    %4446 = vst [vmem:[%s4445] sm:%s4444] %v4442
    %s4447 = scalar_lea.vmem [#allocation0], 3800
    %v4448 = vld [vmem:[%s4447] sm:%s1598]
    %s4450 = ssub.s32 16, 1
    %s4451 = scalar_lea.vmem %s1, 1900
    %4452 = vst [vmem:[%s4451] sm:%s4450] %v4448
    %s4453 = scalar_lea.vmem [#allocation0], 3808
    %v4454 = vld [vmem:[%s4453] sm:%s1598]
    %s4456 = ssub.s32 16, 1
    %s4457 = scalar_lea.vmem %s1, 1904
    %4458 = vst [vmem:[%s4457] sm:%s4456] %v4454
    %s4459 = scalar_lea.vmem [#allocation0], 3816
    %v4460 = vld [vmem:[%s4459] sm:%s1598]
    %s4462 = ssub.s32 16, 1
    %s4463 = scalar_lea.vmem %s1, 1908
    %4464 = vst [vmem:[%s4463] sm:%s4462] %v4460
    %s4465 = scalar_lea.vmem [#allocation0], 3824
    %v4466 = vld [vmem:[%s4465] sm:%s1598]
    %s4468 = ssub.s32 16, 1
    %s4469 = scalar_lea.vmem %s1, 1912
    %4470 = vst [vmem:[%s4469] sm:%s4468] %v4466
    %s4471 = scalar_lea.vmem [#allocation0], 3832
    %v4472 = vld [vmem:[%s4471] sm:%s1598]
    %s4474 = ssub.s32 16, 1
    %s4475 = scalar_lea.vmem %s1, 1916
    %4476 = vst [vmem:[%s4475] sm:%s4474] %v4472
    %s4477 = scalar_lea.vmem [#allocation0], 3840
    %v4478 = vld [vmem:[%s4477] sm:%s1598]
    %s4480 = ssub.s32 16, 1
    %s4481 = scalar_lea.vmem %s1, 1920
    %4482 = vst [vmem:[%s4481] sm:%s4480] %v4478
    %s4483 = scalar_lea.vmem [#allocation0], 3848
    %v4484 = vld [vmem:[%s4483] sm:%s1598]
    %s4486 = ssub.s32 16, 1
    %s4487 = scalar_lea.vmem %s1, 1924
    %4488 = vst [vmem:[%s4487] sm:%s4486] %v4484
    %s4489 = scalar_lea.vmem [#allocation0], 3856
    %v4490 = vld [vmem:[%s4489] sm:%s1598]
    %s4492 = ssub.s32 16, 1
    %s4493 = scalar_lea.vmem %s1, 1928
    %4494 = vst [vmem:[%s4493] sm:%s4492] %v4490
    %s4495 = scalar_lea.vmem [#allocation0], 3864
    %v4496 = vld [vmem:[%s4495] sm:%s1598]
    %s4498 = ssub.s32 16, 1
    %s4499 = scalar_lea.vmem %s1, 1932
    %4500 = vst [vmem:[%s4499] sm:%s4498] %v4496
    %s4501 = scalar_lea.vmem [#allocation0], 3872
    %v4502 = vld [vmem:[%s4501] sm:%s1598]
    %s4504 = ssub.s32 16, 1
    %s4505 = scalar_lea.vmem %s1, 1936
    %4506 = vst [vmem:[%s4505] sm:%s4504] %v4502
    %s4507 = scalar_lea.vmem [#allocation0], 3880
    %v4508 = vld [vmem:[%s4507] sm:%s1598]
    %s4510 = ssub.s32 16, 1
    %s4511 = scalar_lea.vmem %s1, 1940
    %4512 = vst [vmem:[%s4511] sm:%s4510] %v4508
    %s4513 = scalar_lea.vmem [#allocation0], 3888
    %v4514 = vld [vmem:[%s4513] sm:%s1598]
    %s4516 = ssub.s32 16, 1
    %s4517 = scalar_lea.vmem %s1, 1944
    %4518 = vst [vmem:[%s4517] sm:%s4516] %v4514
    %s4519 = scalar_lea.vmem [#allocation0], 3896
    %v4520 = vld [vmem:[%s4519] sm:%s1598]
    %s4522 = ssub.s32 16, 1
    %s4523 = scalar_lea.vmem %s1, 1948
    %4524 = vst [vmem:[%s4523] sm:%s4522] %v4520
    %s4525 = scalar_lea.vmem [#allocation0], 3904
    %v4526 = vld [vmem:[%s4525] sm:%s1598]
    %s4528 = ssub.s32 16, 1
    %s4529 = scalar_lea.vmem %s1, 1952
    %4530 = vst [vmem:[%s4529] sm:%s4528] %v4526
    %s4531 = scalar_lea.vmem [#allocation0], 3912
    %v4532 = vld [vmem:[%s4531] sm:%s1598]
    %s4534 = ssub.s32 16, 1
    %s4535 = scalar_lea.vmem %s1, 1956
    %4536 = vst [vmem:[%s4535] sm:%s4534] %v4532
    %s4537 = scalar_lea.vmem [#allocation0], 3920
    %v4538 = vld [vmem:[%s4537] sm:%s1598]
    %s4540 = ssub.s32 16, 1
    %s4541 = scalar_lea.vmem %s1, 1960
    %4542 = vst [vmem:[%s4541] sm:%s4540] %v4538
    %s4543 = scalar_lea.vmem [#allocation0], 3928
    %v4544 = vld [vmem:[%s4543] sm:%s1598]
    %s4546 = ssub.s32 16, 1
    %s4547 = scalar_lea.vmem %s1, 1964
    %4548 = vst [vmem:[%s4547] sm:%s4546] %v4544
    %s4549 = scalar_lea.vmem [#allocation0], 3936
    %v4550 = vld [vmem:[%s4549] sm:%s1598]
    %s4552 = ssub.s32 16, 1
    %s4553 = scalar_lea.vmem %s1, 1968
    %4554 = vst [vmem:[%s4553] sm:%s4552] %v4550
    %s4555 = scalar_lea.vmem [#allocation0], 3944
    %v4556 = vld [vmem:[%s4555] sm:%s1598]
    %s4558 = ssub.s32 16, 1
    %s4559 = scalar_lea.vmem %s1, 1972
    %4560 = vst [vmem:[%s4559] sm:%s4558] %v4556
    %s4561 = scalar_lea.vmem [#allocation0], 3952
    %v4562 = vld [vmem:[%s4561] sm:%s1598]
    %s4564 = ssub.s32 16, 1
    %s4565 = scalar_lea.vmem %s1, 1976
    %4566 = vst [vmem:[%s4565] sm:%s4564] %v4562
    %s4567 = scalar_lea.vmem [#allocation0], 3960
    %v4568 = vld [vmem:[%s4567] sm:%s1598]
    %s4570 = ssub.s32 16, 1
    %s4571 = scalar_lea.vmem %s1, 1980
    %4572 = vst [vmem:[%s4571] sm:%s4570] %v4568
    %s4573 = scalar_lea.vmem [#allocation0], 3968
    %v4574 = vld [vmem:[%s4573] sm:%s1598]
    %s4576 = ssub.s32 16, 1
    %s4577 = scalar_lea.vmem %s1, 1984
    %4578 = vst [vmem:[%s4577] sm:%s4576] %v4574
    %s4579 = scalar_lea.vmem [#allocation0], 3976
    %v4580 = vld [vmem:[%s4579] sm:%s1598]
    %s4582 = ssub.s32 16, 1
    %s4583 = scalar_lea.vmem %s1, 1988
    %4584 = vst [vmem:[%s4583] sm:%s4582] %v4580
    %s4585 = scalar_lea.vmem [#allocation0], 3984
    %v4586 = vld [vmem:[%s4585] sm:%s1598]
    %s4588 = ssub.s32 16, 1
    %s4589 = scalar_lea.vmem %s1, 1992
    %4590 = vst [vmem:[%s4589] sm:%s4588] %v4586
    %s4591 = scalar_lea.vmem [#allocation0], 3992
    %v4592 = vld [vmem:[%s4591] sm:%s1598]
    %s4594 = ssub.s32 16, 1
    %s4595 = scalar_lea.vmem %s1, 1996
    %4596 = vst [vmem:[%s4595] sm:%s4594] %v4592
    %s4597 = scalar_lea.vmem [#allocation0], 4000
    %v4598 = vld [vmem:[%s4597] sm:%s1598]
    %s4600 = ssub.s32 16, 1
    %s4601 = scalar_lea.vmem %s1, 2000
    %4602 = vst [vmem:[%s4601] sm:%s4600] %v4598
    %s4603 = scalar_lea.vmem [#allocation0], 4008
    %v4604 = vld [vmem:[%s4603] sm:%s1598]
    %s4606 = ssub.s32 16, 1
    %s4607 = scalar_lea.vmem %s1, 2004
    %4608 = vst [vmem:[%s4607] sm:%s4606] %v4604
    %s4609 = scalar_lea.vmem [#allocation0], 4016
    %v4610 = vld [vmem:[%s4609] sm:%s1598]
    %s4612 = ssub.s32 16, 1
    %s4613 = scalar_lea.vmem %s1, 2008
    %4614 = vst [vmem:[%s4613] sm:%s4612] %v4610
    %s4615 = scalar_lea.vmem [#allocation0], 4024
    %v4616 = vld [vmem:[%s4615] sm:%s1598]
    %s4618 = ssub.s32 16, 1
    %s4619 = scalar_lea.vmem %s1, 2012
    %4620 = vst [vmem:[%s4619] sm:%s4618] %v4616
    %s4621 = scalar_lea.vmem [#allocation0], 4032
    %v4622 = vld [vmem:[%s4621] sm:%s1598]
    %s4624 = ssub.s32 16, 1
    %s4625 = scalar_lea.vmem %s1, 2016
    %4626 = vst [vmem:[%s4625] sm:%s4624] %v4622
    %s4627 = scalar_lea.vmem [#allocation0], 4040
    %v4628 = vld [vmem:[%s4627] sm:%s1598]
    %s4630 = ssub.s32 16, 1
    %s4631 = scalar_lea.vmem %s1, 2020
    %4632 = vst [vmem:[%s4631] sm:%s4630] %v4628
    %s4633 = scalar_lea.vmem [#allocation0], 4048
    %v4634 = vld [vmem:[%s4633] sm:%s1598]
    %s4636 = ssub.s32 16, 1
    %s4637 = scalar_lea.vmem %s1, 2024
    %4638 = vst [vmem:[%s4637] sm:%s4636] %v4634
    %s4639 = scalar_lea.vmem [#allocation0], 4056
    %v4640 = vld [vmem:[%s4639] sm:%s1598]
    %s4642 = ssub.s32 16, 1
    %s4643 = scalar_lea.vmem %s1, 2028
    %4644 = vst [vmem:[%s4643] sm:%s4642] %v4640
    %s4645 = scalar_lea.vmem [#allocation0], 4064
    %v4646 = vld [vmem:[%s4645] sm:%s1598]
    %s4648 = ssub.s32 16, 1
    %s4649 = scalar_lea.vmem %s1, 2032
    %4650 = vst [vmem:[%s4649] sm:%s4648] %v4646
    %s4651 = scalar_lea.vmem [#allocation0], 4072
    %v4652 = vld [vmem:[%s4651] sm:%s1598]
    %s4654 = ssub.s32 16, 1
    %s4655 = scalar_lea.vmem %s1, 2036
    %4656 = vst [vmem:[%s4655] sm:%s4654] %v4652
    %s4657 = scalar_lea.vmem [#allocation0], 4080
    %v4658 = vld [vmem:[%s4657] sm:%s1598]
    %s4660 = ssub.s32 16, 1
    %s4661 = scalar_lea.vmem %s1, 2040
    %4662 = vst [vmem:[%s4661] sm:%s4660] %v4658
    %s4663 = scalar_lea.vmem [#allocation0], 4088
    %v4664 = vld [vmem:[%s4663] sm:%s1598]
    %s4666 = ssub.s32 16, 1
    %s4667 = scalar_lea.vmem %s1, 2044
    %4668 = vst [vmem:[%s4667] sm:%s4666] %v4664

// kernel: a_call__.4
$region0: #{a_call__.4}
  #allocation0 [shape = 'u32[]', space=smem, size = 0x4, offset = 0x4, fixed_abs, tag = 'smem constant byte address 0x4 - core index']
  #allocation1 [shape = 'u32[72,128]{1,0:T(1,128)}', space=vmem, size = 0x9000, scoped, tag = 'internal scratch']
  %s0 = inlined_call_operand.vmem [shape: bf16[1,512,128], index: 0, kind: input, shape index: {}]
  %s1 = inlined_call_operand.vmem [shape: bf16[1,128,81], index: 1, kind: input, shape index: {}]
  %s2 = inlined_call_operand.vmem [shape: f32[1,1,81], index: 2, kind: input, shape index: {}]
  %s3 = inlined_call_operand.vmem [shape: f32[1,1,81], index: 3, kind: input, shape index: {}]
  %s4 = inlined_call_operand.vmem [shape: f32[1,512,81], index: 4, kind: output, shape index: {}]
  %s5 = sld [smem:[#allocation0]]
  $region26: #{a_call__.4} parent=0
    _
  %s7 = ssub.s32 1, %s5
  %s8 = scalar_select 0, %s7, %s5
  // Predicated region
  $region2: #{a_call__.4} parent=0 // pred_check
    _
  $region3: #{a_call__.4} parent=0 // pred_check_branch
    %10 = sbr.rel (0) target = $region5
  $region4: #{a_call__.4} parent=0 // pred_region
    _
  $region5: #{a_call__.4} parent=0 // pred_fallthru
    _
  // Predicated region
  $region6: #{a_call__.4} parent=0 // pred_check
    _
  $region7: #{a_call__.4} parent=0 // pred_check_branch
    %12 = sbr.rel (0) target = $region9
  $region8: #{a_call__.4} parent=0 // pred_region
    _
  $region9: #{a_call__.4} parent=0 // pred_fallthru
    _
  // Predicated region
  $region10: #{a_call__.4} parent=0 // pred_check
    _
  $region11: #{a_call__.4} parent=0 // pred_check_branch
    %14 = sbr.rel (0) target = $region13
  $region12: #{a_call__.4} parent=0 // pred_region
    _
  $region13: #{a_call__.4} parent=0 // pred_fallthru
    _
  // Predicated region
  $region14: #{a_call__.4} parent=0 // pred_check
    _
  $region15: #{a_call__.4} parent=0 // pred_check_branch
    %16 = sbr.rel (0) target = $region17
  $region16: #{a_call__.4} parent=0 // pred_region
    _
  $region17: #{a_call__.4} parent=0 // pred_fallthru
    _
  %v17 = vld [vmem:[%s0] sm:$0xf]
  %v18 = vld [vmem:[%s0 + $0x4] sm:$0xf]
  %v19 = vld [vmem:[%s0 + $0x8] sm:$0xf]
  %v20 = vld [vmem:[%s0 + $0xc] sm:$0xf]
  %v21 = vld [vmem:[%s0 + $0x10] sm:$0xf]
  %v22 = vld [vmem:[%s0 + $0x14] sm:$0xf]
  %v23 = vld [vmem:[%s0 + $0x18] sm:$0xf]
  %v24 = vld [vmem:[%s0 + $0x1c] sm:$0xf]
  %v25 = vld [vmem:[%s0 + $0x20] sm:$0xf]
  %v26 = vld [vmem:[%s0 + $0x24] sm:$0xf]
  %v27 = vld [vmem:[%s0 + $0x28] sm:$0xf]
  %v28 = vld [vmem:[%s0 + $0x2c] sm:$0xf]
  %v29 = vld [vmem:[%s0 + $0x30] sm:$0xf]
  %v30 = vld [vmem:[%s0 + $0x34] sm:$0xf]
  %v31 = vld [vmem:[%s0 + $0x38] sm:$0xf]
  %v32 = vld [vmem:[%s0 + $0x3c] sm:$0xf]
  %v33 = vld [vmem:[%s0 + $0x40] sm:$0xf]
  %v34 = vld [vmem:[%s0 + $0x44] sm:$0xf]
  %v35 = vld [vmem:[%s0 + $0x48] sm:$0xf]
  %v36 = vld [vmem:[%s0 + $0x4c] sm:$0xf]
  %v37 = vld [vmem:[%s0 + $0x50] sm:$0xf]
  %v38 = vld [vmem:[%s0 + $0x54] sm:$0xf]
  %v39 = vld [vmem:[%s0 + $0x58] sm:$0xf]
  %v40 = vld [vmem:[%s0 + $0x5c] sm:$0xf]
  %v41 = vld [vmem:[%s0 + $0x60] sm:$0xf]
  %v42 = vld [vmem:[%s0 + $0x64] sm:$0xf]
  %v43 = vld [vmem:[%s0 + $0x68] sm:$0xf]
  %v44 = vld [vmem:[%s0 + $0x6c] sm:$0xf]
  %v45 = vld [vmem:[%s0 + $0x70] sm:$0xf]
  %v46 = vld [vmem:[%s0 + $0x74] sm:$0xf]
  %v47 = vld [vmem:[%s0 + $0x78] sm:$0xf]
  %v48 = vld [vmem:[%s0 + $0x7c] sm:$0xf]
  %v49 = vld [vmem:[%s0 + $0x80] sm:$0xf]
  %v50 = vld [vmem:[%s0 + $0x84] sm:$0xf]
  %v51 = vld [vmem:[%s0 + $0x88] sm:$0xf]
  %v52 = vld [vmem:[%s0 + $0x8c] sm:$0xf]
  %v53 = vld [vmem:[%s0 + $0x90] sm:$0xf]
  %v54 = vld [vmem:[%s0 + $0x94] sm:$0xf]
  %v55 = vld [vmem:[%s0 + $0x98] sm:$0xf]
  %v56 = vld [vmem:[%s0 + $0x9c] sm:$0xf]
  %v57 = vld [vmem:[%s0 + $0xa0] sm:$0xf]
  %v58 = vld [vmem:[%s0 + $0xa4] sm:$0xf]
  %v59 = vld [vmem:[%s0 + $0xa8] sm:$0xf]
  %v60 = vld [vmem:[%s0 + $0xac] sm:$0xf]
  %v61 = vld [vmem:[%s0 + $0xb0] sm:$0xf]
  %v62 = vld [vmem:[%s0 + $0xb4] sm:$0xf]
  %v63 = vld [vmem:[%s0 + $0xb8] sm:$0xf]
  %v64 = vld [vmem:[%s0 + $0xbc] sm:$0xf]
  %v65 = vld [vmem:[%s0 + $0xc0] sm:$0xf]
  %v66 = vld [vmem:[%s0 + $0xc4] sm:$0xf]
  %v67 = vld [vmem:[%s0 + $0xc8] sm:$0xf]
  %v68 = vld [vmem:[%s0 + $0xcc] sm:$0xf]
  %v69 = vld [vmem:[%s0 + $0xd0] sm:$0xf]
  %v70 = vld [vmem:[%s0 + $0xd4] sm:$0xf]
  %v71 = vld [vmem:[%s0 + $0xd8] sm:$0xf]
  %v72 = vld [vmem:[%s0 + $0xdc] sm:$0xf]
  %v73 = vld [vmem:[%s0 + $0xe0] sm:$0xf]
  %v74 = vld [vmem:[%s0 + $0xe4] sm:$0xf]
  %v75 = vld [vmem:[%s0 + $0xe8] sm:$0xf]
  %v76 = vld [vmem:[%s0 + $0xec] sm:$0xf]
  %v77 = vld [vmem:[%s0 + $0xf0] sm:$0xf]
  %v78 = vld [vmem:[%s0 + $0xf4] sm:$0xf]
  %v79 = vld [vmem:[%s0 + $0xf8] sm:$0xf]
  %v80 = vld [vmem:[%s0 + $0xfc] sm:$0xf]
  %v81 = vld [vmem:[%s1] sm:$0xf]
  %v82 = vld [vmem:[%s1 + $0x4] sm:$0xf]
  %v83 = vld [vmem:[%s1 + $0x8] sm:$0xf]
  %v84 = vld [vmem:[%s1 + $0xc] sm:$0xf]
  %v85 = vld [vmem:[%s1 + $0x10] sm:$0xf]
  %v86 = vld [vmem:[%s1 + $0x14] sm:$0xf]
  %v87 = vld [vmem:[%s1 + $0x18] sm:$0xf]
  %v88 = vld [vmem:[%s1 + $0x1c] sm:$0xf]
  %v89 = vld [vmem:[%s1 + $0x20] sm:$0xf]
  %v90 = vld [vmem:[%s1 + $0x24] sm:$0xf]
  %v91 = vld [vmem:[%s1 + $0x28] sm:$0xf]
  %v92 = vld [vmem:[%s1 + $0x2c] sm:$0xf]
  %v93 = vld [vmem:[%s1 + $0x30] sm:$0xf]
  %v94 = vld [vmem:[%s1 + $0x34] sm:$0xf]
  %v95 = vld [vmem:[%s1 + $0x38] sm:$0xf]
  %v96 = vld [vmem:[%s1 + $0x3c] sm:$0xf]
  %v161 = vunpack.c.l.b16 %v17
  %v162 = vunpack.c.l.b16 %v18
  %v163 = vunpack.c.l.b16 %v19
  %v164 = vunpack.c.l.b16 %v20
  %v165 = vunpack.c.l.b16 %v21
  %v166 = vunpack.c.l.b16 %v22
  %v167 = vunpack.c.l.b16 %v23
  %v168 = vunpack.c.l.b16 %v24
  %v169 = vunpack.c.l.b16 %v25
  %v170 = vunpack.c.l.b16 %v26
  %v171 = vunpack.c.l.b16 %v27
  %v172 = vunpack.c.l.b16 %v28
  %v173 = vunpack.c.l.b16 %v29
  %v174 = vunpack.c.l.b16 %v30
  %v175 = vunpack.c.l.b16 %v31
  %v176 = vunpack.c.l.b16 %v32
  %v177 = vunpack.c.l.b16 %v33
  %v178 = vunpack.c.l.b16 %v34
  %v179 = vunpack.c.l.b16 %v35
  %v180 = vunpack.c.l.b16 %v36
  %v181 = vunpack.c.l.b16 %v37
  %v182 = vunpack.c.l.b16 %v38
  %v183 = vunpack.c.l.b16 %v39
  %v184 = vunpack.c.l.b16 %v40
  %v185 = vunpack.c.l.b16 %v41
  %v186 = vunpack.c.l.b16 %v42
  %v187 = vunpack.c.l.b16 %v43
  %v188 = vunpack.c.l.b16 %v44
  %v189 = vunpack.c.l.b16 %v45
  %v190 = vunpack.c.l.b16 %v46
  %v191 = vunpack.c.l.b16 %v47
  %v192 = vunpack.c.l.b16 %v48
  %v193 = vunpack.c.l.b16 %v49
  %v194 = vunpack.c.l.b16 %v50
  %v195 = vunpack.c.l.b16 %v51
  %v196 = vunpack.c.l.b16 %v52
  %v197 = vunpack.c.l.b16 %v53
  %v198 = vunpack.c.l.b16 %v54
  %v199 = vunpack.c.l.b16 %v55
  %v200 = vunpack.c.l.b16 %v56
  %v201 = vunpack.c.l.b16 %v57
  %v202 = vunpack.c.l.b16 %v58
  %v203 = vunpack.c.l.b16 %v59
  %v204 = vunpack.c.l.b16 %v60
  %v205 = vunpack.c.l.b16 %v61
  %v206 = vunpack.c.l.b16 %v62
  %v207 = vunpack.c.l.b16 %v63
  %v208 = vunpack.c.l.b16 %v64
  %v209 = vunpack.c.l.b16 %v65
  %v210 = vunpack.c.l.b16 %v66
  %v211 = vunpack.c.l.b16 %v67
  %v212 = vunpack.c.l.b16 %v68
  %v213 = vunpack.c.l.b16 %v69
  %v214 = vunpack.c.l.b16 %v70
  %v215 = vunpack.c.l.b16 %v71
  %v216 = vunpack.c.l.b16 %v72
  %v217 = vunpack.c.l.b16 %v73
  %v218 = vunpack.c.l.b16 %v74
  %v219 = vunpack.c.l.b16 %v75
  %v220 = vunpack.c.l.b16 %v76
  %v221 = vunpack.c.l.b16 %v77
  %v222 = vunpack.c.l.b16 %v78
  %v223 = vunpack.c.l.b16 %v79
  %v224 = vunpack.c.l.b16 %v80
  %v225 = vpack.c.b16 %v162, %v161
  %v226 = vpack.c.b16 %v164, %v163
  %v227 = vpack.c.b16 %v166, %v165
  %v228 = vpack.c.b16 %v168, %v167
  %v229 = vpack.c.b16 %v170, %v169
  %v230 = vpack.c.b16 %v172, %v171
  %v231 = vpack.c.b16 %v174, %v173
  %v232 = vpack.c.b16 %v176, %v175
  %v233 = vpack.c.b16 %v178, %v177
  %v234 = vpack.c.b16 %v180, %v179
  %v235 = vpack.c.b16 %v182, %v181
  %v236 = vpack.c.b16 %v184, %v183
  %v237 = vpack.c.b16 %v186, %v185
  %v238 = vpack.c.b16 %v188, %v187
  %v239 = vpack.c.b16 %v190, %v189
  %v240 = vpack.c.b16 %v192, %v191
  %v241 = vpack.c.b16 %v194, %v193
  %v242 = vpack.c.b16 %v196, %v195
  %v243 = vpack.c.b16 %v198, %v197
  %v244 = vpack.c.b16 %v200, %v199
  %v245 = vpack.c.b16 %v202, %v201
  %v246 = vpack.c.b16 %v204, %v203
  %v247 = vpack.c.b16 %v206, %v205
  %v248 = vpack.c.b16 %v208, %v207
  %v249 = vpack.c.b16 %v210, %v209
  %v250 = vpack.c.b16 %v212, %v211
  %v251 = vpack.c.b16 %v214, %v213
  %v252 = vpack.c.b16 %v216, %v215
  %v253 = vpack.c.b16 %v218, %v217
  %v254 = vpack.c.b16 %v220, %v219
  %v255 = vpack.c.b16 %v222, %v221
  %v256 = vpack.c.b16 %v224, %v223
  %v305 = vunpack.c.l.b16 %v81
  %v306 = vunpack.c.l.b16 %v82
  %v307 = vunpack.c.l.b16 %v83
  %v308 = vunpack.c.l.b16 %v84
  %v309 = vunpack.c.l.b16 %v85
  %v310 = vunpack.c.l.b16 %v86
  %v311 = vunpack.c.l.b16 %v87
  %v312 = vunpack.c.l.b16 %v88
  %v313 = vunpack.c.l.b16 %v89
  %v314 = vunpack.c.l.b16 %v90
  %v315 = vunpack.c.l.b16 %v91
  %v316 = vunpack.c.l.b16 %v92
  %v317 = vunpack.c.l.b16 %v93
  %v318 = vunpack.c.l.b16 %v94
  %v319 = vunpack.c.l.b16 %v95
  %v320 = vunpack.c.l.b16 %v96
  %v321 = vpack.c.b16 %v306, %v305
  %v322 = vpack.c.b16 %v308, %v307
  %v323 = vpack.c.b16 %v310, %v309
  %v324 = vpack.c.b16 %v312, %v311
  %v325 = vpack.c.b16 %v314, %v313
  %v326 = vpack.c.b16 %v316, %v315
  %v327 = vpack.c.b16 %v318, %v317
  %v328 = vpack.c.b16 %v320, %v319
  %337 = vmatpush.bf16.msra.mxu0 %v328
  %338 = vmatpush.bf16.msra.mxu0 %v327
  %339 = vmatpush.bf16.msra.mxu0 %v326
  %340 = vmatpush.bf16.msra.mxu0 %v325
  %341 = vmatpush.bf16.msra.mxu0 %v324
  %342 = vmatpush.bf16.msra.mxu0 %v323
  %343 = vmatpush.bf16.msra.mxu0 %v322
  %344 = vmatpush.bf16.msra.mxu0 %v321
  %345 = vmatmul.bf16.gmra.mxu0 %v225
  %v346 = vpop.f32.mrf.mxu0
  %v347 = vadd.f32 0.0, %v346
  %v348 = vpop.f32.mrf.mxu0
  %v349 = vadd.f32 0.0, %v348
  %350 = vmatmul.bf16.gmra.mxu0 %v226
  %v351 = vpop.f32.mrf.mxu0
  %v352 = vadd.f32 0.0, %v351
  %v353 = vpop.f32.mrf.mxu0
  %v354 = vadd.f32 0.0, %v353
  %355 = vmatmul.bf16.gmra.mxu0 %v227
  %v356 = vpop.f32.mrf.mxu0
  %v357 = vadd.f32 0.0, %v356
  %v358 = vpop.f32.mrf.mxu0
  %v359 = vadd.f32 0.0, %v358
  %360 = vmatmul.bf16.gmra.mxu0 %v228
  %v361 = vpop.f32.mrf.mxu0
  %v362 = vadd.f32 0.0, %v361
  %v363 = vpop.f32.mrf.mxu0
  %v364 = vadd.f32 0.0, %v363
  %365 = vmatmul.bf16.gmra.mxu0 %v229
  %v366 = vpop.f32.mrf.mxu0
  %v367 = vadd.f32 0.0, %v366
  %v368 = vpop.f32.mrf.mxu0
  %v369 = vadd.f32 0.0, %v368
  %370 = vmatmul.bf16.gmra.mxu0 %v230
  %v371 = vpop.f32.mrf.mxu0
  %v372 = vadd.f32 0.0, %v371
  %v373 = vpop.f32.mrf.mxu0
  %v374 = vadd.f32 0.0, %v373
  %375 = vmatmul.bf16.gmra.mxu0 %v231
  %v376 = vpop.f32.mrf.mxu0
  %v377 = vadd.f32 0.0, %v376
  %v378 = vpop.f32.mrf.mxu0
  %v379 = vadd.f32 0.0, %v378
  %380 = vmatmul.bf16.gmra.mxu0 %v232
  %v381 = vpop.f32.mrf.mxu0
  %v382 = vadd.f32 0.0, %v381
  %v383 = vpop.f32.mrf.mxu0
  %v384 = vadd.f32 0.0, %v383
  %385 = vmatmul.bf16.gmra.mxu0 %v233
  %v386 = vpop.f32.mrf.mxu0
  %v387 = vadd.f32 0.0, %v386
  %v388 = vpop.f32.mrf.mxu0
  %v389 = vadd.f32 0.0, %v388
  %390 = vmatmul.bf16.gmra.mxu0 %v234
  %v391 = vpop.f32.mrf.mxu0
  %v392 = vadd.f32 0.0, %v391
  %v393 = vpop.f32.mrf.mxu0
  %v394 = vadd.f32 0.0, %v393
  %395 = vmatmul.bf16.gmra.mxu0 %v235
  %v396 = vpop.f32.mrf.mxu0
  %v397 = vadd.f32 0.0, %v396
  %v398 = vpop.f32.mrf.mxu0
  %v399 = vadd.f32 0.0, %v398
  %400 = vmatmul.bf16.gmra.mxu0 %v236
  %v401 = vpop.f32.mrf.mxu0
  %v402 = vadd.f32 0.0, %v401
  %v403 = vpop.f32.mrf.mxu0
  %v404 = vadd.f32 0.0, %v403
  %405 = vmatmul.bf16.gmra.mxu0 %v237
  %v406 = vpop.f32.mrf.mxu0
  %v407 = vadd.f32 0.0, %v406
  %v408 = vpop.f32.mrf.mxu0
  %v409 = vadd.f32 0.0, %v408
  %410 = vmatmul.bf16.gmra.mxu0 %v238
  %v411 = vpop.f32.mrf.mxu0
  %v412 = vadd.f32 0.0, %v411
  %v413 = vpop.f32.mrf.mxu0
  %v414 = vadd.f32 0.0, %v413
  %415 = vmatmul.bf16.gmra.mxu0 %v239
  %v416 = vpop.f32.mrf.mxu0
  %v417 = vadd.f32 0.0, %v416
  %v418 = vpop.f32.mrf.mxu0
  %v419 = vadd.f32 0.0, %v418
  %420 = vmatmul.bf16.gmra.mxu0 %v240
  %v421 = vpop.f32.mrf.mxu0
  %v422 = vadd.f32 0.0, %v421
  %v423 = vpop.f32.mrf.mxu0
  %v424 = vadd.f32 0.0, %v423
  %425 = vmatmul.bf16.gmra.mxu0 %v241
  %v426 = vpop.f32.mrf.mxu0
  %v427 = vadd.f32 0.0, %v426
  %v428 = vpop.f32.mrf.mxu0
  %v429 = vadd.f32 0.0, %v428
  %430 = vmatmul.bf16.gmra.mxu0 %v242
  %v431 = vpop.f32.mrf.mxu0
  %v432 = vadd.f32 0.0, %v431
  %v433 = vpop.f32.mrf.mxu0
  %v434 = vadd.f32 0.0, %v433
  %435 = vmatmul.bf16.gmra.mxu0 %v243
  %v436 = vpop.f32.mrf.mxu0
  %v437 = vadd.f32 0.0, %v436
  %v438 = vpop.f32.mrf.mxu0
  %v439 = vadd.f32 0.0, %v438
  %440 = vmatmul.bf16.gmra.mxu0 %v244
  %v441 = vpop.f32.mrf.mxu0
  %v442 = vadd.f32 0.0, %v441
  %v443 = vpop.f32.mrf.mxu0
  %v444 = vadd.f32 0.0, %v443
  %445 = vmatmul.bf16.gmra.mxu0 %v245
  %v446 = vpop.f32.mrf.mxu0
  %v447 = vadd.f32 0.0, %v446
  %v448 = vpop.f32.mrf.mxu0
  %v449 = vadd.f32 0.0, %v448
  %450 = vmatmul.bf16.gmra.mxu0 %v246
  %v451 = vpop.f32.mrf.mxu0
  %v452 = vadd.f32 0.0, %v451
  %v453 = vpop.f32.mrf.mxu0
  %v454 = vadd.f32 0.0, %v453
  %455 = vmatmul.bf16.gmra.mxu0 %v247
  %v456 = vpop.f32.mrf.mxu0
  %v457 = vadd.f32 0.0, %v456
  %v458 = vpop.f32.mrf.mxu0
  %v459 = vadd.f32 0.0, %v458
  %460 = vmatmul.bf16.gmra.mxu0 %v248
  %v461 = vpop.f32.mrf.mxu0
  %v462 = vadd.f32 0.0, %v461
  %v463 = vpop.f32.mrf.mxu0
  %v464 = vadd.f32 0.0, %v463
  %465 = vmatmul.bf16.gmra.mxu0 %v249
  %v466 = vpop.f32.mrf.mxu0
  %v467 = vadd.f32 0.0, %v466
  %v468 = vpop.f32.mrf.mxu0
  %v469 = vadd.f32 0.0, %v468
  %470 = vmatmul.bf16.gmra.mxu0 %v250
  %v471 = vpop.f32.mrf.mxu0
  %v472 = vadd.f32 0.0, %v471
  %v473 = vpop.f32.mrf.mxu0
  %v474 = vadd.f32 0.0, %v473
  %475 = vmatmul.bf16.gmra.mxu0 %v251
  %v476 = vpop.f32.mrf.mxu0
  %v477 = vadd.f32 0.0, %v476
  %v478 = vpop.f32.mrf.mxu0
  %v479 = vadd.f32 0.0, %v478
  %480 = vmatmul.bf16.gmra.mxu0 %v252
  %v481 = vpop.f32.mrf.mxu0
  %v482 = vadd.f32 0.0, %v481
  %v483 = vpop.f32.mrf.mxu0
  %v484 = vadd.f32 0.0, %v483
  %485 = vmatmul.bf16.gmra.mxu0 %v253
  %v486 = vpop.f32.mrf.mxu0
  %v487 = vadd.f32 0.0, %v486
  %v488 = vpop.f32.mrf.mxu0
  %v489 = vadd.f32 0.0, %v488
  %490 = vmatmul.bf16.gmra.mxu0 %v254
  %v491 = vpop.f32.mrf.mxu0
  %v492 = vadd.f32 0.0, %v491
  %v493 = vpop.f32.mrf.mxu0
  %v494 = vadd.f32 0.0, %v493
  %495 = vmatmul.bf16.gmra.mxu0 %v255
  %v496 = vpop.f32.mrf.mxu0
  %v497 = vadd.f32 0.0, %v496
  %v498 = vpop.f32.mrf.mxu0
  %v499 = vadd.f32 0.0, %v498
  %500 = vmatmul.bf16.gmra.mxu0 %v256
  %v501 = vpop.f32.mrf.mxu0
  %v502 = vadd.f32 0.0, %v501
  %v503 = vpop.f32.mrf.mxu0
  %v504 = vadd.f32 0.0, %v503
  %505 = vdwg.mxu0
  %v506 = vld [vmem:[%s3] sm:$0x1]
  %v508 = vperm.slane %v506, 0
  %v510 = vmul.f32 %v347, %v508
  %v511 = vmul.f32 %v349, %v508
  %v512 = vmul.f32 %v352, %v508
  %v513 = vmul.f32 %v354, %v508
  %v514 = vmul.f32 %v357, %v508
  %v515 = vmul.f32 %v359, %v508
  %v516 = vmul.f32 %v362, %v508
  %v517 = vmul.f32 %v364, %v508
  %v518 = vmul.f32 %v367, %v508
  %v519 = vmul.f32 %v369, %v508
  %v520 = vmul.f32 %v372, %v508
  %v521 = vmul.f32 %v374, %v508
  %v522 = vmul.f32 %v377, %v508
  %v523 = vmul.f32 %v379, %v508
  %v524 = vmul.f32 %v382, %v508
  %v525 = vmul.f32 %v384, %v508
  %v526 = vmul.f32 %v387, %v508
  %v527 = vmul.f32 %v389, %v508
  %v528 = vmul.f32 %v392, %v508
  %v529 = vmul.f32 %v394, %v508
  %v530 = vmul.f32 %v397, %v508
  %v531 = vmul.f32 %v399, %v508
  %v532 = vmul.f32 %v402, %v508
  %v533 = vmul.f32 %v404, %v508
  %v534 = vmul.f32 %v407, %v508
  %v535 = vmul.f32 %v409, %v508
  %v536 = vmul.f32 %v412, %v508
  %v537 = vmul.f32 %v414, %v508
  %v538 = vmul.f32 %v417, %v508
  %v539 = vmul.f32 %v419, %v508
  %v540 = vmul.f32 %v422, %v508
  %v541 = vmul.f32 %v424, %v508
  %v542 = vmul.f32 %v427, %v508
  %v543 = vmul.f32 %v429, %v508
  %v544 = vmul.f32 %v432, %v508
  %v545 = vmul.f32 %v434, %v508
  %v546 = vmul.f32 %v437, %v508
  %v547 = vmul.f32 %v439, %v508
  %v548 = vmul.f32 %v442, %v508
  %v549 = vmul.f32 %v444, %v508
  %v550 = vmul.f32 %v447, %v508
  %v551 = vmul.f32 %v449, %v508
  %v552 = vmul.f32 %v452, %v508
  %v553 = vmul.f32 %v454, %v508
  %v554 = vmul.f32 %v457, %v508
  %v555 = vmul.f32 %v459, %v508
  %v556 = vmul.f32 %v462, %v508
  %v557 = vmul.f32 %v464, %v508
  %v558 = vmul.f32 %v467, %v508
  %v559 = vmul.f32 %v469, %v508
  %v560 = vmul.f32 %v472, %v508
  %v561 = vmul.f32 %v474, %v508
  %v562 = vmul.f32 %v477, %v508
  %v563 = vmul.f32 %v479, %v508
  %v564 = vmul.f32 %v482, %v508
  %v565 = vmul.f32 %v484, %v508
  %v566 = vmul.f32 %v487, %v508
  %v567 = vmul.f32 %v489, %v508
  %v568 = vmul.f32 %v492, %v508
  %v569 = vmul.f32 %v494, %v508
  %v570 = vmul.f32 %v497, %v508
  %v571 = vmul.f32 %v499, %v508
  %v572 = vmul.f32 %v502, %v508
  %v573 = vmul.f32 %v504, %v508
  %v574 = vld [vmem:[%s2] sm:$0x1]
  %v576 = vperm.slane %v574, 0
  %v578 = vadd.f32 %v510, %v576
  %v579 = vadd.f32 %v511, %v576
  %v580 = vadd.f32 %v512, %v576
  %v581 = vadd.f32 %v513, %v576
  %v582 = vadd.f32 %v514, %v576
  %v583 = vadd.f32 %v515, %v576
  %v584 = vadd.f32 %v516, %v576
  %v585 = vadd.f32 %v517, %v576
  %v586 = vadd.f32 %v518, %v576
  %v587 = vadd.f32 %v519, %v576
  %v588 = vadd.f32 %v520, %v576
  %v589 = vadd.f32 %v521, %v576
  %v590 = vadd.f32 %v522, %v576
  %v591 = vadd.f32 %v523, %v576
  %v592 = vadd.f32 %v524, %v576
  %v593 = vadd.f32 %v525, %v576
  %v594 = vadd.f32 %v526, %v576
  %v595 = vadd.f32 %v527, %v576
  %v596 = vadd.f32 %v528, %v576
  %v597 = vadd.f32 %v529, %v576
  %v598 = vadd.f32 %v530, %v576
  %v599 = vadd.f32 %v531, %v576
  %v600 = vadd.f32 %v532, %v576
  %v601 = vadd.f32 %v533, %v576
  %v602 = vadd.f32 %v534, %v576
  %v603 = vadd.f32 %v535, %v576
  %v604 = vadd.f32 %v536, %v576
  %v605 = vadd.f32 %v537, %v576
  %v606 = vadd.f32 %v538, %v576
  %v607 = vadd.f32 %v539, %v576
  %v608 = vadd.f32 %v540, %v576
  %v609 = vadd.f32 %v541, %v576
  %v610 = vadd.f32 %v542, %v576
  %v611 = vadd.f32 %v543, %v576
  %v612 = vadd.f32 %v544, %v576
  %v613 = vadd.f32 %v545, %v576
  %v614 = vadd.f32 %v546, %v576
  %v615 = vadd.f32 %v547, %v576
  %v616 = vadd.f32 %v548, %v576
  %v617 = vadd.f32 %v549, %v576
  %v618 = vadd.f32 %v550, %v576
  %v619 = vadd.f32 %v551, %v576
  %v620 = vadd.f32 %v552, %v576
  %v621 = vadd.f32 %v553, %v576
  %v622 = vadd.f32 %v554, %v576
  %v623 = vadd.f32 %v555, %v576
  %v624 = vadd.f32 %v556, %v576
  %v625 = vadd.f32 %v557, %v576
  %v626 = vadd.f32 %v558, %v576
  %v627 = vadd.f32 %v559, %v576
  %v628 = vadd.f32 %v560, %v576
  %v629 = vadd.f32 %v561, %v576
  %v630 = vadd.f32 %v562, %v576
  %v631 = vadd.f32 %v563, %v576
  %v632 = vadd.f32 %v564, %v576
  %v633 = vadd.f32 %v565, %v576
  %v634 = vadd.f32 %v566, %v576
  %v635 = vadd.f32 %v567, %v576
  %v636 = vadd.f32 %v568, %v576
  %v637 = vadd.f32 %v569, %v576
  %v638 = vadd.f32 %v570, %v576
  %v639 = vadd.f32 %v571, %v576
  %v640 = vadd.f32 %v572, %v576
  %v641 = vadd.f32 %v573, %v576
  %vm642 = vcmask 662528
  %643 = vst.msk [vmem:[%s4] sm:$0xff] %vm642, %v578
  %644 = vst.msk [vmem:[%s4 + $0x8] sm:$0xff] %vm642, %v579
  %645 = vst.msk [vmem:[%s4 + $0x10] sm:$0xff] %vm642, %v580
  %646 = vst.msk [vmem:[%s4 + $0x18] sm:$0xff] %vm642, %v581
  %647 = vst.msk [vmem:[%s4 + $0x20] sm:$0xff] %vm642, %v582
  %648 = vst.msk [vmem:[%s4 + $0x28] sm:$0xff] %vm642, %v583
  %649 = vst.msk [vmem:[%s4 + $0x30] sm:$0xff] %vm642, %v584
  %650 = vst.msk [vmem:[%s4 + $0x38] sm:$0xff] %vm642, %v585
  %651 = vst.msk [vmem:[%s4 + $0x40] sm:$0xff] %vm642, %v586
  %652 = vst.msk [vmem:[%s4 + $0x48] sm:$0xff] %vm642, %v587
  %653 = vst.msk [vmem:[%s4 + $0x50] sm:$0xff] %vm642, %v588
  %654 = vst.msk [vmem:[%s4 + $0x58] sm:$0xff] %vm642, %v589
  %655 = vst.msk [vmem:[%s4 + $0x60] sm:$0xff] %vm642, %v590
  %656 = vst.msk [vmem:[%s4 + $0x68] sm:$0xff] %vm642, %v591
  %657 = vst.msk [vmem:[%s4 + $0x70] sm:$0xff] %vm642, %v592
  %658 = vst.msk [vmem:[%s4 + $0x78] sm:$0xff] %vm642, %v593
  %659 = vst.msk [vmem:[%s4 + $0x80] sm:$0xff] %vm642, %v594
  %660 = vst.msk [vmem:[%s4 + $0x88] sm:$0xff] %vm642, %v595
  %661 = vst.msk [vmem:[%s4 + $0x90] sm:$0xff] %vm642, %v596
  %662 = vst.msk [vmem:[%s4 + $0x98] sm:$0xff] %vm642, %v597
  %663 = vst.msk [vmem:[%s4 + $0xa0] sm:$0xff] %vm642, %v598
  %664 = vst.msk [vmem:[%s4 + $0xa8] sm:$0xff] %vm642, %v599
  %665 = vst.msk [vmem:[%s4 + $0xb0] sm:$0xff] %vm642, %v600
  %666 = vst.msk [vmem:[%s4 + $0xb8] sm:$0xff] %vm642, %v601
  %667 = vst.msk [vmem:[%s4 + $0xc0] sm:$0xff] %vm642, %v602
  %668 = vst.msk [vmem:[%s4 + $0xc8] sm:$0xff] %vm642, %v603
  %669 = vst.msk [vmem:[%s4 + $0xd0] sm:$0xff] %vm642, %v604
  %670 = vst.msk [vmem:[%s4 + $0xd8] sm:$0xff] %vm642, %v605
  %671 = vst.msk [vmem:[%s4 + $0xe0] sm:$0xff] %vm642, %v606
  %672 = vst.msk [vmem:[%s4 + $0xe8] sm:$0xff] %vm642, %v607
  %673 = vst.msk [vmem:[%s4 + $0xf0] sm:$0xff] %vm642, %v608
  %674 = vst.msk [vmem:[%s4 + $0xf8] sm:$0xff] %vm642, %v609
  %675 = vst.msk [vmem:[%s4 + $0x100] sm:$0xff] %vm642, %v610
  %676 = vst.msk [vmem:[%s4 + $0x108] sm:$0xff] %vm642, %v611
  %677 = vst.msk [vmem:[%s4 + $0x110] sm:$0xff] %vm642, %v612
  %678 = vst.msk [vmem:[%s4 + $0x118] sm:$0xff] %vm642, %v613
  %679 = vst.msk [vmem:[%s4 + $0x120] sm:$0xff] %vm642, %v614
  %680 = vst.msk [vmem:[%s4 + $0x128] sm:$0xff] %vm642, %v615
  %681 = vst.msk [vmem:[%s4 + $0x130] sm:$0xff] %vm642, %v616
  %682 = vst.msk [vmem:[%s4 + $0x138] sm:$0xff] %vm642, %v617
  %683 = vst.msk [vmem:[%s4 + $0x140] sm:$0xff] %vm642, %v618
  %684 = vst.msk [vmem:[%s4 + $0x148] sm:$0xff] %vm642, %v619
  %685 = vst.msk [vmem:[%s4 + $0x150] sm:$0xff] %vm642, %v620
  %686 = vst.msk [vmem:[%s4 + $0x158] sm:$0xff] %vm642, %v621
  %687 = vst.msk [vmem:[%s4 + $0x160] sm:$0xff] %vm642, %v622
  %688 = vst.msk [vmem:[%s4 + $0x168] sm:$0xff] %vm642, %v623
  %689 = vst.msk [vmem:[%s4 + $0x170] sm:$0xff] %vm642, %v624
  %690 = vst.msk [vmem:[%s4 + $0x178] sm:$0xff] %vm642, %v625
  %691 = vst.msk [vmem:[%s4 + $0x180] sm:$0xff] %vm642, %v626
  %692 = vst.msk [vmem:[%s4 + $0x188] sm:$0xff] %vm642, %v627
  %693 = vst.msk [vmem:[%s4 + $0x190] sm:$0xff] %vm642, %v628
  %694 = vst.msk [vmem:[%s4 + $0x198] sm:$0xff] %vm642, %v629
  %695 = vst.msk [vmem:[%s4 + $0x1a0] sm:$0xff] %vm642, %v630
  %696 = vst.msk [vmem:[%s4 + $0x1a8] sm:$0xff] %vm642, %v631
  %697 = vst.msk [vmem:[%s4 + $0x1b0] sm:$0xff] %vm642, %v632
  %698 = vst.msk [vmem:[%s4 + $0x1b8] sm:$0xff] %vm642, %v633
  %699 = vst.msk [vmem:[%s4 + $0x1c0] sm:$0xff] %vm642, %v634
  %700 = vst.msk [vmem:[%s4 + $0x1c8] sm:$0xff] %vm642, %v635
  %701 = vst.msk [vmem:[%s4 + $0x1d0] sm:$0xff] %vm642, %v636
  %702 = vst.msk [vmem:[%s4 + $0x1d8] sm:$0xff] %vm642, %v637
  %703 = vst.msk [vmem:[%s4 + $0x1e0] sm:$0xff] %vm642, %v638
  %704 = vst.msk [vmem:[%s4 + $0x1e8] sm:$0xff] %vm642, %v639
  %705 = vst.msk [vmem:[%s4 + $0x1f0] sm:$0xff] %vm642, %v640
  %706 = vst.msk [vmem:[%s4 + $0x1f8] sm:$0xff] %vm642, %v641
  // Predicated region
  $region18: #{a_call__.4} parent=0 // pred_check
    _
  $region19: #{a_call__.4} parent=0 // pred_check_branch
    %708 = sbr.rel (0) target = $region21
  $region20: #{a_call__.4} parent=0 // pred_region
    _
  $region21: #{a_call__.4} parent=0 // pred_fallthru
    _
  // Predicated region
  $region22: #{a_call__.4} parent=0 // pred_check
    _
  $region23: #{a_call__.4} parent=0 // pred_check_branch
    %710 = sbr.rel (0) target = $region25
  $region24: #{a_call__.4} parent=0 // pred_region
    _
  $region25: #{a_call__.4} parent=0 // pred_fallthru
    _

// kernel: a_call__.5
$region0: #{a_call__.5}
  #allocation0 [shape = 'u32[]', space=smem, size = 0x4, offset = 0x4, fixed_abs, tag = 'smem constant byte address 0x4 - core index']
  #allocation1 [shape = 'u32[72,128]{1,0:T(1,128)}', space=vmem, size = 0x9000, scoped, tag = 'internal scratch']
  %s0 = inlined_call_operand.vmem [shape: bf16[1,512,256], index: 0, kind: input, shape index: {}]
  %s1 = inlined_call_operand.vmem [shape: bf16[1,256,8], index: 1, kind: input, shape index: {}]
  %s2 = inlined_call_operand.vmem [shape: f32[1,1,8], index: 2, kind: input, shape index: {}]
  %s3 = inlined_call_operand.vmem [shape: f32[1,512,8], index: 3, kind: output, shape index: {}]
  %s4 = sld [smem:[#allocation0]]
  $region22: #{a_call__.5} parent=0
    _
  %s6 = ssub.s32 1, %s4
  %s7 = scalar_select 0, %s6, %s4
  // Predicated region
  $region2: #{a_call__.5} parent=0 // pred_check
    _
  $region3: #{a_call__.5} parent=0 // pred_check_branch
    %9 = sbr.rel (0) target = $region5
  $region4: #{a_call__.5} parent=0 // pred_region
    _
  $region5: #{a_call__.5} parent=0 // pred_fallthru
    _
  // Predicated region
  $region6: #{a_call__.5} parent=0 // pred_check
    _
  $region7: #{a_call__.5} parent=0 // pred_check_branch
    %11 = sbr.rel (0) target = $region9
  $region8: #{a_call__.5} parent=0 // pred_region
    _
  $region9: #{a_call__.5} parent=0 // pred_fallthru
    _
  // Predicated region
  $region10: #{a_call__.5} parent=0 // pred_check
    _
  $region11: #{a_call__.5} parent=0 // pred_check_branch
    %13 = sbr.rel (0) target = $region13
  $region12: #{a_call__.5} parent=0 // pred_region
    _
  $region13: #{a_call__.5} parent=0 // pred_fallthru
    _
  %v14 = vld [vmem:[%s0] sm:$0xff]
  %v15 = vld [vmem:[%s0 + $0x8] sm:$0xff]
  %v16 = vld [vmem:[%s0 + $0x10] sm:$0xff]
  %v17 = vld [vmem:[%s0 + $0x18] sm:$0xff]
  %v18 = vld [vmem:[%s0 + $0x20] sm:$0xff]
  %v19 = vld [vmem:[%s0 + $0x28] sm:$0xff]
  %v20 = vld [vmem:[%s0 + $0x30] sm:$0xff]
  %v21 = vld [vmem:[%s0 + $0x38] sm:$0xff]
  %v22 = vld [vmem:[%s0 + $0x40] sm:$0xff]
  %v23 = vld [vmem:[%s0 + $0x48] sm:$0xff]
  %v24 = vld [vmem:[%s0 + $0x50] sm:$0xff]
  %v25 = vld [vmem:[%s0 + $0x58] sm:$0xff]
  %v26 = vld [vmem:[%s0 + $0x60] sm:$0xff]
  %v27 = vld [vmem:[%s0 + $0x68] sm:$0xff]
  %v28 = vld [vmem:[%s0 + $0x70] sm:$0xff]
  %v29 = vld [vmem:[%s0 + $0x78] sm:$0xff]
  %v30 = vld [vmem:[%s0 + $0x80] sm:$0xff]
  %v31 = vld [vmem:[%s0 + $0x88] sm:$0xff]
  %v32 = vld [vmem:[%s0 + $0x90] sm:$0xff]
  %v33 = vld [vmem:[%s0 + $0x98] sm:$0xff]
  %v34 = vld [vmem:[%s0 + $0xa0] sm:$0xff]
  %v35 = vld [vmem:[%s0 + $0xa8] sm:$0xff]
  %v36 = vld [vmem:[%s0 + $0xb0] sm:$0xff]
  %v37 = vld [vmem:[%s0 + $0xb8] sm:$0xff]
  %v38 = vld [vmem:[%s0 + $0xc0] sm:$0xff]
  %v39 = vld [vmem:[%s0 + $0xc8] sm:$0xff]
  %v40 = vld [vmem:[%s0 + $0xd0] sm:$0xff]
  %v41 = vld [vmem:[%s0 + $0xd8] sm:$0xff]
  %v42 = vld [vmem:[%s0 + $0xe0] sm:$0xff]
  %v43 = vld [vmem:[%s0 + $0xe8] sm:$0xff]
  %v44 = vld [vmem:[%s0 + $0xf0] sm:$0xff]
  %v45 = vld [vmem:[%s0 + $0xf8] sm:$0xff]
  %v46 = vld [vmem:[%s0 + $0x100] sm:$0xff]
  %v47 = vld [vmem:[%s0 + $0x108] sm:$0xff]
  %v48 = vld [vmem:[%s0 + $0x110] sm:$0xff]
  %v49 = vld [vmem:[%s0 + $0x118] sm:$0xff]
  %v50 = vld [vmem:[%s0 + $0x120] sm:$0xff]
  %v51 = vld [vmem:[%s0 + $0x128] sm:$0xff]
  %v52 = vld [vmem:[%s0 + $0x130] sm:$0xff]
  %v53 = vld [vmem:[%s0 + $0x138] sm:$0xff]
  %v54 = vld [vmem:[%s0 + $0x140] sm:$0xff]
  %v55 = vld [vmem:[%s0 + $0x148] sm:$0xff]
  %v56 = vld [vmem:[%s0 + $0x150] sm:$0xff]
  %v57 = vld [vmem:[%s0 + $0x158] sm:$0xff]
  %v58 = vld [vmem:[%s0 + $0x160] sm:$0xff]
  %v59 = vld [vmem:[%s0 + $0x168] sm:$0xff]
  %v60 = vld [vmem:[%s0 + $0x170] sm:$0xff]
  %v61 = vld [vmem:[%s0 + $0x178] sm:$0xff]
  %v62 = vld [vmem:[%s0 + $0x180] sm:$0xff]
  %v63 = vld [vmem:[%s0 + $0x188] sm:$0xff]
  %v64 = vld [vmem:[%s0 + $0x190] sm:$0xff]
  %v65 = vld [vmem:[%s0 + $0x198] sm:$0xff]
  %v66 = vld [vmem:[%s0 + $0x1a0] sm:$0xff]
  %v67 = vld [vmem:[%s0 + $0x1a8] sm:$0xff]
  %v68 = vld [vmem:[%s0 + $0x1b0] sm:$0xff]
  %v69 = vld [vmem:[%s0 + $0x1b8] sm:$0xff]
  %v70 = vld [vmem:[%s0 + $0x1c0] sm:$0xff]
  %v71 = vld [vmem:[%s0 + $0x1c8] sm:$0xff]
  %v72 = vld [vmem:[%s0 + $0x1d0] sm:$0xff]
  %v73 = vld [vmem:[%s0 + $0x1d8] sm:$0xff]
  %v74 = vld [vmem:[%s0 + $0x1e0] sm:$0xff]
  %v75 = vld [vmem:[%s0 + $0x1e8] sm:$0xff]
  %v76 = vld [vmem:[%s0 + $0x1f0] sm:$0xff]
  %v77 = vld [vmem:[%s0 + $0x1f8] sm:$0xff]
  %v78 = vld [vmem:[%s1] sm:$0xf]
  %v79 = vld [vmem:[%s1 + $0x4] sm:$0xf]
  %v80 = vld [vmem:[%s1 + $0x8] sm:$0xf]
  %v81 = vld [vmem:[%s1 + $0xc] sm:$0xf]
  %v82 = vld [vmem:[%s1 + $0x10] sm:$0xf]
  %v83 = vld [vmem:[%s1 + $0x14] sm:$0xf]
  %v84 = vld [vmem:[%s1 + $0x18] sm:$0xf]
  %v85 = vld [vmem:[%s1 + $0x1c] sm:$0xf]
  %v86 = vld [vmem:[%s1 + $0x20] sm:$0xf]
  %v87 = vld [vmem:[%s1 + $0x24] sm:$0xf]
  %v88 = vld [vmem:[%s1 + $0x28] sm:$0xf]
  %v89 = vld [vmem:[%s1 + $0x2c] sm:$0xf]
  %v90 = vld [vmem:[%s1 + $0x30] sm:$0xf]
  %v91 = vld [vmem:[%s1 + $0x34] sm:$0xf]
  %v92 = vld [vmem:[%s1 + $0x38] sm:$0xf]
  %v93 = vld [vmem:[%s1 + $0x3c] sm:$0xf]
  %v94 = vld [vmem:[%s1 + $0x40] sm:$0xf]
  %v95 = vld [vmem:[%s1 + $0x44] sm:$0xf]
  %v96 = vld [vmem:[%s1 + $0x48] sm:$0xf]
  %v97 = vld [vmem:[%s1 + $0x4c] sm:$0xf]
  %v98 = vld [vmem:[%s1 + $0x50] sm:$0xf]
  %v99 = vld [vmem:[%s1 + $0x54] sm:$0xf]
  %v100 = vld [vmem:[%s1 + $0x58] sm:$0xf]
  %v101 = vld [vmem:[%s1 + $0x5c] sm:$0xf]
  %v102 = vld [vmem:[%s1 + $0x60] sm:$0xf]
  %v103 = vld [vmem:[%s1 + $0x64] sm:$0xf]
  %v104 = vld [vmem:[%s1 + $0x68] sm:$0xf]
  %v105 = vld [vmem:[%s1 + $0x6c] sm:$0xf]
  %v106 = vld [vmem:[%s1 + $0x70] sm:$0xf]
  %v107 = vld [vmem:[%s1 + $0x74] sm:$0xf]
  %v108 = vld [vmem:[%s1 + $0x78] sm:$0xf]
  %v109 = vld [vmem:[%s1 + $0x7c] sm:$0xf]
  %v110 = vld [vmem:[%s2] sm:$0x1]
  %v112 = vperm.slane %v110, 0
  %v178 = vunpack.c.l.b16 %v14
  %v179 = vunpack.c.h.b16 %v14
  %v180 = vunpack.c.l.b16 %v15
  %v181 = vunpack.c.h.b16 %v15
  %v182 = vunpack.c.l.b16 %v16
  %v183 = vunpack.c.h.b16 %v16
  %v184 = vunpack.c.l.b16 %v17
  %v185 = vunpack.c.h.b16 %v17
  %v186 = vunpack.c.l.b16 %v18
  %v187 = vunpack.c.h.b16 %v18
  %v188 = vunpack.c.l.b16 %v19
  %v189 = vunpack.c.h.b16 %v19
  %v190 = vunpack.c.l.b16 %v20
  %v191 = vunpack.c.h.b16 %v20
  %v192 = vunpack.c.l.b16 %v21
  %v193 = vunpack.c.h.b16 %v21
  %v194 = vunpack.c.l.b16 %v22
  %v195 = vunpack.c.h.b16 %v22
  %v196 = vunpack.c.l.b16 %v23
  %v197 = vunpack.c.h.b16 %v23
  %v198 = vunpack.c.l.b16 %v24
  %v199 = vunpack.c.h.b16 %v24
  %v200 = vunpack.c.l.b16 %v25
  %v201 = vunpack.c.h.b16 %v25
  %v202 = vunpack.c.l.b16 %v26
  %v203 = vunpack.c.h.b16 %v26
  %v204 = vunpack.c.l.b16 %v27
  %v205 = vunpack.c.h.b16 %v27
  %v206 = vunpack.c.l.b16 %v28
  %v207 = vunpack.c.h.b16 %v28
  %v208 = vunpack.c.l.b16 %v29
  %v209 = vunpack.c.h.b16 %v29
  %v210 = vunpack.c.l.b16 %v30
  %v211 = vunpack.c.h.b16 %v30
  %v212 = vunpack.c.l.b16 %v31
  %v213 = vunpack.c.h.b16 %v31
  %v214 = vunpack.c.l.b16 %v32
  %v215 = vunpack.c.h.b16 %v32
  %v216 = vunpack.c.l.b16 %v33
  %v217 = vunpack.c.h.b16 %v33
  %v218 = vunpack.c.l.b16 %v34
  %v219 = vunpack.c.h.b16 %v34
  %v220 = vunpack.c.l.b16 %v35
  %v221 = vunpack.c.h.b16 %v35
  %v222 = vunpack.c.l.b16 %v36
  %v223 = vunpack.c.h.b16 %v36
  %v224 = vunpack.c.l.b16 %v37
  %v225 = vunpack.c.h.b16 %v37
  %v226 = vunpack.c.l.b16 %v38
  %v227 = vunpack.c.h.b16 %v38
  %v228 = vunpack.c.l.b16 %v39
  %v229 = vunpack.c.h.b16 %v39
  %v230 = vunpack.c.l.b16 %v40
  %v231 = vunpack.c.h.b16 %v40
  %v232 = vunpack.c.l.b16 %v41
  %v233 = vunpack.c.h.b16 %v41
  %v234 = vunpack.c.l.b16 %v42
  %v235 = vunpack.c.h.b16 %v42
  %v236 = vunpack.c.l.b16 %v43
  %v237 = vunpack.c.h.b16 %v43
  %v238 = vunpack.c.l.b16 %v44
  %v239 = vunpack.c.h.b16 %v44
  %v240 = vunpack.c.l.b16 %v45
  %v241 = vunpack.c.h.b16 %v45
  %v242 = vunpack.c.l.b16 %v46
  %v243 = vunpack.c.h.b16 %v46
  %v244 = vunpack.c.l.b16 %v47
  %v245 = vunpack.c.h.b16 %v47
  %v246 = vunpack.c.l.b16 %v48
  %v247 = vunpack.c.h.b16 %v48
  %v248 = vunpack.c.l.b16 %v49
  %v249 = vunpack.c.h.b16 %v49
  %v250 = vunpack.c.l.b16 %v50
  %v251 = vunpack.c.h.b16 %v50
  %v252 = vunpack.c.l.b16 %v51
  %v253 = vunpack.c.h.b16 %v51
  %v254 = vunpack.c.l.b16 %v52
  %v255 = vunpack.c.h.b16 %v52
  %v256 = vunpack.c.l.b16 %v53
  %v257 = vunpack.c.h.b16 %v53
  %v258 = vunpack.c.l.b16 %v54
  %v259 = vunpack.c.h.b16 %v54
  %v260 = vunpack.c.l.b16 %v55
  %v261 = vunpack.c.h.b16 %v55
  %v262 = vunpack.c.l.b16 %v56
  %v263 = vunpack.c.h.b16 %v56
  %v264 = vunpack.c.l.b16 %v57
  %v265 = vunpack.c.h.b16 %v57
  %v266 = vunpack.c.l.b16 %v58
  %v267 = vunpack.c.h.b16 %v58
  %v268 = vunpack.c.l.b16 %v59
  %v269 = vunpack.c.h.b16 %v59
  %v270 = vunpack.c.l.b16 %v60
  %v271 = vunpack.c.h.b16 %v60
  %v272 = vunpack.c.l.b16 %v61
  %v273 = vunpack.c.h.b16 %v61
  %v274 = vunpack.c.l.b16 %v62
  %v275 = vunpack.c.h.b16 %v62
  %v276 = vunpack.c.l.b16 %v63
  %v277 = vunpack.c.h.b16 %v63
  %v278 = vunpack.c.l.b16 %v64
  %v279 = vunpack.c.h.b16 %v64
  %v280 = vunpack.c.l.b16 %v65
  %v281 = vunpack.c.h.b16 %v65
  %v282 = vunpack.c.l.b16 %v66
  %v283 = vunpack.c.h.b16 %v66
  %v284 = vunpack.c.l.b16 %v67
  %v285 = vunpack.c.h.b16 %v67
  %v286 = vunpack.c.l.b16 %v68
  %v287 = vunpack.c.h.b16 %v68
  %v288 = vunpack.c.l.b16 %v69
  %v289 = vunpack.c.h.b16 %v69
  %v290 = vunpack.c.l.b16 %v70
  %v291 = vunpack.c.h.b16 %v70
  %v292 = vunpack.c.l.b16 %v71
  %v293 = vunpack.c.h.b16 %v71
  %v294 = vunpack.c.l.b16 %v72
  %v295 = vunpack.c.h.b16 %v72
  %v296 = vunpack.c.l.b16 %v73
  %v297 = vunpack.c.h.b16 %v73
  %v298 = vunpack.c.l.b16 %v74
  %v299 = vunpack.c.h.b16 %v74
  %v300 = vunpack.c.l.b16 %v75
  %v301 = vunpack.c.h.b16 %v75
  %v302 = vunpack.c.l.b16 %v76
  %v303 = vunpack.c.h.b16 %v76
  %v304 = vunpack.c.l.b16 %v77
  %v305 = vunpack.c.h.b16 %v77
  %v306 = vpack.c.b16 %v180, %v178
  %v307 = vpack.c.b16 %v181, %v179
  %v308 = vpack.c.b16 %v184, %v182
  %v309 = vpack.c.b16 %v185, %v183
  %v310 = vpack.c.b16 %v188, %v186
  %v311 = vpack.c.b16 %v189, %v187
  %v312 = vpack.c.b16 %v192, %v190
  %v313 = vpack.c.b16 %v193, %v191
  %v314 = vpack.c.b16 %v196, %v194
  %v315 = vpack.c.b16 %v197, %v195
  %v316 = vpack.c.b16 %v200, %v198
  %v317 = vpack.c.b16 %v201, %v199
  %v318 = vpack.c.b16 %v204, %v202
  %v319 = vpack.c.b16 %v205, %v203
  %v320 = vpack.c.b16 %v208, %v206
  %v321 = vpack.c.b16 %v209, %v207
  %v322 = vpack.c.b16 %v212, %v210
  %v323 = vpack.c.b16 %v213, %v211
  %v324 = vpack.c.b16 %v216, %v214
  %v325 = vpack.c.b16 %v217, %v215
  %v326 = vpack.c.b16 %v220, %v218
  %v327 = vpack.c.b16 %v221, %v219
  %v328 = vpack.c.b16 %v224, %v222
  %v329 = vpack.c.b16 %v225, %v223
  %v330 = vpack.c.b16 %v228, %v226
  %v331 = vpack.c.b16 %v229, %v227
  %v332 = vpack.c.b16 %v232, %v230
  %v333 = vpack.c.b16 %v233, %v231
  %v334 = vpack.c.b16 %v236, %v234
  %v335 = vpack.c.b16 %v237, %v235
  %v336 = vpack.c.b16 %v240, %v238
  %v337 = vpack.c.b16 %v241, %v239
  %v338 = vpack.c.b16 %v244, %v242
  %v339 = vpack.c.b16 %v245, %v243
  %v340 = vpack.c.b16 %v248, %v246
  %v341 = vpack.c.b16 %v249, %v247
  %v342 = vpack.c.b16 %v252, %v250
  %v343 = vpack.c.b16 %v253, %v251
  %v344 = vpack.c.b16 %v256, %v254
  %v345 = vpack.c.b16 %v257, %v255
  %v346 = vpack.c.b16 %v260, %v258
  %v347 = vpack.c.b16 %v261, %v259
  %v348 = vpack.c.b16 %v264, %v262
  %v349 = vpack.c.b16 %v265, %v263
  %v350 = vpack.c.b16 %v268, %v266
  %v351 = vpack.c.b16 %v269, %v267
  %v352 = vpack.c.b16 %v272, %v270
  %v353 = vpack.c.b16 %v273, %v271
  %v354 = vpack.c.b16 %v276, %v274
  %v355 = vpack.c.b16 %v277, %v275
  %v356 = vpack.c.b16 %v280, %v278
  %v357 = vpack.c.b16 %v281, %v279
  %v358 = vpack.c.b16 %v284, %v282
  %v359 = vpack.c.b16 %v285, %v283
  %v360 = vpack.c.b16 %v288, %v286
  %v361 = vpack.c.b16 %v289, %v287
  %v362 = vpack.c.b16 %v292, %v290
  %v363 = vpack.c.b16 %v293, %v291
  %v364 = vpack.c.b16 %v296, %v294
  %v365 = vpack.c.b16 %v297, %v295
  %v366 = vpack.c.b16 %v300, %v298
  %v367 = vpack.c.b16 %v301, %v299
  %v368 = vpack.c.b16 %v304, %v302
  %v369 = vpack.c.b16 %v305, %v303
  %v466 = vunpack.c.l.b16 %v78
  %v467 = vunpack.c.l.b16 %v79
  %v468 = vunpack.c.l.b16 %v80
  %v469 = vunpack.c.l.b16 %v81
  %v470 = vunpack.c.l.b16 %v82
  %v471 = vunpack.c.l.b16 %v83
  %v472 = vunpack.c.l.b16 %v84
  %v473 = vunpack.c.l.b16 %v85
  %v474 = vunpack.c.l.b16 %v86
  %v475 = vunpack.c.l.b16 %v87
  %v476 = vunpack.c.l.b16 %v88
  %v477 = vunpack.c.l.b16 %v89
  %v478 = vunpack.c.l.b16 %v90
  %v479 = vunpack.c.l.b16 %v91
  %v480 = vunpack.c.l.b16 %v92
  %v481 = vunpack.c.l.b16 %v93
  %v482 = vunpack.c.l.b16 %v94
  %v483 = vunpack.c.l.b16 %v95
  %v484 = vunpack.c.l.b16 %v96
  %v485 = vunpack.c.l.b16 %v97
  %v486 = vunpack.c.l.b16 %v98
  %v487 = vunpack.c.l.b16 %v99
  %v488 = vunpack.c.l.b16 %v100
  %v489 = vunpack.c.l.b16 %v101
  %v490 = vunpack.c.l.b16 %v102
  %v491 = vunpack.c.l.b16 %v103
  %v492 = vunpack.c.l.b16 %v104
  %v493 = vunpack.c.l.b16 %v105
  %v494 = vunpack.c.l.b16 %v106
  %v495 = vunpack.c.l.b16 %v107
  %v496 = vunpack.c.l.b16 %v108
  %v497 = vunpack.c.l.b16 %v109
  %v498 = vpack.c.b16 %v467, %v466
  %v499 = vpack.c.b16 %v469, %v468
  %v500 = vpack.c.b16 %v471, %v470
  %v501 = vpack.c.b16 %v473, %v472
  %v502 = vpack.c.b16 %v475, %v474
  %v503 = vpack.c.b16 %v477, %v476
  %v504 = vpack.c.b16 %v479, %v478
  %v505 = vpack.c.b16 %v481, %v480
  %v506 = vpack.c.b16 %v483, %v482
  %v507 = vpack.c.b16 %v485, %v484
  %v508 = vpack.c.b16 %v487, %v486
  %v509 = vpack.c.b16 %v489, %v488
  %v510 = vpack.c.b16 %v491, %v490
  %v511 = vpack.c.b16 %v493, %v492
  %v512 = vpack.c.b16 %v495, %v494
  %v513 = vpack.c.b16 %v497, %v496
  %530 = vmatpush.bf16.msra.mxu0 %v505
  %531 = vmatpush.bf16.msra.mxu0 %v504
  %532 = vmatpush.bf16.msra.mxu0 %v503
  %533 = vmatpush.bf16.msra.mxu0 %v502
  %534 = vmatpush.bf16.msra.mxu0 %v501
  %535 = vmatpush.bf16.msra.mxu0 %v500
  %536 = vmatpush.bf16.msra.mxu0 %v499
  %537 = vmatpush.bf16.msra.mxu0 %v498
  %538 = vmatmul.bf16.gmra.mxu0 %v306
  %v539 = vpop.f32.mrf.mxu0
  %v540 = vadd.f32 %v112, %v539
  %v541 = vpop.f32.mrf.mxu0
  %v542 = vadd.f32 %v112, %v541
  %543 = vmatmul.bf16.gmra.mxu0 %v308
  %v544 = vpop.f32.mrf.mxu0
  %v545 = vadd.f32 %v112, %v544
  %v546 = vpop.f32.mrf.mxu0
  %v547 = vadd.f32 %v112, %v546
  %548 = vmatmul.bf16.gmra.mxu0 %v310
  %v549 = vpop.f32.mrf.mxu0
  %v550 = vadd.f32 %v112, %v549
  %v551 = vpop.f32.mrf.mxu0
  %v552 = vadd.f32 %v112, %v551
  %553 = vmatmul.bf16.gmra.mxu0 %v312
  %v554 = vpop.f32.mrf.mxu0
  %v555 = vadd.f32 %v112, %v554
  %v556 = vpop.f32.mrf.mxu0
  %v557 = vadd.f32 %v112, %v556
  %558 = vmatmul.bf16.gmra.mxu0 %v314
  %v559 = vpop.f32.mrf.mxu0
  %v560 = vadd.f32 %v112, %v559
  %v561 = vpop.f32.mrf.mxu0
  %v562 = vadd.f32 %v112, %v561
  %563 = vmatmul.bf16.gmra.mxu0 %v316
  %v564 = vpop.f32.mrf.mxu0
  %v565 = vadd.f32 %v112, %v564
  %v566 = vpop.f32.mrf.mxu0
  %v567 = vadd.f32 %v112, %v566
  %568 = vmatmul.bf16.gmra.mxu0 %v318
  %v569 = vpop.f32.mrf.mxu0
  %v570 = vadd.f32 %v112, %v569
  %v571 = vpop.f32.mrf.mxu0
  %v572 = vadd.f32 %v112, %v571
  %573 = vmatmul.bf16.gmra.mxu0 %v320
  %v574 = vpop.f32.mrf.mxu0
  %v575 = vadd.f32 %v112, %v574
  %v576 = vpop.f32.mrf.mxu0
  %v577 = vadd.f32 %v112, %v576
  %578 = vmatmul.bf16.gmra.mxu0 %v322
  %v579 = vpop.f32.mrf.mxu0
  %v580 = vadd.f32 %v112, %v579
  %v581 = vpop.f32.mrf.mxu0
  %v582 = vadd.f32 %v112, %v581
  %583 = vmatmul.bf16.gmra.mxu0 %v324
  %v584 = vpop.f32.mrf.mxu0
  %v585 = vadd.f32 %v112, %v584
  %v586 = vpop.f32.mrf.mxu0
  %v587 = vadd.f32 %v112, %v586
  %588 = vmatmul.bf16.gmra.mxu0 %v326
  %v589 = vpop.f32.mrf.mxu0
  %v590 = vadd.f32 %v112, %v589
  %v591 = vpop.f32.mrf.mxu0
  %v592 = vadd.f32 %v112, %v591
  %593 = vmatmul.bf16.gmra.mxu0 %v328
  %v594 = vpop.f32.mrf.mxu0
  %v595 = vadd.f32 %v112, %v594
  %v596 = vpop.f32.mrf.mxu0
  %v597 = vadd.f32 %v112, %v596
  %598 = vmatmul.bf16.gmra.mxu0 %v330
  %v599 = vpop.f32.mrf.mxu0
  %v600 = vadd.f32 %v112, %v599
  %v601 = vpop.f32.mrf.mxu0
  %v602 = vadd.f32 %v112, %v601
  %603 = vmatmul.bf16.gmra.mxu0 %v332
  %v604 = vpop.f32.mrf.mxu0
  %v605 = vadd.f32 %v112, %v604
  %v606 = vpop.f32.mrf.mxu0
  %v607 = vadd.f32 %v112, %v606
  %608 = vmatmul.bf16.gmra.mxu0 %v334
  %v609 = vpop.f32.mrf.mxu0
  %v610 = vadd.f32 %v112, %v609
  %v611 = vpop.f32.mrf.mxu0
  %v612 = vadd.f32 %v112, %v611
  %613 = vmatmul.bf16.gmra.mxu0 %v336
  %v614 = vpop.f32.mrf.mxu0
  %v615 = vadd.f32 %v112, %v614
  %v616 = vpop.f32.mrf.mxu0
  %v617 = vadd.f32 %v112, %v616
  %618 = vmatmul.bf16.gmra.mxu0 %v338
  %v619 = vpop.f32.mrf.mxu0
  %v620 = vadd.f32 %v112, %v619
  %v621 = vpop.f32.mrf.mxu0
  %v622 = vadd.f32 %v112, %v621
  %623 = vmatmul.bf16.gmra.mxu0 %v340
  %v624 = vpop.f32.mrf.mxu0
  %v625 = vadd.f32 %v112, %v624
  %v626 = vpop.f32.mrf.mxu0
  %v627 = vadd.f32 %v112, %v626
  %628 = vmatmul.bf16.gmra.mxu0 %v342
  %v629 = vpop.f32.mrf.mxu0
  %v630 = vadd.f32 %v112, %v629
  %v631 = vpop.f32.mrf.mxu0
  %v632 = vadd.f32 %v112, %v631
  %633 = vmatmul.bf16.gmra.mxu0 %v344
  %v634 = vpop.f32.mrf.mxu0
  %v635 = vadd.f32 %v112, %v634
  %v636 = vpop.f32.mrf.mxu0
  %v637 = vadd.f32 %v112, %v636
  %638 = vmatmul.bf16.gmra.mxu0 %v346
  %v639 = vpop.f32.mrf.mxu0
  %v640 = vadd.f32 %v112, %v639
  %v641 = vpop.f32.mrf.mxu0
  %v642 = vadd.f32 %v112, %v641
  %643 = vmatmul.bf16.gmra.mxu0 %v348
  %v644 = vpop.f32.mrf.mxu0
  %v645 = vadd.f32 %v112, %v644
  %v646 = vpop.f32.mrf.mxu0
  %v647 = vadd.f32 %v112, %v646
  %648 = vmatmul.bf16.gmra.mxu0 %v350
  %v649 = vpop.f32.mrf.mxu0
  %v650 = vadd.f32 %v112, %v649
  %v651 = vpop.f32.mrf.mxu0
  %v652 = vadd.f32 %v112, %v651
  %653 = vmatmul.bf16.gmra.mxu0 %v352
  %v654 = vpop.f32.mrf.mxu0
  %v655 = vadd.f32 %v112, %v654
  %v656 = vpop.f32.mrf.mxu0
  %v657 = vadd.f32 %v112, %v656
  %658 = vmatmul.bf16.gmra.mxu0 %v354
  %v659 = vpop.f32.mrf.mxu0
  %v660 = vadd.f32 %v112, %v659
  %v661 = vpop.f32.mrf.mxu0
  %v662 = vadd.f32 %v112, %v661
  %663 = vmatmul.bf16.gmra.mxu0 %v356
  %v664 = vpop.f32.mrf.mxu0
  %v665 = vadd.f32 %v112, %v664
  %v666 = vpop.f32.mrf.mxu0
  %v667 = vadd.f32 %v112, %v666
  %668 = vmatmul.bf16.gmra.mxu0 %v358
  %v669 = vpop.f32.mrf.mxu0
  %v670 = vadd.f32 %v112, %v669
  %v671 = vpop.f32.mrf.mxu0
  %v672 = vadd.f32 %v112, %v671
  %673 = vmatmul.bf16.gmra.mxu0 %v360
  %v674 = vpop.f32.mrf.mxu0
  %v675 = vadd.f32 %v112, %v674
  %v676 = vpop.f32.mrf.mxu0
  %v677 = vadd.f32 %v112, %v676
  %678 = vmatmul.bf16.gmra.mxu0 %v362
  %v679 = vpop.f32.mrf.mxu0
  %v680 = vadd.f32 %v112, %v679
  %v681 = vpop.f32.mrf.mxu0
  %v682 = vadd.f32 %v112, %v681
  %683 = vmatmul.bf16.gmra.mxu0 %v364
  %v684 = vpop.f32.mrf.mxu0
  %v685 = vadd.f32 %v112, %v684
  %v686 = vpop.f32.mrf.mxu0
  %v687 = vadd.f32 %v112, %v686
  %688 = vmatmul.bf16.gmra.mxu0 %v366
  %v689 = vpop.f32.mrf.mxu0
  %v690 = vadd.f32 %v112, %v689
  %v691 = vpop.f32.mrf.mxu0
  %v692 = vadd.f32 %v112, %v691
  %693 = vmatmul.bf16.gmra.mxu0 %v368
  %v694 = vpop.f32.mrf.mxu0
  %v695 = vadd.f32 %v112, %v694
  %v696 = vpop.f32.mrf.mxu0
  %v697 = vadd.f32 %v112, %v696
  %698 = vdwg.mxu0
  %699 = vmatpush.bf16.msra.mxu0 %v513
  %700 = vmatpush.bf16.msra.mxu0 %v512
  %701 = vmatpush.bf16.msra.mxu0 %v511
  %702 = vmatpush.bf16.msra.mxu0 %v510
  %703 = vmatpush.bf16.msra.mxu0 %v509
  %704 = vmatpush.bf16.msra.mxu0 %v508
  %705 = vmatpush.bf16.msra.mxu0 %v507
  %706 = vmatpush.bf16.msra.mxu0 %v506
  %707 = vmatmul.bf16.gmra.mxu0 %v307
  %v708 = vpop.f32.mrf.mxu0
  %v709 = vadd.f32 %v540, %v708
  %v710 = vpop.f32.mrf.mxu0
  %v711 = vadd.f32 %v542, %v710
  %712 = vmatmul.bf16.gmra.mxu0 %v309
  %v713 = vpop.f32.mrf.mxu0
  %v714 = vadd.f32 %v545, %v713
  %v715 = vpop.f32.mrf.mxu0
  %v716 = vadd.f32 %v547, %v715
  %717 = vmatmul.bf16.gmra.mxu0 %v311
  %v718 = vpop.f32.mrf.mxu0
  %v719 = vadd.f32 %v550, %v718
  %v720 = vpop.f32.mrf.mxu0
  %v721 = vadd.f32 %v552, %v720
  %722 = vmatmul.bf16.gmra.mxu0 %v313
  %v723 = vpop.f32.mrf.mxu0
  %v724 = vadd.f32 %v555, %v723
  %v725 = vpop.f32.mrf.mxu0
  %v726 = vadd.f32 %v557, %v725
  %727 = vmatmul.bf16.gmra.mxu0 %v315
  %v728 = vpop.f32.mrf.mxu0
  %v729 = vadd.f32 %v560, %v728
  %v730 = vpop.f32.mrf.mxu0
  %v731 = vadd.f32 %v562, %v730
  %732 = vmatmul.bf16.gmra.mxu0 %v317
  %v733 = vpop.f32.mrf.mxu0
  %v734 = vadd.f32 %v565, %v733
  %v735 = vpop.f32.mrf.mxu0
  %v736 = vadd.f32 %v567, %v735
  %737 = vmatmul.bf16.gmra.mxu0 %v319
  %v738 = vpop.f32.mrf.mxu0
  %v739 = vadd.f32 %v570, %v738
  %v740 = vpop.f32.mrf.mxu0
  %v741 = vadd.f32 %v572, %v740
  %742 = vmatmul.bf16.gmra.mxu0 %v321
  %v743 = vpop.f32.mrf.mxu0
  %v744 = vadd.f32 %v575, %v743
  %v745 = vpop.f32.mrf.mxu0
  %v746 = vadd.f32 %v577, %v745
  %747 = vmatmul.bf16.gmra.mxu0 %v323
  %v748 = vpop.f32.mrf.mxu0
  %v749 = vadd.f32 %v580, %v748
  %v750 = vpop.f32.mrf.mxu0
  %v751 = vadd.f32 %v582, %v750
  %752 = vmatmul.bf16.gmra.mxu0 %v325
  %v753 = vpop.f32.mrf.mxu0
  %v754 = vadd.f32 %v585, %v753
  %v755 = vpop.f32.mrf.mxu0
  %v756 = vadd.f32 %v587, %v755
  %757 = vmatmul.bf16.gmra.mxu0 %v327
  %v758 = vpop.f32.mrf.mxu0
  %v759 = vadd.f32 %v590, %v758
  %v760 = vpop.f32.mrf.mxu0
  %v761 = vadd.f32 %v592, %v760
  %762 = vmatmul.bf16.gmra.mxu0 %v329
  %v763 = vpop.f32.mrf.mxu0
  %v764 = vadd.f32 %v595, %v763
  %v765 = vpop.f32.mrf.mxu0
  %v766 = vadd.f32 %v597, %v765
  %767 = vmatmul.bf16.gmra.mxu0 %v331
  %v768 = vpop.f32.mrf.mxu0
  %v769 = vadd.f32 %v600, %v768
  %v770 = vpop.f32.mrf.mxu0
  %v771 = vadd.f32 %v602, %v770
  %772 = vmatmul.bf16.gmra.mxu0 %v333
  %v773 = vpop.f32.mrf.mxu0
  %v774 = vadd.f32 %v605, %v773
  %v775 = vpop.f32.mrf.mxu0
  %v776 = vadd.f32 %v607, %v775
  %777 = vmatmul.bf16.gmra.mxu0 %v335
  %v778 = vpop.f32.mrf.mxu0
  %v779 = vadd.f32 %v610, %v778
  %v780 = vpop.f32.mrf.mxu0
  %v781 = vadd.f32 %v612, %v780
  %782 = vmatmul.bf16.gmra.mxu0 %v337
  %v783 = vpop.f32.mrf.mxu0
  %v784 = vadd.f32 %v615, %v783
  %v785 = vpop.f32.mrf.mxu0
  %v786 = vadd.f32 %v617, %v785
  %787 = vmatmul.bf16.gmra.mxu0 %v339
  %v788 = vpop.f32.mrf.mxu0
  %v789 = vadd.f32 %v620, %v788
  %v790 = vpop.f32.mrf.mxu0
  %v791 = vadd.f32 %v622, %v790
  %792 = vmatmul.bf16.gmra.mxu0 %v341
  %v793 = vpop.f32.mrf.mxu0
  %v794 = vadd.f32 %v625, %v793
  %v795 = vpop.f32.mrf.mxu0
  %v796 = vadd.f32 %v627, %v795
  %797 = vmatmul.bf16.gmra.mxu0 %v343
  %v798 = vpop.f32.mrf.mxu0
  %v799 = vadd.f32 %v630, %v798
  %v800 = vpop.f32.mrf.mxu0
  %v801 = vadd.f32 %v632, %v800
  %802 = vmatmul.bf16.gmra.mxu0 %v345
  %v803 = vpop.f32.mrf.mxu0
  %v804 = vadd.f32 %v635, %v803
  %v805 = vpop.f32.mrf.mxu0
  %v806 = vadd.f32 %v637, %v805
  %807 = vmatmul.bf16.gmra.mxu0 %v347
  %v808 = vpop.f32.mrf.mxu0
  %v809 = vadd.f32 %v640, %v808
  %v810 = vpop.f32.mrf.mxu0
  %v811 = vadd.f32 %v642, %v810
  %812 = vmatmul.bf16.gmra.mxu0 %v349
  %v813 = vpop.f32.mrf.mxu0
  %v814 = vadd.f32 %v645, %v813
  %v815 = vpop.f32.mrf.mxu0
  %v816 = vadd.f32 %v647, %v815
  %817 = vmatmul.bf16.gmra.mxu0 %v351
  %v818 = vpop.f32.mrf.mxu0
  %v819 = vadd.f32 %v650, %v818
  %v820 = vpop.f32.mrf.mxu0
  %v821 = vadd.f32 %v652, %v820
  %822 = vmatmul.bf16.gmra.mxu0 %v353
  %v823 = vpop.f32.mrf.mxu0
  %v824 = vadd.f32 %v655, %v823
  %v825 = vpop.f32.mrf.mxu0
  %v826 = vadd.f32 %v657, %v825
  %827 = vmatmul.bf16.gmra.mxu0 %v355
  %v828 = vpop.f32.mrf.mxu0
  %v829 = vadd.f32 %v660, %v828
  %v830 = vpop.f32.mrf.mxu0
  %v831 = vadd.f32 %v662, %v830
  %832 = vmatmul.bf16.gmra.mxu0 %v357
  %v833 = vpop.f32.mrf.mxu0
  %v834 = vadd.f32 %v665, %v833
  %v835 = vpop.f32.mrf.mxu0
  %v836 = vadd.f32 %v667, %v835
  %837 = vmatmul.bf16.gmra.mxu0 %v359
  %v838 = vpop.f32.mrf.mxu0
  %v839 = vadd.f32 %v670, %v838
  %v840 = vpop.f32.mrf.mxu0
  %v841 = vadd.f32 %v672, %v840
  %842 = vmatmul.bf16.gmra.mxu0 %v361
  %v843 = vpop.f32.mrf.mxu0
  %v844 = vadd.f32 %v675, %v843
  %v845 = vpop.f32.mrf.mxu0
  %v846 = vadd.f32 %v677, %v845
  %847 = vmatmul.bf16.gmra.mxu0 %v363
  %v848 = vpop.f32.mrf.mxu0
  %v849 = vadd.f32 %v680, %v848
  %v850 = vpop.f32.mrf.mxu0
  %v851 = vadd.f32 %v682, %v850
  %852 = vmatmul.bf16.gmra.mxu0 %v365
  %v853 = vpop.f32.mrf.mxu0
  %v854 = vadd.f32 %v685, %v853
  %v855 = vpop.f32.mrf.mxu0
  %v856 = vadd.f32 %v687, %v855
  %857 = vmatmul.bf16.gmra.mxu0 %v367
  %v858 = vpop.f32.mrf.mxu0
  %v859 = vadd.f32 %v690, %v858
  %v860 = vpop.f32.mrf.mxu0
  %v861 = vadd.f32 %v692, %v860
  %862 = vmatmul.bf16.gmra.mxu0 %v369
  %v863 = vpop.f32.mrf.mxu0
  %v864 = vadd.f32 %v695, %v863
  %v865 = vpop.f32.mrf.mxu0
  %v866 = vadd.f32 %v697, %v865
  %867 = vdwg.mxu0
  %vm868 = vcmask 64512
  %869 = vst.msk [vmem:[%s3] sm:$0xff] %vm868, %v709
  %870 = vst.msk [vmem:[%s3 + $0x8] sm:$0xff] %vm868, %v711
  %871 = vst.msk [vmem:[%s3 + $0x10] sm:$0xff] %vm868, %v714
  %872 = vst.msk [vmem:[%s3 + $0x18] sm:$0xff] %vm868, %v716
  %873 = vst.msk [vmem:[%s3 + $0x20] sm:$0xff] %vm868, %v719
  %874 = vst.msk [vmem:[%s3 + $0x28] sm:$0xff] %vm868, %v721
  %875 = vst.msk [vmem:[%s3 + $0x30] sm:$0xff] %vm868, %v724
  %876 = vst.msk [vmem:[%s3 + $0x38] sm:$0xff] %vm868, %v726
  %877 = vst.msk [vmem:[%s3 + $0x40] sm:$0xff] %vm868, %v729
  %878 = vst.msk [vmem:[%s3 + $0x48] sm:$0xff] %vm868, %v731
  %879 = vst.msk [vmem:[%s3 + $0x50] sm:$0xff] %vm868, %v734
  %880 = vst.msk [vmem:[%s3 + $0x58] sm:$0xff] %vm868, %v736
  %881 = vst.msk [vmem:[%s3 + $0x60] sm:$0xff] %vm868, %v739
  %882 = vst.msk [vmem:[%s3 + $0x68] sm:$0xff] %vm868, %v741
  %883 = vst.msk [vmem:[%s3 + $0x70] sm:$0xff] %vm868, %v744
  %884 = vst.msk [vmem:[%s3 + $0x78] sm:$0xff] %vm868, %v746
  %885 = vst.msk [vmem:[%s3 + $0x80] sm:$0xff] %vm868, %v749
  %886 = vst.msk [vmem:[%s3 + $0x88] sm:$0xff] %vm868, %v751
  %887 = vst.msk [vmem:[%s3 + $0x90] sm:$0xff] %vm868, %v754
  %888 = vst.msk [vmem:[%s3 + $0x98] sm:$0xff] %vm868, %v756
  %889 = vst.msk [vmem:[%s3 + $0xa0] sm:$0xff] %vm868, %v759
  %890 = vst.msk [vmem:[%s3 + $0xa8] sm:$0xff] %vm868, %v761
  %891 = vst.msk [vmem:[%s3 + $0xb0] sm:$0xff] %vm868, %v764
  %892 = vst.msk [vmem:[%s3 + $0xb8] sm:$0xff] %vm868, %v766
  %893 = vst.msk [vmem:[%s3 + $0xc0] sm:$0xff] %vm868, %v769
  %894 = vst.msk [vmem:[%s3 + $0xc8] sm:$0xff] %vm868, %v771
  %895 = vst.msk [vmem:[%s3 + $0xd0] sm:$0xff] %vm868, %v774
  %896 = vst.msk [vmem:[%s3 + $0xd8] sm:$0xff] %vm868, %v776
  %897 = vst.msk [vmem:[%s3 + $0xe0] sm:$0xff] %vm868, %v779
  %898 = vst.msk [vmem:[%s3 + $0xe8] sm:$0xff] %vm868, %v781
  %899 = vst.msk [vmem:[%s3 + $0xf0] sm:$0xff] %vm868, %v784
  %900 = vst.msk [vmem:[%s3 + $0xf8] sm:$0xff] %vm868, %v786
  %901 = vst.msk [vmem:[%s3 + $0x100] sm:$0xff] %vm868, %v789
  %902 = vst.msk [vmem:[%s3 + $0x108] sm:$0xff] %vm868, %v791
  %903 = vst.msk [vmem:[%s3 + $0x110] sm:$0xff] %vm868, %v794
  %904 = vst.msk [vmem:[%s3 + $0x118] sm:$0xff] %vm868, %v796
  %905 = vst.msk [vmem:[%s3 + $0x120] sm:$0xff] %vm868, %v799
  %906 = vst.msk [vmem:[%s3 + $0x128] sm:$0xff] %vm868, %v801
  %907 = vst.msk [vmem:[%s3 + $0x130] sm:$0xff] %vm868, %v804
  %908 = vst.msk [vmem:[%s3 + $0x138] sm:$0xff] %vm868, %v806
  %909 = vst.msk [vmem:[%s3 + $0x140] sm:$0xff] %vm868, %v809
  %910 = vst.msk [vmem:[%s3 + $0x148] sm:$0xff] %vm868, %v811
  %911 = vst.msk [vmem:[%s3 + $0x150] sm:$0xff] %vm868, %v814
  %912 = vst.msk [vmem:[%s3 + $0x158] sm:$0xff] %vm868, %v816
  %913 = vst.msk [vmem:[%s3 + $0x160] sm:$0xff] %vm868, %v819
  %914 = vst.msk [vmem:[%s3 + $0x168] sm:$0xff] %vm868, %v821
  %915 = vst.msk [vmem:[%s3 + $0x170] sm:$0xff] %vm868, %v824
  %916 = vst.msk [vmem:[%s3 + $0x178] sm:$0xff] %vm868, %v826
  %917 = vst.msk [vmem:[%s3 + $0x180] sm:$0xff] %vm868, %v829
  %918 = vst.msk [vmem:[%s3 + $0x188] sm:$0xff] %vm868, %v831
  %919 = vst.msk [vmem:[%s3 + $0x190] sm:$0xff] %vm868, %v834
  %920 = vst.msk [vmem:[%s3 + $0x198] sm:$0xff] %vm868, %v836
  %921 = vst.msk [vmem:[%s3 + $0x1a0] sm:$0xff] %vm868, %v839
  %922 = vst.msk [vmem:[%s3 + $0x1a8] sm:$0xff] %vm868, %v841
  %923 = vst.msk [vmem:[%s3 + $0x1b0] sm:$0xff] %vm868, %v844
  %924 = vst.msk [vmem:[%s3 + $0x1b8] sm:$0xff] %vm868, %v846
  %925 = vst.msk [vmem:[%s3 + $0x1c0] sm:$0xff] %vm868, %v849
  %926 = vst.msk [vmem:[%s3 + $0x1c8] sm:$0xff] %vm868, %v851
  %927 = vst.msk [vmem:[%s3 + $0x1d0] sm:$0xff] %vm868, %v854
  %928 = vst.msk [vmem:[%s3 + $0x1d8] sm:$0xff] %vm868, %v856
  %929 = vst.msk [vmem:[%s3 + $0x1e0] sm:$0xff] %vm868, %v859
  %930 = vst.msk [vmem:[%s3 + $0x1e8] sm:$0xff] %vm868, %v861
  %931 = vst.msk [vmem:[%s3 + $0x1f0] sm:$0xff] %vm868, %v864
  %932 = vst.msk [vmem:[%s3 + $0x1f8] sm:$0xff] %vm868, %v866
  // Predicated region
  $region14: #{a_call__.5} parent=0 // pred_check
    _
  $region15: #{a_call__.5} parent=0 // pred_check_branch
    %934 = sbr.rel (0) target = $region17
  $region16: #{a_call__.5} parent=0 // pred_region
    _
  $region17: #{a_call__.5} parent=0 // pred_fallthru
    _
  // Predicated region
  $region18: #{a_call__.5} parent=0 // pred_check
    _
  $region19: #{a_call__.5} parent=0 // pred_check_branch
    %936 = sbr.rel (0) target = $region21
  $region20: #{a_call__.5} parent=0 // pred_region
    _
  $region21: #{a_call__.5} parent=0 // pred_fallthru
    _

</llo_original>
